<compile_context>
chip_gen: v6e
topology: v6e:2x2x1
jax: 0.10.0
libtpu: 0.0.40
codegen_flags: <defaults>
</compile_context>

<pallas_src>
import jax
import jax.numpy as jnp
from jax import lax
from jax.experimental import pallas as pl
from jax.experimental.pallas import tpu as pltpu

# ---------------- model dims (from MotionSSM.__init__) ----------------
D_MODEL = 256          # d_model
N_LAYER = 6            # n_layer
VOCAB   = 8            # vocab_size -> continuous input feature dim (first 4 = bbox)
D_INNER = 2 * D_MODEL  # mamba expand=2
D_STATE = 16
DT_RANK = 16
D_CONV  = 4
EPS     = 1e-5
PROJ_PAD = 128         # merged dt/B/C projection padded to one 128-lane tile
OUT_PAD  = 128         # lane-dense decoder output width (sliced to 4 in wrapper)


def _silu(x):
    return x * jax.nn.sigmoid(x)


def _softplus(x):
    return jnp.where(x > 30.0, x, jnp.log1p(jnp.exp(jnp.minimum(x, 30.0))))


def _rmsnorm(x, w):
    var = jnp.mean(x * x, axis=-1, keepdims=True)
    return x * lax.rsqrt(var + EPS) * w


# ======================= fused Pallas kernel =======================

def motion_ssm_kernel(
    # shared inputs / params (constant across the layer grid axis)
    seq_ref, bbox_ref, emb_w_ref, emb_b_ref, norm_f_ref,
    # per-layer params (blocked on the leading layer axis; matmul weights bf16)
    norm_w_ref, w_in_ref, conv_w_ref, conv_b_ref, w_xproj_ref,
    w_dt_ref, b_dt_ref, a_log_ref, d_ref, w_out_ref,
    # decoder params
    w1_ref, b1_ref, wi_ref, bi_ref, we_ref, be_ref,
    w2_ref, b2_ref, wp_ref, bp_ref,
    # outputs (lane-dense, written once at the last layer)
    pred_ref, interm_ref,
    # scratch: residual stream + stacked scan states
    h_res, h_all,
):
    layer = pl.program_id(0)
    B, L, F = seq_ref.shape

    # ---- layer 0: embedding linear (VOCAB -> D_MODEL) into the VMEM residual ----
    @pl.when(layer == 0)
    def _embed():
        seq = seq_ref[...].reshape(B * L, F)
        x = jnp.dot(seq, emb_w_ref[...],
                    preferred_element_type=jnp.float32) + emb_b_ref[...]
        h_res[...] = x.reshape(B, L, D_MODEL)

    # ---- one Mamba block (this layer's weights were pipelined into VMEM) ----
    u = h_res[...]                                            # (B, L, D)
    xn = _rmsnorm(u, norm_w_ref[0])

    # merged input projection: x and z in one bf16 MXU matmul (f32 accumulate)
    xz = jnp.dot(xn.reshape(B * L, D_MODEL).astype(jnp.bfloat16), w_in_ref[0],
                 preferred_element_type=jnp.float32)          # (BL, 2*Din)
    x_in = xz[:, :D_INNER].reshape(B, L, D_INNER)
    z = xz[:, D_INNER:]                                       # (BL, Din)

    # causal depthwise conv1d: XLU sublane rolls + causal mask (no padded concat,
    # no unaligned sublane slices)
    cw = conv_w_ref[0]                                        # (K, Din)
    t_idx = lax.broadcasted_iota(jnp.int32, (B, L, D_INNER), 1)
    acc = cw[D_CONV - 1:D_CONV] * x_in                        # shift-0 tap
    for s in range(1, D_CONV):
        k = D_CONV - 1 - s
        rolled = jnp.stack(
            [pltpu.roll(x_in[b], shift=s, axis=0) for b in range(B)], axis=0)
        rolled = jnp.where(t_idx >= s, rolled, 0.0)           # zero the wrapped rows
        acc = acc + cw[k:k + 1] * rolled
    x_act = _silu(acc + conv_b_ref[0])                        # (B, L, Din)

    # merged (dt_low | B | C) projection, padded to exactly 128 output lanes
    xf = x_act.reshape(B * L, D_INNER)
    proj = jnp.dot(xf.astype(jnp.bfloat16), w_xproj_ref[0],
                   preferred_element_type=jnp.float32)        # (BL, 128)
    dt_low = proj[:, :DT_RANK]
    Bm = proj[:, DT_RANK:DT_RANK + D_STATE].reshape(B, L, D_STATE)
    Cm = proj[:, DT_RANK + D_STATE:DT_RANK + 2 * D_STATE].reshape(B, L, D_STATE)
    dt = _softplus(jnp.dot(dt_low.astype(jnp.bfloat16), w_dt_ref[0],
                           preferred_element_type=jnp.float32) + b_dt_ref[0])
    dt3 = dt.reshape(B, L, D_INNER)

    A = -jnp.exp(a_log_ref[0])                                # (S, Din)

    # hoisted scan coefficients (one big exp); dBx reassociated so the S-expansion
    # only happens once
    dA = jnp.exp(dt3[:, :, None, :] * A[None, None, :, :])    # (B,L,S,Din)
    dtx = dt3 * x_act                                         # (B,L,Din)
    dBx = dtx[:, :, None, :] * Bm[:, :, :, None]              # (B,L,S,Din)

    # selective scan over time: only pure VPU FMAs on the serial chain; states are
    # stashed to VMEM and the C.h contraction is vectorized over all L afterwards.
    h = jnp.zeros((B, D_STATE, D_INNER), jnp.float32)
    for t in range(L):
        h = dA[:, t] * h + dBx[:, t]                          # (B, S, Din)
        h_all[:, t, :, :] = h
    y = jnp.sum(Cm[:, :, :, None] * h_all[...], axis=2)       # (B, L, Din)
    y = y + d_ref[0] * x_act

    yf = y.reshape(B * L, D_INNER) * _silu(z)
    out = jnp.dot(yf.astype(jnp.bfloat16), w_out_ref[0],
                  preferred_element_type=jnp.float32)
    h_res[...] = u + out.reshape(B, L, D_MODEL)

    # ---- last layer: final RMSNorm (last timestep only) + SSMDecoder ----
    @pl.when(layer == N_LAYER - 1)
    def _decode():
        h_last = _rmsnorm(h_res[:, L - 1, :], norm_f_ref[...])      # (B, D)
        bbox_pad = bbox_ref[...]                                    # (B, 128), lanes >=4 zero
        h1 = jnp.maximum(jnp.dot(h_last, w1_ref[...],
                                 preferred_element_type=jnp.float32) + b1_ref[...], 0.0)
        d_int = jnp.dot(h1, wi_ref[...],
                        preferred_element_type=jnp.float32) + bi_ref[...]
        interm = bbox_pad + d_int                                   # (B, 128)
        emb = jnp.maximum(jnp.dot(interm, we_ref[...],
                                  preferred_element_type=jnp.float32) + be_ref[...], 0.0)
        h2 = jnp.maximum(jnp.dot(h_last + emb, w2_ref[...],
                                 preferred_element_type=jnp.float32) + b2_ref[...], 0.0)
        d_p = jnp.dot(h2, wp_ref[...],
                      preferred_element_type=jnp.float32) + bp_ref[...]
        pred_ref[...] = interm + d_p
        interm_ref[...] = interm


# ======================= pallas_call wrapper =======================

def _full_spec(shape):
    nd = len(shape)
    return pl.BlockSpec(tuple(shape), lambda l, _nd=nd: (0,) * _nd)


def _layer_spec(shape_wo_layer):
    nd = len(shape_wo_layer)
    return pl.BlockSpec((1,) + tuple(shape_wo_layer),
                        lambda l, _nd=nd: (l,) + (0,) * _nd)


@jax.jit
def motion_ssm_forward(params, seq_features):
    B, L, F = seq_features.shape
    lp = params['layers']
    dec = params['dec']

    # decoder bbox base, zero-padded to a lane-dense (B, 128) buffer (first 4 lanes valid)
    bbox_pad = jnp.zeros((B, OUT_PAD), jnp.float32).at[:, :4].set(
        seq_features[:, -1, :4])

    layer_keys = ('norm_w', 'w_in', 'conv_w', 'conv_b', 'w_xproj',
                  'w_dt', 'b_dt', 'a_log', 'd', 'w_out')
    dec_keys = ('w1', 'b1', 'wi', 'bi', 'we', 'be', 'w2', 'b2', 'wp', 'bp')

    args = (
        seq_features, bbox_pad, params['emb_w'], params['emb_b'], params['norm_f'],
        *[lp[k] for k in layer_keys],
        *[dec[k] for k in dec_keys],
    )
    in_specs = (
        [_full_spec(seq_features.shape), _full_spec(bbox_pad.shape),
         _full_spec(params['emb_w'].shape), _full_spec(params['emb_b'].shape),
         _full_spec(params['norm_f'].shape)]
        + [_layer_spec(lp[k].shape[1:]) for k in layer_keys]
        + [_full_spec(dec[k].shape) for k in dec_keys]
    )
    out_shape = (jax.ShapeDtypeStruct((B, OUT_PAD), jnp.float32),
                 jax.ShapeDtypeStruct((B, OUT_PAD), jnp.float32))
    out_specs = (_full_spec((B, OUT_PAD)), _full_spec((B, OUT_PAD)))

    pred_pad, interm_pad = pl.pallas_call(
        motion_ssm_kernel,
        grid=(N_LAYER,),
        in_specs=in_specs,
        out_specs=out_specs,
        out_shape=out_shape,
        scratch_shapes=[
            pltpu.VMEM((B, L, D_MODEL), jnp.float32),             # residual stream
            pltpu.VMEM((B, L, D_STATE, D_INNER), jnp.float32),    # stacked scan states
        ],
        compiler_params=pltpu.CompilerParams(
            # layer axis carries the residual -> must stay sequential ("arbitrary")
            dimension_semantics=("arbitrary",),
            vmem_limit_bytes=32 * 1024 * 1024),
    )(*args)
    return pred_pad[:, :4], interm_pad[:, :4]


# ======================= deterministic parameter init =======================

def init_params(key):
    keys = jax.random.split(key, 128)
    it = iter(keys)

    def dense(shape, scale):
        return jax.random.normal(next(it), shape, jnp.float32) * scale

    params = {
        'emb_w': dense((VOCAB, D_MODEL), VOCAB ** -0.5),
        'emb_b': jnp.zeros((1, D_MODEL), jnp.float32),
        'norm_f': jnp.ones((1, D_MODEL), jnp.float32),
    }

    a_log_single = jnp.broadcast_to(
        jnp.log(jnp.arange(1, D_STATE + 1, dtype=jnp.float32))[:, None],
        (D_STATE, D_INNER))

    def stack(fn):
        return jnp.stack([fn() for _ in range(N_LAYER)], axis=0)

    def xproj():
        w = jnp.zeros((D_INNER, PROJ_PAD), jnp.float32)
        w = w.at[:, :DT_RANK].set(dense((D_INNER, DT_RANK), 0.02))
        w = w.at[:, DT_RANK:DT_RANK + D_STATE].set(dense((D_INNER, D_STATE), 0.02))
        w = w.at[:, DT_RANK + D_STATE:DT_RANK + 2 * D_STATE].set(
            dense((D_INNER, D_STATE), 0.02))
        return w

    params['layers'] = {
        'norm_w': jnp.ones((N_LAYER, 1, D_MODEL), jnp.float32),
        'w_in': stack(lambda: dense((D_MODEL, 2 * D_INNER), 0.02)),
        'conv_w': stack(lambda: dense((D_CONV, D_INNER), 0.1)),
        'conv_b': jnp.zeros((N_LAYER, 1, D_INNER), jnp.float32),
        'w_xproj': stack(xproj),
        'w_dt': stack(lambda: dense((DT_RANK, D_INNER), 0.1)),
        'b_dt': jnp.full((N_LAYER, 1, D_INNER), -4.0, jnp.float32),
        'a_log': jnp.array(jnp.broadcast_to(a_log_single[None],
                                            (N_LAYER, D_STATE, D_INNER))),
        'd': jnp.ones((N_LAYER, 1, D_INNER), jnp.float32),
        'w_out': stack(lambda: dense((D_INNER, D_MODEL), 0.02)),
    }
    # bf16 storage for the DMA-heavy per-layer matmul weights (MXU-native on v5e/v6e/v7x)
    for k in ('w_in', 'w_xproj', 'w_dt', 'w_out'):
        params['layers'][k] = params['layers'][k].astype(jnp.bfloat16)

    def pad_cols(w, width):
        out = jnp.zeros((w.shape[0], width), jnp.float32)
        return out.at[:, :w.shape[1]].set(w)

    def pad_rows(w, height):
        out = jnp.zeros((height, w.shape[1]), jnp.float32)
        return out.at[:w.shape[0], :].set(w)

    params['dec'] = {
        'w1': dense((D_MODEL, D_MODEL), 0.02),
        'b1': jnp.zeros((1, D_MODEL), jnp.float32),
        'wi': pad_cols(dense((D_MODEL, 4), 0.02), OUT_PAD),
        'bi': jnp.zeros((1, OUT_PAD), jnp.float32),
        'we': pad_rows(dense((4, D_MODEL), 0.02), OUT_PAD),
        'be': jnp.zeros((1, D_MODEL), jnp.float32),
        'w2': dense((D_MODEL, D_MODEL), 0.02),
        'b2': jnp.zeros((1, D_MODEL), jnp.float32),
        'wp': pad_cols(dense((D_MODEL, 4), 0.02), OUT_PAD),
        'bp': jnp.zeros((1, OUT_PAD), jnp.float32),
    }
    return params


if __name__ == "__main__":
    key = jax.random.PRNGKey(0)
    pkey, xkey = jax.random.split(key)
    params = init_params(pkey)

    B, L = 2, 8
    seq_features = jax.random.normal(xkey, (B, L, VOCAB), jnp.float32)

    bbox_pred, bbox_interm = motion_ssm_forward(params, seq_features)
    jax.block_until_ready((bbox_pred, bbox_interm))

    assert bbox_pred.shape == (B, 4) and bbox_pred.dtype == jnp.float32
    assert bbox_interm.shape == (B, 4) and bbox_interm.dtype == jnp.float32
    assert bool(jnp.all(jnp.isfinite(bbox_pred))) and bool(jnp.all(jnp.isfinite(bbox_interm)))
    print("KERNEL_OK")
</pallas_src>

<mosaic_0001>
module attributes {stable_mosaic.version = 11 : i64} {
  func.func @motion_ssm_kernel(%arg0: i32, %arg1: memref<2x8x8xf32, #tpu.memory_space<vmem>>, %arg2: memref<2x128xf32, #tpu.memory_space<vmem>>, %arg3: memref<8x256xf32, #tpu.memory_space<vmem>>, %arg4: memref<1x256xf32, #tpu.memory_space<vmem>>, %arg5: memref<1x256xf32, #tpu.memory_space<vmem>>, %arg6: memref<1x1x256xf32, #tpu.memory_space<vmem>>, %arg7: memref<1x256x1024xbf16, #tpu.memory_space<vmem>>, %arg8: memref<1x4x512xf32, #tpu.memory_space<vmem>>, %arg9: memref<1x1x512xf32, #tpu.memory_space<vmem>>, %arg10: memref<1x512x128xbf16, #tpu.memory_space<vmem>>, %arg11: memref<1x16x512xbf16, #tpu.memory_space<vmem>>, %arg12: memref<1x1x512xf32, #tpu.memory_space<vmem>>, %arg13: memref<1x16x512xf32, #tpu.memory_space<vmem>>, %arg14: memref<1x1x512xf32, #tpu.memory_space<vmem>>, %arg15: memref<1x512x256xbf16, #tpu.memory_space<vmem>>, %arg16: memref<256x256xf32, #tpu.memory_space<vmem>>, %arg17: memref<1x256xf32, #tpu.memory_space<vmem>>, %arg18: memref<256x128xf32, #tpu.memory_space<vmem>>, %arg19: memref<1x128xf32, #tpu.memory_space<vmem>>, %arg20: memref<128x256xf32, #tpu.memory_space<vmem>>, %arg21: memref<1x256xf32, #tpu.memory_space<vmem>>, %arg22: memref<256x256xf32, #tpu.memory_space<vmem>>, %arg23: memref<1x256xf32, #tpu.memory_space<vmem>>, %arg24: memref<256x128xf32, #tpu.memory_space<vmem>>, %arg25: memref<1x128xf32, #tpu.memory_space<vmem>>, %arg26: memref<2x128xf32, #tpu.memory_space<vmem>>, %arg27: memref<2x128xf32, #tpu.memory_space<vmem>>, %arg28: memref<2x8x256xf32, #tpu.memory_space<vmem>>, %arg29: memref<2x8x16x512xf32, #tpu.memory_space<vmem>>) attributes {dimension_semantics = [#tpu.dimension_semantics<arbitrary>], iteration_bounds = array<i64: 6>, scalar_prefetch = 0 : i64, scratch_operands = 2 : i64, tpu.core_type = #tpu.core_type<tc>, window_params = [{pipeline_mode = #tpu.pipeline_mode<synchronous>, transform_indices = @transform_0, window_bounds = array<i64: 2, 8, 8>}, {pipeline_mode = #tpu.pipeline_mode<synchronous>, transform_indices = @transform_1, window_bounds = array<i64: 2, 128>}, {pipeline_mode = #tpu.pipeline_mode<synchronous>, transform_indices = @transform_2, window_bounds = array<i64: 8, 256>}, {pipeline_mode = #tpu.pipeline_mode<synchronous>, transform_indices = @transform_3, window_bounds = array<i64: 1, 256>}, {pipeline_mode = #tpu.pipeline_mode<synchronous>, transform_indices = @transform_4, window_bounds = array<i64: 1, 256>}, {transform_indices = @transform_5, window_bounds = array<i64: 1, 1, 256>}, {transform_indices = @transform_6, window_bounds = array<i64: 1, 256, 1024>}, {transform_indices = @transform_7, window_bounds = array<i64: 1, 4, 512>}, {transform_indices = @transform_8, window_bounds = array<i64: 1, 1, 512>}, {transform_indices = @transform_9, window_bounds = array<i64: 1, 512, 128>}, {transform_indices = @transform_10, window_bounds = array<i64: 1, 16, 512>}, {transform_indices = @transform_11, window_bounds = array<i64: 1, 1, 512>}, {transform_indices = @transform_12, window_bounds = array<i64: 1, 16, 512>}, {transform_indices = @transform_13, window_bounds = array<i64: 1, 1, 512>}, {transform_indices = @transform_14, window_bounds = array<i64: 1, 512, 256>}, {pipeline_mode = #tpu.pipeline_mode<synchronous>, transform_indices = @transform_15, window_bounds = array<i64: 256, 256>}, {pipeline_mode = #tpu.pipeline_mode<synchronous>, transform_indices = @transform_16, window_bounds = array<i64: 1, 256>}, {pipeline_mode = #tpu.pipeline_mode<synchronous>, transform_indices = @transform_17, window_bounds = array<i64: 256, 128>}, {pipeline_mode = #tpu.pipeline_mode<synchronous>, transform_indices = @transform_18, window_bounds = array<i64: 1, 128>}, {pipeline_mode = #tpu.pipeline_mode<synchronous>, transform_indices = @transform_19, window_bounds = array<i64: 128, 256>}, {pipeline_mode = #tpu.pipeline_mode<synchronous>, transform_indices = @transform_20, window_bounds = array<i64: 1, 256>}, {pipeline_mode = #tpu.pipeline_mode<synchronous>, transform_indices = @transform_21, window_bounds = array<i64: 256, 256>}, {pipeline_mode = #tpu.pipeline_mode<synchronous>, transform_indices = @transform_22, window_bounds = array<i64: 1, 256>}, {pipeline_mode = #tpu.pipeline_mode<synchronous>, transform_indices = @transform_23, window_bounds = array<i64: 256, 128>}, {pipeline_mode = #tpu.pipeline_mode<synchronous>, transform_indices = @transform_24, window_bounds = array<i64: 1, 128>}, {pipeline_mode = #tpu.pipeline_mode<synchronous>, transform_indices = @transform_25, window_bounds = array<i64: 2, 128>}, {pipeline_mode = #tpu.pipeline_mode<synchronous>, transform_indices = @transform_26, window_bounds = array<i64: 2, 128>}]} {
    %c0_i32 = arith.constant 0 : i32
    %0 = arith.cmpi eq, %arg0, %c0_i32 : i32
    %1 = arith.extui %0 : i1 to i32
    %c0_i32_0 = arith.constant 0 : i32
    %2 = arith.cmpi ne, %1, %c0_i32_0 : i32
    scf.if %2 {
      %c0_88 = arith.constant 0 : index
      %c0_89 = arith.constant 0 : index
      %c0_90 = arith.constant 0 : index
      %244 = vector.load %arg1[%c0_88, %c0_89, %c0_90] : memref<2x8x8xf32, #tpu.memory_space<vmem>>, vector<2x8x8xf32>
      %245 = vector.shape_cast %244 : vector<2x8x8xf32> to vector<16x8xf32>
      %c0_91 = arith.constant 0 : index
      %c0_92 = arith.constant 0 : index
      %246 = vector.load %arg3[%c0_91, %c0_92] : memref<8x256xf32, #tpu.memory_space<vmem>>, vector<8x256xf32>
      %cst_93 = arith.constant dense<0.000000e+00> : vector<16x256xf32>
      %247 = tpu.matmul %245, %246, %cst_93 {dimension_numbers = #tpu.dot_dimension_numbers<[1], [0], [0], [1], [0, 0, 1, 1], [], []>} : vector<16x8xf32>, vector<8x256xf32>, vector<16x256xf32> -> vector<16x256xf32>
      %c0_94 = arith.constant 0 : index
      %c0_95 = arith.constant 0 : index
      %248 = vector.load %arg4[%c0_94, %c0_95] : memref<1x256xf32, #tpu.memory_space<vmem>>, vector<1x256xf32>
      %249 = vector.broadcast %248 : vector<1x256xf32> to vector<16x256xf32>
      %250 = arith.addf %247, %249 : vector<16x256xf32>
      %251 = vector.shape_cast %250 : vector<16x256xf32> to vector<2x8x256xf32>
      %c0_96 = arith.constant 0 : index
      %c0_97 = arith.constant 0 : index
      %c0_98 = arith.constant 0 : index
      %252 = vector.load %arg28[%c0_96, %c0_97, %c0_98] : memref<2x8x256xf32, #tpu.memory_space<vmem>>, vector<2x8x256xf32>
      tpu.vector_store %arg28[%c0_96, %c0_97, %c0_98], %251 {strides = array<i32>} : memref<2x8x256xf32, #tpu.memory_space<vmem>>, vector<2x8x256xf32>,
    } else {
    }
    %c0 = arith.constant 0 : index
    %c0_1 = arith.constant 0 : index
    %c0_2 = arith.constant 0 : index
    %3 = vector.load %arg28[%c0, %c0_1, %c0_2] : memref<2x8x256xf32, #tpu.memory_space<vmem>>, vector<2x8x256xf32>
    %c0_3 = arith.constant 0 : index
    %c0_4 = arith.constant 0 : index
    %c0_5 = arith.constant 0 : index
    %4 = vector.load %arg6[%c0_3, %c0_4, %c0_5] : memref<1x1x256xf32, #tpu.memory_space<vmem>>, vector<1x1x256xf32>
    %5 = vector.shape_cast %4 : vector<1x1x256xf32> to vector<1x256xf32>
    %6 = arith.mulf %3, %3 : vector<2x8x256xf32>
    %cst = arith.constant dense<0.000000e+00> : vector<2x8xf32>
    %7 = vector.multi_reduction <add>, %6, %cst [2] : vector<2x8x256xf32> to vector<2x8xf32>
    %8 = vector.shape_cast %7 : vector<2x8xf32> to vector<2x8x1xf32>
    %cst_6 = arith.constant 2.560000e+02 : f32
    %9 = vector.broadcast %cst_6 : f32 to vector<2x8x1xf32>
    %10 = arith.divf %8, %9 : vector<2x8x1xf32>
    %cst_7 = arith.constant 9.99999974E-6 : f32
    %11 = vector.broadcast %cst_7 : f32 to vector<2x8x1xf32>
    %12 = arith.addf %10, %11 : vector<2x8x1xf32>
    %13 = math.rsqrt %12 : vector<2x8x1xf32>
    %14 = vector.broadcast %13 : vector<2x8x1xf32> to vector<2x8x256xf32>
    %15 = arith.mulf %3, %14 : vector<2x8x256xf32>
    %16 = vector.shape_cast %5 : vector<1x256xf32> to vector<1x1x256xf32>
    %17 = vector.broadcast %16 : vector<1x1x256xf32> to vector<2x8x256xf32>
    %18 = arith.mulf %15, %17 : vector<2x8x256xf32>
    %19 = vector.shape_cast %18 : vector<2x8x256xf32> to vector<16x256xf32>
    %20 = arith.truncf %19 : vector<16x256xf32> to vector<16x256xbf16>
    %c0_8 = arith.constant 0 : index
    %c0_9 = arith.constant 0 : index
    %c0_10 = arith.constant 0 : index
    %21 = vector.load %arg7[%c0_8, %c0_9, %c0_10] : memref<1x256x1024xbf16, #tpu.memory_space<vmem>>, vector<1x256x1024xbf16>
    %22 = vector.shape_cast %21 : vector<1x256x1024xbf16> to vector<256x1024xbf16>
    %cst_11 = arith.constant dense<0.000000e+00> : vector<16x1024xf32>
    %23 = tpu.matmul %20, %22, %cst_11 {dimension_numbers = #tpu.dot_dimension_numbers<[1], [0], [0], [1], [0, 0, 1, 1], [], []>} : vector<16x256xbf16>, vector<256x1024xbf16>, vector<16x1024xf32> -> vector<16x1024xf32>
    %24 = vector.extract_strided_slice %23 {offsets = [0, 0], sizes = [16, 512], strides = [1, 1]} : vector<16x1024xf32> to vector<16x512xf32>
    %25 = vector.shape_cast %24 : vector<16x512xf32> to vector<2x8x512xf32>
    %26 = vector.extract_strided_slice %23 {offsets = [0, 512], sizes = [16, 512], strides = [1, 1]} : vector<16x1024xf32> to vector<16x512xf32>
    %c0_12 = arith.constant 0 : index
    %c0_13 = arith.constant 0 : index
    %c0_14 = arith.constant 0 : index
    %27 = vector.load %arg8[%c0_12, %c0_13, %c0_14] : memref<1x4x512xf32, #tpu.memory_space<vmem>>, vector<1x4x512xf32>
    %28 = vector.shape_cast %27 : vector<1x4x512xf32> to vector<4x512xf32>
    %29 = tpu.iota {dimensions = array<i32: 1>} : vector<2x8x512xi32>
    %30 = vector.extract_strided_slice %28 {offsets = [3, 0], sizes = [1, 512], strides = [1, 1]} : vector<4x512xf32> to vector<1x512xf32>
    %31 = vector.shape_cast %30 : vector<1x512xf32> to vector<1x1x512xf32>
    %32 = vector.broadcast %31 : vector<1x1x512xf32> to vector<2x8x512xf32>
    %33 = arith.mulf %32, %25 : vector<2x8x512xf32>
    %34 = vector.extract_strided_slice %25 {offsets = [0, 0, 0], sizes = [1, 8, 512], strides = [1, 1, 1]} : vector<2x8x512xf32> to vector<1x8x512xf32>
    %35 = vector.shape_cast %34 : vector<1x8x512xf32> to vector<8x512xf32>
    %c1_i32 = arith.constant 1 : i32
    %36 = tpu.dynamic_rotate %35 by %c1_i32 dim 0 : vector<8x512xf32>, i32 -> vector<8x512xf32>
    %37 = vector.extract_strided_slice %25 {offsets = [1, 0, 0], sizes = [1, 8, 512], strides = [1, 1, 1]} : vector<2x8x512xf32> to vector<1x8x512xf32>
    %38 = vector.shape_cast %37 : vector<1x8x512xf32> to vector<8x512xf32>
    %c1_i32_15 = arith.constant 1 : i32
    %39 = tpu.dynamic_rotate %38 by %c1_i32_15 dim 0 : vector<8x512xf32>, i32 -> vector<8x512xf32>
    %40 = vector.shape_cast %36 : vector<8x512xf32> to vector<1x8x512xf32>
    %41 = vector.shape_cast %39 : vector<8x512xf32> to vector<1x8x512xf32>
    %42 = tpu.concatenate %40, %41 in 0 : vector<1x8x512xf32>, vector<1x8x512xf32> -> vector<2x8x512xf32>
    %c1_i32_16 = arith.constant 1 : i32
    %43 = vector.broadcast %c1_i32_16 : i32 to vector<2x8x512xi32>
    %44 = arith.cmpi sge, %29, %43 : vector<2x8x512xi32>
    %cst_17 = arith.constant 0.000000e+00 : f32
    %45 = vector.broadcast %cst_17 : f32 to vector<2x8x512xf32>
    %46 = arith.select %44, %42, %45 : vector<2x8x512xi1>, vector<2x8x512xf32>
    %47 = vector.extract_strided_slice %28 {offsets = [2, 0], sizes = [1, 512], strides = [1, 1]} : vector<4x512xf32> to vector<1x512xf32>
    %48 = vector.shape_cast %47 : vector<1x512xf32> to vector<1x1x512xf32>
    %49 = vector.broadcast %48 : vector<1x1x512xf32> to vector<2x8x512xf32>
    %50 = arith.mulf %49, %46 : vector<2x8x512xf32>
    %51 = arith.addf %33, %50 : vector<2x8x512xf32>
    %52 = vector.extract_strided_slice %25 {offsets = [0, 0, 0], sizes = [1, 8, 512], strides = [1, 1, 1]} : vector<2x8x512xf32> to vector<1x8x512xf32>
    %53 = vector.shape_cast %52 : vector<1x8x512xf32> to vector<8x512xf32>
    %c2_i32 = arith.constant 2 : i32
    %54 = tpu.dynamic_rotate %53 by %c2_i32 dim 0 : vector<8x512xf32>, i32 -> vector<8x512xf32>
    %55 = vector.extract_strided_slice %25 {offsets = [1, 0, 0], sizes = [1, 8, 512], strides = [1, 1, 1]} : vector<2x8x512xf32> to vector<1x8x512xf32>
    %56 = vector.shape_cast %55 : vector<1x8x512xf32> to vector<8x512xf32>
    %c2_i32_18 = arith.constant 2 : i32
    %57 = tpu.dynamic_rotate %56 by %c2_i32_18 dim 0 : vector<8x512xf32>, i32 -> vector<8x512xf32>
    %58 = vector.shape_cast %54 : vector<8x512xf32> to vector<1x8x512xf32>
    %59 = vector.shape_cast %57 : vector<8x512xf32> to vector<1x8x512xf32>
    %60 = tpu.concatenate %58, %59 in 0 : vector<1x8x512xf32>, vector<1x8x512xf32> -> vector<2x8x512xf32>
    %c2_i32_19 = arith.constant 2 : i32
    %61 = vector.broadcast %c2_i32_19 : i32 to vector<2x8x512xi32>
    %62 = arith.cmpi sge, %29, %61 : vector<2x8x512xi32>
    %cst_20 = arith.constant 0.000000e+00 : f32
    %63 = vector.broadcast %cst_20 : f32 to vector<2x8x512xf32>
    %64 = arith.select %62, %60, %63 : vector<2x8x512xi1>, vector<2x8x512xf32>
    %65 = vector.extract_strided_slice %28 {offsets = [1, 0], sizes = [1, 512], strides = [1, 1]} : vector<4x512xf32> to vector<1x512xf32>
    %66 = vector.shape_cast %65 : vector<1x512xf32> to vector<1x1x512xf32>
    %67 = vector.broadcast %66 : vector<1x1x512xf32> to vector<2x8x512xf32>
    %68 = arith.mulf %67, %64 : vector<2x8x512xf32>
    %69 = arith.addf %51, %68 : vector<2x8x512xf32>
    %70 = vector.extract_strided_slice %25 {offsets = [0, 0, 0], sizes = [1, 8, 512], strides = [1, 1, 1]} : vector<2x8x512xf32> to vector<1x8x512xf32>
    %71 = vector.shape_cast %70 : vector<1x8x512xf32> to vector<8x512xf32>
    %c3_i32 = arith.constant 3 : i32
    %72 = tpu.dynamic_rotate %71 by %c3_i32 dim 0 : vector<8x512xf32>, i32 -> vector<8x512xf32>
    %73 = vector.extract_strided_slice %25 {offsets = [1, 0, 0], sizes = [1, 8, 512], strides = [1, 1, 1]} : vector<2x8x512xf32> to vector<1x8x512xf32>
    %74 = vector.shape_cast %73 : vector<1x8x512xf32> to vector<8x512xf32>
    %c3_i32_21 = arith.constant 3 : i32
    %75 = tpu.dynamic_rotate %74 by %c3_i32_21 dim 0 : vector<8x512xf32>, i32 -> vector<8x512xf32>
    %76 = vector.shape_cast %72 : vector<8x512xf32> to vector<1x8x512xf32>
    %77 = vector.shape_cast %75 : vector<8x512xf32> to vector<1x8x512xf32>
    %78 = tpu.concatenate %76, %77 in 0 : vector<1x8x512xf32>, vector<1x8x512xf32> -> vector<2x8x512xf32>
    %c3_i32_22 = arith.constant 3 : i32
    %79 = vector.broadcast %c3_i32_22 : i32 to vector<2x8x512xi32>
    %80 = arith.cmpi sge, %29, %79 : vector<2x8x512xi32>
    %cst_23 = arith.constant 0.000000e+00 : f32
    %81 = vector.broadcast %cst_23 : f32 to vector<2x8x512xf32>
    %82 = arith.select %80, %78, %81 : vector<2x8x512xi1>, vector<2x8x512xf32>
    %83 = vector.extract_strided_slice %28 {offsets = [0, 0], sizes = [1, 512], strides = [1, 1]} : vector<4x512xf32> to vector<1x512xf32>
    %84 = vector.shape_cast %83 : vector<1x512xf32> to vector<1x1x512xf32>
    %85 = vector.broadcast %84 : vector<1x1x512xf32> to vector<2x8x512xf32>
    %86 = arith.mulf %85, %82 : vector<2x8x512xf32>
    %87 = arith.addf %69, %86 : vector<2x8x512xf32>
    %c0_24 = arith.constant 0 : index
    %c0_25 = arith.constant 0 : index
    %c0_26 = arith.constant 0 : index
    %88 = vector.load %arg9[%c0_24, %c0_25, %c0_26] : memref<1x1x512xf32, #tpu.memory_space<vmem>>, vector<1x1x512xf32>
    %89 = vector.shape_cast %88 : vector<1x1x512xf32> to vector<1x512xf32>
    %90 = vector.shape_cast %89 : vector<1x512xf32> to vector<1x1x512xf32>
    %91 = vector.broadcast %90 : vector<1x1x512xf32> to vector<2x8x512xf32>
    %92 = arith.addf %87, %91 : vector<2x8x512xf32>
    %93 = arith.negf %92 : vector<2x8x512xf32>
    %94 = math.exp %93 : vector<2x8x512xf32>
    %cst_27 = arith.constant 1.000000e+00 : f32
    %95 = vector.broadcast %cst_27 : f32 to vector<2x8x512xf32>
    %96 = arith.addf %95, %94 : vector<2x8x512xf32>
    %97 = arith.divf %95, %96 : vector<2x8x512xf32>
    %98 = arith.mulf %92, %97 : vector<2x8x512xf32>
    %99 = vector.shape_cast %98 : vector<2x8x512xf32> to vector<16x512xf32>
    %100 = arith.truncf %99 : vector<16x512xf32> to vector<16x512xbf16>
    %c0_28 = arith.constant 0 : index
    %c0_29 = arith.constant 0 : index
    %c0_30 = arith.constant 0 : index
    %101 = vector.load %arg10[%c0_28, %c0_29, %c0_30] : memref<1x512x128xbf16, #tpu.memory_space<vmem>>, vector<1x512x128xbf16>
    %102 = vector.shape_cast %101 : vector<1x512x128xbf16> to vector<512x128xbf16>
    %cst_31 = arith.constant dense<0.000000e+00> : vector<16x128xf32>
    %103 = tpu.matmul %100, %102, %cst_31 {dimension_numbers = #tpu.dot_dimension_numbers<[1], [0], [0], [1], [0, 0, 1, 1], [], []>} : vector<16x512xbf16>, vector<512x128xbf16>, vector<16x128xf32> -> vector<16x128xf32>
    %104 = vector.extract_strided_slice %103 {offsets = [0, 0], sizes = [16, 16], strides = [1, 1]} : vector<16x128xf32> to vector<16x16xf32>
    %105 = vector.extract_strided_slice %103 {offsets = [0, 16], sizes = [16, 16], strides = [1, 1]} : vector<16x128xf32> to vector<16x16xf32>
    %106 = vector.shape_cast %105 : vector<16x16xf32> to vector<2x8x16xf32>
    %107 = vector.extract_strided_slice %103 {offsets = [0, 32], sizes = [16, 16], strides = [1, 1]} : vector<16x128xf32> to vector<16x16xf32>
    %108 = vector.shape_cast %107 : vector<16x16xf32> to vector<2x8x16xf32>
    %109 = arith.truncf %104 : vector<16x16xf32> to vector<16x16xbf16>
    %c0_32 = arith.constant 0 : index
    %c0_33 = arith.constant 0 : index
    %c0_34 = arith.constant 0 : index
    %110 = vector.load %arg11[%c0_32, %c0_33, %c0_34] : memref<1x16x512xbf16, #tpu.memory_space<vmem>>, vector<1x16x512xbf16>
    %111 = vector.shape_cast %110 : vector<1x16x512xbf16> to vector<16x512xbf16>
    %cst_35 = arith.constant dense<0.000000e+00> : vector<16x512xf32>
    %112 = tpu.matmul %109, %111, %cst_35 {dimension_numbers = #tpu.dot_dimension_numbers<[1], [0], [0], [1], [0, 0, 1, 1], [], []>} : vector<16x16xbf16>, vector<16x512xbf16>, vector<16x512xf32> -> vector<16x512xf32>
    %c0_36 = arith.constant 0 : index
    %c0_37 = arith.constant 0 : index
    %c0_38 = arith.constant 0 : index
    %113 = vector.load %arg12[%c0_36, %c0_37, %c0_38] : memref<1x1x512xf32, #tpu.memory_space<vmem>>, vector<1x1x512xf32>
    %114 = vector.shape_cast %113 : vector<1x1x512xf32> to vector<1x512xf32>
    %115 = vector.broadcast %114 : vector<1x512xf32> to vector<16x512xf32>
    %116 = arith.addf %112, %115 : vector<16x512xf32>
    %cst_39 = arith.constant 3.000000e+01 : f32
    %117 = vector.broadcast %cst_39 : f32 to vector<16x512xf32>
    %118 = arith.cmpf ogt, %116, %117 : vector<16x512xf32>
    %cst_40 = arith.constant 3.000000e+01 : f32
    %119 = vector.broadcast %cst_40 : f32 to vector<16x512xf32>
    %120 = arith.minimumf %116, %119 : vector<16x512xf32>
    %121 = math.exp %120 : vector<16x512xf32>
    %122 = math.log1p %121 : vector<16x512xf32>
    %123 = arith.select %118, %116, %122 : vector<16x512xi1>, vector<16x512xf32>
    %124 = vector.shape_cast %123 : vector<16x512xf32> to vector<2x8x512xf32>
    %c0_41 = arith.constant 0 : index
    %c0_42 = arith.constant 0 : index
    %c0_43 = arith.constant 0 : index
    %125 = vector.load %arg13[%c0_41, %c0_42, %c0_43] : memref<1x16x512xf32, #tpu.memory_space<vmem>>, vector<1x16x512xf32>
    %126 = vector.shape_cast %125 : vector<1x16x512xf32> to vector<16x512xf32>
    %127 = math.exp %126 : vector<16x512xf32>
    %cst_44 = arith.constant 0.000000e+00 : f32
    %128 = vector.broadcast %cst_44 : f32 to vector<16x512xf32>
    %129 = arith.subf %128, %127 : vector<16x512xf32>
    %130 = vector.shape_cast %124 : vector<2x8x512xf32> to vector<2x8x1x512xf32>
    %131 = vector.shape_cast %129 : vector<16x512xf32> to vector<1x1x16x512xf32>
    %132 = vector.broadcast %130 : vector<2x8x1x512xf32> to vector<2x8x16x512xf32>
    %133 = vector.broadcast %131 : vector<1x1x16x512xf32> to vector<2x8x16x512xf32>
    %134 = arith.mulf %132, %133 : vector<2x8x16x512xf32>
    %135 = math.exp %134 : vector<2x8x16x512xf32>
    %136 = arith.mulf %124, %98 : vector<2x8x512xf32>
    %137 = vector.shape_cast %136 : vector<2x8x512xf32> to vector<2x8x1x512xf32>
    %138 = vector.shape_cast %106 : vector<2x8x16xf32> to vector<2x8x16x1xf32>
    %139 = vector.broadcast %137 : vector<2x8x1x512xf32> to vector<2x8x16x512xf32>
    %140 = vector.broadcast %138 : vector<2x8x16x1xf32> to vector<2x8x16x512xf32>
    %141 = arith.mulf %139, %140 : vector<2x8x16x512xf32>
    %cst_45 = arith.constant 0.000000e+00 : f32
    %142 = vector.broadcast %cst_45 : f32 to vector<2x16x512xf32>
    %143 = vector.extract_strided_slice %135 {offsets = [0, 0, 0, 0], sizes = [2, 1, 16, 512], strides = [1, 1, 1, 1]} : vector<2x8x16x512xf32> to vector<2x1x16x512xf32>
    %144 = vector.shape_cast %143 : vector<2x1x16x512xf32> to vector<2x16x512xf32>
    %145 = arith.mulf %144, %142 : vector<2x16x512xf32>
    %146 = vector.extract_strided_slice %141 {offsets = [0, 0, 0, 0], sizes = [2, 1, 16, 512], strides = [1, 1, 1, 1]} : vector<2x8x16x512xf32> to vector<2x1x16x512xf32>
    %147 = vector.shape_cast %146 : vector<2x1x16x512xf32> to vector<2x16x512xf32>
    %148 = arith.addf %145, %147 : vector<2x16x512xf32>
    %c0_46 = arith.constant 0 : index
    %c0_47 = arith.constant 0 : index
    %c0_48 = arith.constant 0 : index
    %c0_49 = arith.constant 0 : index
    %149 = vector.load %arg29[%c0_46, %c0_47, %c0_48, %c0_49] : memref<2x8x16x512xf32, #tpu.memory_space<vmem>>, vector<2x1x16x512xf32>
    %150 = vector.shape_cast %149 : vector<2x1x16x512xf32> to vector<2x16x512xf32>
    %151 = vector.shape_cast %148 : vector<2x16x512xf32> to vector<2x1x16x512xf32>
    tpu.vector_store %arg29[%c0_46, %c0_47, %c0_48, %c0_49], %151 {strides = array<i32>} : memref<2x8x16x512xf32, #tpu.memory_space<vmem>>, vector<2x1x16x512xf32>,
    %152 = vector.extract_strided_slice %135 {offsets = [0, 1, 0, 0], sizes = [2, 1, 16, 512], strides = [1, 1, 1, 1]} : vector<2x8x16x512xf32> to vector<2x1x16x512xf32>
    %153 = vector.shape_cast %152 : vector<2x1x16x512xf32> to vector<2x16x512xf32>
    %154 = arith.mulf %153, %148 : vector<2x16x512xf32>
    %155 = vector.extract_strided_slice %141 {offsets = [0, 1, 0, 0], sizes = [2, 1, 16, 512], strides = [1, 1, 1, 1]} : vector<2x8x16x512xf32> to vector<2x1x16x512xf32>
    %156 = vector.shape_cast %155 : vector<2x1x16x512xf32> to vector<2x16x512xf32>
    %157 = arith.addf %154, %156 : vector<2x16x512xf32>
    %c0_50 = arith.constant 0 : index
    %c1 = arith.constant 1 : index
    %c0_51 = arith.constant 0 : index
    %c0_52 = arith.constant 0 : index
    %158 = vector.load %arg29[%c0_50, %c1, %c0_51, %c0_52] : memref<2x8x16x512xf32, #tpu.memory_space<vmem>>, vector<2x1x16x512xf32>
    %159 = vector.shape_cast %158 : vector<2x1x16x512xf32> to vector<2x16x512xf32>
    %160 = vector.shape_cast %157 : vector<2x16x512xf32> to vector<2x1x16x512xf32>
    tpu.vector_store %arg29[%c0_50, %c1, %c0_51, %c0_52], %160 {strides = array<i32>} : memref<2x8x16x512xf32, #tpu.memory_space<vmem>>, vector<2x1x16x512xf32>,
    %161 = vector.extract_strided_slice %135 {offsets = [0, 2, 0, 0], sizes = [2, 1, 16, 512], strides = [1, 1, 1, 1]} : vector<2x8x16x512xf32> to vector<2x1x16x512xf32>
    %162 = vector.shape_cast %161 : vector<2x1x16x512xf32> to vector<2x16x512xf32>
    %163 = arith.mulf %162, %157 : vector<2x16x512xf32>
    %164 = vector.extract_strided_slice %141 {offsets = [0, 2, 0, 0], sizes = [2, 1, 16, 512], strides = [1, 1, 1, 1]} : vector<2x8x16x512xf32> to vector<2x1x16x512xf32>
    %165 = vector.shape_cast %164 : vector<2x1x16x512xf32> to vector<2x16x512xf32>
    %166 = arith.addf %163, %165 : vector<2x16x512xf32>
    %c0_53 = arith.constant 0 : index
    %c2 = arith.constant 2 : index
    %c0_54 = arith.constant 0 : index
    %c0_55 = arith.constant 0 : index
    %167 = vector.load %arg29[%c0_53, %c2, %c0_54, %c0_55] : memref<2x8x16x512xf32, #tpu.memory_space<vmem>>, vector<2x1x16x512xf32>
    %168 = vector.shape_cast %167 : vector<2x1x16x512xf32> to vector<2x16x512xf32>
    %169 = vector.shape_cast %166 : vector<2x16x512xf32> to vector<2x1x16x512xf32>
    tpu.vector_store %arg29[%c0_53, %c2, %c0_54, %c0_55], %169 {strides = array<i32>} : memref<2x8x16x512xf32, #tpu.memory_space<vmem>>, vector<2x1x16x512xf32>,
    %170 = vector.extract_strided_slice %135 {offsets = [0, 3, 0, 0], sizes = [2, 1, 16, 512], strides = [1, 1, 1, 1]} : vector<2x8x16x512xf32> to vector<2x1x16x512xf32>
    %171 = vector.shape_cast %170 : vector<2x1x16x512xf32> to vector<2x16x512xf32>
    %172 = arith.mulf %171, %166 : vector<2x16x512xf32>
    %173 = vector.extract_strided_slice %141 {offsets = [0, 3, 0, 0], sizes = [2, 1, 16, 512], strides = [1, 1, 1, 1]} : vector<2x8x16x512xf32> to vector<2x1x16x512xf32>
    %174 = vector.shape_cast %173 : vector<2x1x16x512xf32> to vector<2x16x512xf32>
    %175 = arith.addf %172, %174 : vector<2x16x512xf32>
    %c0_56 = arith.constant 0 : index
    %c3 = arith.constant 3 : index
    %c0_57 = arith.constant 0 : index
    %c0_58 = arith.constant 0 : index
    %176 = vector.load %arg29[%c0_56, %c3, %c0_57, %c0_58] : memref<2x8x16x512xf32, #tpu.memory_space<vmem>>, vector<2x1x16x512xf32>
    %177 = vector.shape_cast %176 : vector<2x1x16x512xf32> to vector<2x16x512xf32>
    %178 = vector.shape_cast %175 : vector<2x16x512xf32> to vector<2x1x16x512xf32>
    tpu.vector_store %arg29[%c0_56, %c3, %c0_57, %c0_58], %178 {strides = array<i32>} : memref<2x8x16x512xf32, #tpu.memory_space<vmem>>, vector<2x1x16x512xf32>,
    %179 = vector.extract_strided_slice %135 {offsets = [0, 4, 0, 0], sizes = [2, 1, 16, 512], strides = [1, 1, 1, 1]} : vector<2x8x16x512xf32> to vector<2x1x16x512xf32>
    %180 = vector.shape_cast %179 : vector<2x1x16x512xf32> to vector<2x16x512xf32>
    %181 = arith.mulf %180, %175 : vector<2x16x512xf32>
    %182 = vector.extract_strided_slice %141 {offsets = [0, 4, 0, 0], sizes = [2, 1, 16, 512], strides = [1, 1, 1, 1]} : vector<2x8x16x512xf32> to vector<2x1x16x512xf32>
    %183 = vector.shape_cast %182 : vector<2x1x16x512xf32> to vector<2x16x512xf32>
    %184 = arith.addf %181, %183 : vector<2x16x512xf32>
    %c0_59 = arith.constant 0 : index
    %c4 = arith.constant 4 : index
    %c0_60 = arith.constant 0 : index
    %c0_61 = arith.constant 0 : index
    %185 = vector.load %arg29[%c0_59, %c4, %c0_60, %c0_61] : memref<2x8x16x512xf32, #tpu.memory_space<vmem>>, vector<2x1x16x512xf32>
    %186 = vector.shape_cast %185 : vector<2x1x16x512xf32> to vector<2x16x512xf32>
    %187 = vector.shape_cast %184 : vector<2x16x512xf32> to vector<2x1x16x512xf32>
    tpu.vector_store %arg29[%c0_59, %c4, %c0_60, %c0_61], %187 {strides = array<i32>} : memref<2x8x16x512xf32, #tpu.memory_space<vmem>>, vector<2x1x16x512xf32>,
    %188 = vector.extract_strided_slice %135 {offsets = [0, 5, 0, 0], sizes = [2, 1, 16, 512], strides = [1, 1, 1, 1]} : vector<2x8x16x512xf32> to vector<2x1x16x512xf32>
    %189 = vector.shape_cast %188 : vector<2x1x16x512xf32> to vector<2x16x512xf32>
    %190 = arith.mulf %189, %184 : vector<2x16x512xf32>
    %191 = vector.extract_strided_slice %141 {offsets = [0, 5, 0, 0], sizes = [2, 1, 16, 512], strides = [1, 1, 1, 1]} : vector<2x8x16x512xf32> to vector<2x1x16x512xf32>
    %192 = vector.shape_cast %191 : vector<2x1x16x512xf32> to vector<2x16x512xf32>
    %193 = arith.addf %190, %192 : vector<2x16x512xf32>
    %c0_62 = arith.constant 0 : index
    %c5 = arith.constant 5 : index
    %c0_63 = arith.constant 0 : index
    %c0_64 = arith.constant 0 : index
    %194 = vector.load %arg29[%c0_62, %c5, %c0_63, %c0_64] : memref<2x8x16x512xf32, #tpu.memory_space<vmem>>, vector<2x1x16x512xf32>
    %195 = vector.shape_cast %194 : vector<2x1x16x512xf32> to vector<2x16x512xf32>
    %196 = vector.shape_cast %193 : vector<2x16x512xf32> to vector<2x1x16x512xf32>
    tpu.vector_store %arg29[%c0_62, %c5, %c0_63, %c0_64], %196 {strides = array<i32>} : memref<2x8x16x512xf32, #tpu.memory_space<vmem>>, vector<2x1x16x512xf32>,
    %197 = vector.extract_strided_slice %135 {offsets = [0, 6, 0, 0], sizes = [2, 1, 16, 512], strides = [1, 1, 1, 1]} : vector<2x8x16x512xf32> to vector<2x1x16x512xf32>
    %198 = vector.shape_cast %197 : vector<2x1x16x512xf32> to vector<2x16x512xf32>
    %199 = arith.mulf %198, %193 : vector<2x16x512xf32>
    %200 = vector.extract_strided_slice %141 {offsets = [0, 6, 0, 0], sizes = [2, 1, 16, 512], strides = [1, 1, 1, 1]} : vector<2x8x16x512xf32> to vector<2x1x16x512xf32>
    %201 = vector.shape_cast %200 : vector<2x1x16x512xf32> to vector<2x16x512xf32>
    %202 = arith.addf %199, %201 : vector<2x16x512xf32>
    %c0_65 = arith.constant 0 : index
    %c6 = arith.constant 6 : index
    %c0_66 = arith.constant 0 : index
    %c0_67 = arith.constant 0 : index
    %203 = vector.load %arg29[%c0_65, %c6, %c0_66, %c0_67] : memref<2x8x16x512xf32, #tpu.memory_space<vmem>>, vector<2x1x16x512xf32>
    %204 = vector.shape_cast %203 : vector<2x1x16x512xf32> to vector<2x16x512xf32>
    %205 = vector.shape_cast %202 : vector<2x16x512xf32> to vector<2x1x16x512xf32>
    tpu.vector_store %arg29[%c0_65, %c6, %c0_66, %c0_67], %205 {strides = array<i32>} : memref<2x8x16x512xf32, #tpu.memory_space<vmem>>, vector<2x1x16x512xf32>,
    %206 = vector.extract_strided_slice %135 {offsets = [0, 7, 0, 0], sizes = [2, 1, 16, 512], strides = [1, 1, 1, 1]} : vector<2x8x16x512xf32> to vector<2x1x16x512xf32>
    %207 = vector.shape_cast %206 : vector<2x1x16x512xf32> to vector<2x16x512xf32>
    %208 = arith.mulf %207, %202 : vector<2x16x512xf32>
    %209 = vector.extract_strided_slice %141 {offsets = [0, 7, 0, 0], sizes = [2, 1, 16, 512], strides = [1, 1, 1, 1]} : vector<2x8x16x512xf32> to vector<2x1x16x512xf32>
    %210 = vector.shape_cast %209 : vector<2x1x16x512xf32> to vector<2x16x512xf32>
    %211 = arith.addf %208, %210 : vector<2x16x512xf32>
    %c0_68 = arith.constant 0 : index
    %c7 = arith.constant 7 : index
    %c0_69 = arith.constant 0 : index
    %c0_70 = arith.constant 0 : index
    %212 = vector.load %arg29[%c0_68, %c7, %c0_69, %c0_70] : memref<2x8x16x512xf32, #tpu.memory_space<vmem>>, vector<2x1x16x512xf32>
    %213 = vector.shape_cast %212 : vector<2x1x16x512xf32> to vector<2x16x512xf32>
    %214 = vector.shape_cast %211 : vector<2x16x512xf32> to vector<2x1x16x512xf32>
    tpu.vector_store %arg29[%c0_68, %c7, %c0_69, %c0_70], %214 {strides = array<i32>} : memref<2x8x16x512xf32, #tpu.memory_space<vmem>>, vector<2x1x16x512xf32>,
    %215 = vector.shape_cast %108 : vector<2x8x16xf32> to vector<2x8x16x1xf32>
    %c0_71 = arith.constant 0 : index
    %c0_72 = arith.constant 0 : index
    %c0_73 = arith.constant 0 : index
    %c0_74 = arith.constant 0 : index
    %216 = vector.load %arg29[%c0_71, %c0_72, %c0_73, %c0_74] : memref<2x8x16x512xf32, #tpu.memory_space<vmem>>, vector<2x8x16x512xf32>
    %217 = vector.broadcast %215 : vector<2x8x16x1xf32> to vector<2x8x16x512xf32>
    %218 = arith.mulf %217, %216 : vector<2x8x16x512xf32>
    %cst_75 = arith.constant dense<0.000000e+00> : vector<2x8x512xf32>
    %219 = vector.multi_reduction <add>, %218, %cst_75 [2] : vector<2x8x16x512xf32> to vector<2x8x512xf32>
    %c0_76 = arith.constant 0 : index
    %c0_77 = arith.constant 0 : index
    %c0_78 = arith.constant 0 : index
    %220 = vector.load %arg14[%c0_76, %c0_77, %c0_78] : memref<1x1x512xf32, #tpu.memory_space<vmem>>, vector<1x1x512xf32>
    %221 = vector.shape_cast %220 : vector<1x1x512xf32> to vector<1x512xf32>
    %222 = vector.shape_cast %221 : vector<1x512xf32> to vector<1x1x512xf32>
    %223 = vector.broadcast %222 : vector<1x1x512xf32> to vector<2x8x512xf32>
    %224 = arith.mulf %223, %98 : vector<2x8x512xf32>
    %225 = arith.addf %219, %224 : vector<2x8x512xf32>
    %226 = vector.shape_cast %225 : vector<2x8x512xf32> to vector<16x512xf32>
    %227 = arith.negf %26 : vector<16x512xf32>
    %228 = math.exp %227 : vector<16x512xf32>
    %cst_79 = arith.constant 1.000000e+00 : f32
    %229 = vector.broadcast %cst_79 : f32 to vector<16x512xf32>
    %230 = arith.addf %229, %228 : vector<16x512xf32>
    %231 = arith.divf %229, %230 : vector<16x512xf32>
    %232 = arith.mulf %26, %231 : vector<16x512xf32>
    %233 = arith.mulf %226, %232 : vector<16x512xf32>
    %234 = arith.truncf %233 : vector<16x512xf32> to vector<16x512xbf16>
    %c0_80 = arith.constant 0 : index
    %c0_81 = arith.constant 0 : index
    %c0_82 = arith.constant 0 : index
    %235 = vector.load %arg15[%c0_80, %c0_81, %c0_82] : memref<1x512x256xbf16, #tpu.memory_space<vmem>>, vector<1x512x256xbf16>
    %236 = vector.shape_cast %235 : vector<1x512x256xbf16> to vector<512x256xbf16>
    %cst_83 = arith.constant dense<0.000000e+00> : vector<16x256xf32>
    %237 = tpu.matmul %234, %236, %cst_83 {dimension_numbers = #tpu.dot_dimension_numbers<[1], [0], [0], [1], [0, 0, 1, 1], [], []>} : vector<16x512xbf16>, vector<512x256xbf16>, vector<16x256xf32> -> vector<16x256xf32>
    %238 = vector.shape_cast %237 : vector<16x256xf32> to vector<2x8x256xf32>
    %239 = arith.addf %3, %238 : vector<2x8x256xf32>
    %c0_84 = arith.constant 0 : index
    %c0_85 = arith.constant 0 : index
    %c0_86 = arith.constant 0 : index
    %240 = vector.load %arg28[%c0_84, %c0_85, %c0_86] : memref<2x8x256xf32, #tpu.memory_space<vmem>>, vector<2x8x256xf32>
    tpu.vector_store %arg28[%c0_84, %c0_85, %c0_86], %239 {strides = array<i32>} : memref<2x8x256xf32, #tpu.memory_space<vmem>>, vector<2x8x256xf32>,
    %c5_i32 = arith.constant 5 : i32
    %241 = arith.cmpi eq, %arg0, %c5_i32 : i32
    %242 = arith.extui %241 : i1 to i32
    %c0_i32_87 = arith.constant 0 : i32
    %243 = arith.cmpi ne, %242, %c0_i32_87 : i32
    scf.if %243 {
      %c0_88 = arith.constant 0 : index
      %c7_89 = arith.constant 7 : index
      %c0_90 = arith.constant 0 : index
      %244 = vector.load %arg28[%c0_88, %c7_89, %c0_90] : memref<2x8x256xf32, #tpu.memory_space<vmem>>, vector<2x1x256xf32>
      %245 = vector.shape_cast %244 : vector<2x1x256xf32> to vector<2x256xf32>
      %c0_91 = arith.constant 0 : index
      %c0_92 = arith.constant 0 : index
      %246 = vector.load %arg5[%c0_91, %c0_92] : memref<1x256xf32, #tpu.memory_space<vmem>>, vector<1x256xf32>
      %247 = arith.mulf %245, %245 : vector<2x256xf32>
      %cst_93 = arith.constant dense<0.000000e+00> : vector<2xf32>
      %248 = vector.multi_reduction <add>, %247, %cst_93 [1] : vector<2x256xf32> to vector<2xf32>
      %249 = vector.shape_cast %248 : vector<2xf32> to vector<2x1xf32>
      %cst_94 = arith.constant 2.560000e+02 : f32
      %250 = vector.broadcast %cst_94 : f32 to vector<2x1xf32>
      %251 = arith.divf %249, %250 : vector<2x1xf32>
      %cst_95 = arith.constant 9.99999974E-6 : f32
      %252 = vector.broadcast %cst_95 : f32 to vector<2x1xf32>
      %253 = arith.addf %251, %252 : vector<2x1xf32>
      %254 = math.rsqrt %253 : vector<2x1xf32>
      %255 = vector.broadcast %254 : vector<2x1xf32> to vector<2x256xf32>
      %256 = arith.mulf %245, %255 : vector<2x256xf32>
      %257 = vector.broadcast %246 : vector<1x256xf32> to vector<2x256xf32>
      %258 = arith.mulf %256, %257 : vector<2x256xf32>
      %c0_96 = arith.constant 0 : index
      %c0_97 = arith.constant 0 : index
      %259 = vector.load %arg2[%c0_96, %c0_97] : memref<2x128xf32, #tpu.memory_space<vmem>>, vector<2x128xf32>
      %c0_98 = arith.constant 0 : index
      %c0_99 = arith.constant 0 : index
      %260 = vector.load %arg16[%c0_98, %c0_99] : memref<256x256xf32, #tpu.memory_space<vmem>>, vector<256x256xf32>
      %cst_100 = arith.constant dense<0.000000e+00> : vector<2x256xf32>
      %261 = tpu.matmul %258, %260, %cst_100 {dimension_numbers = #tpu.dot_dimension_numbers<[1], [0], [0], [1], [0, 0, 1, 1], [], []>} : vector<2x256xf32>, vector<256x256xf32>, vector<2x256xf32> -> vector<2x256xf32>
      %c0_101 = arith.constant 0 : index
      %c0_102 = arith.constant 0 : index
      %262 = vector.load %arg17[%c0_101, %c0_102] : memref<1x256xf32, #tpu.memory_space<vmem>>, vector<1x256xf32>
      %263 = vector.broadcast %262 : vector<1x256xf32> to vector<2x256xf32>
      %264 = arith.addf %261, %263 : vector<2x256xf32>
      %cst_103 = arith.constant 0.000000e+00 : f32
      %265 = vector.broadcast %cst_103 : f32 to vector<2x256xf32>
      %266 = arith.maximumf %264, %265 : vector<2x256xf32>
      %c0_104 = arith.constant 0 : index
      %c0_105 = arith.constant 0 : index
      %267 = vector.load %arg18[%c0_104, %c0_105] : memref<256x128xf32, #tpu.memory_space<vmem>>, vector<256x128xf32>
      %cst_106 = arith.constant dense<0.000000e+00> : vector<2x128xf32>
      %268 = tpu.matmul %266, %267, %cst_106 {dimension_numbers = #tpu.dot_dimension_numbers<[1], [0], [0], [1], [0, 0, 1, 1], [], []>} : vector<2x256xf32>, vector<256x128xf32>, vector<2x128xf32> -> vector<2x128xf32>
      %c0_107 = arith.constant 0 : index
      %c0_108 = arith.constant 0 : index
      %269 = vector.load %arg19[%c0_107, %c0_108] : memref<1x128xf32, #tpu.memory_space<vmem>>, vector<1x128xf32>
      %270 = vector.broadcast %269 : vector<1x128xf32> to vector<2x128xf32>
      %271 = arith.addf %268, %270 : vector<2x128xf32>
      %272 = arith.addf %259, %271 : vector<2x128xf32>
      %c0_109 = arith.constant 0 : index
      %c0_110 = arith.constant 0 : index
      %273 = vector.load %arg20[%c0_109, %c0_110] : memref<128x256xf32, #tpu.memory_space<vmem>>, vector<128x256xf32>
      %cst_111 = arith.constant dense<0.000000e+00> : vector<2x256xf32>
      %274 = tpu.matmul %272, %273, %cst_111 {dimension_numbers = #tpu.dot_dimension_numbers<[1], [0], [0], [1], [0, 0, 1, 1], [], []>} : vector<2x128xf32>, vector<128x256xf32>, vector<2x256xf32> -> vector<2x256xf32>
      %c0_112 = arith.constant 0 : index
      %c0_113 = arith.constant 0 : index
      %275 = vector.load %arg21[%c0_112, %c0_113] : memref<1x256xf32, #tpu.memory_space<vmem>>, vector<1x256xf32>
      %276 = vector.broadcast %275 : vector<1x256xf32> to vector<2x256xf32>
      %277 = arith.addf %274, %276 : vector<2x256xf32>
      %cst_114 = arith.constant 0.000000e+00 : f32
      %278 = vector.broadcast %cst_114 : f32 to vector<2x256xf32>
      %279 = arith.maximumf %277, %278 : vector<2x256xf32>
      %280 = arith.addf %258, %279 : vector<2x256xf32>
      %c0_115 = arith.constant 0 : index
      %c0_116 = arith.constant 0 : index
      %281 = vector.load %arg22[%c0_115, %c0_116] : memref<256x256xf32, #tpu.memory_space<vmem>>, vector<256x256xf32>
      %cst_117 = arith.constant dense<0.000000e+00> : vector<2x256xf32>
      %282 = tpu.matmul %280, %281, %cst_117 {dimension_numbers = #tpu.dot_dimension_numbers<[1], [0], [0], [1], [0, 0, 1, 1], [], []>} : vector<2x256xf32>, vector<256x256xf32>, vector<2x256xf32> -> vector<2x256xf32>
      %c0_118 = arith.constant 0 : index
      %c0_119 = arith.constant 0 : index
      %283 = vector.load %arg23[%c0_118, %c0_119] : memref<1x256xf32, #tpu.memory_space<vmem>>, vector<1x256xf32>
      %284 = vector.broadcast %283 : vector<1x256xf32> to vector<2x256xf32>
      %285 = arith.addf %282, %284 : vector<2x256xf32>
      %cst_120 = arith.constant 0.000000e+00 : f32
      %286 = vector.broadcast %cst_120 : f32 to vector<2x256xf32>
      %287 = arith.maximumf %285, %286 : vector<2x256xf32>
      %c0_121 = arith.constant 0 : index
      %c0_122 = arith.constant 0 : index
      %288 = vector.load %arg24[%c0_121, %c0_122] : memref<256x128xf32, #tpu.memory_space<vmem>>, vector<256x128xf32>
      %cst_123 = arith.constant dense<0.000000e+00> : vector<2x128xf32>
      %289 = tpu.matmul %287, %288, %cst_123 {dimension_numbers = #tpu.dot_dimension_numbers<[1], [0], [0], [1], [0, 0, 1, 1], [], []>} : vector<2x256xf32>, vector<256x128xf32>, vector<2x128xf32> -> vector<2x128xf32>
      %c0_124 = arith.constant 0 : index
      %c0_125 = arith.constant 0 : index
      %290 = vector.load %arg25[%c0_124, %c0_125] : memref<1x128xf32, #tpu.memory_space<vmem>>, vector<1x128xf32>
      %291 = vector.broadcast %290 : vector<1x128xf32> to vector<2x128xf32>
      %292 = arith.addf %289, %291 : vector<2x128xf32>
      %293 = arith.addf %272, %292 : vector<2x128xf32>
      %c0_126 = arith.constant 0 : index
      %c0_127 = arith.constant 0 : index
      %294 = vector.load %arg26[%c0_126, %c0_127] : memref<2x128xf32, #tpu.memory_space<vmem>>, vector<2x128xf32>
      tpu.vector_store %arg26[%c0_126, %c0_127], %293 {strides = array<i32>} : memref<2x128xf32, #tpu.memory_space<vmem>>, vector<2x128xf32>,
      %c0_128 = arith.constant 0 : index
      %c0_129 = arith.constant 0 : index
      %295 = vector.load %arg27[%c0_128, %c0_129] : memref<2x128xf32, #tpu.memory_space<vmem>>, vector<2x128xf32>
      tpu.vector_store %arg27[%c0_128, %c0_129], %272 {strides = array<i32>} : memref<2x128xf32, #tpu.memory_space<vmem>>, vector<2x128xf32>,
    } else {
    }
    return
  }
  func.func @transform_0(%arg0: i32) -> (i32, i32, i32) {
    %c0_i32 = arith.constant 0 : i32
    %c0_i32_0 = arith.constant 0 : i32
    %c0_i32_1 = arith.constant 0 : i32
    %c0_i32_2 = arith.constant 0 : i32
    return %c0_i32, %c0_i32_0, %c0_i32_1 : i32, i32, i32
  }
  func.func @transform_1(%arg0: i32) -> (i32, i32) {
    %c0_i32 = arith.constant 0 : i32
    %c0_i32_0 = arith.constant 0 : i32
    %c0_i32_1 = arith.constant 0 : i32
    return %c0_i32, %c0_i32_0 : i32, i32
  }
  func.func @transform_2(%arg0: i32) -> (i32, i32) {
    %c0_i32 = arith.constant 0 : i32
    %c0_i32_0 = arith.constant 0 : i32
    %c0_i32_1 = arith.constant 0 : i32
    return %c0_i32, %c0_i32_0 : i32, i32
  }
  func.func @transform_3(%arg0: i32) -> (i32, i32) {
    %c0_i32 = arith.constant 0 : i32
    %c0_i32_0 = arith.constant 0 : i32
    %c0_i32_1 = arith.constant 0 : i32
    return %c0_i32, %c0_i32_0 : i32, i32
  }
  func.func @transform_4(%arg0: i32) -> (i32, i32) {
    %c0_i32 = arith.constant 0 : i32
    %c0_i32_0 = arith.constant 0 : i32
    %c0_i32_1 = arith.constant 0 : i32
    return %c0_i32, %c0_i32_0 : i32, i32
  }
  func.func @transform_5(%arg0: i32) -> (i32, i32, i32) {
    %c0_i32 = arith.constant 0 : i32
    %c0_i32_0 = arith.constant 0 : i32
    %c0_i32_1 = arith.constant 0 : i32
    return %arg0, %c0_i32, %c0_i32_0 : i32, i32, i32
  }
  func.func @transform_6(%arg0: i32) -> (i32, i32, i32) {
    %c0_i32 = arith.constant 0 : i32
    %c0_i32_0 = arith.constant 0 : i32
    %c0_i32_1 = arith.constant 0 : i32
    return %arg0, %c0_i32, %c0_i32_0 : i32, i32, i32
  }
  func.func @transform_7(%arg0: i32) -> (i32, i32, i32) {
    %c0_i32 = arith.constant 0 : i32
    %c0_i32_0 = arith.constant 0 : i32
    %c0_i32_1 = arith.constant 0 : i32
    return %arg0, %c0_i32, %c0_i32_0 : i32, i32, i32
  }
  func.func @transform_8(%arg0: i32) -> (i32, i32, i32) {
    %c0_i32 = arith.constant 0 : i32
    %c0_i32_0 = arith.constant 0 : i32
    %c0_i32_1 = arith.constant 0 : i32
    return %arg0, %c0_i32, %c0_i32_0 : i32, i32, i32
  }
  func.func @transform_9(%arg0: i32) -> (i32, i32, i32) {
    %c0_i32 = arith.constant 0 : i32
    %c0_i32_0 = arith.constant 0 : i32
    %c0_i32_1 = arith.constant 0 : i32
    return %arg0, %c0_i32, %c0_i32_0 : i32, i32, i32
  }
  func.func @transform_10(%arg0: i32) -> (i32, i32, i32) {
    %c0_i32 = arith.constant 0 : i32
    %c0_i32_0 = arith.constant 0 : i32
    %c0_i32_1 = arith.constant 0 : i32
    return %arg0, %c0_i32, %c0_i32_0 : i32, i32, i32
  }
  func.func @transform_11(%arg0: i32) -> (i32, i32, i32) {
    %c0_i32 = arith.constant 0 : i32
    %c0_i32_0 = arith.constant 0 : i32
    %c0_i32_1 = arith.constant 0 : i32
    return %arg0, %c0_i32, %c0_i32_0 : i32, i32, i32
  }
  func.func @transform_12(%arg0: i32) -> (i32, i32, i32) {
    %c0_i32 = arith.constant 0 : i32
    %c0_i32_0 = arith.constant 0 : i32
    %c0_i32_1 = arith.constant 0 : i32
    return %arg0, %c0_i32, %c0_i32_0 : i32, i32, i32
  }
  func.func @transform_13(%arg0: i32) -> (i32, i32, i32) {
    %c0_i32 = arith.constant 0 : i32
    %c0_i32_0 = arith.constant 0 : i32
    %c0_i32_1 = arith.constant 0 : i32
    return %arg0, %c0_i32, %c0_i32_0 : i32, i32, i32
  }
  func.func @transform_14(%arg0: i32) -> (i32, i32, i32) {
    %c0_i32 = arith.constant 0 : i32
    %c0_i32_0 = arith.constant 0 : i32
    %c0_i32_1 = arith.constant 0 : i32
    return %arg0, %c0_i32, %c0_i32_0 : i32, i32, i32
  }
  func.func @transform_15(%arg0: i32) -> (i32, i32) {
    %c0_i32 = arith.constant 0 : i32
    %c0_i32_0 = arith.constant 0 : i32
    %c0_i32_1 = arith.constant 0 : i32
    return %c0_i32, %c0_i32_0 : i32, i32
  }
  func.func @transform_16(%arg0: i32) -> (i32, i32) {
    %c0_i32 = arith.constant 0 : i32
    %c0_i32_0 = arith.constant 0 : i32
    %c0_i32_1 = arith.constant 0 : i32
    return %c0_i32, %c0_i32_0 : i32, i32
  }
  func.func @transform_17(%arg0: i32) -> (i32, i32) {
    %c0_i32 = arith.constant 0 : i32
    %c0_i32_0 = arith.constant 0 : i32
    %c0_i32_1 = arith.constant 0 : i32
    return %c0_i32, %c0_i32_0 : i32, i32
  }
  func.func @transform_18(%arg0: i32) -> (i32, i32) {
    %c0_i32 = arith.constant 0 : i32
    %c0_i32_0 = arith.constant 0 : i32
    %c0_i32_1 = arith.constant 0 : i32
    return %c0_i32, %c0_i32_0 : i32, i32
  }
  func.func @transform_19(%arg0: i32) -> (i32, i32) {
    %c0_i32 = arith.constant 0 : i32
    %c0_i32_0 = arith.constant 0 : i32
    %c0_i32_1 = arith.constant 0 : i32
    return %c0_i32, %c0_i32_0 : i32, i32
  }
  func.func @transform_20(%arg0: i32) -> (i32, i32) {
    %c0_i32 = arith.constant 0 : i32
    %c0_i32_0 = arith.constant 0 : i32
    %c0_i32_1 = arith.constant 0 : i32
    return %c0_i32, %c0_i32_0 : i32, i32
  }
  func.func @transform_21(%arg0: i32) -> (i32, i32) {
    %c0_i32 = arith.constant 0 : i32
    %c0_i32_0 = arith.constant 0 : i32
    %c0_i32_1 = arith.constant 0 : i32
    return %c0_i32, %c0_i32_0 : i32, i32
  }
  func.func @transform_22(%arg0: i32) -> (i32, i32) {
    %c0_i32 = arith.constant 0 : i32
    %c0_i32_0 = arith.constant 0 : i32
    %c0_i32_1 = arith.constant 0 : i32
    return %c0_i32, %c0_i32_0 : i32, i32
  }
  func.func @transform_23(%arg0: i32) -> (i32, i32) {
    %c0_i32 = arith.constant 0 : i32
    %c0_i32_0 = arith.constant 0 : i32
    %c0_i32_1 = arith.constant 0 : i32
    return %c0_i32, %c0_i32_0 : i32, i32
  }
  func.func @transform_24(%arg0: i32) -> (i32, i32) {
    %c0_i32 = arith.constant 0 : i32
    %c0_i32_0 = arith.constant 0 : i32
    %c0_i32_1 = arith.constant 0 : i32
    return %c0_i32, %c0_i32_0 : i32, i32
  }
  func.func @transform_25(%arg0: i32) -> (i32, i32) {
    %c0_i32 = arith.constant 0 : i32
    %c0_i32_0 = arith.constant 0 : i32
    %c0_i32_1 = arith.constant 0 : i32
    return %c0_i32, %c0_i32_0 : i32, i32
  }
  func.func @transform_26(%arg0: i32) -> (i32, i32) {
    %c0_i32 = arith.constant 0 : i32
    %c0_i32_0 = arith.constant 0 : i32
    %c0_i32_1 = arith.constant 0 : i32
    return %c0_i32, %c0_i32_0 : i32, i32
  }
}

</mosaic_0001>

<llo_original>
// kernel: motion_ssm_forward.1
$region0: #{motion_ssm_forward.1}
  #allocation0 [shape = 'u32[]', space=smem, size = 0x4, offset = 0x4, fixed_abs, tag = 'smem constant byte address 0x4 - core index']
  #allocation1 [shape = 'u32[144,128]{1,0:T(1,128)}', space=vmem, size = 0x12000, scoped, tag = 'internal scratch']
  #allocation2 [shape = 'f32[2,8,256]{2,1,0:T(8,128)}', space=vmem, size = 0x4000, scoped, tag = 'scratch operand']
  #allocation3 [shape = 'f32[2,8,16,512]{3,2,1,0:T(8,128)}', space=vmem, size = 0x80000, scoped, tag = 'scratch operand']
  %s0 = inlined_call_operand.hbm [shape: f32[2,8,8], index: 0, kind: input, shape index: {}]
  %s1 = inlined_call_operand.vmem [shape: f32[2,128], index: 1, kind: input, shape index: {}]
  %s2 = inlined_call_operand.hbm [shape: f32[8,256], index: 2, kind: input, shape index: {}]
  %s3 = inlined_call_operand.hbm [shape: f32[1,256], index: 3, kind: input, shape index: {}]
  %s4 = inlined_call_operand.hbm [shape: f32[1,256], index: 4, kind: input, shape index: {}]
  %s5 = inlined_call_operand.hbm [shape: f32[6,1,256], index: 5, kind: input, shape index: {}]
  %s6 = inlined_call_operand.hbm [shape: bf16[6,256,1024], index: 6, kind: input, shape index: {}]
  %s7 = inlined_call_operand.hbm [shape: f32[6,4,512], index: 7, kind: input, shape index: {}]
  %s8 = inlined_call_operand.hbm [shape: f32[6,1,512], index: 8, kind: input, shape index: {}]
  %s9 = inlined_call_operand.hbm [shape: bf16[6,512,128], index: 9, kind: input, shape index: {}]
  %s10 = inlined_call_operand.hbm [shape: bf16[6,16,512], index: 10, kind: input, shape index: {}]
  %s11 = inlined_call_operand.hbm [shape: f32[6,1,512], index: 11, kind: input, shape index: {}]
  %s12 = inlined_call_operand.hbm [shape: f32[6,16,512], index: 12, kind: input, shape index: {}]
  %s13 = inlined_call_operand.hbm [shape: f32[6,1,512], index: 13, kind: input, shape index: {}]
  %s14 = inlined_call_operand.hbm [shape: bf16[6,512,256], index: 14, kind: input, shape index: {}]
  %s15 = inlined_call_operand.hbm [shape: f32[256,256], index: 15, kind: input, shape index: {}]
  %s16 = inlined_call_operand.hbm [shape: f32[1,256], index: 16, kind: input, shape index: {}]
  %s17 = inlined_call_operand.hbm [shape: f32[256,128], index: 17, kind: input, shape index: {}]
  %s18 = inlined_call_operand.hbm [shape: f32[1,128], index: 18, kind: input, shape index: {}]
  %s19 = inlined_call_operand.hbm [shape: f32[128,256], index: 19, kind: input, shape index: {}]
  %s20 = inlined_call_operand.hbm [shape: f32[1,256], index: 20, kind: input, shape index: {}]
  %s21 = inlined_call_operand.hbm [shape: f32[256,256], index: 21, kind: input, shape index: {}]
  %s22 = inlined_call_operand.hbm [shape: f32[1,256], index: 22, kind: input, shape index: {}]
  %s23 = inlined_call_operand.hbm [shape: f32[256,128], index: 23, kind: input, shape index: {}]
  %s24 = inlined_call_operand.hbm [shape: f32[1,128], index: 24, kind: input, shape index: {}]
  %s25 = inlined_call_operand.hbm [shape: f32[2,128], index: 25, kind: output, shape index: {0}]
  %s26 = inlined_call_operand.hbm [shape: f32[2,128], index: 26, kind: output, shape index: {1}]
  %27 = xla_tuple %s25, %s26
  %s28 = sld [smem:[#allocation0]]
  $region245: #{motion_ssm_forward.1} parent=0
    _
  %s30 = ssub.s32 1, %s28
  %s31 = scalar_select 0, %s30, %s28
  $region1: #{motion_ssm_forward.1} parent=0
    #allocation4 [shape = 'u8[8192]{0}', space=vmem, size = 0x2000, scoped, tag = 'input window, operand 0, single buffered']
    #allocation5 [shape = 's32[2]{0}', space=sflag, size = 0x8, scoped, tag = 'scoped memory for motion_ssm_forward.1']
    #allocation6 [shape = 's32[2]{0}', space=sflag, size = 0x8, scoped, tag = 'scoped memory for motion_ssm_forward.1']
    #allocation7 [shape = 'u8[8192]{0}', space=vmem, size = 0x2000, scoped, tag = 'input window, operand 2, single buffered']
    #allocation8 [shape = 's32[1]{0}', space=sflag, size = 0x4, scoped, tag = 'scoped memory for motion_ssm_forward.1']
    #allocation9 [shape = 'u8[1024]{0}', space=vmem, size = 0x400, scoped, tag = 'input window, operand 3, single buffered']
    #allocation10 [shape = 'u8[1024]{0}', space=vmem, size = 0x400, scoped, tag = 'input window, operand 4, single buffered']
    #allocation11 [shape = 's32[1]{0}', space=sflag, size = 0x4, scoped, tag = 'scoped memory for motion_ssm_forward.1']
    #allocation12 [shape = 'u8[2048]{0}', space=vmem, size = 0x800, scoped, tag = 'input window, operand 5']
    #allocation13 [shape = 'u8[1048576]{0}', space=vmem, size = 0x100000, scoped, tag = 'input window, operand 6']
    #allocation14 [shape = 'u8[16384]{0}', space=vmem, size = 0x4000, scoped, tag = 'input window, operand 7']
    #allocation15 [shape = 'u8[4096]{0}', space=vmem, size = 0x1000, scoped, tag = 'input window, operand 8']
    #allocation16 [shape = 'u8[262144]{0}', space=vmem, size = 0x40000, scoped, tag = 'input window, operand 9']
    #allocation17 [shape = 'u8[32768]{0}', space=vmem, size = 0x8000, scoped, tag = 'input window, operand 10']
    #allocation18 [shape = 'u8[4096]{0}', space=vmem, size = 0x1000, scoped, tag = 'input window, operand 11']
    #allocation19 [shape = 'u8[65536]{0}', space=vmem, size = 0x10000, scoped, tag = 'input window, operand 12']
    #allocation20 [shape = 'u8[4096]{0}', space=vmem, size = 0x1000, scoped, tag = 'input window, operand 13']
    #allocation21 [shape = 'u8[524288]{0}', space=vmem, size = 0x80000, scoped, tag = 'input window, operand 14']
    #allocation22 [shape = 'u8[262144]{0}', space=vmem, size = 0x40000, scoped, tag = 'input window, operand 15, single buffered']
    #allocation23 [shape = 'u8[1024]{0}', space=vmem, size = 0x400, scoped, tag = 'input window, operand 16, single buffered']
    #allocation24 [shape = 'u8[131072]{0}', space=vmem, size = 0x20000, scoped, tag = 'input window, operand 17, single buffered']
    #allocation25 [shape = 's32[1]{0}', space=sflag, size = 0x4, scoped, tag = 'scoped memory for motion_ssm_forward.1']
    #allocation26 [shape = 'u8[512]{0}', space=vmem, size = 0x400, scoped, tag = 'input window, operand 18, single buffered']
    #allocation27 [shape = 'u8[131072]{0}', space=vmem, size = 0x20000, scoped, tag = 'input window, operand 19, single buffered']
    #allocation28 [shape = 's32[1]{0}', space=sflag, size = 0x4, scoped, tag = 'scoped memory for motion_ssm_forward.1']
    #allocation29 [shape = 'u8[1024]{0}', space=vmem, size = 0x400, scoped, tag = 'input window, operand 20, single buffered']
    #allocation30 [shape = 'u8[262144]{0}', space=vmem, size = 0x40000, scoped, tag = 'input window, operand 21, single buffered']
    #allocation31 [shape = 's32[1]{0}', space=sflag, size = 0x4, scoped, tag = 'scoped memory for motion_ssm_forward.1']
    #allocation32 [shape = 'u8[1024]{0}', space=vmem, size = 0x400, scoped, tag = 'input window, operand 22, single buffered']
    #allocation33 [shape = 'u8[131072]{0}', space=vmem, size = 0x20000, scoped, tag = 'input window, operand 23, single buffered']
    #allocation34 [shape = 's32[1]{0}', space=sflag, size = 0x4, scoped, tag = 'scoped memory for motion_ssm_forward.1']
    #allocation35 [shape = 'u8[512]{0}', space=vmem, size = 0x400, scoped, tag = 'input window, operand 24, single buffered']
    #allocation36 [shape = 'u8[1024]{0}', space=vmem, size = 0x400, scoped, tag = 'output window, operand 0, single buffered']
    #allocation37 [shape = 'u8[1024]{0}', space=vmem, size = 0x400, scoped, tag = 'output window, operand 1, single buffered']
    #allocation38 [shape = 's32[1]{0}', space=sflag, size = 0x4, scoped, tag = 'scoped memory for motion_ssm_forward.1']
    %32 = vsyncpa [#allocation5], 0
    %33 = vsyncpa [#allocation8], 0
    %34 = vsyncpa [#allocation11], 0
    %35 = vsyncpa [#allocation25], 0
    %36 = vsyncpa [#allocation28], 0
    %37 = vsyncpa [#allocation31], 0
    %38 = vsyncpa [#allocation34], 0
    %39 = vsyncpa [#allocation6], 0
    %40 = vsyncpa [#allocation38], 0
    loop: start=0, step=1, limit=8
    $region2: #{motion_ssm_forward.1} parent=1 // loop_pre_header
      _
    $region3: #{motion_ssm_forward.1} parent=1 // loop_header
      %s42 = sphi 0, %s46
      %p43 = scmp.ge.s32.totalorder %s42, 8
      %s50 = sphi 0, %s50
      %s52 = sphi 0, %s50
      %s53 = sphi 0, %s52
      %s67 = sphi 0, %s53
      %s71 = sphi 0, %s71
      %s73 = sphi 0, %s71
      %s74 = sphi 0, %s73
      %s88 = sphi 0, %s74
      %s92 = sphi 0, %s92
      %s94 = sphi 0, %s92
      %s95 = sphi 0, %s94
      %s109 = sphi 0, %s95
      %s113 = sphi 0, %s113
      %s115 = sphi 0, %s113
      %s116 = sphi 0, %s115
      %s130 = sphi 0, %s116
      %s134 = sphi 0, %s134
      %s136 = sphi 0, %s134
      %s137 = sphi 0, %s136
      %s151 = sphi 0, %s137
      %s157 = sphi 0, %s159
      %s160 = sphi 0, %s157
      %s161 = sphi 0, %s160
      %s177 = sphi 0, %s161
      %s183 = sphi 0, %s185
      %s186 = sphi 0, %s183
      %s187 = sphi 0, %s186
      %s203 = sphi 0, %s187
      %s209 = sphi 0, %s211
      %s212 = sphi 0, %s209
      %s213 = sphi 0, %s212
      %s229 = sphi 0, %s213
      %s235 = sphi 0, %s237
      %s238 = sphi 0, %s235
      %s239 = sphi 0, %s238
      %s255 = sphi 0, %s239
      %s261 = sphi 0, %s263
      %s264 = sphi 0, %s261
      %s265 = sphi 0, %s264
      %s281 = sphi 0, %s265
      %s287 = sphi 0, %s289
      %s290 = sphi 0, %s287
      %s291 = sphi 0, %s290
      %s307 = sphi 0, %s291
      %s313 = sphi 0, %s315
      %s316 = sphi 0, %s313
      %s317 = sphi 0, %s316
      %s333 = sphi 0, %s317
      %s339 = sphi 0, %s341
      %s342 = sphi 0, %s339
      %s343 = sphi 0, %s342
      %s359 = sphi 0, %s343
      %s365 = sphi 0, %s367
      %s368 = sphi 0, %s365
      %s369 = sphi 0, %s368
      %s385 = sphi 0, %s369
      %s391 = sphi 0, %s393
      %s394 = sphi 0, %s391
      %s395 = sphi 0, %s394
      %s411 = sphi 0, %s395
      %s415 = sphi 0, %s415
      %s417 = sphi 0, %s415
      %s418 = sphi 0, %s417
      %s432 = sphi 0, %s418
      %s436 = sphi 0, %s436
      %s438 = sphi 0, %s436
      %s439 = sphi 0, %s438
      %s453 = sphi 0, %s439
      %s457 = sphi 0, %s457
      %s459 = sphi 0, %s457
      %s460 = sphi 0, %s459
      %s474 = sphi 0, %s460
      %s478 = sphi 0, %s478
      %s480 = sphi 0, %s478
      %s481 = sphi 0, %s480
      %s495 = sphi 0, %s481
      %s499 = sphi 0, %s499
      %s501 = sphi 0, %s499
      %s502 = sphi 0, %s501
      %s516 = sphi 0, %s502
      %s520 = sphi 0, %s520
      %s522 = sphi 0, %s520
      %s523 = sphi 0, %s522
      %s537 = sphi 0, %s523
      %s541 = sphi 0, %s541
      %s543 = sphi 0, %s541
      %s544 = sphi 0, %s543
      %s558 = sphi 0, %s544
      %s562 = sphi 0, %s562
      %s564 = sphi 0, %s562
      %s565 = sphi 0, %s564
      %s579 = sphi 0, %s565
      %s583 = sphi 0, %s583
      %s585 = sphi 0, %s583
      %s586 = sphi 0, %s585
      %s600 = sphi 0, %s586
      %s604 = sphi 0, %s604
      %s606 = sphi 0, %s604
      %s607 = sphi 0, %s606
      %s621 = sphi 0, %s607
      %s625 = sphi 0, %s625
      %s627 = sphi 0, %s625
      %s628 = sphi 0, %s627
      %s642 = sphi 0, %s628
      %s646 = sphi 0, %s646
      %s648 = sphi 0, %s646
      %s649 = sphi 0, %s648
      %s663 = sphi 0, %s649
    $region4: #{motion_ssm_forward.1} parent=1 // loop_header_branch
      %45 = sbr.rel (%p43) target = $region8
    $region5: #{motion_ssm_forward.1} parent=1 // loop_body
      %s47 = ssub.s32 %s42, 1
      %s48 = ssub.s32 %s42, 2
      %s49 = sadd.s32 %s42, 1
      %s51 = sadd.s32 %s50, 1
      %p54 = scmp.eq.s32.totalorder %s42, 5
      %p55 = scmp.ne.s32.totalorder %s50, %s52
      %p56 = scmp.eq.s32.totalorder %s42, 0
      %p57 = por %p55, %p56
      %p58 = scmp.ne.s32.totalorder %s50, %s52
      %p59 = scmp.eq.s32.totalorder %s47, 5
      %p60 = por %p58, %p59
      %p61 = scmp.ne.s32.totalorder %s52, %s53
      %p62 = scmp.eq.s32.totalorder %s47, 0
      %p63 = por %p61, %p62
      %p64 = scmp.ne.s32.totalorder %s52, %s53
      %p65 = scmp.eq.s32.totalorder %s48, 5
      %p66 = por %p64, %p65
      %p68 = scmp.ne.s32.totalorder %s53, %s67
      %p69 = scmp.eq.s32.totalorder %s48, 0
      %p70 = por %p68, %p69
      %s72 = sadd.s32 %s71, 1
      %p75 = scmp.eq.s32.totalorder %s42, 5
      %p76 = scmp.ne.s32.totalorder %s71, %s73
      %p77 = scmp.eq.s32.totalorder %s42, 0
      %p78 = por %p76, %p77
      %p79 = scmp.ne.s32.totalorder %s71, %s73
      %p80 = scmp.eq.s32.totalorder %s47, 5
      %p81 = por %p79, %p80
      %p82 = scmp.ne.s32.totalorder %s73, %s74
      %p83 = scmp.eq.s32.totalorder %s47, 0
      %p84 = por %p82, %p83
      %p85 = scmp.ne.s32.totalorder %s73, %s74
      %p86 = scmp.eq.s32.totalorder %s48, 5
      %p87 = por %p85, %p86
      %p89 = scmp.ne.s32.totalorder %s74, %s88
      %p90 = scmp.eq.s32.totalorder %s48, 0
      %p91 = por %p89, %p90
      %s93 = sadd.s32 %s92, 1
      %p96 = scmp.eq.s32.totalorder %s42, 5
      %p97 = scmp.ne.s32.totalorder %s92, %s94
      %p98 = scmp.eq.s32.totalorder %s42, 0
      %p99 = por %p97, %p98
      %p100 = scmp.ne.s32.totalorder %s92, %s94
      %p101 = scmp.eq.s32.totalorder %s47, 5
      %p102 = por %p100, %p101
      %p103 = scmp.ne.s32.totalorder %s94, %s95
      %p104 = scmp.eq.s32.totalorder %s47, 0
      %p105 = por %p103, %p104
      %p106 = scmp.ne.s32.totalorder %s94, %s95
      %p107 = scmp.eq.s32.totalorder %s48, 5
      %p108 = por %p106, %p107
      %p110 = scmp.ne.s32.totalorder %s95, %s109
      %p111 = scmp.eq.s32.totalorder %s48, 0
      %p112 = por %p110, %p111
      %s114 = sadd.s32 %s113, 1
      %p117 = scmp.eq.s32.totalorder %s42, 5
      %p118 = scmp.ne.s32.totalorder %s113, %s115
      %p119 = scmp.eq.s32.totalorder %s42, 0
      %p120 = por %p118, %p119
      %p121 = scmp.ne.s32.totalorder %s113, %s115
      %p122 = scmp.eq.s32.totalorder %s47, 5
      %p123 = por %p121, %p122
      %p124 = scmp.ne.s32.totalorder %s115, %s116
      %p125 = scmp.eq.s32.totalorder %s47, 0
      %p126 = por %p124, %p125
      %p127 = scmp.ne.s32.totalorder %s115, %s116
      %p128 = scmp.eq.s32.totalorder %s48, 5
      %p129 = por %p127, %p128
      %p131 = scmp.ne.s32.totalorder %s116, %s130
      %p132 = scmp.eq.s32.totalorder %s48, 0
      %p133 = por %p131, %p132
      %s135 = sadd.s32 %s134, 1
      %p138 = scmp.eq.s32.totalorder %s42, 5
      %p139 = scmp.ne.s32.totalorder %s134, %s136
      %p140 = scmp.eq.s32.totalorder %s42, 0
      %p141 = por %p139, %p140
      %p142 = scmp.ne.s32.totalorder %s134, %s136
      %p143 = scmp.eq.s32.totalorder %s47, 5
      %p144 = por %p142, %p143
      %p145 = scmp.ne.s32.totalorder %s136, %s137
      %p146 = scmp.eq.s32.totalorder %s47, 0
      %p147 = por %p145, %p146
      %p148 = scmp.ne.s32.totalorder %s136, %s137
      %p149 = scmp.eq.s32.totalorder %s48, 5
      %p150 = por %p148, %p149
      %p152 = scmp.ne.s32.totalorder %s137, %s151
      %p153 = scmp.eq.s32.totalorder %s48, 0
      %p154 = por %p152, %p153
      %s155 = ssub.s32 %s42, %s49
      %p156 = scmp.eq.s32.totalorder %s155, 0
      %s158 = sadd.s32 %s157, 1
      %s159 = scalar_select %p156, %s157, %s158
      %p162 = pneg %p156
      %p163 = scmp.eq.s32.totalorder %s42, 5
      %p164 = por %p162, %p163
      %p165 = scmp.ne.s32.totalorder %s157, %s160
      %p166 = scmp.eq.s32.totalorder %s42, 0
      %p167 = por %p165, %p166
      %p168 = scmp.ne.s32.totalorder %s157, %s160
      %p169 = scmp.eq.s32.totalorder %s47, 5
      %p170 = por %p168, %p169
      %p171 = scmp.ne.s32.totalorder %s160, %s161
      %p172 = scmp.eq.s32.totalorder %s47, 0
      %p173 = por %p171, %p172
      %p174 = scmp.ne.s32.totalorder %s160, %s161
      %p175 = scmp.eq.s32.totalorder %s48, 5
      %p176 = por %p174, %p175
      %p178 = scmp.ne.s32.totalorder %s161, %s177
      %p179 = scmp.eq.s32.totalorder %s48, 0
      %p180 = por %p178, %p179
      %s181 = ssub.s32 %s42, %s49
      %p182 = scmp.eq.s32.totalorder %s181, 0
      %s184 = sadd.s32 %s183, 1
      %s185 = scalar_select %p182, %s183, %s184
      %p188 = pneg %p182
      %p189 = scmp.eq.s32.totalorder %s42, 5
      %p190 = por %p188, %p189
      %p191 = scmp.ne.s32.totalorder %s183, %s186
      %p192 = scmp.eq.s32.totalorder %s42, 0
      %p193 = por %p191, %p192
      %p194 = scmp.ne.s32.totalorder %s183, %s186
      %p195 = scmp.eq.s32.totalorder %s47, 5
      %p196 = por %p194, %p195
      %p197 = scmp.ne.s32.totalorder %s186, %s187
      %p198 = scmp.eq.s32.totalorder %s47, 0
      %p199 = por %p197, %p198
      %p200 = scmp.ne.s32.totalorder %s186, %s187
      %p201 = scmp.eq.s32.totalorder %s48, 5
      %p202 = por %p200, %p201
      %p204 = scmp.ne.s32.totalorder %s187, %s203
      %p205 = scmp.eq.s32.totalorder %s48, 0
      %p206 = por %p204, %p205
      %s207 = ssub.s32 %s42, %s49
      %p208 = scmp.eq.s32.totalorder %s207, 0
      %s210 = sadd.s32 %s209, 1
      %s211 = scalar_select %p208, %s209, %s210
      %p214 = pneg %p208
      %p215 = scmp.eq.s32.totalorder %s42, 5
      %p216 = por %p214, %p215
      %p217 = scmp.ne.s32.totalorder %s209, %s212
      %p218 = scmp.eq.s32.totalorder %s42, 0
      %p219 = por %p217, %p218
      %p220 = scmp.ne.s32.totalorder %s209, %s212
      %p221 = scmp.eq.s32.totalorder %s47, 5
      %p222 = por %p220, %p221
      %p223 = scmp.ne.s32.totalorder %s212, %s213
      %p224 = scmp.eq.s32.totalorder %s47, 0
      %p225 = por %p223, %p224
      %p226 = scmp.ne.s32.totalorder %s212, %s213
      %p227 = scmp.eq.s32.totalorder %s48, 5
      %p228 = por %p226, %p227
      %p230 = scmp.ne.s32.totalorder %s213, %s229
      %p231 = scmp.eq.s32.totalorder %s48, 0
      %p232 = por %p230, %p231
      %s233 = ssub.s32 %s42, %s49
      %p234 = scmp.eq.s32.totalorder %s233, 0
      %s236 = sadd.s32 %s235, 1
      %s237 = scalar_select %p234, %s235, %s236
      %p240 = pneg %p234
      %p241 = scmp.eq.s32.totalorder %s42, 5
      %p242 = por %p240, %p241
      %p243 = scmp.ne.s32.totalorder %s235, %s238
      %p244 = scmp.eq.s32.totalorder %s42, 0
      %p245 = por %p243, %p244
      %p246 = scmp.ne.s32.totalorder %s235, %s238
      %p247 = scmp.eq.s32.totalorder %s47, 5
      %p248 = por %p246, %p247
      %p249 = scmp.ne.s32.totalorder %s238, %s239
      %p250 = scmp.eq.s32.totalorder %s47, 0
      %p251 = por %p249, %p250
      %p252 = scmp.ne.s32.totalorder %s238, %s239
      %p253 = scmp.eq.s32.totalorder %s48, 5
      %p254 = por %p252, %p253
      %p256 = scmp.ne.s32.totalorder %s239, %s255
      %p257 = scmp.eq.s32.totalorder %s48, 0
      %p258 = por %p256, %p257
      %s259 = ssub.s32 %s42, %s49
      %p260 = scmp.eq.s32.totalorder %s259, 0
      %s262 = sadd.s32 %s261, 1
      %s263 = scalar_select %p260, %s261, %s262
      %p266 = pneg %p260
      %p267 = scmp.eq.s32.totalorder %s42, 5
      %p268 = por %p266, %p267
      %p269 = scmp.ne.s32.totalorder %s261, %s264
      %p270 = scmp.eq.s32.totalorder %s42, 0
      %p271 = por %p269, %p270
      %p272 = scmp.ne.s32.totalorder %s261, %s264
      %p273 = scmp.eq.s32.totalorder %s47, 5
      %p274 = por %p272, %p273
      %p275 = scmp.ne.s32.totalorder %s264, %s265
      %p276 = scmp.eq.s32.totalorder %s47, 0
      %p277 = por %p275, %p276
      %p278 = scmp.ne.s32.totalorder %s264, %s265
      %p279 = scmp.eq.s32.totalorder %s48, 5
      %p280 = por %p278, %p279
      %p282 = scmp.ne.s32.totalorder %s265, %s281
      %p283 = scmp.eq.s32.totalorder %s48, 0
      %p284 = por %p282, %p283
      %s285 = ssub.s32 %s42, %s49
      %p286 = scmp.eq.s32.totalorder %s285, 0
      %s288 = sadd.s32 %s287, 1
      %s289 = scalar_select %p286, %s287, %s288
      %p292 = pneg %p286
      %p293 = scmp.eq.s32.totalorder %s42, 5
      %p294 = por %p292, %p293
      %p295 = scmp.ne.s32.totalorder %s287, %s290
      %p296 = scmp.eq.s32.totalorder %s42, 0
      %p297 = por %p295, %p296
      %p298 = scmp.ne.s32.totalorder %s287, %s290
      %p299 = scmp.eq.s32.totalorder %s47, 5
      %p300 = por %p298, %p299
      %p301 = scmp.ne.s32.totalorder %s290, %s291
      %p302 = scmp.eq.s32.totalorder %s47, 0
      %p303 = por %p301, %p302
      %p304 = scmp.ne.s32.totalorder %s290, %s291
      %p305 = scmp.eq.s32.totalorder %s48, 5
      %p306 = por %p304, %p305
      %p308 = scmp.ne.s32.totalorder %s291, %s307
      %p309 = scmp.eq.s32.totalorder %s48, 0
      %p310 = por %p308, %p309
      %s311 = ssub.s32 %s42, %s49
      %p312 = scmp.eq.s32.totalorder %s311, 0
      %s314 = sadd.s32 %s313, 1
      %s315 = scalar_select %p312, %s313, %s314
      %p318 = pneg %p312
      %p319 = scmp.eq.s32.totalorder %s42, 5
      %p320 = por %p318, %p319
      %p321 = scmp.ne.s32.totalorder %s313, %s316
      %p322 = scmp.eq.s32.totalorder %s42, 0
      %p323 = por %p321, %p322
      %p324 = scmp.ne.s32.totalorder %s313, %s316
      %p325 = scmp.eq.s32.totalorder %s47, 5
      %p326 = por %p324, %p325
      %p327 = scmp.ne.s32.totalorder %s316, %s317
      %p328 = scmp.eq.s32.totalorder %s47, 0
      %p329 = por %p327, %p328
      %p330 = scmp.ne.s32.totalorder %s316, %s317
      %p331 = scmp.eq.s32.totalorder %s48, 5
      %p332 = por %p330, %p331
      %p334 = scmp.ne.s32.totalorder %s317, %s333
      %p335 = scmp.eq.s32.totalorder %s48, 0
      %p336 = por %p334, %p335
      %s337 = ssub.s32 %s42, %s49
      %p338 = scmp.eq.s32.totalorder %s337, 0
      %s340 = sadd.s32 %s339, 1
      %s341 = scalar_select %p338, %s339, %s340
      %p344 = pneg %p338
      %p345 = scmp.eq.s32.totalorder %s42, 5
      %p346 = por %p344, %p345
      %p347 = scmp.ne.s32.totalorder %s339, %s342
      %p348 = scmp.eq.s32.totalorder %s42, 0
      %p349 = por %p347, %p348
      %p350 = scmp.ne.s32.totalorder %s339, %s342
      %p351 = scmp.eq.s32.totalorder %s47, 5
      %p352 = por %p350, %p351
      %p353 = scmp.ne.s32.totalorder %s342, %s343
      %p354 = scmp.eq.s32.totalorder %s47, 0
      %p355 = por %p353, %p354
      %p356 = scmp.ne.s32.totalorder %s342, %s343
      %p357 = scmp.eq.s32.totalorder %s48, 5
      %p358 = por %p356, %p357
      %p360 = scmp.ne.s32.totalorder %s343, %s359
      %p361 = scmp.eq.s32.totalorder %s48, 0
      %p362 = por %p360, %p361
      %s363 = ssub.s32 %s42, %s49
      %p364 = scmp.eq.s32.totalorder %s363, 0
      %s366 = sadd.s32 %s365, 1
      %s367 = scalar_select %p364, %s365, %s366
      %p370 = pneg %p364
      %p371 = scmp.eq.s32.totalorder %s42, 5
      %p372 = por %p370, %p371
      %p373 = scmp.ne.s32.totalorder %s365, %s368
      %p374 = scmp.eq.s32.totalorder %s42, 0
      %p375 = por %p373, %p374
      %p376 = scmp.ne.s32.totalorder %s365, %s368
      %p377 = scmp.eq.s32.totalorder %s47, 5
      %p378 = por %p376, %p377
      %p379 = scmp.ne.s32.totalorder %s368, %s369
      %p380 = scmp.eq.s32.totalorder %s47, 0
      %p381 = por %p379, %p380
      %p382 = scmp.ne.s32.totalorder %s368, %s369
      %p383 = scmp.eq.s32.totalorder %s48, 5
      %p384 = por %p382, %p383
      %p386 = scmp.ne.s32.totalorder %s369, %s385
      %p387 = scmp.eq.s32.totalorder %s48, 0
      %p388 = por %p386, %p387
      %s389 = ssub.s32 %s42, %s49
      %p390 = scmp.eq.s32.totalorder %s389, 0
      %s392 = sadd.s32 %s391, 1
      %s393 = scalar_select %p390, %s391, %s392
      %p396 = pneg %p390
      %p397 = scmp.eq.s32.totalorder %s42, 5
      %p398 = por %p396, %p397
      %p399 = scmp.ne.s32.totalorder %s391, %s394
      %p400 = scmp.eq.s32.totalorder %s42, 0
      %p401 = por %p399, %p400
      %p402 = scmp.ne.s32.totalorder %s391, %s394
      %p403 = scmp.eq.s32.totalorder %s47, 5
      %p404 = por %p402, %p403
      %p405 = scmp.ne.s32.totalorder %s394, %s395
      %p406 = scmp.eq.s32.totalorder %s47, 0
      %p407 = por %p405, %p406
      %p408 = scmp.ne.s32.totalorder %s394, %s395
      %p409 = scmp.eq.s32.totalorder %s48, 5
      %p410 = por %p408, %p409
      %p412 = scmp.ne.s32.totalorder %s395, %s411
      %p413 = scmp.eq.s32.totalorder %s48, 0
      %p414 = por %p412, %p413
      %s416 = sadd.s32 %s415, 1
      %p419 = scmp.eq.s32.totalorder %s42, 5
      %p420 = scmp.ne.s32.totalorder %s415, %s417
      %p421 = scmp.eq.s32.totalorder %s42, 0
      %p422 = por %p420, %p421
      %p423 = scmp.ne.s32.totalorder %s415, %s417
      %p424 = scmp.eq.s32.totalorder %s47, 5
      %p425 = por %p423, %p424
      %p426 = scmp.ne.s32.totalorder %s417, %s418
      %p427 = scmp.eq.s32.totalorder %s47, 0
      %p428 = por %p426, %p427
      %p429 = scmp.ne.s32.totalorder %s417, %s418
      %p430 = scmp.eq.s32.totalorder %s48, 5
      %p431 = por %p429, %p430
      %p433 = scmp.ne.s32.totalorder %s418, %s432
      %p434 = scmp.eq.s32.totalorder %s48, 0
      %p435 = por %p433, %p434
      %s437 = sadd.s32 %s436, 1
      %p440 = scmp.eq.s32.totalorder %s42, 5
      %p441 = scmp.ne.s32.totalorder %s436, %s438
      %p442 = scmp.eq.s32.totalorder %s42, 0
      %p443 = por %p441, %p442
      %p444 = scmp.ne.s32.totalorder %s436, %s438
      %p445 = scmp.eq.s32.totalorder %s47, 5
      %p446 = por %p444, %p445
      %p447 = scmp.ne.s32.totalorder %s438, %s439
      %p448 = scmp.eq.s32.totalorder %s47, 0
      %p449 = por %p447, %p448
      %p450 = scmp.ne.s32.totalorder %s438, %s439
      %p451 = scmp.eq.s32.totalorder %s48, 5
      %p452 = por %p450, %p451
      %p454 = scmp.ne.s32.totalorder %s439, %s453
      %p455 = scmp.eq.s32.totalorder %s48, 0
      %p456 = por %p454, %p455
      %s458 = sadd.s32 %s457, 1
      %p461 = scmp.eq.s32.totalorder %s42, 5
      %p462 = scmp.ne.s32.totalorder %s457, %s459
      %p463 = scmp.eq.s32.totalorder %s42, 0
      %p464 = por %p462, %p463
      %p465 = scmp.ne.s32.totalorder %s457, %s459
      %p466 = scmp.eq.s32.totalorder %s47, 5
      %p467 = por %p465, %p466
      %p468 = scmp.ne.s32.totalorder %s459, %s460
      %p469 = scmp.eq.s32.totalorder %s47, 0
      %p470 = por %p468, %p469
      %p471 = scmp.ne.s32.totalorder %s459, %s460
      %p472 = scmp.eq.s32.totalorder %s48, 5
      %p473 = por %p471, %p472
      %p475 = scmp.ne.s32.totalorder %s460, %s474
      %p476 = scmp.eq.s32.totalorder %s48, 0
      %p477 = por %p475, %p476
      %s479 = sadd.s32 %s478, 1
      %p482 = scmp.eq.s32.totalorder %s42, 5
      %p483 = scmp.ne.s32.totalorder %s478, %s480
      %p484 = scmp.eq.s32.totalorder %s42, 0
      %p485 = por %p483, %p484
      %p486 = scmp.ne.s32.totalorder %s478, %s480
      %p487 = scmp.eq.s32.totalorder %s47, 5
      %p488 = por %p486, %p487
      %p489 = scmp.ne.s32.totalorder %s480, %s481
      %p490 = scmp.eq.s32.totalorder %s47, 0
      %p491 = por %p489, %p490
      %p492 = scmp.ne.s32.totalorder %s480, %s481
      %p493 = scmp.eq.s32.totalorder %s48, 5
      %p494 = por %p492, %p493
      %p496 = scmp.ne.s32.totalorder %s481, %s495
      %p497 = scmp.eq.s32.totalorder %s48, 0
      %p498 = por %p496, %p497
      %s500 = sadd.s32 %s499, 1
      %p503 = scmp.eq.s32.totalorder %s42, 5
      %p504 = scmp.ne.s32.totalorder %s499, %s501
      %p505 = scmp.eq.s32.totalorder %s42, 0
      %p506 = por %p504, %p505
      %p507 = scmp.ne.s32.totalorder %s499, %s501
      %p508 = scmp.eq.s32.totalorder %s47, 5
      %p509 = por %p507, %p508
      %p510 = scmp.ne.s32.totalorder %s501, %s502
      %p511 = scmp.eq.s32.totalorder %s47, 0
      %p512 = por %p510, %p511
      %p513 = scmp.ne.s32.totalorder %s501, %s502
      %p514 = scmp.eq.s32.totalorder %s48, 5
      %p515 = por %p513, %p514
      %p517 = scmp.ne.s32.totalorder %s502, %s516
      %p518 = scmp.eq.s32.totalorder %s48, 0
      %p519 = por %p517, %p518
      %s521 = sadd.s32 %s520, 1
      %p524 = scmp.eq.s32.totalorder %s42, 5
      %p525 = scmp.ne.s32.totalorder %s520, %s522
      %p526 = scmp.eq.s32.totalorder %s42, 0
      %p527 = por %p525, %p526
      %p528 = scmp.ne.s32.totalorder %s520, %s522
      %p529 = scmp.eq.s32.totalorder %s47, 5
      %p530 = por %p528, %p529
      %p531 = scmp.ne.s32.totalorder %s522, %s523
      %p532 = scmp.eq.s32.totalorder %s47, 0
      %p533 = por %p531, %p532
      %p534 = scmp.ne.s32.totalorder %s522, %s523
      %p535 = scmp.eq.s32.totalorder %s48, 5
      %p536 = por %p534, %p535
      %p538 = scmp.ne.s32.totalorder %s523, %s537
      %p539 = scmp.eq.s32.totalorder %s48, 0
      %p540 = por %p538, %p539
      %s542 = sadd.s32 %s541, 1
      %p545 = scmp.eq.s32.totalorder %s42, 5
      %p546 = scmp.ne.s32.totalorder %s541, %s543
      %p547 = scmp.eq.s32.totalorder %s42, 0
      %p548 = por %p546, %p547
      %p549 = scmp.ne.s32.totalorder %s541, %s543
      %p550 = scmp.eq.s32.totalorder %s47, 5
      %p551 = por %p549, %p550
      %p552 = scmp.ne.s32.totalorder %s543, %s544
      %p553 = scmp.eq.s32.totalorder %s47, 0
      %p554 = por %p552, %p553
      %p555 = scmp.ne.s32.totalorder %s543, %s544
      %p556 = scmp.eq.s32.totalorder %s48, 5
      %p557 = por %p555, %p556
      %p559 = scmp.ne.s32.totalorder %s544, %s558
      %p560 = scmp.eq.s32.totalorder %s48, 0
      %p561 = por %p559, %p560
      %s563 = sadd.s32 %s562, 1
      %p566 = scmp.eq.s32.totalorder %s42, 5
      %p567 = scmp.ne.s32.totalorder %s562, %s564
      %p568 = scmp.eq.s32.totalorder %s42, 0
      %p569 = por %p567, %p568
      %p570 = scmp.ne.s32.totalorder %s562, %s564
      %p571 = scmp.eq.s32.totalorder %s47, 5
      %p572 = por %p570, %p571
      %p573 = scmp.ne.s32.totalorder %s564, %s565
      %p574 = scmp.eq.s32.totalorder %s47, 0
      %p575 = por %p573, %p574
      %p576 = scmp.ne.s32.totalorder %s564, %s565
      %p577 = scmp.eq.s32.totalorder %s48, 5
      %p578 = por %p576, %p577
      %p580 = scmp.ne.s32.totalorder %s565, %s579
      %p581 = scmp.eq.s32.totalorder %s48, 0
      %p582 = por %p580, %p581
      %s584 = sadd.s32 %s583, 1
      %p587 = scmp.eq.s32.totalorder %s42, 5
      %p588 = scmp.ne.s32.totalorder %s583, %s585
      %p589 = scmp.eq.s32.totalorder %s42, 0
      %p590 = por %p588, %p589
      %p591 = scmp.ne.s32.totalorder %s583, %s585
      %p592 = scmp.eq.s32.totalorder %s47, 5
      %p593 = por %p591, %p592
      %p594 = scmp.ne.s32.totalorder %s585, %s586
      %p595 = scmp.eq.s32.totalorder %s47, 0
      %p596 = por %p594, %p595
      %p597 = scmp.ne.s32.totalorder %s585, %s586
      %p598 = scmp.eq.s32.totalorder %s48, 5
      %p599 = por %p597, %p598
      %p601 = scmp.ne.s32.totalorder %s586, %s600
      %p602 = scmp.eq.s32.totalorder %s48, 0
      %p603 = por %p601, %p602
      %s605 = sadd.s32 %s604, 1
      %p608 = scmp.eq.s32.totalorder %s42, 5
      %p609 = scmp.ne.s32.totalorder %s604, %s606
      %p610 = scmp.eq.s32.totalorder %s42, 0
      %p611 = por %p609, %p610
      %p612 = scmp.ne.s32.totalorder %s604, %s606
      %p613 = scmp.eq.s32.totalorder %s47, 5
      %p614 = por %p612, %p613
      %p615 = scmp.ne.s32.totalorder %s606, %s607
      %p616 = scmp.eq.s32.totalorder %s47, 0
      %p617 = por %p615, %p616
      %p618 = scmp.ne.s32.totalorder %s606, %s607
      %p619 = scmp.eq.s32.totalorder %s48, 5
      %p620 = por %p618, %p619
      %p622 = scmp.ne.s32.totalorder %s607, %s621
      %p623 = scmp.eq.s32.totalorder %s48, 0
      %p624 = por %p622, %p623
      %s626 = sadd.s32 %s625, 1
      %p629 = scmp.eq.s32.totalorder %s42, 5
      %p630 = scmp.ne.s32.totalorder %s625, %s627
      %p631 = scmp.eq.s32.totalorder %s42, 0
      %p632 = por %p630, %p631
      %p633 = scmp.ne.s32.totalorder %s625, %s627
      %p634 = scmp.eq.s32.totalorder %s47, 5
      %p635 = por %p633, %p634
      %p636 = scmp.ne.s32.totalorder %s627, %s628
      %p637 = scmp.eq.s32.totalorder %s47, 0
      %p638 = por %p636, %p637
      %p639 = scmp.ne.s32.totalorder %s627, %s628
      %p640 = scmp.eq.s32.totalorder %s48, 5
      %p641 = por %p639, %p640
      %p643 = scmp.ne.s32.totalorder %s628, %s642
      %p644 = scmp.eq.s32.totalorder %s48, 0
      %p645 = por %p643, %p644
      %s647 = sadd.s32 %s646, 1
      %p650 = scmp.eq.s32.totalorder %s42, 5
      %p651 = scmp.ne.s32.totalorder %s646, %s648
      %p652 = scmp.eq.s32.totalorder %s42, 0
      %p653 = por %p651, %p652
      %p654 = scmp.ne.s32.totalorder %s646, %s648
      %p655 = scmp.eq.s32.totalorder %s47, 5
      %p656 = por %p654, %p655
      %p657 = scmp.ne.s32.totalorder %s648, %s649
      %p658 = scmp.eq.s32.totalorder %s47, 0
      %p659 = por %p657, %p658
      %p660 = scmp.ne.s32.totalorder %s648, %s649
      %p661 = scmp.eq.s32.totalorder %s48, 5
      %p662 = por %p660, %p661
      %p664 = scmp.ne.s32.totalorder %s649, %s663
      %p665 = scmp.eq.s32.totalorder %s48, 0
      %p666 = por %p664, %p665
      %p667 = scmp.le.s32.totalorder 1, %s42
      %p668 = scmp.lt.s32.totalorder %s42, 7
      %p669 = pnand %p667, %p668
      %p670 = pneg %p669
      // Predicated region
      $region9: #{motion_ssm_forward.1} parent=5 // pred_check
        _
      $region10: #{motion_ssm_forward.1} parent=5 // pred_check_branch
        %672 = sbr.rel (%p669) target = $region12
      $region11: #{motion_ssm_forward.1} parent=5 // pred_region
        %s673 = ssub.s32 %s42, 1
        // Predicated region
        $region13: #{motion_ssm_forward.1} parent=11 // pred_check
          %p674 = pneg %p63
        $region14: #{motion_ssm_forward.1} parent=11 // pred_check_branch
          %676 = sbr.rel (%p674) target = $region16
        $region15: #{motion_ssm_forward.1} parent=11 // pred_region
          %s678 = ssub.s32 256, 256
          %679 = vsyncadd [#allocation5], %s678
          %s680 = sshll.u32 [#allocation4], 4
          %s681 = int_to_ptr.vmem [resolvable:$true] %s680
          %686 = dma.hbm_to_vmem [thread:$0]  %s0, 256, %s681, [#allocation5], 128, 128, 8
        $region16: #{motion_ssm_forward.1} parent=11 // pred_fallthru
          _
        // Predicated region
        $region17: #{motion_ssm_forward.1} parent=11 // pred_check
          %p687 = pneg %p84
        $region18: #{motion_ssm_forward.1} parent=11 // pred_check_branch
          %689 = sbr.rel (%p687) target = $region20
        $region19: #{motion_ssm_forward.1} parent=11 // pred_region
          _
        $region20: #{motion_ssm_forward.1} parent=11 // pred_fallthru
          _
        // Predicated region
        $region21: #{motion_ssm_forward.1} parent=11 // pred_check
          %p690 = pneg %p105
        $region22: #{motion_ssm_forward.1} parent=11 // pred_check_branch
          %692 = sbr.rel (%p690) target = $region24
        $region23: #{motion_ssm_forward.1} parent=11 // pred_region
          %s694 = ssub.s32 256, 256
          %695 = vsyncadd [#allocation8], %s694
          %s697 = sshll.u32 [#allocation7], 4
          %s698 = int_to_ptr.vmem [resolvable:$true] %s697
          %700 = dma.hbm_to_vmem [thread:$0]  %s2, 256, %s698, [#allocation8]
        $region24: #{motion_ssm_forward.1} parent=11 // pred_fallthru
          _
        // Predicated region
        $region25: #{motion_ssm_forward.1} parent=11 // pred_check
          %p701 = pneg %p126
        $region26: #{motion_ssm_forward.1} parent=11 // pred_check_branch
          %703 = sbr.rel (%p701) target = $region28
        $region27: #{motion_ssm_forward.1} parent=11 // pred_region
          %s705 = ssub.s32 32, 32
          %706 = vsyncadd [#allocation8], %s705
          %s708 = sshll.u32 [#allocation9], 4
          %s709 = int_to_ptr.vmem [resolvable:$true] %s708
          %711 = dma.hbm_to_vmem [thread:$0]  %s3, 32, %s709, [#allocation8]
        $region28: #{motion_ssm_forward.1} parent=11 // pred_fallthru
          _
        // Predicated region
        $region29: #{motion_ssm_forward.1} parent=11 // pred_check
          %p712 = pneg %p147
        $region30: #{motion_ssm_forward.1} parent=11 // pred_check_branch
          %714 = sbr.rel (%p712) target = $region32
        $region31: #{motion_ssm_forward.1} parent=11 // pred_region
          %s716 = ssub.s32 32, 32
          %717 = vsyncadd [#allocation11], %s716
          %s719 = sshll.u32 [#allocation10], 4
          %s720 = int_to_ptr.vmem [resolvable:$true] %s719
          %722 = dma.hbm_to_vmem [thread:$0]  %s4, 32, %s720, [#allocation11]
        $region32: #{motion_ssm_forward.1} parent=11 // pred_fallthru
          _
        // Predicated region
        $region33: #{motion_ssm_forward.1} parent=11 // pred_check
          %p723 = pneg %p428
        $region34: #{motion_ssm_forward.1} parent=11 // pred_check_branch
          %725 = sbr.rel (%p723) target = $region36
        $region35: #{motion_ssm_forward.1} parent=11 // pred_region
          %s727 = ssub.s32 8192, 8192
          %728 = vsyncadd [#allocation8], %s727
          %s729 = sshll.u32 [#allocation22], 4
          %s730 = int_to_ptr.vmem [resolvable:$true] %s729
          %735 = dma.hbm_to_vmem [thread:$0]  %s15, 8192, %s730, [#allocation8], 256, 256, 16
        $region36: #{motion_ssm_forward.1} parent=11 // pred_fallthru
          _
        // Predicated region
        $region37: #{motion_ssm_forward.1} parent=11 // pred_check
          %p736 = pneg %p449
        $region38: #{motion_ssm_forward.1} parent=11 // pred_check_branch
          %738 = sbr.rel (%p736) target = $region40
        $region39: #{motion_ssm_forward.1} parent=11 // pred_region
          %s740 = ssub.s32 32, 32
          %741 = vsyncadd [#allocation11], %s740
          %s743 = sshll.u32 [#allocation23], 4
          %s744 = int_to_ptr.vmem [resolvable:$true] %s743
          %746 = dma.hbm_to_vmem [thread:$0]  %s16, 32, %s744, [#allocation11]
        $region40: #{motion_ssm_forward.1} parent=11 // pred_fallthru
          _
        // Predicated region
        $region41: #{motion_ssm_forward.1} parent=11 // pred_check
          %p747 = pneg %p470
        $region42: #{motion_ssm_forward.1} parent=11 // pred_check_branch
          %749 = sbr.rel (%p747) target = $region44
        $region43: #{motion_ssm_forward.1} parent=11 // pred_region
          %s751 = ssub.s32 4096, 4096
          %752 = vsyncadd [#allocation25], %s751
          %s753 = sshll.u32 [#allocation24], 4
          %s754 = int_to_ptr.vmem [resolvable:$true] %s753
          %759 = dma.hbm_to_vmem [thread:$0]  %s17, 4096, %s754, [#allocation25], 128, 128, 8
        $region44: #{motion_ssm_forward.1} parent=11 // pred_fallthru
          _
        // Predicated region
        $region45: #{motion_ssm_forward.1} parent=11 // pred_check
          %p760 = pneg %p491
        $region46: #{motion_ssm_forward.1} parent=11 // pred_check_branch
          %762 = sbr.rel (%p760) target = $region48
        $region47: #{motion_ssm_forward.1} parent=11 // pred_region
          %s764 = ssub.s32 16, 16
          %765 = vsyncadd [#allocation25], %s764
          %s767 = sshll.u32 [#allocation26], 4
          %s768 = int_to_ptr.vmem [resolvable:$true] %s767
          %770 = dma.hbm_to_vmem [thread:$0]  %s18, 16, %s768, [#allocation25]
        $region48: #{motion_ssm_forward.1} parent=11 // pred_fallthru
          _
        // Predicated region
        $region49: #{motion_ssm_forward.1} parent=11 // pred_check
          %p771 = pneg %p512
        $region50: #{motion_ssm_forward.1} parent=11 // pred_check_branch
          %773 = sbr.rel (%p771) target = $region52
        $region51: #{motion_ssm_forward.1} parent=11 // pred_region
          %s775 = ssub.s32 4096, 4096
          %776 = vsyncadd [#allocation28], %s775
          %s777 = sshll.u32 [#allocation27], 4
          %s778 = int_to_ptr.vmem [resolvable:$true] %s777
          %783 = dma.hbm_to_vmem [thread:$0]  %s19, 4096, %s778, [#allocation28], 256, 256, 16
        $region52: #{motion_ssm_forward.1} parent=11 // pred_fallthru
          _
        // Predicated region
        $region53: #{motion_ssm_forward.1} parent=11 // pred_check
          %p784 = pneg %p533
        $region54: #{motion_ssm_forward.1} parent=11 // pred_check_branch
          %786 = sbr.rel (%p784) target = $region56
        $region55: #{motion_ssm_forward.1} parent=11 // pred_region
          %s788 = ssub.s32 32, 32
          %789 = vsyncadd [#allocation28], %s788
          %s791 = sshll.u32 [#allocation29], 4
          %s792 = int_to_ptr.vmem [resolvable:$true] %s791
          %794 = dma.hbm_to_vmem [thread:$0]  %s20, 32, %s792, [#allocation28]
        $region56: #{motion_ssm_forward.1} parent=11 // pred_fallthru
          _
        // Predicated region
        $region57: #{motion_ssm_forward.1} parent=11 // pred_check
          %p795 = pneg %p554
        $region58: #{motion_ssm_forward.1} parent=11 // pred_check_branch
          %797 = sbr.rel (%p795) target = $region60
        $region59: #{motion_ssm_forward.1} parent=11 // pred_region
          %s799 = ssub.s32 8192, 8192
          %800 = vsyncadd [#allocation31], %s799
          %s801 = sshll.u32 [#allocation30], 4
          %s802 = int_to_ptr.vmem [resolvable:$true] %s801
          %807 = dma.hbm_to_vmem [thread:$0]  %s21, 8192, %s802, [#allocation31], 256, 256, 16
        $region60: #{motion_ssm_forward.1} parent=11 // pred_fallthru
          _
        // Predicated region
        $region61: #{motion_ssm_forward.1} parent=11 // pred_check
          %p808 = pneg %p575
        $region62: #{motion_ssm_forward.1} parent=11 // pred_check_branch
          %810 = sbr.rel (%p808) target = $region64
        $region63: #{motion_ssm_forward.1} parent=11 // pred_region
          %s812 = ssub.s32 32, 32
          %813 = vsyncadd [#allocation31], %s812
          %s815 = sshll.u32 [#allocation32], 4
          %s816 = int_to_ptr.vmem [resolvable:$true] %s815
          %818 = dma.hbm_to_vmem [thread:$0]  %s22, 32, %s816, [#allocation31]
        $region64: #{motion_ssm_forward.1} parent=11 // pred_fallthru
          _
        // Predicated region
        $region65: #{motion_ssm_forward.1} parent=11 // pred_check
          %p819 = pneg %p596
        $region66: #{motion_ssm_forward.1} parent=11 // pred_check_branch
          %821 = sbr.rel (%p819) target = $region68
        $region67: #{motion_ssm_forward.1} parent=11 // pred_region
          %s823 = ssub.s32 4096, 4096
          %824 = vsyncadd [#allocation34], %s823
          %s825 = sshll.u32 [#allocation33], 4
          %s826 = int_to_ptr.vmem [resolvable:$true] %s825
          %831 = dma.hbm_to_vmem [thread:$0]  %s23, 4096, %s826, [#allocation34], 128, 128, 8
        $region68: #{motion_ssm_forward.1} parent=11 // pred_fallthru
          _
        // Predicated region
        $region69: #{motion_ssm_forward.1} parent=11 // pred_check
          %p832 = pneg %p617
        $region70: #{motion_ssm_forward.1} parent=11 // pred_check_branch
          %834 = sbr.rel (%p832) target = $region72
        $region71: #{motion_ssm_forward.1} parent=11 // pred_region
          %s836 = ssub.s32 16, 16
          %837 = vsyncadd [#allocation34], %s836
          %s839 = sshll.u32 [#allocation35], 4
          %s840 = int_to_ptr.vmem [resolvable:$true] %s839
          %842 = dma.hbm_to_vmem [thread:$0]  %s24, 16, %s840, [#allocation34]
        $region72: #{motion_ssm_forward.1} parent=11 // pred_fallthru
          _
      $region12: #{motion_ssm_forward.1} parent=5 // pred_fallthru
        _
      %p843 = scmp.lt.s32.totalorder %s42, 6
      // Predicated region
      $region73: #{motion_ssm_forward.1} parent=5 // pred_check
        %p844 = pneg %p843
      $region74: #{motion_ssm_forward.1} parent=5 // pred_check_branch
        %846 = sbr.rel (%p844) target = $region76
      $region75: #{motion_ssm_forward.1} parent=5 // pred_region
        // Predicated region
        $region77: #{motion_ssm_forward.1} parent=75 // pred_check
          %p847 = pneg %p167
        $region78: #{motion_ssm_forward.1} parent=75 // pred_check_branch
          %849 = sbr.rel (%p847) target = $region80
        $region79: #{motion_ssm_forward.1} parent=75 // pred_region
          %s850 = sand.u32 %s42, 1
          %s851 = scalar_lea.sflag [#allocation5], %s850
          %s852 = sand.u32 %s157, 1
          %s853 = smul.addr %s852, 2
          %s854 = scalar_lea.vmem [#allocation12], %s853
          %s856 = ssub.s32 32, 32
          %857 = vsyncadd %s851, %s856
          %s858 = smul.addr %s42, 2
          %s859 = smul.addr %s858, 16
          %s860 = scalar_lea.hbm %s5, %s859
          %s862 = sshll.u32 %s854, 4
          %s863 = int_to_ptr.vmem [resolvable:$true] %s862
          %865 = dma.hbm_to_vmem [thread:$0]  %s860, 32, %s863, %s851
        $region80: #{motion_ssm_forward.1} parent=75 // pred_fallthru
          _
        // Predicated region
        $region81: #{motion_ssm_forward.1} parent=75 // pred_check
          %p866 = pneg %p193
        $region82: #{motion_ssm_forward.1} parent=75 // pred_check_branch
          %868 = sbr.rel (%p866) target = $region84
        $region83: #{motion_ssm_forward.1} parent=75 // pred_region
          %s869 = sand.u32 %s42, 1
          %s870 = scalar_lea.sflag [#allocation5], %s869
          %s871 = sand.u32 %s183, 1
          %s872 = smul.addr %s871, 1024
          %s873 = scalar_lea.vmem [#allocation13], %s872
          %s875 = ssub.s32 16384, 16384
          %876 = vsyncadd %s870, %s875
          %s877 = smul.addr %s42, 256
          %s878 = smul.addr %s877, 64
          %s879 = scalar_lea.hbm %s6, %s878
          %s880 = sshll.u32 %s873, 4
          %s881 = int_to_ptr.vmem [resolvable:$true] %s880
          %886 = dma.hbm_to_vmem [thread:$0]  %s879, 16384, %s881, %s870, 512, 512, 32
        $region84: #{motion_ssm_forward.1} parent=75 // pred_fallthru
          _
        // Predicated region
        $region85: #{motion_ssm_forward.1} parent=75 // pred_check
          %p887 = pneg %p219
        $region86: #{motion_ssm_forward.1} parent=75 // pred_check_branch
          %889 = sbr.rel (%p887) target = $region88
        $region87: #{motion_ssm_forward.1} parent=75 // pred_region
          %s890 = sand.u32 %s42, 1
          %s891 = scalar_lea.sflag [#allocation5], %s890
          %s892 = sand.u32 %s209, 1
          %s893 = smul.addr %s892, 16
          %s894 = scalar_lea.vmem [#allocation14], %s893
          %s896 = ssub.s32 256, 256
          %897 = vsyncadd %s891, %s896
          %s898 = smul.addr %s42, 4
          %s899 = smul.addr %s898, 64
          %s900 = scalar_lea.hbm %s7, %s899
          %s902 = sshll.u32 %s894, 4
          %s903 = int_to_ptr.vmem [resolvable:$true] %s902
          %905 = dma.hbm_to_vmem [thread:$0]  %s900, 256, %s903, %s891
        $region88: #{motion_ssm_forward.1} parent=75 // pred_fallthru
          _
        // Predicated region
        $region89: #{motion_ssm_forward.1} parent=75 // pred_check
          %p906 = pneg %p245
        $region90: #{motion_ssm_forward.1} parent=75 // pred_check_branch
          %908 = sbr.rel (%p906) target = $region92
        $region91: #{motion_ssm_forward.1} parent=75 // pred_region
          %s909 = sand.u32 %s42, 1
          %s910 = scalar_lea.sflag [#allocation5], %s909
          %s911 = sand.u32 %s235, 1
          %s912 = smul.addr %s911, 4
          %s913 = scalar_lea.vmem [#allocation15], %s912
          %s915 = ssub.s32 64, 64
          %916 = vsyncadd %s910, %s915
          %s917 = smul.addr %s42, 4
          %s918 = smul.addr %s917, 16
          %s919 = scalar_lea.hbm %s8, %s918
          %s921 = sshll.u32 %s913, 4
          %s922 = int_to_ptr.vmem [resolvable:$true] %s921
          %924 = dma.hbm_to_vmem [thread:$0]  %s919, 64, %s922, %s910
        $region92: #{motion_ssm_forward.1} parent=75 // pred_fallthru
          _
        // Predicated region
        $region93: #{motion_ssm_forward.1} parent=75 // pred_check
          %p925 = pneg %p271
        $region94: #{motion_ssm_forward.1} parent=75 // pred_check_branch
          %927 = sbr.rel (%p925) target = $region96
        $region95: #{motion_ssm_forward.1} parent=75 // pred_region
          %s928 = sand.u32 %s42, 1
          %s929 = scalar_lea.sflag [#allocation5], %s928
          %s930 = sand.u32 %s261, 1
          %s931 = smul.addr %s930, 256
          %s932 = scalar_lea.vmem [#allocation16], %s931
          %s934 = ssub.s32 4096, 4096
          %935 = vsyncadd %s929, %s934
          %s936 = smul.addr %s42, 64
          %s937 = smul.addr %s936, 64
          %s938 = scalar_lea.hbm %s9, %s937
          %s939 = sshll.u32 %s932, 4
          %s940 = int_to_ptr.vmem [resolvable:$true] %s939
          %945 = dma.hbm_to_vmem [thread:$0]  %s938, 4096, %s940, %s929, 64, 64, 4
        $region96: #{motion_ssm_forward.1} parent=75 // pred_fallthru
          _
        // Predicated region
        $region97: #{motion_ssm_forward.1} parent=75 // pred_check
          %p946 = pneg %p297
        $region98: #{motion_ssm_forward.1} parent=75 // pred_check_branch
          %948 = sbr.rel (%p946) target = $region100
        $region99: #{motion_ssm_forward.1} parent=75 // pred_region
          %s949 = sand.u32 %s42, 1
          %s950 = scalar_lea.sflag [#allocation5], %s949
          %s951 = sand.u32 %s287, 1
          %s952 = smul.addr %s951, 32
          %s953 = scalar_lea.vmem [#allocation17], %s952
          %s955 = ssub.s32 512, 512
          %956 = vsyncadd %s950, %s955
          %s957 = smul.addr %s42, 8
          %s958 = smul.addr %s957, 64
          %s959 = scalar_lea.hbm %s10, %s958
          %s960 = sshll.u32 %s953, 4
          %s961 = int_to_ptr.vmem [resolvable:$true] %s960
          %966 = dma.hbm_to_vmem [thread:$0]  %s959, 512, %s961, %s950, 256, 256, 16
        $region100: #{motion_ssm_forward.1} parent=75 // pred_fallthru
          _
        // Predicated region
        $region101: #{motion_ssm_forward.1} parent=75 // pred_check
          %p967 = pneg %p323
        $region102: #{motion_ssm_forward.1} parent=75 // pred_check_branch
          %969 = sbr.rel (%p967) target = $region104
        $region103: #{motion_ssm_forward.1} parent=75 // pred_region
          %s970 = sand.u32 %s42, 1
          %s971 = scalar_lea.sflag [#allocation5], %s970
          %s972 = sand.u32 %s313, 1
          %s973 = smul.addr %s972, 4
          %s974 = scalar_lea.vmem [#allocation18], %s973
          %s976 = ssub.s32 64, 64
          %977 = vsyncadd %s971, %s976
          %s978 = smul.addr %s42, 4
          %s979 = smul.addr %s978, 16
          %s980 = scalar_lea.hbm %s11, %s979
          %s982 = sshll.u32 %s974, 4
          %s983 = int_to_ptr.vmem [resolvable:$true] %s982
          %985 = dma.hbm_to_vmem [thread:$0]  %s980, 64, %s983, %s971
        $region104: #{motion_ssm_forward.1} parent=75 // pred_fallthru
          _
        // Predicated region
        $region105: #{motion_ssm_forward.1} parent=75 // pred_check
          %p986 = pneg %p349
        $region106: #{motion_ssm_forward.1} parent=75 // pred_check_branch
          %988 = sbr.rel (%p986) target = $region108
        $region107: #{motion_ssm_forward.1} parent=75 // pred_region
          %s989 = sand.u32 %s42, 1
          %s990 = scalar_lea.sflag [#allocation5], %s989
          %s991 = sand.u32 %s339, 1
          %s992 = smul.addr %s991, 64
          %s993 = scalar_lea.vmem [#allocation19], %s992
          %s995 = ssub.s32 1024, 1024
          %996 = vsyncadd %s990, %s995
          %s997 = smul.addr %s42, 8
          %s998 = smul.addr %s997, 128
          %s999 = scalar_lea.hbm %s12, %s998
          %s1000 = sshll.u32 %s993, 4
          %s1001 = int_to_ptr.vmem [resolvable:$true] %s1000
          %1006 = dma.hbm_to_vmem [thread:$0]  %s999, 1024, %s1001, %s990, 512, 512, 32
        $region108: #{motion_ssm_forward.1} parent=75 // pred_fallthru
          _
        // Predicated region
        $region109: #{motion_ssm_forward.1} parent=75 // pred_check
          %p1007 = pneg %p375
        $region110: #{motion_ssm_forward.1} parent=75 // pred_check_branch
          %1009 = sbr.rel (%p1007) target = $region112
        $region111: #{motion_ssm_forward.1} parent=75 // pred_region
          %s1010 = sand.u32 %s42, 1
          %s1011 = scalar_lea.sflag [#allocation5], %s1010
          %s1012 = sand.u32 %s365, 1
          %s1013 = smul.addr %s1012, 4
          %s1014 = scalar_lea.vmem [#allocation20], %s1013
          %s1016 = ssub.s32 64, 64
          %1017 = vsyncadd %s1011, %s1016
          %s1018 = smul.addr %s42, 4
          %s1019 = smul.addr %s1018, 16
          %s1020 = scalar_lea.hbm %s13, %s1019
          %s1022 = sshll.u32 %s1014, 4
          %s1023 = int_to_ptr.vmem [resolvable:$true] %s1022
          %1025 = dma.hbm_to_vmem [thread:$0]  %s1020, 64, %s1023, %s1011
        $region112: #{motion_ssm_forward.1} parent=75 // pred_fallthru
          _
        // Predicated region
        $region113: #{motion_ssm_forward.1} parent=75 // pred_check
          %p1026 = pneg %p401
        $region114: #{motion_ssm_forward.1} parent=75 // pred_check_branch
          %1028 = sbr.rel (%p1026) target = $region116
        $region115: #{motion_ssm_forward.1} parent=75 // pred_region
          %s1029 = sand.u32 %s42, 1
          %s1030 = scalar_lea.sflag [#allocation5], %s1029
          %s1031 = sand.u32 %s391, 1
          %s1032 = smul.addr %s1031, 512
          %s1033 = scalar_lea.vmem [#allocation21], %s1032
          %s1035 = ssub.s32 8192, 8192
          %1036 = vsyncadd %s1030, %s1035
          %s1037 = smul.addr %s42, 128
          %s1038 = smul.addr %s1037, 64
          %s1039 = scalar_lea.hbm %s14, %s1038
          %s1040 = sshll.u32 %s1033, 4
          %s1041 = int_to_ptr.vmem [resolvable:$true] %s1040
          %1046 = dma.hbm_to_vmem [thread:$0]  %s1039, 8192, %s1041, %s1030, 128, 128, 8
        $region116: #{motion_ssm_forward.1} parent=75 // pred_fallthru
          _
      $region76: #{motion_ssm_forward.1} parent=5 // pred_fallthru
        _
      %p1047 = scmp.le.s32.totalorder 1, %s42
      %p1048 = scmp.lt.s32.totalorder %s42, 7
      %p1049 = pnand %p1047, %p1048
      %p1050 = pneg %p1049
      // Predicated region
      $region117: #{motion_ssm_forward.1} parent=5 // pred_check
        _
      $region118: #{motion_ssm_forward.1} parent=5 // pred_check_branch
        %1052 = sbr.rel (%p1049) target = $region120
      $region119: #{motion_ssm_forward.1} parent=5 // pred_region
        %s1053 = ssub.s32 %s42, 1
        // Predicated region
        $region121: #{motion_ssm_forward.1} parent=119 // pred_check
          %p1054 = pneg %p63
        $region122: #{motion_ssm_forward.1} parent=119 // pred_check_branch
          %1056 = sbr.rel (%p1054) target = $region124
        $region123: #{motion_ssm_forward.1} parent=119 // pred_region
          %1057 = dma.done [#allocation5], 256
        $region124: #{motion_ssm_forward.1} parent=119 // pred_fallthru
          _
        // Predicated region
        $region125: #{motion_ssm_forward.1} parent=119 // pred_check
          %p1058 = pneg %p105
        $region126: #{motion_ssm_forward.1} parent=119 // pred_check_branch
          %1060 = sbr.rel (%p1058) target = $region128
        $region127: #{motion_ssm_forward.1} parent=119 // pred_region
          %1061 = dma.done [#allocation8], 256
        $region128: #{motion_ssm_forward.1} parent=119 // pred_fallthru
          _
        // Predicated region
        $region129: #{motion_ssm_forward.1} parent=119 // pred_check
          %p1062 = pneg %p126
        $region130: #{motion_ssm_forward.1} parent=119 // pred_check_branch
          %1064 = sbr.rel (%p1062) target = $region132
        $region131: #{motion_ssm_forward.1} parent=119 // pred_region
          %1065 = dma.done [#allocation8], 32
        $region132: #{motion_ssm_forward.1} parent=119 // pred_fallthru
          _
        // Predicated region
        $region133: #{motion_ssm_forward.1} parent=119 // pred_check
          %p1066 = pneg %p147
        $region134: #{motion_ssm_forward.1} parent=119 // pred_check_branch
          %1068 = sbr.rel (%p1066) target = $region136
        $region135: #{motion_ssm_forward.1} parent=119 // pred_region
          %1069 = dma.done [#allocation11], 32
        $region136: #{motion_ssm_forward.1} parent=119 // pred_fallthru
          _
        %s1070 = sand.u32 %s47, 1
        %s1071 = scalar_lea.sflag [#allocation5], %s1070
        %s1072 = sand.u32 %s160, 1
        %s1073 = smul.addr %s1072, 2
        %s1074 = scalar_lea.vmem [#allocation12], %s1073
        // Predicated region
        $region137: #{motion_ssm_forward.1} parent=119 // pred_check
          %p1075 = pneg %p173
        $region138: #{motion_ssm_forward.1} parent=119 // pred_check_branch
          %1077 = sbr.rel (%p1075) target = $region140
        $region139: #{motion_ssm_forward.1} parent=119 // pred_region
          %1078 = dma.done %s1071, 32
        $region140: #{motion_ssm_forward.1} parent=119 // pred_fallthru
          _
        %s1079 = sand.u32 %s47, 1
        %s1080 = scalar_lea.sflag [#allocation5], %s1079
        %s1081 = sand.u32 %s186, 1
        %s1082 = smul.addr %s1081, 1024
        %s1083 = scalar_lea.vmem [#allocation13], %s1082
        // Predicated region
        $region141: #{motion_ssm_forward.1} parent=119 // pred_check
          %p1084 = pneg %p199
        $region142: #{motion_ssm_forward.1} parent=119 // pred_check_branch
          %1086 = sbr.rel (%p1084) target = $region144
        $region143: #{motion_ssm_forward.1} parent=119 // pred_region
          %1087 = dma.done %s1080, 16384
        $region144: #{motion_ssm_forward.1} parent=119 // pred_fallthru
          _
        %s1088 = sand.u32 %s47, 1
        %s1089 = scalar_lea.sflag [#allocation5], %s1088
        %s1090 = sand.u32 %s212, 1
        %s1091 = smul.addr %s1090, 16
        %s1092 = scalar_lea.vmem [#allocation14], %s1091
        // Predicated region
        $region145: #{motion_ssm_forward.1} parent=119 // pred_check
          %p1093 = pneg %p225
        $region146: #{motion_ssm_forward.1} parent=119 // pred_check_branch
          %1095 = sbr.rel (%p1093) target = $region148
        $region147: #{motion_ssm_forward.1} parent=119 // pred_region
          %1096 = dma.done %s1089, 256
        $region148: #{motion_ssm_forward.1} parent=119 // pred_fallthru
          _
        %s1097 = sand.u32 %s47, 1
        %s1098 = scalar_lea.sflag [#allocation5], %s1097
        %s1099 = sand.u32 %s238, 1
        %s1100 = smul.addr %s1099, 4
        %s1101 = scalar_lea.vmem [#allocation15], %s1100
        // Predicated region
        $region149: #{motion_ssm_forward.1} parent=119 // pred_check
          %p1102 = pneg %p251
        $region150: #{motion_ssm_forward.1} parent=119 // pred_check_branch
          %1104 = sbr.rel (%p1102) target = $region152
        $region151: #{motion_ssm_forward.1} parent=119 // pred_region
          %1105 = dma.done %s1098, 64
        $region152: #{motion_ssm_forward.1} parent=119 // pred_fallthru
          _
        %s1106 = sand.u32 %s47, 1
        %s1107 = scalar_lea.sflag [#allocation5], %s1106
        %s1108 = sand.u32 %s264, 1
        %s1109 = smul.addr %s1108, 256
        %s1110 = scalar_lea.vmem [#allocation16], %s1109
        // Predicated region
        $region153: #{motion_ssm_forward.1} parent=119 // pred_check
          %p1111 = pneg %p277
        $region154: #{motion_ssm_forward.1} parent=119 // pred_check_branch
          %1113 = sbr.rel (%p1111) target = $region156
        $region155: #{motion_ssm_forward.1} parent=119 // pred_region
          %1114 = dma.done %s1107, 4096
        $region156: #{motion_ssm_forward.1} parent=119 // pred_fallthru
          _
        %s1115 = sand.u32 %s47, 1
        %s1116 = scalar_lea.sflag [#allocation5], %s1115
        %s1117 = sand.u32 %s290, 1
        %s1118 = smul.addr %s1117, 32
        %s1119 = scalar_lea.vmem [#allocation17], %s1118
        // Predicated region
        $region157: #{motion_ssm_forward.1} parent=119 // pred_check
          %p1120 = pneg %p303
        $region158: #{motion_ssm_forward.1} parent=119 // pred_check_branch
          %1122 = sbr.rel (%p1120) target = $region160
        $region159: #{motion_ssm_forward.1} parent=119 // pred_region
          %1123 = dma.done %s1116, 512
        $region160: #{motion_ssm_forward.1} parent=119 // pred_fallthru
          _
        %s1124 = sand.u32 %s47, 1
        %s1125 = scalar_lea.sflag [#allocation5], %s1124
        %s1126 = sand.u32 %s316, 1
        %s1127 = smul.addr %s1126, 4
        %s1128 = scalar_lea.vmem [#allocation18], %s1127
        // Predicated region
        $region161: #{motion_ssm_forward.1} parent=119 // pred_check
          %p1129 = pneg %p329
        $region162: #{motion_ssm_forward.1} parent=119 // pred_check_branch
          %1131 = sbr.rel (%p1129) target = $region164
        $region163: #{motion_ssm_forward.1} parent=119 // pred_region
          %1132 = dma.done %s1125, 64
        $region164: #{motion_ssm_forward.1} parent=119 // pred_fallthru
          _
        %s1133 = sand.u32 %s47, 1
        %s1134 = scalar_lea.sflag [#allocation5], %s1133
        %s1135 = sand.u32 %s342, 1
        %s1136 = smul.addr %s1135, 64
        %s1137 = scalar_lea.vmem [#allocation19], %s1136
        // Predicated region
        $region165: #{motion_ssm_forward.1} parent=119 // pred_check
          %p1138 = pneg %p355
        $region166: #{motion_ssm_forward.1} parent=119 // pred_check_branch
          %1140 = sbr.rel (%p1138) target = $region168
        $region167: #{motion_ssm_forward.1} parent=119 // pred_region
          %1141 = dma.done %s1134, 1024
        $region168: #{motion_ssm_forward.1} parent=119 // pred_fallthru
          _
        %s1142 = sand.u32 %s47, 1
        %s1143 = scalar_lea.sflag [#allocation5], %s1142
        %s1144 = sand.u32 %s368, 1
        %s1145 = smul.addr %s1144, 4
        %s1146 = scalar_lea.vmem [#allocation20], %s1145
        // Predicated region
        $region169: #{motion_ssm_forward.1} parent=119 // pred_check
          %p1147 = pneg %p381
        $region170: #{motion_ssm_forward.1} parent=119 // pred_check_branch
          %1149 = sbr.rel (%p1147) target = $region172
        $region171: #{motion_ssm_forward.1} parent=119 // pred_region
          %1150 = dma.done %s1143, 64
        $region172: #{motion_ssm_forward.1} parent=119 // pred_fallthru
          _
        %s1151 = sand.u32 %s47, 1
        %s1152 = scalar_lea.sflag [#allocation5], %s1151
        %s1153 = sand.u32 %s394, 1
        %s1154 = smul.addr %s1153, 512
        %s1155 = scalar_lea.vmem [#allocation21], %s1154
        // Predicated region
        $region173: #{motion_ssm_forward.1} parent=119 // pred_check
          %p1156 = pneg %p407
        $region174: #{motion_ssm_forward.1} parent=119 // pred_check_branch
          %1158 = sbr.rel (%p1156) target = $region176
        $region175: #{motion_ssm_forward.1} parent=119 // pred_region
          %1159 = dma.done %s1152, 8192
        $region176: #{motion_ssm_forward.1} parent=119 // pred_fallthru
          _
        // Predicated region
        $region177: #{motion_ssm_forward.1} parent=119 // pred_check
          %p1160 = pneg %p428
        $region178: #{motion_ssm_forward.1} parent=119 // pred_check_branch
          %1162 = sbr.rel (%p1160) target = $region180
        $region179: #{motion_ssm_forward.1} parent=119 // pred_region
          %1163 = dma.done [#allocation8], 8192
        $region180: #{motion_ssm_forward.1} parent=119 // pred_fallthru
          _
        // Predicated region
        $region181: #{motion_ssm_forward.1} parent=119 // pred_check
          %p1164 = pneg %p449
        $region182: #{motion_ssm_forward.1} parent=119 // pred_check_branch
          %1166 = sbr.rel (%p1164) target = $region184
        $region183: #{motion_ssm_forward.1} parent=119 // pred_region
          %1167 = dma.done [#allocation11], 32
        $region184: #{motion_ssm_forward.1} parent=119 // pred_fallthru
          _
        // Predicated region
        $region185: #{motion_ssm_forward.1} parent=119 // pred_check
          %p1168 = pneg %p470
        $region186: #{motion_ssm_forward.1} parent=119 // pred_check_branch
          %1170 = sbr.rel (%p1168) target = $region188
        $region187: #{motion_ssm_forward.1} parent=119 // pred_region
          %1171 = dma.done [#allocation25], 4096
        $region188: #{motion_ssm_forward.1} parent=119 // pred_fallthru
          _
        // Predicated region
        $region189: #{motion_ssm_forward.1} parent=119 // pred_check
          %p1172 = pneg %p491
        $region190: #{motion_ssm_forward.1} parent=119 // pred_check_branch
          %1174 = sbr.rel (%p1172) target = $region192
        $region191: #{motion_ssm_forward.1} parent=119 // pred_region
          %1175 = dma.done [#allocation25], 16
        $region192: #{motion_ssm_forward.1} parent=119 // pred_fallthru
          _
        // Predicated region
        $region193: #{motion_ssm_forward.1} parent=119 // pred_check
          %p1176 = pneg %p512
        $region194: #{motion_ssm_forward.1} parent=119 // pred_check_branch
          %1178 = sbr.rel (%p1176) target = $region196
        $region195: #{motion_ssm_forward.1} parent=119 // pred_region
          %1179 = dma.done [#allocation28], 4096
        $region196: #{motion_ssm_forward.1} parent=119 // pred_fallthru
          _
        // Predicated region
        $region197: #{motion_ssm_forward.1} parent=119 // pred_check
          %p1180 = pneg %p533
        $region198: #{motion_ssm_forward.1} parent=119 // pred_check_branch
          %1182 = sbr.rel (%p1180) target = $region200
        $region199: #{motion_ssm_forward.1} parent=119 // pred_region
          %1183 = dma.done [#allocation28], 32
        $region200: #{motion_ssm_forward.1} parent=119 // pred_fallthru
          _
        // Predicated region
        $region201: #{motion_ssm_forward.1} parent=119 // pred_check
          %p1184 = pneg %p554
        $region202: #{motion_ssm_forward.1} parent=119 // pred_check_branch
          %1186 = sbr.rel (%p1184) target = $region204
        $region203: #{motion_ssm_forward.1} parent=119 // pred_region
          %1187 = dma.done [#allocation31], 8192
        $region204: #{motion_ssm_forward.1} parent=119 // pred_fallthru
          _
        // Predicated region
        $region205: #{motion_ssm_forward.1} parent=119 // pred_check
          %p1188 = pneg %p575
        $region206: #{motion_ssm_forward.1} parent=119 // pred_check_branch
          %1190 = sbr.rel (%p1188) target = $region208
        $region207: #{motion_ssm_forward.1} parent=119 // pred_region
          %1191 = dma.done [#allocation31], 32
        $region208: #{motion_ssm_forward.1} parent=119 // pred_fallthru
          _
        // Predicated region
        $region209: #{motion_ssm_forward.1} parent=119 // pred_check
          %p1192 = pneg %p596
        $region210: #{motion_ssm_forward.1} parent=119 // pred_check_branch
          %1194 = sbr.rel (%p1192) target = $region212
        $region211: #{motion_ssm_forward.1} parent=119 // pred_region
          %1195 = dma.done [#allocation34], 4096
        $region212: #{motion_ssm_forward.1} parent=119 // pred_fallthru
          _
        // Predicated region
        $region213: #{motion_ssm_forward.1} parent=119 // pred_check
          %p1196 = pneg %p617
        $region214: #{motion_ssm_forward.1} parent=119 // pred_check_branch
          %1198 = sbr.rel (%p1196) target = $region216
        $region215: #{motion_ssm_forward.1} parent=119 // pred_region
          %1199 = dma.done [#allocation34], 16
        $region216: #{motion_ssm_forward.1} parent=119 // pred_fallthru
          _
        %p1200 = pneg %p63
        %p1201 = pneg %p60
        %p1202 = pneg %p84
        %p1203 = pneg %p81
        %p1204 = pneg %p105
        %p1205 = pneg %p102
        %p1206 = pneg %p126
        %p1207 = pneg %p123
        %p1208 = pneg %p147
        %p1209 = pneg %p144
        %s1210 = sand.u32 %s47, 1
        %s1211 = scalar_lea.sflag [#allocation5], %s1210
        %s1212 = sand.u32 %s160, 1
        %s1213 = smul.addr %s1212, 2
        %s1214 = scalar_lea.vmem [#allocation12], %s1213
        %p1215 = pneg %p173
        %p1216 = pneg %p170
        %s1217 = sand.u32 %s47, 1
        %s1218 = scalar_lea.sflag [#allocation5], %s1217
        %s1219 = sand.u32 %s186, 1
        %s1220 = smul.addr %s1219, 1024
        %s1221 = scalar_lea.vmem [#allocation13], %s1220
        %p1222 = pneg %p199
        %p1223 = pneg %p196
        %s1224 = sand.u32 %s47, 1
        %s1225 = scalar_lea.sflag [#allocation5], %s1224
        %s1226 = sand.u32 %s212, 1
        %s1227 = smul.addr %s1226, 16
        %s1228 = scalar_lea.vmem [#allocation14], %s1227
        %p1229 = pneg %p225
        %p1230 = pneg %p222
        %s1231 = sand.u32 %s47, 1
        %s1232 = scalar_lea.sflag [#allocation5], %s1231
        %s1233 = sand.u32 %s238, 1
        %s1234 = smul.addr %s1233, 4
        %s1235 = scalar_lea.vmem [#allocation15], %s1234
        %p1236 = pneg %p251
        %p1237 = pneg %p248
        %s1238 = sand.u32 %s47, 1
        %s1239 = scalar_lea.sflag [#allocation5], %s1238
        %s1240 = sand.u32 %s264, 1
        %s1241 = smul.addr %s1240, 256
        %s1242 = scalar_lea.vmem [#allocation16], %s1241
        %p1243 = pneg %p277
        %p1244 = pneg %p274
        %s1245 = sand.u32 %s47, 1
        %s1246 = scalar_lea.sflag [#allocation5], %s1245
        %s1247 = sand.u32 %s290, 1
        %s1248 = smul.addr %s1247, 32
        %s1249 = scalar_lea.vmem [#allocation17], %s1248
        %p1250 = pneg %p303
        %p1251 = pneg %p300
        %s1252 = sand.u32 %s47, 1
        %s1253 = scalar_lea.sflag [#allocation5], %s1252
        %s1254 = sand.u32 %s316, 1
        %s1255 = smul.addr %s1254, 4
        %s1256 = scalar_lea.vmem [#allocation18], %s1255
        %p1257 = pneg %p329
        %p1258 = pneg %p326
        %s1259 = sand.u32 %s47, 1
        %s1260 = scalar_lea.sflag [#allocation5], %s1259
        %s1261 = sand.u32 %s342, 1
        %s1262 = smul.addr %s1261, 64
        %s1263 = scalar_lea.vmem [#allocation19], %s1262
        %p1264 = pneg %p355
        %p1265 = pneg %p352
        %s1266 = sand.u32 %s47, 1
        %s1267 = scalar_lea.sflag [#allocation5], %s1266
        %s1268 = sand.u32 %s368, 1
        %s1269 = smul.addr %s1268, 4
        %s1270 = scalar_lea.vmem [#allocation20], %s1269
        %p1271 = pneg %p381
        %p1272 = pneg %p378
        %s1273 = sand.u32 %s47, 1
        %s1274 = scalar_lea.sflag [#allocation5], %s1273
        %s1275 = sand.u32 %s394, 1
        %s1276 = smul.addr %s1275, 512
        %s1277 = scalar_lea.vmem [#allocation21], %s1276
        %p1278 = pneg %p407
        %p1279 = pneg %p404
        %p1280 = pneg %p428
        %p1281 = pneg %p425
        %p1282 = pneg %p449
        %p1283 = pneg %p446
        %p1284 = pneg %p470
        %p1285 = pneg %p467
        %p1286 = pneg %p491
        %p1287 = pneg %p488
        %p1288 = pneg %p512
        %p1289 = pneg %p509
        %p1290 = pneg %p533
        %p1291 = pneg %p530
        %p1292 = pneg %p554
        %p1293 = pneg %p551
        %p1294 = pneg %p575
        %p1295 = pneg %p572
        %p1296 = pneg %p596
        %p1297 = pneg %p593
        %p1298 = pneg %p617
        %p1299 = pneg %p614
        %p1300 = pneg %p638
        %p1301 = pneg %p635
        %p1302 = pneg %p659
        %p1303 = pneg %p656
        %p1305 = scmp.eq.s32.totalorder %s47, 0
        // Predicated region
        $region217: #{motion_ssm_forward.1} parent=119 // pred_check
          %p1306 = pneg %p1305
        $region218: #{motion_ssm_forward.1} parent=119 // pred_check_branch
          %1308 = sbr.rel (%p1306) target = $region220
        $region219: #{motion_ssm_forward.1} parent=119 // pred_region
          %v1309 = vld [vmem:[#allocation4] sm:$0xff]
          %v1310 = vld [vmem:[#allocation4 + $0x8] sm:$0xff]
          %v1311 = vld [vmem:[#allocation7] sm:$0xff]
          %v1312 = vld [vmem:[#allocation7 + $0x8] sm:$0xff]
          %v1313 = vld [vmem:[#allocation9] sm:$0x3]
          %v1315 = vlaneseq
          %v1316 = vshrl.u32 %v1315, 7
          %v1317 = vsub.s32 0, %v1316
          %v1318 = vrot.slane %v1313, %v1317
          %v1319 = vlaneseq
          %v1320 = vshrl.u32 %v1319, 7
          %v1321 = vsub.s32 1, %v1320
          %v1322 = vrot.slane %v1313, %v1321
          %vm1325 = vcmask 64512
          %v1327 = vsel %vm1325, %v1309, 0
          %v1330 = vsel %vm1325, %v1310, 0
          %1332 = vmatprep.subr.mxu0 0.0
          %1333 = vmatpush1.msra.mxu0 0.0
          %1334 = vmatprep.subr.mxu0 0.0
          %1335 = vmatpush1.msra.mxu0 0.0
          %1336 = vmatprep.subr.mxu0 0.0
          %1337 = vmatpush1.msra.mxu0 0.0
          %1338 = vmatprep.subr.mxu0 0.0
          %1339 = vmatpush1.msra.mxu0 0.0
          %1340 = vmatprep.subr.mxu0 0.0
          %1341 = vmatpush1.msra.mxu0 0.0
          %1342 = vmatprep.subr.mxu0 0.0
          %1343 = vmatpush1.msra.mxu0 0.0
          %1344 = vmatprep.subr.mxu0 0.0
          %1345 = vmatpush1.msra.mxu0 0.0
          %1346 = vmatprep.subr.mxu0 0.0
          %1347 = vmatpush1.msra.mxu0 0.0
          %1348 = vmatprep.subr.mxu0 0.0
          %1349 = vmatpush1.msra.mxu0 0.0
          %1350 = vmatprep.subr.mxu0 0.0
          %1351 = vmatpush1.msra.mxu0 0.0
          %1352 = vmatprep.subr.mxu0 0.0
          %1353 = vmatpush1.msra.mxu0 0.0
          %1354 = vmatprep.subr.mxu0 0.0
          %1355 = vmatpush1.msra.mxu0 0.0
          %1356 = vmatprep.subr.mxu0 0.0
          %1357 = vmatpush1.msra.mxu0 0.0
          %1358 = vmatprep.subr.mxu0 0.0
          %1359 = vmatpush1.msra.mxu0 0.0
          %1360 = vmatprep.subr.mxu0 0.0
          %1361 = vmatpush1.msra.mxu0 0.0
          %1362 = vmatprep.subr.mxu0 %v1312
          %1363 = vmatpush1.msra.mxu0 %v1311
          %1364 = vmatprep.subr.mxu0 0.0
          %1365 = vmatpush2.msra.mxu0 0.0
          %1366 = vmatprep.subr.mxu0 0.0
          %1367 = vmatpush2.msra.mxu0 0.0
          %1368 = vmatprep.subr.mxu0 0.0
          %1369 = vmatpush2.msra.mxu0 0.0
          %1370 = vmatprep.subr.mxu0 0.0
          %1371 = vmatpush2.msra.mxu0 0.0
          %1372 = vmatprep.subr.mxu0 0.0
          %1373 = vmatpush2.msra.mxu0 0.0
          %1374 = vmatprep.subr.mxu0 0.0
          %1375 = vmatpush2.msra.mxu0 0.0
          %1376 = vmatprep.subr.mxu0 0.0
          %1377 = vmatpush2.msra.mxu0 0.0
          %1378 = vmatprep.subr.mxu0 0.0
          %1379 = vmatpush2.msra.mxu0 0.0
          %1380 = vmatprep.subr.mxu0 0.0
          %1381 = vmatpush2.msra.mxu0 0.0
          %1382 = vmatprep.subr.mxu0 0.0
          %1383 = vmatpush2.msra.mxu0 0.0
          %1384 = vmatprep.subr.mxu0 0.0
          %1385 = vmatpush2.msra.mxu0 0.0
          %1386 = vmatprep.subr.mxu0 0.0
          %1387 = vmatpush2.msra.mxu0 0.0
          %1388 = vmatprep.subr.mxu0 0.0
          %1389 = vmatpush2.msra.mxu0 0.0
          %1390 = vmatprep.subr.mxu0 0.0
          %1391 = vmatpush2.msra.mxu0 0.0
          %1392 = vmatprep.subr.mxu0 0.0
          %1393 = vmatpush2.msra.mxu0 0.0
          %1394 = vmatprep.subr.mxu0 0.0
          %1395 = vmatpush2.msra.mxu0 0.0
          %1396 = vmatprep.mubr.f32.mxu0 0.0
          %1397 = vmatmul.mubr.f32.gmra.mxu0 %v1327
          %v1398 = vpop.f32.mrf.mxu0
          %v1399 = vadd.f32 %v1318, %v1398
          %v1400 = vpop.f32.mrf.mxu0
          %v1401 = vadd.f32 %v1322, %v1400
          %1402 = vmatprep.mubr.f32.mxu0 0.0
          %1403 = vmatmul.mubr.f32.gmra.mxu0 %v1330
          %v1404 = vpop.f32.mrf.mxu0
          %v1405 = vadd.f32 %v1318, %v1404
          %v1406 = vpop.f32.mrf.mxu0
          %v1407 = vadd.f32 %v1322, %v1406
          %1408 = vdwg.mxu0
          %1409 = vst [vmem:[#allocation2] sm:$0xff] %v1399
          %1410 = vst [vmem:[#allocation2 + $0x8] sm:$0xff] %v1401
          %1411 = vst [vmem:[#allocation2 + $0x10] sm:$0xff] %v1405
          %1412 = vst [vmem:[#allocation2 + $0x18] sm:$0xff] %v1407
        $region220: #{motion_ssm_forward.1} parent=119 // pred_fallthru
          _
        %v1413 = vld [vmem:[#allocation2] sm:$0xff]
        %v1414 = vld [vmem:[#allocation2 + $0x8] sm:$0xff]
        %v1415 = vld [vmem:[#allocation2 + $0x10] sm:$0xff]
        %v1416 = vld [vmem:[#allocation2 + $0x18] sm:$0xff]
        %v1417 = vld [vmem:[%s1074] sm:$0x3]
        %v1418 = vmul.f32 %v1413, %v1413
        %v1419 = vmul.f32 %v1414, %v1414
        %v1420 = vmul.f32 %v1415, %v1415
        %v1421 = vmul.f32 %v1416, %v1416
        %v1422 = vadd.f32 %v1418, %v1419
        %1423 = vadd.xlane.f32.xlu0 %v1422
        %v1424 = vpop.xlane.xlu0 %1423
        %v1425 = vadd.f32 %v1420, %v1421
        %1426 = vadd.xlane.f32.xlu0 %v1425
        %v1427 = vpop.xlane.xlu0 %1426
        %v1428 = vrcp.pop 256.0
        %v1429 = vmul.f32 %v1424, %v1428
        %v1430 = vmul.f32 %v1427, %v1428
        %v1431 = vadd.f32 %v1429, 1e-05
        %v1432 = vadd.f32 %v1430, 1e-05
        %v1433 = vrsqrt.pop %v1431
        %v1434 = vrsqrt.pop %v1432
        %v1435 = vmul.f32 %v1413, %v1433
        %v1436 = vmul.f32 %v1414, %v1433
        %v1437 = vmul.f32 %v1415, %v1434
        %v1438 = vmul.f32 %v1416, %v1434
        %v1440 = vlaneseq
        %v1441 = vshrl.u32 %v1440, 7
        %v1442 = vsub.s32 0, %v1441
        %v1443 = vrot.slane %v1417, %v1442
        %v1444 = vlaneseq
        %v1445 = vshrl.u32 %v1444, 7
        %v1446 = vsub.s32 1, %v1445
        %v1447 = vrot.slane %v1417, %v1446
        %v1450 = vmul.f32 %v1435, %v1443
        %v1451 = vmul.f32 %v1436, %v1447
        %v1452 = vmul.f32 %v1437, %v1443
        %v1453 = vmul.f32 %v1438, %v1447
        %v1454 = vpack.c.bf16 %v1452, %v1450
        %v1455 = vpack.c.bf16 %v1453, %v1451
        %v1456 = vld [vmem:[%s1083] sm:$0xff]
        %v1457 = vld [vmem:[%s1083 + $0x8] sm:$0xff]
        %v1458 = vld [vmem:[%s1083 + $0x10] sm:$0xff]
        %v1459 = vld [vmem:[%s1083 + $0x18] sm:$0xff]
        %v1460 = vld [vmem:[%s1083 + $0x20] sm:$0xff]
        %v1461 = vld [vmem:[%s1083 + $0x28] sm:$0xff]
        %v1462 = vld [vmem:[%s1083 + $0x30] sm:$0xff]
        %v1463 = vld [vmem:[%s1083 + $0x38] sm:$0xff]
        %v1464 = vld [vmem:[%s1083 + $0x40] sm:$0xff]
        %v1465 = vld [vmem:[%s1083 + $0x48] sm:$0xff]
        %v1466 = vld [vmem:[%s1083 + $0x50] sm:$0xff]
        %v1467 = vld [vmem:[%s1083 + $0x58] sm:$0xff]
        %v1468 = vld [vmem:[%s1083 + $0x60] sm:$0xff]
        %v1469 = vld [vmem:[%s1083 + $0x68] sm:$0xff]
        %v1470 = vld [vmem:[%s1083 + $0x70] sm:$0xff]
        %v1471 = vld [vmem:[%s1083 + $0x78] sm:$0xff]
        %v1472 = vld [vmem:[%s1083 + $0x80] sm:$0xff]
        %v1473 = vld [vmem:[%s1083 + $0x88] sm:$0xff]
        %v1474 = vld [vmem:[%s1083 + $0x90] sm:$0xff]
        %v1475 = vld [vmem:[%s1083 + $0x98] sm:$0xff]
        %v1476 = vld [vmem:[%s1083 + $0xa0] sm:$0xff]
        %v1477 = vld [vmem:[%s1083 + $0xa8] sm:$0xff]
        %v1478 = vld [vmem:[%s1083 + $0xb0] sm:$0xff]
        %v1479 = vld [vmem:[%s1083 + $0xb8] sm:$0xff]
        %v1480 = vld [vmem:[%s1083 + $0xc0] sm:$0xff]
        %v1481 = vld [vmem:[%s1083 + $0xc8] sm:$0xff]
        %v1482 = vld [vmem:[%s1083 + $0xd0] sm:$0xff]
        %v1483 = vld [vmem:[%s1083 + $0xd8] sm:$0xff]
        %v1484 = vld [vmem:[%s1083 + $0xe0] sm:$0xff]
        %v1485 = vld [vmem:[%s1083 + $0xe8] sm:$0xff]
        %v1486 = vld [vmem:[%s1083 + $0xf0] sm:$0xff]
        %v1487 = vld [vmem:[%s1083 + $0xf8] sm:$0xff]
        %v1488 = vld [vmem:[%s1083 + $0x100] sm:$0xff]
        %v1489 = vld [vmem:[%s1083 + $0x108] sm:$0xff]
        %v1490 = vld [vmem:[%s1083 + $0x110] sm:$0xff]
        %v1491 = vld [vmem:[%s1083 + $0x118] sm:$0xff]
        %v1492 = vld [vmem:[%s1083 + $0x120] sm:$0xff]
        %v1493 = vld [vmem:[%s1083 + $0x128] sm:$0xff]
        %v1494 = vld [vmem:[%s1083 + $0x130] sm:$0xff]
        %v1495 = vld [vmem:[%s1083 + $0x138] sm:$0xff]
        %v1496 = vld [vmem:[%s1083 + $0x140] sm:$0xff]
        %v1497 = vld [vmem:[%s1083 + $0x148] sm:$0xff]
        %v1498 = vld [vmem:[%s1083 + $0x150] sm:$0xff]
        %v1499 = vld [vmem:[%s1083 + $0x158] sm:$0xff]
        %v1500 = vld [vmem:[%s1083 + $0x160] sm:$0xff]
        %v1501 = vld [vmem:[%s1083 + $0x168] sm:$0xff]
        %v1502 = vld [vmem:[%s1083 + $0x170] sm:$0xff]
        %v1503 = vld [vmem:[%s1083 + $0x178] sm:$0xff]
        %v1504 = vld [vmem:[%s1083 + $0x180] sm:$0xff]
        %v1505 = vld [vmem:[%s1083 + $0x188] sm:$0xff]
        %v1506 = vld [vmem:[%s1083 + $0x190] sm:$0xff]
        %v1507 = vld [vmem:[%s1083 + $0x198] sm:$0xff]
        %v1508 = vld [vmem:[%s1083 + $0x1a0] sm:$0xff]
        %v1509 = vld [vmem:[%s1083 + $0x1a8] sm:$0xff]
        %v1510 = vld [vmem:[%s1083 + $0x1b0] sm:$0xff]
        %v1511 = vld [vmem:[%s1083 + $0x1b8] sm:$0xff]
        %v1512 = vld [vmem:[%s1083 + $0x1c0] sm:$0xff]
        %v1513 = vld [vmem:[%s1083 + $0x1c8] sm:$0xff]
        %v1514 = vld [vmem:[%s1083 + $0x1d0] sm:$0xff]
        %v1515 = vld [vmem:[%s1083 + $0x1d8] sm:$0xff]
        %v1516 = vld [vmem:[%s1083 + $0x1e0] sm:$0xff]
        %v1517 = vld [vmem:[%s1083 + $0x1e8] sm:$0xff]
        %v1518 = vld [vmem:[%s1083 + $0x1f0] sm:$0xff]
        %v1519 = vld [vmem:[%s1083 + $0x1f8] sm:$0xff]
        %v1520 = vld [vmem:[%s1083 + $0x200] sm:$0xff]
        %v1521 = vld [vmem:[%s1083 + $0x208] sm:$0xff]
        %v1522 = vld [vmem:[%s1083 + $0x210] sm:$0xff]
        %v1523 = vld [vmem:[%s1083 + $0x218] sm:$0xff]
        %v1524 = vld [vmem:[%s1083 + $0x220] sm:$0xff]
        %v1525 = vld [vmem:[%s1083 + $0x228] sm:$0xff]
        %v1526 = vld [vmem:[%s1083 + $0x230] sm:$0xff]
        %v1527 = vld [vmem:[%s1083 + $0x238] sm:$0xff]
        %v1528 = vld [vmem:[%s1083 + $0x240] sm:$0xff]
        %v1529 = vld [vmem:[%s1083 + $0x248] sm:$0xff]
        %v1530 = vld [vmem:[%s1083 + $0x250] sm:$0xff]
        %v1531 = vld [vmem:[%s1083 + $0x258] sm:$0xff]
        %v1532 = vld [vmem:[%s1083 + $0x260] sm:$0xff]
        %v1533 = vld [vmem:[%s1083 + $0x268] sm:$0xff]
        %v1534 = vld [vmem:[%s1083 + $0x270] sm:$0xff]
        %v1535 = vld [vmem:[%s1083 + $0x278] sm:$0xff]
        %v1536 = vld [vmem:[%s1083 + $0x280] sm:$0xff]
        %v1537 = vld [vmem:[%s1083 + $0x288] sm:$0xff]
        %v1538 = vld [vmem:[%s1083 + $0x290] sm:$0xff]
        %v1539 = vld [vmem:[%s1083 + $0x298] sm:$0xff]
        %v1540 = vld [vmem:[%s1083 + $0x2a0] sm:$0xff]
        %v1541 = vld [vmem:[%s1083 + $0x2a8] sm:$0xff]
        %v1542 = vld [vmem:[%s1083 + $0x2b0] sm:$0xff]
        %v1543 = vld [vmem:[%s1083 + $0x2b8] sm:$0xff]
        %v1544 = vld [vmem:[%s1083 + $0x2c0] sm:$0xff]
        %v1545 = vld [vmem:[%s1083 + $0x2c8] sm:$0xff]
        %v1546 = vld [vmem:[%s1083 + $0x2d0] sm:$0xff]
        %v1547 = vld [vmem:[%s1083 + $0x2d8] sm:$0xff]
        %v1548 = vld [vmem:[%s1083 + $0x2e0] sm:$0xff]
        %v1549 = vld [vmem:[%s1083 + $0x2e8] sm:$0xff]
        %v1550 = vld [vmem:[%s1083 + $0x2f0] sm:$0xff]
        %v1551 = vld [vmem:[%s1083 + $0x2f8] sm:$0xff]
        %v1552 = vld [vmem:[%s1083 + $0x300] sm:$0xff]
        %v1553 = vld [vmem:[%s1083 + $0x308] sm:$0xff]
        %v1554 = vld [vmem:[%s1083 + $0x310] sm:$0xff]
        %v1555 = vld [vmem:[%s1083 + $0x318] sm:$0xff]
        %v1556 = vld [vmem:[%s1083 + $0x320] sm:$0xff]
        %v1557 = vld [vmem:[%s1083 + $0x328] sm:$0xff]
        %v1558 = vld [vmem:[%s1083 + $0x330] sm:$0xff]
        %v1559 = vld [vmem:[%s1083 + $0x338] sm:$0xff]
        %v1560 = vld [vmem:[%s1083 + $0x340] sm:$0xff]
        %v1561 = vld [vmem:[%s1083 + $0x348] sm:$0xff]
        %v1562 = vld [vmem:[%s1083 + $0x350] sm:$0xff]
        %v1563 = vld [vmem:[%s1083 + $0x358] sm:$0xff]
        %v1564 = vld [vmem:[%s1083 + $0x360] sm:$0xff]
        %v1565 = vld [vmem:[%s1083 + $0x368] sm:$0xff]
        %v1566 = vld [vmem:[%s1083 + $0x370] sm:$0xff]
        %v1567 = vld [vmem:[%s1083 + $0x378] sm:$0xff]
        %v1568 = vld [vmem:[%s1083 + $0x380] sm:$0xff]
        %v1569 = vld [vmem:[%s1083 + $0x388] sm:$0xff]
        %v1570 = vld [vmem:[%s1083 + $0x390] sm:$0xff]
        %v1571 = vld [vmem:[%s1083 + $0x398] sm:$0xff]
        %v1572 = vld [vmem:[%s1083 + $0x3a0] sm:$0xff]
        %v1573 = vld [vmem:[%s1083 + $0x3a8] sm:$0xff]
        %v1574 = vld [vmem:[%s1083 + $0x3b0] sm:$0xff]
        %v1575 = vld [vmem:[%s1083 + $0x3b8] sm:$0xff]
        %v1576 = vld [vmem:[%s1083 + $0x3c0] sm:$0xff]
        %v1577 = vld [vmem:[%s1083 + $0x3c8] sm:$0xff]
        %v1578 = vld [vmem:[%s1083 + $0x3d0] sm:$0xff]
        %v1579 = vld [vmem:[%s1083 + $0x3d8] sm:$0xff]
        %v1580 = vld [vmem:[%s1083 + $0x3e0] sm:$0xff]
        %v1581 = vld [vmem:[%s1083 + $0x3e8] sm:$0xff]
        %v1582 = vld [vmem:[%s1083 + $0x3f0] sm:$0xff]
        %v1583 = vld [vmem:[%s1083 + $0x3f8] sm:$0xff]
        %v1712 = vunpack.c.l.b16 %v1456
        %v1713 = vunpack.c.h.b16 %v1456
        %v1714 = vunpack.c.l.b16 %v1457
        %v1715 = vunpack.c.h.b16 %v1457
        %v1716 = vunpack.c.l.b16 %v1458
        %v1717 = vunpack.c.h.b16 %v1458
        %v1718 = vunpack.c.l.b16 %v1459
        %v1719 = vunpack.c.h.b16 %v1459
        %v1720 = vunpack.c.l.b16 %v1460
        %v1721 = vunpack.c.h.b16 %v1460
        %v1722 = vunpack.c.l.b16 %v1461
        %v1723 = vunpack.c.h.b16 %v1461
        %v1724 = vunpack.c.l.b16 %v1462
        %v1725 = vunpack.c.h.b16 %v1462
        %v1726 = vunpack.c.l.b16 %v1463
        %v1727 = vunpack.c.h.b16 %v1463
        %v1728 = vunpack.c.l.b16 %v1464
        %v1729 = vunpack.c.h.b16 %v1464
        %v1730 = vunpack.c.l.b16 %v1465
        %v1731 = vunpack.c.h.b16 %v1465
        %v1732 = vunpack.c.l.b16 %v1466
        %v1733 = vunpack.c.h.b16 %v1466
        %v1734 = vunpack.c.l.b16 %v1467
        %v1735 = vunpack.c.h.b16 %v1467
        %v1736 = vunpack.c.l.b16 %v1468
        %v1737 = vunpack.c.h.b16 %v1468
        %v1738 = vunpack.c.l.b16 %v1469
        %v1739 = vunpack.c.h.b16 %v1469
        %v1740 = vunpack.c.l.b16 %v1470
        %v1741 = vunpack.c.h.b16 %v1470
        %v1742 = vunpack.c.l.b16 %v1471
        %v1743 = vunpack.c.h.b16 %v1471
        %v1744 = vunpack.c.l.b16 %v1472
        %v1745 = vunpack.c.h.b16 %v1472
        %v1746 = vunpack.c.l.b16 %v1473
        %v1747 = vunpack.c.h.b16 %v1473
        %v1748 = vunpack.c.l.b16 %v1474
        %v1749 = vunpack.c.h.b16 %v1474
        %v1750 = vunpack.c.l.b16 %v1475
        %v1751 = vunpack.c.h.b16 %v1475
        %v1752 = vunpack.c.l.b16 %v1476
        %v1753 = vunpack.c.h.b16 %v1476
        %v1754 = vunpack.c.l.b16 %v1477
        %v1755 = vunpack.c.h.b16 %v1477
        %v1756 = vunpack.c.l.b16 %v1478
        %v1757 = vunpack.c.h.b16 %v1478
        %v1758 = vunpack.c.l.b16 %v1479
        %v1759 = vunpack.c.h.b16 %v1479
        %v1760 = vunpack.c.l.b16 %v1480
        %v1761 = vunpack.c.h.b16 %v1480
        %v1762 = vunpack.c.l.b16 %v1481
        %v1763 = vunpack.c.h.b16 %v1481
        %v1764 = vunpack.c.l.b16 %v1482
        %v1765 = vunpack.c.h.b16 %v1482
        %v1766 = vunpack.c.l.b16 %v1483
        %v1767 = vunpack.c.h.b16 %v1483
        %v1768 = vunpack.c.l.b16 %v1484
        %v1769 = vunpack.c.h.b16 %v1484
        %v1770 = vunpack.c.l.b16 %v1485
        %v1771 = vunpack.c.h.b16 %v1485
        %v1772 = vunpack.c.l.b16 %v1486
        %v1773 = vunpack.c.h.b16 %v1486
        %v1774 = vunpack.c.l.b16 %v1487
        %v1775 = vunpack.c.h.b16 %v1487
        %v1776 = vunpack.c.l.b16 %v1488
        %v1777 = vunpack.c.h.b16 %v1488
        %v1778 = vunpack.c.l.b16 %v1489
        %v1779 = vunpack.c.h.b16 %v1489
        %v1780 = vunpack.c.l.b16 %v1490
        %v1781 = vunpack.c.h.b16 %v1490
        %v1782 = vunpack.c.l.b16 %v1491
        %v1783 = vunpack.c.h.b16 %v1491
        %v1784 = vunpack.c.l.b16 %v1492
        %v1785 = vunpack.c.h.b16 %v1492
        %v1786 = vunpack.c.l.b16 %v1493
        %v1787 = vunpack.c.h.b16 %v1493
        %v1788 = vunpack.c.l.b16 %v1494
        %v1789 = vunpack.c.h.b16 %v1494
        %v1790 = vunpack.c.l.b16 %v1495
        %v1791 = vunpack.c.h.b16 %v1495
        %v1792 = vunpack.c.l.b16 %v1496
        %v1793 = vunpack.c.h.b16 %v1496
        %v1794 = vunpack.c.l.b16 %v1497
        %v1795 = vunpack.c.h.b16 %v1497
        %v1796 = vunpack.c.l.b16 %v1498
        %v1797 = vunpack.c.h.b16 %v1498
        %v1798 = vunpack.c.l.b16 %v1499
        %v1799 = vunpack.c.h.b16 %v1499
        %v1800 = vunpack.c.l.b16 %v1500
        %v1801 = vunpack.c.h.b16 %v1500
        %v1802 = vunpack.c.l.b16 %v1501
        %v1803 = vunpack.c.h.b16 %v1501
        %v1804 = vunpack.c.l.b16 %v1502
        %v1805 = vunpack.c.h.b16 %v1502
        %v1806 = vunpack.c.l.b16 %v1503
        %v1807 = vunpack.c.h.b16 %v1503
        %v1808 = vunpack.c.l.b16 %v1504
        %v1809 = vunpack.c.h.b16 %v1504
        %v1810 = vunpack.c.l.b16 %v1505
        %v1811 = vunpack.c.h.b16 %v1505
        %v1812 = vunpack.c.l.b16 %v1506
        %v1813 = vunpack.c.h.b16 %v1506
        %v1814 = vunpack.c.l.b16 %v1507
        %v1815 = vunpack.c.h.b16 %v1507
        %v1816 = vunpack.c.l.b16 %v1508
        %v1817 = vunpack.c.h.b16 %v1508
        %v1818 = vunpack.c.l.b16 %v1509
        %v1819 = vunpack.c.h.b16 %v1509
        %v1820 = vunpack.c.l.b16 %v1510
        %v1821 = vunpack.c.h.b16 %v1510
        %v1822 = vunpack.c.l.b16 %v1511
        %v1823 = vunpack.c.h.b16 %v1511
        %v1824 = vunpack.c.l.b16 %v1512
        %v1825 = vunpack.c.h.b16 %v1512
        %v1826 = vunpack.c.l.b16 %v1513
        %v1827 = vunpack.c.h.b16 %v1513
        %v1828 = vunpack.c.l.b16 %v1514
        %v1829 = vunpack.c.h.b16 %v1514
        %v1830 = vunpack.c.l.b16 %v1515
        %v1831 = vunpack.c.h.b16 %v1515
        %v1832 = vunpack.c.l.b16 %v1516
        %v1833 = vunpack.c.h.b16 %v1516
        %v1834 = vunpack.c.l.b16 %v1517
        %v1835 = vunpack.c.h.b16 %v1517
        %v1836 = vunpack.c.l.b16 %v1518
        %v1837 = vunpack.c.h.b16 %v1518
        %v1838 = vunpack.c.l.b16 %v1519
        %v1839 = vunpack.c.h.b16 %v1519
        %v1840 = vunpack.c.l.b16 %v1520
        %v1841 = vunpack.c.h.b16 %v1520
        %v1842 = vunpack.c.l.b16 %v1521
        %v1843 = vunpack.c.h.b16 %v1521
        %v1844 = vunpack.c.l.b16 %v1522
        %v1845 = vunpack.c.h.b16 %v1522
        %v1846 = vunpack.c.l.b16 %v1523
        %v1847 = vunpack.c.h.b16 %v1523
        %v1848 = vunpack.c.l.b16 %v1524
        %v1849 = vunpack.c.h.b16 %v1524
        %v1850 = vunpack.c.l.b16 %v1525
        %v1851 = vunpack.c.h.b16 %v1525
        %v1852 = vunpack.c.l.b16 %v1526
        %v1853 = vunpack.c.h.b16 %v1526
        %v1854 = vunpack.c.l.b16 %v1527
        %v1855 = vunpack.c.h.b16 %v1527
        %v1856 = vunpack.c.l.b16 %v1528
        %v1857 = vunpack.c.h.b16 %v1528
        %v1858 = vunpack.c.l.b16 %v1529
        %v1859 = vunpack.c.h.b16 %v1529
        %v1860 = vunpack.c.l.b16 %v1530
        %v1861 = vunpack.c.h.b16 %v1530
        %v1862 = vunpack.c.l.b16 %v1531
        %v1863 = vunpack.c.h.b16 %v1531
        %v1864 = vunpack.c.l.b16 %v1532
        %v1865 = vunpack.c.h.b16 %v1532
        %v1866 = vunpack.c.l.b16 %v1533
        %v1867 = vunpack.c.h.b16 %v1533
        %v1868 = vunpack.c.l.b16 %v1534
        %v1869 = vunpack.c.h.b16 %v1534
        %v1870 = vunpack.c.l.b16 %v1535
        %v1871 = vunpack.c.h.b16 %v1535
        %v1872 = vunpack.c.l.b16 %v1536
        %v1873 = vunpack.c.h.b16 %v1536
        %v1874 = vunpack.c.l.b16 %v1537
        %v1875 = vunpack.c.h.b16 %v1537
        %v1876 = vunpack.c.l.b16 %v1538
        %v1877 = vunpack.c.h.b16 %v1538
        %v1878 = vunpack.c.l.b16 %v1539
        %v1879 = vunpack.c.h.b16 %v1539
        %v1880 = vunpack.c.l.b16 %v1540
        %v1881 = vunpack.c.h.b16 %v1540
        %v1882 = vunpack.c.l.b16 %v1541
        %v1883 = vunpack.c.h.b16 %v1541
        %v1884 = vunpack.c.l.b16 %v1542
        %v1885 = vunpack.c.h.b16 %v1542
        %v1886 = vunpack.c.l.b16 %v1543
        %v1887 = vunpack.c.h.b16 %v1543
        %v1888 = vunpack.c.l.b16 %v1544
        %v1889 = vunpack.c.h.b16 %v1544
        %v1890 = vunpack.c.l.b16 %v1545
        %v1891 = vunpack.c.h.b16 %v1545
        %v1892 = vunpack.c.l.b16 %v1546
        %v1893 = vunpack.c.h.b16 %v1546
        %v1894 = vunpack.c.l.b16 %v1547
        %v1895 = vunpack.c.h.b16 %v1547
        %v1896 = vunpack.c.l.b16 %v1548
        %v1897 = vunpack.c.h.b16 %v1548
        %v1898 = vunpack.c.l.b16 %v1549
        %v1899 = vunpack.c.h.b16 %v1549
        %v1900 = vunpack.c.l.b16 %v1550
        %v1901 = vunpack.c.h.b16 %v1550
        %v1902 = vunpack.c.l.b16 %v1551
        %v1903 = vunpack.c.h.b16 %v1551
        %v1904 = vunpack.c.l.b16 %v1552
        %v1905 = vunpack.c.h.b16 %v1552
        %v1906 = vunpack.c.l.b16 %v1553
        %v1907 = vunpack.c.h.b16 %v1553
        %v1908 = vunpack.c.l.b16 %v1554
        %v1909 = vunpack.c.h.b16 %v1554
        %v1910 = vunpack.c.l.b16 %v1555
        %v1911 = vunpack.c.h.b16 %v1555
        %v1912 = vunpack.c.l.b16 %v1556
        %v1913 = vunpack.c.h.b16 %v1556
        %v1914 = vunpack.c.l.b16 %v1557
        %v1915 = vunpack.c.h.b16 %v1557
        %v1916 = vunpack.c.l.b16 %v1558
        %v1917 = vunpack.c.h.b16 %v1558
        %v1918 = vunpack.c.l.b16 %v1559
        %v1919 = vunpack.c.h.b16 %v1559
        %v1920 = vunpack.c.l.b16 %v1560
        %v1921 = vunpack.c.h.b16 %v1560
        %v1922 = vunpack.c.l.b16 %v1561
        %v1923 = vunpack.c.h.b16 %v1561
        %v1924 = vunpack.c.l.b16 %v1562
        %v1925 = vunpack.c.h.b16 %v1562
        %v1926 = vunpack.c.l.b16 %v1563
        %v1927 = vunpack.c.h.b16 %v1563
        %v1928 = vunpack.c.l.b16 %v1564
        %v1929 = vunpack.c.h.b16 %v1564
        %v1930 = vunpack.c.l.b16 %v1565
        %v1931 = vunpack.c.h.b16 %v1565
        %v1932 = vunpack.c.l.b16 %v1566
        %v1933 = vunpack.c.h.b16 %v1566
        %v1934 = vunpack.c.l.b16 %v1567
        %v1935 = vunpack.c.h.b16 %v1567
        %v1936 = vunpack.c.l.b16 %v1568
        %v1937 = vunpack.c.h.b16 %v1568
        %v1938 = vunpack.c.l.b16 %v1569
        %v1939 = vunpack.c.h.b16 %v1569
        %v1940 = vunpack.c.l.b16 %v1570
        %v1941 = vunpack.c.h.b16 %v1570
        %v1942 = vunpack.c.l.b16 %v1571
        %v1943 = vunpack.c.h.b16 %v1571
        %v1944 = vunpack.c.l.b16 %v1572
        %v1945 = vunpack.c.h.b16 %v1572
        %v1946 = vunpack.c.l.b16 %v1573
        %v1947 = vunpack.c.h.b16 %v1573
        %v1948 = vunpack.c.l.b16 %v1574
        %v1949 = vunpack.c.h.b16 %v1574
        %v1950 = vunpack.c.l.b16 %v1575
        %v1951 = vunpack.c.h.b16 %v1575
        %v1952 = vunpack.c.l.b16 %v1576
        %v1953 = vunpack.c.h.b16 %v1576
        %v1954 = vunpack.c.l.b16 %v1577
        %v1955 = vunpack.c.h.b16 %v1577
        %v1956 = vunpack.c.l.b16 %v1578
        %v1957 = vunpack.c.h.b16 %v1578
        %v1958 = vunpack.c.l.b16 %v1579
        %v1959 = vunpack.c.h.b16 %v1579
        %v1960 = vunpack.c.l.b16 %v1580
        %v1961 = vunpack.c.h.b16 %v1580
        %v1962 = vunpack.c.l.b16 %v1581
        %v1963 = vunpack.c.h.b16 %v1581
        %v1964 = vunpack.c.l.b16 %v1582
        %v1965 = vunpack.c.h.b16 %v1582
        %v1966 = vunpack.c.l.b16 %v1583
        %v1967 = vunpack.c.h.b16 %v1583
        %v1968 = vpack.c.b16 %v1720, %v1712
        %v1969 = vpack.c.b16 %v1721, %v1713
        %v1970 = vpack.c.b16 %v1722, %v1714
        %v1971 = vpack.c.b16 %v1723, %v1715
        %v1972 = vpack.c.b16 %v1724, %v1716
        %v1973 = vpack.c.b16 %v1725, %v1717
        %v1974 = vpack.c.b16 %v1726, %v1718
        %v1975 = vpack.c.b16 %v1727, %v1719
        %v1976 = vpack.c.b16 %v1736, %v1728
        %v1977 = vpack.c.b16 %v1737, %v1729
        %v1978 = vpack.c.b16 %v1738, %v1730
        %v1979 = vpack.c.b16 %v1739, %v1731
        %v1980 = vpack.c.b16 %v1740, %v1732
        %v1981 = vpack.c.b16 %v1741, %v1733
        %v1982 = vpack.c.b16 %v1742, %v1734
        %v1983 = vpack.c.b16 %v1743, %v1735
        %v1984 = vpack.c.b16 %v1752, %v1744
        %v1985 = vpack.c.b16 %v1753, %v1745
        %v1986 = vpack.c.b16 %v1754, %v1746
        %v1987 = vpack.c.b16 %v1755, %v1747
        %v1988 = vpack.c.b16 %v1756, %v1748
        %v1989 = vpack.c.b16 %v1757, %v1749
        %v1990 = vpack.c.b16 %v1758, %v1750
        %v1991 = vpack.c.b16 %v1759, %v1751
        %v1992 = vpack.c.b16 %v1768, %v1760
        %v1993 = vpack.c.b16 %v1769, %v1761
        %v1994 = vpack.c.b16 %v1770, %v1762
        %v1995 = vpack.c.b16 %v1771, %v1763
        %v1996 = vpack.c.b16 %v1772, %v1764
        %v1997 = vpack.c.b16 %v1773, %v1765
        %v1998 = vpack.c.b16 %v1774, %v1766
        %v1999 = vpack.c.b16 %v1775, %v1767
        %v2000 = vpack.c.b16 %v1784, %v1776
        %v2001 = vpack.c.b16 %v1785, %v1777
        %v2002 = vpack.c.b16 %v1786, %v1778
        %v2003 = vpack.c.b16 %v1787, %v1779
        %v2004 = vpack.c.b16 %v1788, %v1780
        %v2005 = vpack.c.b16 %v1789, %v1781
        %v2006 = vpack.c.b16 %v1790, %v1782
        %v2007 = vpack.c.b16 %v1791, %v1783
        %v2008 = vpack.c.b16 %v1800, %v1792
        %v2009 = vpack.c.b16 %v1801, %v1793
        %v2010 = vpack.c.b16 %v1802, %v1794
        %v2011 = vpack.c.b16 %v1803, %v1795
        %v2012 = vpack.c.b16 %v1804, %v1796
        %v2013 = vpack.c.b16 %v1805, %v1797
        %v2014 = vpack.c.b16 %v1806, %v1798
        %v2015 = vpack.c.b16 %v1807, %v1799
        %v2016 = vpack.c.b16 %v1816, %v1808
        %v2017 = vpack.c.b16 %v1817, %v1809
        %v2018 = vpack.c.b16 %v1818, %v1810
        %v2019 = vpack.c.b16 %v1819, %v1811
        %v2020 = vpack.c.b16 %v1820, %v1812
        %v2021 = vpack.c.b16 %v1821, %v1813
        %v2022 = vpack.c.b16 %v1822, %v1814
        %v2023 = vpack.c.b16 %v1823, %v1815
        %v2024 = vpack.c.b16 %v1832, %v1824
        %v2025 = vpack.c.b16 %v1833, %v1825
        %v2026 = vpack.c.b16 %v1834, %v1826
        %v2027 = vpack.c.b16 %v1835, %v1827
        %v2028 = vpack.c.b16 %v1836, %v1828
        %v2029 = vpack.c.b16 %v1837, %v1829
        %v2030 = vpack.c.b16 %v1838, %v1830
        %v2031 = vpack.c.b16 %v1839, %v1831
        %v2032 = vpack.c.b16 %v1848, %v1840
        %v2033 = vpack.c.b16 %v1849, %v1841
        %v2034 = vpack.c.b16 %v1850, %v1842
        %v2035 = vpack.c.b16 %v1851, %v1843
        %v2036 = vpack.c.b16 %v1852, %v1844
        %v2037 = vpack.c.b16 %v1853, %v1845
        %v2038 = vpack.c.b16 %v1854, %v1846
        %v2039 = vpack.c.b16 %v1855, %v1847
        %v2040 = vpack.c.b16 %v1864, %v1856
        %v2041 = vpack.c.b16 %v1865, %v1857
        %v2042 = vpack.c.b16 %v1866, %v1858
        %v2043 = vpack.c.b16 %v1867, %v1859
        %v2044 = vpack.c.b16 %v1868, %v1860
        %v2045 = vpack.c.b16 %v1869, %v1861
        %v2046 = vpack.c.b16 %v1870, %v1862
        %v2047 = vpack.c.b16 %v1871, %v1863
        %v2048 = vpack.c.b16 %v1880, %v1872
        %v2049 = vpack.c.b16 %v1881, %v1873
        %v2050 = vpack.c.b16 %v1882, %v1874
        %v2051 = vpack.c.b16 %v1883, %v1875
        %v2052 = vpack.c.b16 %v1884, %v1876
        %v2053 = vpack.c.b16 %v1885, %v1877
        %v2054 = vpack.c.b16 %v1886, %v1878
        %v2055 = vpack.c.b16 %v1887, %v1879
        %v2056 = vpack.c.b16 %v1896, %v1888
        %v2057 = vpack.c.b16 %v1897, %v1889
        %v2058 = vpack.c.b16 %v1898, %v1890
        %v2059 = vpack.c.b16 %v1899, %v1891
        %v2060 = vpack.c.b16 %v1900, %v1892
        %v2061 = vpack.c.b16 %v1901, %v1893
        %v2062 = vpack.c.b16 %v1902, %v1894
        %v2063 = vpack.c.b16 %v1903, %v1895
        %v2064 = vpack.c.b16 %v1912, %v1904
        %v2065 = vpack.c.b16 %v1913, %v1905
        %v2066 = vpack.c.b16 %v1914, %v1906
        %v2067 = vpack.c.b16 %v1915, %v1907
        %v2068 = vpack.c.b16 %v1916, %v1908
        %v2069 = vpack.c.b16 %v1917, %v1909
        %v2070 = vpack.c.b16 %v1918, %v1910
        %v2071 = vpack.c.b16 %v1919, %v1911
        %v2072 = vpack.c.b16 %v1928, %v1920
        %v2073 = vpack.c.b16 %v1929, %v1921
        %v2074 = vpack.c.b16 %v1930, %v1922
        %v2075 = vpack.c.b16 %v1931, %v1923
        %v2076 = vpack.c.b16 %v1932, %v1924
        %v2077 = vpack.c.b16 %v1933, %v1925
        %v2078 = vpack.c.b16 %v1934, %v1926
        %v2079 = vpack.c.b16 %v1935, %v1927
        %v2080 = vpack.c.b16 %v1944, %v1936
        %v2081 = vpack.c.b16 %v1945, %v1937
        %v2082 = vpack.c.b16 %v1946, %v1938
        %v2083 = vpack.c.b16 %v1947, %v1939
        %v2084 = vpack.c.b16 %v1948, %v1940
        %v2085 = vpack.c.b16 %v1949, %v1941
        %v2086 = vpack.c.b16 %v1950, %v1942
        %v2087 = vpack.c.b16 %v1951, %v1943
        %v2088 = vpack.c.b16 %v1960, %v1952
        %v2089 = vpack.c.b16 %v1961, %v1953
        %v2090 = vpack.c.b16 %v1962, %v1954
        %v2091 = vpack.c.b16 %v1963, %v1955
        %v2092 = vpack.c.b16 %v1964, %v1956
        %v2093 = vpack.c.b16 %v1965, %v1957
        %v2094 = vpack.c.b16 %v1966, %v1958
        %v2095 = vpack.c.b16 %v1967, %v1959
        %2224 = vmatprep.subr.bf16.mxu0 %v2025
        %2225 = vmatpush1.bf16.msra.mxu0 %v2024
        %2226 = vmatprep.subr.bf16.mxu0 %v2017
        %2227 = vmatpush1.bf16.msra.mxu0 %v2016
        %2228 = vmatprep.subr.bf16.mxu0 %v2009
        %2229 = vmatpush1.bf16.msra.mxu0 %v2008
        %2230 = vmatprep.subr.bf16.mxu0 %v2001
        %2231 = vmatpush1.bf16.msra.mxu0 %v2000
        %2232 = vmatprep.subr.bf16.mxu0 %v1993
        %2233 = vmatpush1.bf16.msra.mxu0 %v1992
        %2234 = vmatprep.subr.bf16.mxu0 %v1985
        %2235 = vmatpush1.bf16.msra.mxu0 %v1984
        %2236 = vmatprep.subr.bf16.mxu0 %v1977
        %2237 = vmatpush1.bf16.msra.mxu0 %v1976
        %2238 = vmatprep.subr.bf16.mxu0 %v1969
        %2239 = vmatpush1.bf16.msra.mxu0 %v1968
        %2240 = vmatprep.subr.bf16.mxu0 %v2089
        %2241 = vmatpush2.bf16.msra.mxu0 %v2088
        %2242 = vmatprep.subr.bf16.mxu0 %v2081
        %2243 = vmatpush2.bf16.msra.mxu0 %v2080
        %2244 = vmatprep.subr.bf16.mxu0 %v2073
        %2245 = vmatpush2.bf16.msra.mxu0 %v2072
        %2246 = vmatprep.subr.bf16.mxu0 %v2065
        %2247 = vmatpush2.bf16.msra.mxu0 %v2064
        %2248 = vmatprep.subr.bf16.mxu0 %v2057
        %2249 = vmatpush2.bf16.msra.mxu0 %v2056
        %2250 = vmatprep.subr.bf16.mxu0 %v2049
        %2251 = vmatpush2.bf16.msra.mxu0 %v2048
        %2252 = vmatprep.subr.bf16.mxu0 %v2041
        %2253 = vmatpush2.bf16.msra.mxu0 %v2040
        %2254 = vmatprep.subr.bf16.mxu0 %v2033
        %2255 = vmatpush2.bf16.msra.mxu0 %v2032
        %2256 = vmatprep.mubr.bf16.mxu0 %v1455
        %2257 = vmatmul.mubr.bf16.gmra.mxu0 %v1454
        %v2258 = vpop.f32.mrf.mxu0
        %v2259 = vadd.f32 0.0, %v2258
        %v2260 = vpop.f32.mrf.mxu0
        %v2261 = vadd.f32 0.0, %v2260
        %v2262 = vpop.f32.mrf.mxu0
        %v2263 = vadd.f32 0.0, %v2262
        %v2264 = vpop.f32.mrf.mxu0
        %v2265 = vadd.f32 0.0, %v2264
        %2266 = vdwg.mxu0
        %2267 = vmatprep.subr.bf16.mxu0 %v2027
        %2268 = vmatpush1.bf16.msra.mxu0 %v2026
        %2269 = vmatprep.subr.bf16.mxu0 %v2019
        %2270 = vmatpush1.bf16.msra.mxu0 %v2018
        %2271 = vmatprep.subr.bf16.mxu0 %v2011
        %2272 = vmatpush1.bf16.msra.mxu0 %v2010
        %2273 = vmatprep.subr.bf16.mxu0 %v2003
        %2274 = vmatpush1.bf16.msra.mxu0 %v2002
        %2275 = vmatprep.subr.bf16.mxu0 %v1995
        %2276 = vmatpush1.bf16.msra.mxu0 %v1994
        %2277 = vmatprep.subr.bf16.mxu0 %v1987
        %2278 = vmatpush1.bf16.msra.mxu0 %v1986
        %2279 = vmatprep.subr.bf16.mxu0 %v1979
        %2280 = vmatpush1.bf16.msra.mxu0 %v1978
        %2281 = vmatprep.subr.bf16.mxu0 %v1971
        %2282 = vmatpush1.bf16.msra.mxu0 %v1970
        %2283 = vmatprep.subr.bf16.mxu0 %v2091
        %2284 = vmatpush2.bf16.msra.mxu0 %v2090
        %2285 = vmatprep.subr.bf16.mxu0 %v2083
        %2286 = vmatpush2.bf16.msra.mxu0 %v2082
        %2287 = vmatprep.subr.bf16.mxu0 %v2075
        %2288 = vmatpush2.bf16.msra.mxu0 %v2074
        %2289 = vmatprep.subr.bf16.mxu0 %v2067
        %2290 = vmatpush2.bf16.msra.mxu0 %v2066
        %2291 = vmatprep.subr.bf16.mxu0 %v2059
        %2292 = vmatpush2.bf16.msra.mxu0 %v2058
        %2293 = vmatprep.subr.bf16.mxu0 %v2051
        %2294 = vmatpush2.bf16.msra.mxu0 %v2050
        %2295 = vmatprep.subr.bf16.mxu0 %v2043
        %2296 = vmatpush2.bf16.msra.mxu0 %v2042
        %2297 = vmatprep.subr.bf16.mxu0 %v2035
        %2298 = vmatpush2.bf16.msra.mxu0 %v2034
        %2299 = vmatprep.mubr.bf16.mxu0 %v1455
        %2300 = vmatmul.mubr.bf16.gmra.mxu0 %v1454
        %v2301 = vpop.f32.mrf.mxu0
        %v2302 = vadd.f32 0.0, %v2301
        %v2303 = vpop.f32.mrf.mxu0
        %v2304 = vadd.f32 0.0, %v2303
        %v2305 = vpop.f32.mrf.mxu0
        %v2306 = vadd.f32 0.0, %v2305
        %v2307 = vpop.f32.mrf.mxu0
        %v2308 = vadd.f32 0.0, %v2307
        %2309 = vdwg.mxu0
        %2310 = vmatprep.subr.bf16.mxu0 %v2029
        %2311 = vmatpush1.bf16.msra.mxu0 %v2028
        %2312 = vmatprep.subr.bf16.mxu0 %v2021
        %2313 = vmatpush1.bf16.msra.mxu0 %v2020
        %2314 = vmatprep.subr.bf16.mxu0 %v2013
        %2315 = vmatpush1.bf16.msra.mxu0 %v2012
        %2316 = vmatprep.subr.bf16.mxu0 %v2005
        %2317 = vmatpush1.bf16.msra.mxu0 %v2004
        %2318 = vmatprep.subr.bf16.mxu0 %v1997
        %2319 = vmatpush1.bf16.msra.mxu0 %v1996
        %2320 = vmatprep.subr.bf16.mxu0 %v1989
        %2321 = vmatpush1.bf16.msra.mxu0 %v1988
        %2322 = vmatprep.subr.bf16.mxu0 %v1981
        %2323 = vmatpush1.bf16.msra.mxu0 %v1980
        %2324 = vmatprep.subr.bf16.mxu0 %v1973
        %2325 = vmatpush1.bf16.msra.mxu0 %v1972
        %2326 = vmatprep.subr.bf16.mxu0 %v2093
        %2327 = vmatpush2.bf16.msra.mxu0 %v2092
        %2328 = vmatprep.subr.bf16.mxu0 %v2085
        %2329 = vmatpush2.bf16.msra.mxu0 %v2084
        %2330 = vmatprep.subr.bf16.mxu0 %v2077
        %2331 = vmatpush2.bf16.msra.mxu0 %v2076
        %2332 = vmatprep.subr.bf16.mxu0 %v2069
        %2333 = vmatpush2.bf16.msra.mxu0 %v2068
        %2334 = vmatprep.subr.bf16.mxu0 %v2061
        %2335 = vmatpush2.bf16.msra.mxu0 %v2060
        %2336 = vmatprep.subr.bf16.mxu0 %v2053
        %2337 = vmatpush2.bf16.msra.mxu0 %v2052
        %2338 = vmatprep.subr.bf16.mxu0 %v2045
        %2339 = vmatpush2.bf16.msra.mxu0 %v2044
        %2340 = vmatprep.subr.bf16.mxu0 %v2037
        %2341 = vmatpush2.bf16.msra.mxu0 %v2036
        %2342 = vmatprep.mubr.bf16.mxu0 %v1455
        %2343 = vmatmul.mubr.bf16.gmra.mxu0 %v1454
        %v2344 = vpop.f32.mrf.mxu0
        %v2345 = vadd.f32 0.0, %v2344
        %v2346 = vpop.f32.mrf.mxu0
        %v2347 = vadd.f32 0.0, %v2346
        %v2348 = vpop.f32.mrf.mxu0
        %v2349 = vadd.f32 0.0, %v2348
        %v2350 = vpop.f32.mrf.mxu0
        %v2351 = vadd.f32 0.0, %v2350
        %2352 = vdwg.mxu0
        %2353 = vmatprep.subr.bf16.mxu0 %v2031
        %2354 = vmatpush1.bf16.msra.mxu0 %v2030
        %2355 = vmatprep.subr.bf16.mxu0 %v2023
        %2356 = vmatpush1.bf16.msra.mxu0 %v2022
        %2357 = vmatprep.subr.bf16.mxu0 %v2015
        %2358 = vmatpush1.bf16.msra.mxu0 %v2014
        %2359 = vmatprep.subr.bf16.mxu0 %v2007
        %2360 = vmatpush1.bf16.msra.mxu0 %v2006
        %2361 = vmatprep.subr.bf16.mxu0 %v1999
        %2362 = vmatpush1.bf16.msra.mxu0 %v1998
        %2363 = vmatprep.subr.bf16.mxu0 %v1991
        %2364 = vmatpush1.bf16.msra.mxu0 %v1990
        %2365 = vmatprep.subr.bf16.mxu0 %v1983
        %2366 = vmatpush1.bf16.msra.mxu0 %v1982
        %2367 = vmatprep.subr.bf16.mxu0 %v1975
        %2368 = vmatpush1.bf16.msra.mxu0 %v1974
        %2369 = vmatprep.subr.bf16.mxu0 %v2095
        %2370 = vmatpush2.bf16.msra.mxu0 %v2094
        %2371 = vmatprep.subr.bf16.mxu0 %v2087
        %2372 = vmatpush2.bf16.msra.mxu0 %v2086
        %2373 = vmatprep.subr.bf16.mxu0 %v2079
        %2374 = vmatpush2.bf16.msra.mxu0 %v2078
        %2375 = vmatprep.subr.bf16.mxu0 %v2071
        %2376 = vmatpush2.bf16.msra.mxu0 %v2070
        %2377 = vmatprep.subr.bf16.mxu0 %v2063
        %2378 = vmatpush2.bf16.msra.mxu0 %v2062
        %2379 = vmatprep.subr.bf16.mxu0 %v2055
        %2380 = vmatpush2.bf16.msra.mxu0 %v2054
        %2381 = vmatprep.subr.bf16.mxu0 %v2047
        %2382 = vmatpush2.bf16.msra.mxu0 %v2046
        %2383 = vmatprep.subr.bf16.mxu0 %v2039
        %2384 = vmatpush2.bf16.msra.mxu0 %v2038
        %2385 = vmatprep.mubr.bf16.mxu0 %v1455
        %2386 = vmatmul.mubr.bf16.gmra.mxu0 %v1454
        %v2387 = vpop.f32.mrf.mxu0
        %v2388 = vadd.f32 0.0, %v2387
        %v2389 = vpop.f32.mrf.mxu0
        %v2390 = vadd.f32 0.0, %v2389
        %v2391 = vpop.f32.mrf.mxu0
        %v2392 = vadd.f32 0.0, %v2391
        %v2393 = vpop.f32.mrf.mxu0
        %v2394 = vadd.f32 0.0, %v2393
        %2395 = vdwg.mxu0
        %v2396 = vld [vmem:[%s1092] sm:$0xff]
        %v2397 = vld [vmem:[%s1092 + $0x8] sm:$0xff]
        %v2398 = vlaneseq
        %v2399 = vshrl.u32 %v2398, 7
        %v2402 = vlaneseq
        %v2403 = vshrl.u32 %v2402, 7
        %v2404 = vsub.s32 3, %v2403
        %v2405 = vrot.slane %v2396, %v2404
        %v2406 = vlaneseq
        %v2407 = vshrl.u32 %v2406, 7
        %v2408 = vsub.s32 7, %v2407
        %v2409 = vrot.slane %v2396, %v2408
        %v2410 = vlaneseq
        %v2411 = vshrl.u32 %v2410, 7
        %v2412 = vsub.s32 3, %v2411
        %v2413 = vrot.slane %v2397, %v2412
        %v2414 = vlaneseq
        %v2415 = vshrl.u32 %v2414, 7
        %v2416 = vsub.s32 7, %v2415
        %v2417 = vrot.slane %v2397, %v2416
        %v2422 = vlaneseq
        %v2423 = vshrl.u32 %v2422, 7
        %v2424 = vsub.s32 3, %v2423
        %v2425 = vrot.slane %v2405, %v2424
        %v2426 = vlaneseq
        %v2427 = vshrl.u32 %v2426, 7
        %v2428 = vsub.s32 3, %v2427
        %v2429 = vrot.slane %v2409, %v2428
        %v2430 = vlaneseq
        %v2431 = vshrl.u32 %v2430, 7
        %v2432 = vsub.s32 3, %v2431
        %v2433 = vrot.slane %v2413, %v2432
        %v2434 = vlaneseq
        %v2435 = vshrl.u32 %v2434, 7
        %v2436 = vsub.s32 3, %v2435
        %v2437 = vrot.slane %v2417, %v2436
        %v2438 = vmul.f32 %v2425, %v2259
        %v2439 = vmul.f32 %v2429, %v2261
        %v2440 = vmul.f32 %v2433, %v2302
        %v2441 = vmul.f32 %v2437, %v2304
        %v2442 = vmul.f32 %v2425, %v2263
        %v2443 = vmul.f32 %v2429, %v2265
        %v2444 = vmul.f32 %v2433, %v2306
        %v2445 = vmul.f32 %v2437, %v2308
        %v2446 = vrot.slane %v2259, 7
        %v2447 = vrot.slane %v2261, 7
        %v2448 = vrot.slane %v2302, 7
        %v2449 = vrot.slane %v2304, 7
        %v2450 = vrot.slane %v2263, 7
        %v2451 = vrot.slane %v2265, 7
        %v2452 = vrot.slane %v2306, 7
        %v2453 = vrot.slane %v2308, 7
        %vm2454 = vcmp.ge.s32.totalorder %v2399, 1
        %v2455 = vsel %vm2454, %v2446, 0.0
        %v2456 = vsel %vm2454, %v2447, 0.0
        %v2457 = vsel %vm2454, %v2448, 0.0
        %v2458 = vsel %vm2454, %v2449, 0.0
        %v2459 = vsel %vm2454, %v2450, 0.0
        %v2460 = vsel %vm2454, %v2451, 0.0
        %v2461 = vsel %vm2454, %v2452, 0.0
        %v2462 = vsel %vm2454, %v2453, 0.0
        %v2463 = vlaneseq
        %v2464 = vshrl.u32 %v2463, 7
        %v2465 = vsub.s32 2, %v2464
        %v2466 = vrot.slane %v2396, %v2465
        %v2467 = vlaneseq
        %v2468 = vshrl.u32 %v2467, 7
        %v2469 = vsub.s32 6, %v2468
        %v2470 = vrot.slane %v2396, %v2469
        %v2471 = vlaneseq
        %v2472 = vshrl.u32 %v2471, 7
        %v2473 = vsub.s32 2, %v2472
        %v2474 = vrot.slane %v2397, %v2473
        %v2475 = vlaneseq
        %v2476 = vshrl.u32 %v2475, 7
        %v2477 = vsub.s32 6, %v2476
        %v2478 = vrot.slane %v2397, %v2477
        %v2483 = vlaneseq
        %v2484 = vshrl.u32 %v2483, 7
        %v2485 = vsub.s32 2, %v2484
        %v2486 = vrot.slane %v2466, %v2485
        %v2487 = vlaneseq
        %v2488 = vshrl.u32 %v2487, 7
        %v2489 = vsub.s32 2, %v2488
        %v2490 = vrot.slane %v2470, %v2489
        %v2491 = vlaneseq
        %v2492 = vshrl.u32 %v2491, 7
        %v2493 = vsub.s32 2, %v2492
        %v2494 = vrot.slane %v2474, %v2493
        %v2495 = vlaneseq
        %v2496 = vshrl.u32 %v2495, 7
        %v2497 = vsub.s32 2, %v2496
        %v2498 = vrot.slane %v2478, %v2497
        %v2499 = vmul.f32 %v2486, %v2455
        %v2500 = vmul.f32 %v2490, %v2456
        %v2501 = vmul.f32 %v2494, %v2457
        %v2502 = vmul.f32 %v2498, %v2458
        %v2503 = vmul.f32 %v2486, %v2459
        %v2504 = vmul.f32 %v2490, %v2460
        %v2505 = vmul.f32 %v2494, %v2461
        %v2506 = vmul.f32 %v2498, %v2462
        %v2507 = vadd.f32 %v2438, %v2499
        %v2508 = vadd.f32 %v2439, %v2500
        %v2509 = vadd.f32 %v2440, %v2501
        %v2510 = vadd.f32 %v2441, %v2502
        %v2511 = vadd.f32 %v2442, %v2503
        %v2512 = vadd.f32 %v2443, %v2504
        %v2513 = vadd.f32 %v2444, %v2505
        %v2514 = vadd.f32 %v2445, %v2506
        %v2515 = vrot.slane %v2259, 6
        %v2516 = vrot.slane %v2261, 6
        %v2517 = vrot.slane %v2302, 6
        %v2518 = vrot.slane %v2304, 6
        %v2519 = vrot.slane %v2263, 6
        %v2520 = vrot.slane %v2265, 6
        %v2521 = vrot.slane %v2306, 6
        %v2522 = vrot.slane %v2308, 6
        %vm2523 = vcmp.ge.s32.totalorder %v2399, 2
        %v2524 = vsel %vm2523, %v2515, 0.0
        %v2525 = vsel %vm2523, %v2516, 0.0
        %v2526 = vsel %vm2523, %v2517, 0.0
        %v2527 = vsel %vm2523, %v2518, 0.0
        %v2528 = vsel %vm2523, %v2519, 0.0
        %v2529 = vsel %vm2523, %v2520, 0.0
        %v2530 = vsel %vm2523, %v2521, 0.0
        %v2531 = vsel %vm2523, %v2522, 0.0
        %v2532 = vlaneseq
        %v2533 = vshrl.u32 %v2532, 7
        %v2534 = vsub.s32 1, %v2533
        %v2535 = vrot.slane %v2396, %v2534
        %v2536 = vlaneseq
        %v2537 = vshrl.u32 %v2536, 7
        %v2538 = vsub.s32 5, %v2537
        %v2539 = vrot.slane %v2396, %v2538
        %v2540 = vlaneseq
        %v2541 = vshrl.u32 %v2540, 7
        %v2542 = vsub.s32 1, %v2541
        %v2543 = vrot.slane %v2397, %v2542
        %v2544 = vlaneseq
        %v2545 = vshrl.u32 %v2544, 7
        %v2546 = vsub.s32 5, %v2545
        %v2547 = vrot.slane %v2397, %v2546
        %v2552 = vlaneseq
        %v2553 = vshrl.u32 %v2552, 7
        %v2554 = vsub.s32 1, %v2553
        %v2555 = vrot.slane %v2535, %v2554
        %v2556 = vlaneseq
        %v2557 = vshrl.u32 %v2556, 7
        %v2558 = vsub.s32 1, %v2557
        %v2559 = vrot.slane %v2539, %v2558
        %v2560 = vlaneseq
        %v2561 = vshrl.u32 %v2560, 7
        %v2562 = vsub.s32 1, %v2561
        %v2563 = vrot.slane %v2543, %v2562
        %v2564 = vlaneseq
        %v2565 = vshrl.u32 %v2564, 7
        %v2566 = vsub.s32 1, %v2565
        %v2567 = vrot.slane %v2547, %v2566
        %v2568 = vmul.f32 %v2555, %v2524
        %v2569 = vmul.f32 %v2559, %v2525
        %v2570 = vmul.f32 %v2563, %v2526
        %v2571 = vmul.f32 %v2567, %v2527
        %v2572 = vmul.f32 %v2555, %v2528
        %v2573 = vmul.f32 %v2559, %v2529
        %v2574 = vmul.f32 %v2563, %v2530
        %v2575 = vmul.f32 %v2567, %v2531
        %v2576 = vadd.f32 %v2507, %v2568
        %v2577 = vadd.f32 %v2508, %v2569
        %v2578 = vadd.f32 %v2509, %v2570
        %v2579 = vadd.f32 %v2510, %v2571
        %v2580 = vadd.f32 %v2511, %v2572
        %v2581 = vadd.f32 %v2512, %v2573
        %v2582 = vadd.f32 %v2513, %v2574
        %v2583 = vadd.f32 %v2514, %v2575
        %v2584 = vrot.slane %v2259, 5
        %v2585 = vrot.slane %v2261, 5
        %v2586 = vrot.slane %v2302, 5
        %v2587 = vrot.slane %v2304, 5
        %v2588 = vrot.slane %v2263, 5
        %v2589 = vrot.slane %v2265, 5
        %v2590 = vrot.slane %v2306, 5
        %v2591 = vrot.slane %v2308, 5
        %vm2592 = vcmp.ge.s32.totalorder %v2399, 3
        %v2593 = vsel %vm2592, %v2584, 0.0
        %v2594 = vsel %vm2592, %v2585, 0.0
        %v2595 = vsel %vm2592, %v2586, 0.0
        %v2596 = vsel %vm2592, %v2587, 0.0
        %v2597 = vsel %vm2592, %v2588, 0.0
        %v2598 = vsel %vm2592, %v2589, 0.0
        %v2599 = vsel %vm2592, %v2590, 0.0
        %v2600 = vsel %vm2592, %v2591, 0.0
        %v2601 = vlaneseq
        %v2602 = vshrl.u32 %v2601, 7
        %v2603 = vsub.s32 0, %v2602
        %v2604 = vrot.slane %v2396, %v2603
        %v2605 = vlaneseq
        %v2606 = vshrl.u32 %v2605, 7
        %v2607 = vsub.s32 4, %v2606
        %v2608 = vrot.slane %v2396, %v2607
        %v2609 = vlaneseq
        %v2610 = vshrl.u32 %v2609, 7
        %v2611 = vsub.s32 0, %v2610
        %v2612 = vrot.slane %v2397, %v2611
        %v2613 = vlaneseq
        %v2614 = vshrl.u32 %v2613, 7
        %v2615 = vsub.s32 4, %v2614
        %v2616 = vrot.slane %v2397, %v2615
        %v2621 = vlaneseq
        %v2622 = vshrl.u32 %v2621, 7
        %v2623 = vsub.s32 0, %v2622
        %v2624 = vrot.slane %v2604, %v2623
        %v2625 = vlaneseq
        %v2626 = vshrl.u32 %v2625, 7
        %v2627 = vsub.s32 0, %v2626
        %v2628 = vrot.slane %v2608, %v2627
        %v2629 = vlaneseq
        %v2630 = vshrl.u32 %v2629, 7
        %v2631 = vsub.s32 0, %v2630
        %v2632 = vrot.slane %v2612, %v2631
        %v2633 = vlaneseq
        %v2634 = vshrl.u32 %v2633, 7
        %v2635 = vsub.s32 0, %v2634
        %v2636 = vrot.slane %v2616, %v2635
        %v2637 = vmul.f32 %v2624, %v2593
        %v2638 = vmul.f32 %v2628, %v2594
        %v2639 = vmul.f32 %v2632, %v2595
        %v2640 = vmul.f32 %v2636, %v2596
        %v2641 = vmul.f32 %v2624, %v2597
        %v2642 = vmul.f32 %v2628, %v2598
        %v2643 = vmul.f32 %v2632, %v2599
        %v2644 = vmul.f32 %v2636, %v2600
        %v2645 = vadd.f32 %v2576, %v2637
        %v2646 = vadd.f32 %v2577, %v2638
        %v2647 = vadd.f32 %v2578, %v2639
        %v2648 = vadd.f32 %v2579, %v2640
        %v2649 = vadd.f32 %v2580, %v2641
        %v2650 = vadd.f32 %v2581, %v2642
        %v2651 = vadd.f32 %v2582, %v2643
        %v2652 = vadd.f32 %v2583, %v2644
        %v2653 = vld [vmem:[%s1101] sm:$0xf]
        %v2655 = vlaneseq
        %v2656 = vshrl.u32 %v2655, 7
        %v2657 = vsub.s32 0, %v2656
        %v2658 = vrot.slane %v2653, %v2657
        %v2659 = vlaneseq
        %v2660 = vshrl.u32 %v2659, 7
        %v2661 = vsub.s32 1, %v2660
        %v2662 = vrot.slane %v2653, %v2661
        %v2663 = vlaneseq
        %v2664 = vshrl.u32 %v2663, 7
        %v2665 = vsub.s32 2, %v2664
        %v2666 = vrot.slane %v2653, %v2665
        %v2667 = vlaneseq
        %v2668 = vshrl.u32 %v2667, 7
        %v2669 = vsub.s32 3, %v2668
        %v2670 = vrot.slane %v2653, %v2669
        %v2675 = vadd.f32 %v2645, %v2658
        %v2676 = vadd.f32 %v2646, %v2662
        %v2677 = vadd.f32 %v2647, %v2666
        %v2678 = vadd.f32 %v2648, %v2670
        %v2679 = vadd.f32 %v2649, %v2658
        %v2680 = vadd.f32 %v2650, %v2662
        %v2681 = vadd.f32 %v2651, %v2666
        %v2682 = vadd.f32 %v2652, %v2670
        %v2683 = vxor.u32 %v2675, 2147483648
        %v2684 = vxor.u32 %v2676, 2147483648
        %v2685 = vxor.u32 %v2677, 2147483648
        %v2686 = vxor.u32 %v2678, 2147483648
        %v2687 = vxor.u32 %v2679, 2147483648
        %v2688 = vxor.u32 %v2680, 2147483648
        %v2689 = vxor.u32 %v2681, 2147483648
        %v2690 = vxor.u32 %v2682, 2147483648
        %v2691 = vmul.f32 %v2683, 1.442695
        %v2692 = vpow.pop %v2691
        %v2693 = vmul.f32 %v2684, 1.442695
        %v2694 = vpow.pop %v2693
        %v2695 = vmul.f32 %v2685, 1.442695
        %v2696 = vpow.pop %v2695
        %v2697 = vmul.f32 %v2686, 1.442695
        %v2698 = vpow.pop %v2697
        %v2699 = vmul.f32 %v2687, 1.442695
        %v2700 = vpow.pop %v2699
        %v2701 = vmul.f32 %v2688, 1.442695
        %v2702 = vpow.pop %v2701
        %v2703 = vmul.f32 %v2689, 1.442695
        %v2704 = vpow.pop %v2703
        %v2705 = vmul.f32 %v2690, 1.442695
        %v2706 = vpow.pop %v2705
        %v2707 = vadd.f32 %v2692, 1.0
        %v2708 = vadd.f32 %v2694, 1.0
        %v2709 = vadd.f32 %v2696, 1.0
        %v2710 = vadd.f32 %v2698, 1.0
        %v2711 = vadd.f32 %v2700, 1.0
        %v2712 = vadd.f32 %v2702, 1.0
        %v2713 = vadd.f32 %v2704, 1.0
        %v2714 = vadd.f32 %v2706, 1.0
        %v2715 = vrcp.pop %v2707
        %v2716 = vmul.f32 1.0, %v2715
        %v2717 = vrcp.pop %v2708
        %v2718 = vmul.f32 1.0, %v2717
        %v2719 = vrcp.pop %v2709
        %v2720 = vmul.f32 1.0, %v2719
        %v2721 = vrcp.pop %v2710
        %v2722 = vmul.f32 1.0, %v2721
        %v2723 = vrcp.pop %v2711
        %v2724 = vmul.f32 1.0, %v2723
        %v2725 = vrcp.pop %v2712
        %v2726 = vmul.f32 1.0, %v2725
        %v2727 = vrcp.pop %v2713
        %v2728 = vmul.f32 1.0, %v2727
        %v2729 = vrcp.pop %v2714
        %v2730 = vmul.f32 1.0, %v2729
        %v2731 = vmul.f32 %v2675, %v2716
        %v2732 = vmul.f32 %v2676, %v2718
        %v2733 = vmul.f32 %v2677, %v2720
        %v2734 = vmul.f32 %v2678, %v2722
        %v2735 = vmul.f32 %v2679, %v2724
        %v2736 = vmul.f32 %v2680, %v2726
        %v2737 = vmul.f32 %v2681, %v2728
        %v2738 = vmul.f32 %v2682, %v2730
        %v2739 = vpack.c.bf16 %v2735, %v2731
        %v2740 = vpack.c.bf16 %v2736, %v2732
        %v2741 = vpack.c.bf16 %v2737, %v2733
        %v2742 = vpack.c.bf16 %v2738, %v2734
        %v2743 = vld [vmem:[%s1110] sm:$0xf]
        %v2744 = vld [vmem:[%s1110 + $0x4] sm:$0xf]
        %v2745 = vld [vmem:[%s1110 + $0x8] sm:$0xf]
        %v2746 = vld [vmem:[%s1110 + $0xc] sm:$0xf]
        %v2747 = vld [vmem:[%s1110 + $0x10] sm:$0xf]
        %v2748 = vld [vmem:[%s1110 + $0x14] sm:$0xf]
        %v2749 = vld [vmem:[%s1110 + $0x18] sm:$0xf]
        %v2750 = vld [vmem:[%s1110 + $0x1c] sm:$0xf]
        %v2751 = vld [vmem:[%s1110 + $0x20] sm:$0xf]
        %v2752 = vld [vmem:[%s1110 + $0x24] sm:$0xf]
        %v2753 = vld [vmem:[%s1110 + $0x28] sm:$0xf]
        %v2754 = vld [vmem:[%s1110 + $0x2c] sm:$0xf]
        %v2755 = vld [vmem:[%s1110 + $0x30] sm:$0xf]
        %v2756 = vld [vmem:[%s1110 + $0x34] sm:$0xf]
        %v2757 = vld [vmem:[%s1110 + $0x38] sm:$0xf]
        %v2758 = vld [vmem:[%s1110 + $0x3c] sm:$0xf]
        %v2759 = vld [vmem:[%s1110 + $0x40] sm:$0xf]
        %v2760 = vld [vmem:[%s1110 + $0x44] sm:$0xf]
        %v2761 = vld [vmem:[%s1110 + $0x48] sm:$0xf]
        %v2762 = vld [vmem:[%s1110 + $0x4c] sm:$0xf]
        %v2763 = vld [vmem:[%s1110 + $0x50] sm:$0xf]
        %v2764 = vld [vmem:[%s1110 + $0x54] sm:$0xf]
        %v2765 = vld [vmem:[%s1110 + $0x58] sm:$0xf]
        %v2766 = vld [vmem:[%s1110 + $0x5c] sm:$0xf]
        %v2767 = vld [vmem:[%s1110 + $0x60] sm:$0xf]
        %v2768 = vld [vmem:[%s1110 + $0x64] sm:$0xf]
        %v2769 = vld [vmem:[%s1110 + $0x68] sm:$0xf]
        %v2770 = vld [vmem:[%s1110 + $0x6c] sm:$0xf]
        %v2771 = vld [vmem:[%s1110 + $0x70] sm:$0xf]
        %v2772 = vld [vmem:[%s1110 + $0x74] sm:$0xf]
        %v2773 = vld [vmem:[%s1110 + $0x78] sm:$0xf]
        %v2774 = vld [vmem:[%s1110 + $0x7c] sm:$0xf]
        %v2775 = vld [vmem:[%s1110 + $0x80] sm:$0xf]
        %v2776 = vld [vmem:[%s1110 + $0x84] sm:$0xf]
        %v2777 = vld [vmem:[%s1110 + $0x88] sm:$0xf]
        %v2778 = vld [vmem:[%s1110 + $0x8c] sm:$0xf]
        %v2779 = vld [vmem:[%s1110 + $0x90] sm:$0xf]
        %v2780 = vld [vmem:[%s1110 + $0x94] sm:$0xf]
        %v2781 = vld [vmem:[%s1110 + $0x98] sm:$0xf]
        %v2782 = vld [vmem:[%s1110 + $0x9c] sm:$0xf]
        %v2783 = vld [vmem:[%s1110 + $0xa0] sm:$0xf]
        %v2784 = vld [vmem:[%s1110 + $0xa4] sm:$0xf]
        %v2785 = vld [vmem:[%s1110 + $0xa8] sm:$0xf]
        %v2786 = vld [vmem:[%s1110 + $0xac] sm:$0xf]
        %v2787 = vld [vmem:[%s1110 + $0xb0] sm:$0xf]
        %v2788 = vld [vmem:[%s1110 + $0xb4] sm:$0xf]
        %v2789 = vld [vmem:[%s1110 + $0xb8] sm:$0xf]
        %v2790 = vld [vmem:[%s1110 + $0xbc] sm:$0xf]
        %v2791 = vld [vmem:[%s1110 + $0xc0] sm:$0xf]
        %v2792 = vld [vmem:[%s1110 + $0xc4] sm:$0xf]
        %v2793 = vld [vmem:[%s1110 + $0xc8] sm:$0xf]
        %v2794 = vld [vmem:[%s1110 + $0xcc] sm:$0xf]
        %v2795 = vld [vmem:[%s1110 + $0xd0] sm:$0xf]
        %v2796 = vld [vmem:[%s1110 + $0xd4] sm:$0xf]
        %v2797 = vld [vmem:[%s1110 + $0xd8] sm:$0xf]
        %v2798 = vld [vmem:[%s1110 + $0xdc] sm:$0xf]
        %v2799 = vld [vmem:[%s1110 + $0xe0] sm:$0xf]
        %v2800 = vld [vmem:[%s1110 + $0xe4] sm:$0xf]
        %v2801 = vld [vmem:[%s1110 + $0xe8] sm:$0xf]
        %v2802 = vld [vmem:[%s1110 + $0xec] sm:$0xf]
        %v2803 = vld [vmem:[%s1110 + $0xf0] sm:$0xf]
        %v2804 = vld [vmem:[%s1110 + $0xf4] sm:$0xf]
        %v2805 = vld [vmem:[%s1110 + $0xf8] sm:$0xf]
        %v2806 = vld [vmem:[%s1110 + $0xfc] sm:$0xf]
        %v2871 = vunpack.c.l.b16 %v2743
        %v2872 = vunpack.c.l.b16 %v2744
        %v2873 = vunpack.c.l.b16 %v2745
        %v2874 = vunpack.c.l.b16 %v2746
        %v2875 = vunpack.c.l.b16 %v2747
        %v2876 = vunpack.c.l.b16 %v2748
        %v2877 = vunpack.c.l.b16 %v2749
        %v2878 = vunpack.c.l.b16 %v2750
        %v2879 = vunpack.c.l.b16 %v2751
        %v2880 = vunpack.c.l.b16 %v2752
        %v2881 = vunpack.c.l.b16 %v2753
        %v2882 = vunpack.c.l.b16 %v2754
        %v2883 = vunpack.c.l.b16 %v2755
        %v2884 = vunpack.c.l.b16 %v2756
        %v2885 = vunpack.c.l.b16 %v2757
        %v2886 = vunpack.c.l.b16 %v2758
        %v2887 = vunpack.c.l.b16 %v2759
        %v2888 = vunpack.c.l.b16 %v2760
        %v2889 = vunpack.c.l.b16 %v2761
        %v2890 = vunpack.c.l.b16 %v2762
        %v2891 = vunpack.c.l.b16 %v2763
        %v2892 = vunpack.c.l.b16 %v2764
        %v2893 = vunpack.c.l.b16 %v2765
        %v2894 = vunpack.c.l.b16 %v2766
        %v2895 = vunpack.c.l.b16 %v2767
        %v2896 = vunpack.c.l.b16 %v2768
        %v2897 = vunpack.c.l.b16 %v2769
        %v2898 = vunpack.c.l.b16 %v2770
        %v2899 = vunpack.c.l.b16 %v2771
        %v2900 = vunpack.c.l.b16 %v2772
        %v2901 = vunpack.c.l.b16 %v2773
        %v2902 = vunpack.c.l.b16 %v2774
        %v2903 = vunpack.c.l.b16 %v2775
        %v2904 = vunpack.c.l.b16 %v2776
        %v2905 = vunpack.c.l.b16 %v2777
        %v2906 = vunpack.c.l.b16 %v2778
        %v2907 = vunpack.c.l.b16 %v2779
        %v2908 = vunpack.c.l.b16 %v2780
        %v2909 = vunpack.c.l.b16 %v2781
        %v2910 = vunpack.c.l.b16 %v2782
        %v2911 = vunpack.c.l.b16 %v2783
        %v2912 = vunpack.c.l.b16 %v2784
        %v2913 = vunpack.c.l.b16 %v2785
        %v2914 = vunpack.c.l.b16 %v2786
        %v2915 = vunpack.c.l.b16 %v2787
        %v2916 = vunpack.c.l.b16 %v2788
        %v2917 = vunpack.c.l.b16 %v2789
        %v2918 = vunpack.c.l.b16 %v2790
        %v2919 = vunpack.c.l.b16 %v2791
        %v2920 = vunpack.c.l.b16 %v2792
        %v2921 = vunpack.c.l.b16 %v2793
        %v2922 = vunpack.c.l.b16 %v2794
        %v2923 = vunpack.c.l.b16 %v2795
        %v2924 = vunpack.c.l.b16 %v2796
        %v2925 = vunpack.c.l.b16 %v2797
        %v2926 = vunpack.c.l.b16 %v2798
        %v2927 = vunpack.c.l.b16 %v2799
        %v2928 = vunpack.c.l.b16 %v2800
        %v2929 = vunpack.c.l.b16 %v2801
        %v2930 = vunpack.c.l.b16 %v2802
        %v2931 = vunpack.c.l.b16 %v2803
        %v2932 = vunpack.c.l.b16 %v2804
        %v2933 = vunpack.c.l.b16 %v2805
        %v2934 = vunpack.c.l.b16 %v2806
        %v2935 = vpack.c.b16 %v2872, %v2871
        %v2936 = vpack.c.b16 %v2874, %v2873
        %v2937 = vpack.c.b16 %v2876, %v2875
        %v2938 = vpack.c.b16 %v2878, %v2877
        %v2939 = vpack.c.b16 %v2880, %v2879
        %v2940 = vpack.c.b16 %v2882, %v2881
        %v2941 = vpack.c.b16 %v2884, %v2883
        %v2942 = vpack.c.b16 %v2886, %v2885
        %v2943 = vpack.c.b16 %v2888, %v2887
        %v2944 = vpack.c.b16 %v2890, %v2889
        %v2945 = vpack.c.b16 %v2892, %v2891
        %v2946 = vpack.c.b16 %v2894, %v2893
        %v2947 = vpack.c.b16 %v2896, %v2895
        %v2948 = vpack.c.b16 %v2898, %v2897
        %v2949 = vpack.c.b16 %v2900, %v2899
        %v2950 = vpack.c.b16 %v2902, %v2901
        %v2951 = vpack.c.b16 %v2904, %v2903
        %v2952 = vpack.c.b16 %v2906, %v2905
        %v2953 = vpack.c.b16 %v2908, %v2907
        %v2954 = vpack.c.b16 %v2910, %v2909
        %v2955 = vpack.c.b16 %v2912, %v2911
        %v2956 = vpack.c.b16 %v2914, %v2913
        %v2957 = vpack.c.b16 %v2916, %v2915
        %v2958 = vpack.c.b16 %v2918, %v2917
        %v2959 = vpack.c.b16 %v2920, %v2919
        %v2960 = vpack.c.b16 %v2922, %v2921
        %v2961 = vpack.c.b16 %v2924, %v2923
        %v2962 = vpack.c.b16 %v2926, %v2925
        %v2963 = vpack.c.b16 %v2928, %v2927
        %v2964 = vpack.c.b16 %v2930, %v2929
        %v2965 = vpack.c.b16 %v2932, %v2931
        %v2966 = vpack.c.b16 %v2934, %v2933
        %2999 = vmatprep.subr.bf16.mxu0 0
        %3000 = vmatpush1.bf16.msra.mxu0 %v2942
        %3001 = vmatprep.subr.bf16.mxu0 0
        %3002 = vmatpush1.bf16.msra.mxu0 %v2941
        %3003 = vmatprep.subr.bf16.mxu0 0
        %3004 = vmatpush1.bf16.msra.mxu0 %v2940
        %3005 = vmatprep.subr.bf16.mxu0 0
        %3006 = vmatpush1.bf16.msra.mxu0 %v2939
        %3007 = vmatprep.subr.bf16.mxu0 0
        %3008 = vmatpush1.bf16.msra.mxu0 %v2938
        %3009 = vmatprep.subr.bf16.mxu0 0
        %3010 = vmatpush1.bf16.msra.mxu0 %v2937
        %3011 = vmatprep.subr.bf16.mxu0 0
        %3012 = vmatpush1.bf16.msra.mxu0 %v2936
        %3013 = vmatprep.subr.bf16.mxu0 0
        %3014 = vmatpush1.bf16.msra.mxu0 %v2935
        %3015 = vmatprep.subr.bf16.mxu0 0
        %3016 = vmatpush2.bf16.msra.mxu0 %v2950
        %3017 = vmatprep.subr.bf16.mxu0 0
        %3018 = vmatpush2.bf16.msra.mxu0 %v2949
        %3019 = vmatprep.subr.bf16.mxu0 0
        %3020 = vmatpush2.bf16.msra.mxu0 %v2948
        %3021 = vmatprep.subr.bf16.mxu0 0
        %3022 = vmatpush2.bf16.msra.mxu0 %v2947
        %3023 = vmatprep.subr.bf16.mxu0 0
        %3024 = vmatpush2.bf16.msra.mxu0 %v2946
        %3025 = vmatprep.subr.bf16.mxu0 0
        %3026 = vmatpush2.bf16.msra.mxu0 %v2945
        %3027 = vmatprep.subr.bf16.mxu0 0
        %3028 = vmatpush2.bf16.msra.mxu0 %v2944
        %3029 = vmatprep.subr.bf16.mxu0 0
        %3030 = vmatpush2.bf16.msra.mxu0 %v2943
        %3031 = vmatprep.mubr.bf16.mxu0 %v2740
        %3032 = vmatmul.mubr.bf16.gmra.mxu0 %v2739
        %v3033 = vpop.f32.mrf.mxu0
        %v3034 = vadd.f32 0.0, %v3033
        %v3035 = vpop.f32.mrf.mxu0
        %v3036 = vpop.f32.mrf.mxu0
        %v3037 = vadd.f32 0.0, %v3036
        %v3038 = vpop.f32.mrf.mxu0
        %3039 = vdwg.mxu0
        %3040 = vmatprep.subr.bf16.mxu0 0
        %3041 = vmatpush1.bf16.msra.mxu0 %v2958
        %3042 = vmatprep.subr.bf16.mxu0 0
        %3043 = vmatpush1.bf16.msra.mxu0 %v2957
        %3044 = vmatprep.subr.bf16.mxu0 0
        %3045 = vmatpush1.bf16.msra.mxu0 %v2956
        %3046 = vmatprep.subr.bf16.mxu0 0
        %3047 = vmatpush1.bf16.msra.mxu0 %v2955
        %3048 = vmatprep.subr.bf16.mxu0 0
        %3049 = vmatpush1.bf16.msra.mxu0 %v2954
        %3050 = vmatprep.subr.bf16.mxu0 0
        %3051 = vmatpush1.bf16.msra.mxu0 %v2953
        %3052 = vmatprep.subr.bf16.mxu0 0
        %3053 = vmatpush1.bf16.msra.mxu0 %v2952
        %3054 = vmatprep.subr.bf16.mxu0 0
        %3055 = vmatpush1.bf16.msra.mxu0 %v2951
        %3056 = vmatprep.subr.bf16.mxu0 0
        %3057 = vmatpush2.bf16.msra.mxu0 %v2966
        %3058 = vmatprep.subr.bf16.mxu0 0
        %3059 = vmatpush2.bf16.msra.mxu0 %v2965
        %3060 = vmatprep.subr.bf16.mxu0 0
        %3061 = vmatpush2.bf16.msra.mxu0 %v2964
        %3062 = vmatprep.subr.bf16.mxu0 0
        %3063 = vmatpush2.bf16.msra.mxu0 %v2963
        %3064 = vmatprep.subr.bf16.mxu0 0
        %3065 = vmatpush2.bf16.msra.mxu0 %v2962
        %3066 = vmatprep.subr.bf16.mxu0 0
        %3067 = vmatpush2.bf16.msra.mxu0 %v2961
        %3068 = vmatprep.subr.bf16.mxu0 0
        %3069 = vmatpush2.bf16.msra.mxu0 %v2960
        %3070 = vmatprep.subr.bf16.mxu0 0
        %3071 = vmatpush2.bf16.msra.mxu0 %v2959
        %3072 = vmatprep.mubr.bf16.mxu0 %v2742
        %3073 = vmatmul.mubr.bf16.gmra.mxu0 %v2741
        %v3074 = vpop.f32.mrf.mxu0
        %v3075 = vadd.f32 %v3034, %v3074
        %v3076 = vpop.f32.mrf.mxu0
        %v3077 = vpop.f32.mrf.mxu0
        %v3078 = vadd.f32 %v3037, %v3077
        %v3079 = vpop.f32.mrf.mxu0
        %3080 = vdwg.mxu0
        %v3081 = vpack.c.bf16 %v3078, %v3075
        %v3082 = vld [vmem:[%s1119] sm:$0xff]
        %v3083 = vld [vmem:[%s1119 + $0x8] sm:$0xff]
        %v3084 = vld [vmem:[%s1119 + $0x10] sm:$0xff]
        %v3085 = vld [vmem:[%s1119 + $0x18] sm:$0xff]
        %v3086 = vld [vmem:[%s1128] sm:$0xf]
        %v3088 = vlaneseq
        %v3089 = vshrl.u32 %v3088, 7
        %v3090 = vsub.s32 0, %v3089
        %v3091 = vrot.slane %v3086, %v3090
        %v3092 = vlaneseq
        %v3093 = vshrl.u32 %v3092, 7
        %v3094 = vsub.s32 1, %v3093
        %v3095 = vrot.slane %v3086, %v3094
        %v3096 = vlaneseq
        %v3097 = vshrl.u32 %v3096, 7
        %v3098 = vsub.s32 2, %v3097
        %v3099 = vrot.slane %v3086, %v3098
        %v3100 = vlaneseq
        %v3101 = vshrl.u32 %v3100, 7
        %v3102 = vsub.s32 3, %v3101
        %v3103 = vrot.slane %v3086, %v3102
        %v3112 = vunpack.c.l.b16 %v3082
        %v3113 = vunpack.c.h.b16 %v3082
        %v3114 = vunpack.c.l.b16 %v3083
        %v3115 = vunpack.c.h.b16 %v3083
        %v3116 = vunpack.c.l.b16 %v3084
        %v3117 = vunpack.c.h.b16 %v3084
        %v3118 = vunpack.c.l.b16 %v3085
        %v3119 = vunpack.c.h.b16 %v3085
        %v3120 = vpack.c.b16 %v3116, %v3112
        %v3121 = vpack.c.b16 %v3117, %v3113
        %v3122 = vpack.c.b16 %v3118, %v3114
        %v3123 = vpack.c.b16 %v3119, %v3115
        %vm3128 = vcmask 130048
        %v3130 = vsel %vm3128, %v3081, 0
        %3132 = vmatprep.subr.bf16.mxu0 0
        %3133 = vmatpush1.bf16.msra.mxu0 0
        %3134 = vmatprep.subr.bf16.mxu0 0
        %3135 = vmatpush1.bf16.msra.mxu0 0
        %3136 = vmatprep.subr.bf16.mxu0 0
        %3137 = vmatpush1.bf16.msra.mxu0 0
        %3138 = vmatprep.subr.bf16.mxu0 0
        %3139 = vmatpush1.bf16.msra.mxu0 0
        %3140 = vmatprep.subr.bf16.mxu0 0
        %3141 = vmatpush1.bf16.msra.mxu0 0
        %3142 = vmatprep.subr.bf16.mxu0 0
        %3143 = vmatpush1.bf16.msra.mxu0 0
        %3144 = vmatprep.subr.bf16.mxu0 0
        %3145 = vmatpush1.bf16.msra.mxu0 0
        %3146 = vmatprep.subr.bf16.mxu0 %v3121
        %3147 = vmatpush1.bf16.msra.mxu0 %v3120
        %3148 = vmatprep.subr.bf16.mxu0 0
        %3149 = vmatpush2.bf16.msra.mxu0 0
        %3150 = vmatprep.subr.bf16.mxu0 0
        %3151 = vmatpush2.bf16.msra.mxu0 0
        %3152 = vmatprep.subr.bf16.mxu0 0
        %3153 = vmatpush2.bf16.msra.mxu0 0
        %3154 = vmatprep.subr.bf16.mxu0 0
        %3155 = vmatpush2.bf16.msra.mxu0 0
        %3156 = vmatprep.subr.bf16.mxu0 0
        %3157 = vmatpush2.bf16.msra.mxu0 0
        %3158 = vmatprep.subr.bf16.mxu0 0
        %3159 = vmatpush2.bf16.msra.mxu0 0
        %3160 = vmatprep.subr.bf16.mxu0 0
        %3161 = vmatpush2.bf16.msra.mxu0 0
        %3162 = vmatprep.subr.bf16.mxu0 0
        %3163 = vmatpush2.bf16.msra.mxu0 0
        %3164 = vmatprep.mubr.bf16.mxu0 0
        %3165 = vmatmul.mubr.bf16.gmra.mxu0 %v3130
        %v3166 = vpop.f32.mrf.mxu0
        %v3167 = vadd.f32 %v3091, %v3166
        %v3168 = vpop.f32.mrf.mxu0
        %v3169 = vadd.f32 %v3095, %v3168
        %v3170 = vpop.f32.mrf.mxu0
        %v3171 = vadd.f32 %v3091, %v3170
        %v3172 = vpop.f32.mrf.mxu0
        %v3173 = vadd.f32 %v3095, %v3172
        %3174 = vdwg.mxu0
        %3175 = vmatprep.subr.bf16.mxu0 0
        %3176 = vmatpush1.bf16.msra.mxu0 0
        %3177 = vmatprep.subr.bf16.mxu0 0
        %3178 = vmatpush1.bf16.msra.mxu0 0
        %3179 = vmatprep.subr.bf16.mxu0 0
        %3180 = vmatpush1.bf16.msra.mxu0 0
        %3181 = vmatprep.subr.bf16.mxu0 0
        %3182 = vmatpush1.bf16.msra.mxu0 0
        %3183 = vmatprep.subr.bf16.mxu0 0
        %3184 = vmatpush1.bf16.msra.mxu0 0
        %3185 = vmatprep.subr.bf16.mxu0 0
        %3186 = vmatpush1.bf16.msra.mxu0 0
        %3187 = vmatprep.subr.bf16.mxu0 0
        %3188 = vmatpush1.bf16.msra.mxu0 0
        %3189 = vmatprep.subr.bf16.mxu0 %v3123
        %3190 = vmatpush1.bf16.msra.mxu0 %v3122
        %3191 = vmatprep.subr.bf16.mxu0 0
        %3192 = vmatpush2.bf16.msra.mxu0 0
        %3193 = vmatprep.subr.bf16.mxu0 0
        %3194 = vmatpush2.bf16.msra.mxu0 0
        %3195 = vmatprep.subr.bf16.mxu0 0
        %3196 = vmatpush2.bf16.msra.mxu0 0
        %3197 = vmatprep.subr.bf16.mxu0 0
        %3198 = vmatpush2.bf16.msra.mxu0 0
        %3199 = vmatprep.subr.bf16.mxu0 0
        %3200 = vmatpush2.bf16.msra.mxu0 0
        %3201 = vmatprep.subr.bf16.mxu0 0
        %3202 = vmatpush2.bf16.msra.mxu0 0
        %3203 = vmatprep.subr.bf16.mxu0 0
        %3204 = vmatpush2.bf16.msra.mxu0 0
        %3205 = vmatprep.subr.bf16.mxu0 0
        %3206 = vmatpush2.bf16.msra.mxu0 0
        %3207 = vmatprep.mubr.bf16.mxu0 0
        %3208 = vmatmul.mubr.bf16.gmra.mxu0 %v3130
        %v3209 = vpop.f32.mrf.mxu0
        %v3210 = vadd.f32 %v3099, %v3209
        %v3211 = vpop.f32.mrf.mxu0
        %v3212 = vadd.f32 %v3103, %v3211
        %v3213 = vpop.f32.mrf.mxu0
        %v3214 = vadd.f32 %v3099, %v3213
        %v3215 = vpop.f32.mrf.mxu0
        %v3216 = vadd.f32 %v3103, %v3215
        %3217 = vdwg.mxu0
        %vm3218 = vcmp.gt.f32.partialorder %v3167, 30.0
        %vm3219 = vcmp.gt.f32.partialorder %v3169, 30.0
        %vm3220 = vcmp.gt.f32.partialorder %v3210, 30.0
        %vm3221 = vcmp.gt.f32.partialorder %v3212, 30.0
        %vm3222 = vcmp.gt.f32.partialorder %v3171, 30.0
        %vm3223 = vcmp.gt.f32.partialorder %v3173, 30.0
        %vm3224 = vcmp.gt.f32.partialorder %v3214, 30.0
        %vm3225 = vcmp.gt.f32.partialorder %v3216, 30.0
        %v3226 = vmin.f32 %v3167, 30.0
        %v3227 = vmin.f32 %v3169, 30.0
        %v3228 = vmin.f32 %v3210, 30.0
        %v3229 = vmin.f32 %v3212, 30.0
        %v3230 = vmin.f32 %v3171, 30.0
        %v3231 = vmin.f32 %v3173, 30.0
        %v3232 = vmin.f32 %v3214, 30.0
        %v3233 = vmin.f32 %v3216, 30.0
        %v3234 = vmul.f32 %v3226, 1.442695
        %v3235 = vpow.pop %v3234
        %v3236 = vmul.f32 %v3227, 1.442695
        %v3237 = vpow.pop %v3236
        %v3238 = vmul.f32 %v3228, 1.442695
        %v3239 = vpow.pop %v3238
        %v3240 = vmul.f32 %v3229, 1.442695
        %v3241 = vpow.pop %v3240
        %v3242 = vmul.f32 %v3230, 1.442695
        %v3243 = vpow.pop %v3242
        %v3244 = vmul.f32 %v3231, 1.442695
        %v3245 = vpow.pop %v3244
        %v3246 = vmul.f32 %v3232, 1.442695
        %v3247 = vpow.pop %v3246
        %v3248 = vmul.f32 %v3233, 1.442695
        %v3249 = vpow.pop %v3248
        %v3250 = vadd.f32 %v3235, 1.0
        %v3251 = vlog2.pop %v3250
        %v3252 = vmul.f32 %v3251, 0.6931472
        %v3253 = vmul.f32 -0.5, %v3235
        %v3254 = vadd.f32 %v3253, 1.0
        %v3255 = vmul.f32 %v3254, %v3235
        %v3256 = vand.u32 2147483647, %v3235
        %vm3257 = vcmp.lt.f32.partialorder %v3256, 0.0004427343
        %v3258 = vsel %vm3257, %v3255, %v3252
        %v3259 = vadd.f32 %v3237, 1.0
        %v3260 = vlog2.pop %v3259
        %v3261 = vmul.f32 %v3260, 0.6931472
        %v3262 = vmul.f32 -0.5, %v3237
        %v3263 = vadd.f32 %v3262, 1.0
        %v3264 = vmul.f32 %v3263, %v3237
        %v3265 = vand.u32 2147483647, %v3237
        %vm3266 = vcmp.lt.f32.partialorder %v3265, 0.0004427343
        %v3267 = vsel %vm3266, %v3264, %v3261
        %v3268 = vadd.f32 %v3239, 1.0
        %v3269 = vlog2.pop %v3268
        %v3270 = vmul.f32 %v3269, 0.6931472
        %v3271 = vmul.f32 -0.5, %v3239
        %v3272 = vadd.f32 %v3271, 1.0
        %v3273 = vmul.f32 %v3272, %v3239
        %v3274 = vand.u32 2147483647, %v3239
        %vm3275 = vcmp.lt.f32.partialorder %v3274, 0.0004427343
        %v3276 = vsel %vm3275, %v3273, %v3270
        %v3277 = vadd.f32 %v3241, 1.0
        %v3278 = vlog2.pop %v3277
        %v3279 = vmul.f32 %v3278, 0.6931472
        %v3280 = vmul.f32 -0.5, %v3241
        %v3281 = vadd.f32 %v3280, 1.0
        %v3282 = vmul.f32 %v3281, %v3241
        %v3283 = vand.u32 2147483647, %v3241
        %vm3284 = vcmp.lt.f32.partialorder %v3283, 0.0004427343
        %v3285 = vsel %vm3284, %v3282, %v3279
        %v3286 = vadd.f32 %v3243, 1.0
        %v3287 = vlog2.pop %v3286
        %v3288 = vmul.f32 %v3287, 0.6931472
        %v3289 = vmul.f32 -0.5, %v3243
        %v3290 = vadd.f32 %v3289, 1.0
        %v3291 = vmul.f32 %v3290, %v3243
        %v3292 = vand.u32 2147483647, %v3243
        %vm3293 = vcmp.lt.f32.partialorder %v3292, 0.0004427343
        %v3294 = vsel %vm3293, %v3291, %v3288
        %v3295 = vadd.f32 %v3245, 1.0
        %v3296 = vlog2.pop %v3295
        %v3297 = vmul.f32 %v3296, 0.6931472
        %v3298 = vmul.f32 -0.5, %v3245
        %v3299 = vadd.f32 %v3298, 1.0
        %v3300 = vmul.f32 %v3299, %v3245
        %v3301 = vand.u32 2147483647, %v3245
        %vm3302 = vcmp.lt.f32.partialorder %v3301, 0.0004427343
        %v3303 = vsel %vm3302, %v3300, %v3297
        %v3304 = vadd.f32 %v3247, 1.0
        %v3305 = vlog2.pop %v3304
        %v3306 = vmul.f32 %v3305, 0.6931472
        %v3307 = vmul.f32 -0.5, %v3247
        %v3308 = vadd.f32 %v3307, 1.0
        %v3309 = vmul.f32 %v3308, %v3247
        %v3310 = vand.u32 2147483647, %v3247
        %vm3311 = vcmp.lt.f32.partialorder %v3310, 0.0004427343
        %v3312 = vsel %vm3311, %v3309, %v3306
        %v3313 = vadd.f32 %v3249, 1.0
        %v3314 = vlog2.pop %v3313
        %v3315 = vmul.f32 %v3314, 0.6931472
        %v3316 = vmul.f32 -0.5, %v3249
        %v3317 = vadd.f32 %v3316, 1.0
        %v3318 = vmul.f32 %v3317, %v3249
        %v3319 = vand.u32 2147483647, %v3249
        %vm3320 = vcmp.lt.f32.partialorder %v3319, 0.0004427343
        %v3321 = vsel %vm3320, %v3318, %v3315
        %v3322 = vsel %vm3218, %v3167, %v3258
        %v3323 = vsel %vm3219, %v3169, %v3267
        %v3324 = vsel %vm3220, %v3210, %v3276
        %v3325 = vsel %vm3221, %v3212, %v3285
        %v3326 = vsel %vm3222, %v3171, %v3294
        %v3327 = vsel %vm3223, %v3173, %v3303
        %v3328 = vsel %vm3224, %v3214, %v3312
        %v3329 = vsel %vm3225, %v3216, %v3321
        %v3330 = vld [vmem:[%s1137] sm:$0xff]
        %v3331 = vld [vmem:[%s1137 + $0x8] sm:$0xff]
        %v3332 = vld [vmem:[%s1137 + $0x10] sm:$0xff]
        %v3333 = vld [vmem:[%s1137 + $0x18] sm:$0xff]
        %v3334 = vld [vmem:[%s1137 + $0x20] sm:$0xff]
        %v3335 = vld [vmem:[%s1137 + $0x28] sm:$0xff]
        %v3336 = vld [vmem:[%s1137 + $0x30] sm:$0xff]
        %v3337 = vld [vmem:[%s1137 + $0x38] sm:$0xff]
        %v3338 = vmul.f32 %v3330, 1.442695
        %v3339 = vpow.pop %v3338
        %v3340 = vmul.f32 %v3331, 1.442695
        %v3341 = vpow.pop %v3340
        %v3342 = vmul.f32 %v3332, 1.442695
        %v3343 = vpow.pop %v3342
        %v3344 = vmul.f32 %v3333, 1.442695
        %v3345 = vpow.pop %v3344
        %v3346 = vmul.f32 %v3334, 1.442695
        %v3347 = vpow.pop %v3346
        %v3348 = vmul.f32 %v3335, 1.442695
        %v3349 = vpow.pop %v3348
        %v3350 = vmul.f32 %v3336, 1.442695
        %v3351 = vpow.pop %v3350
        %v3352 = vmul.f32 %v3337, 1.442695
        %v3353 = vpow.pop %v3352
        %v3354 = vsub.f32 0.0, %v3339
        %v3355 = vsub.f32 0.0, %v3341
        %v3356 = vsub.f32 0.0, %v3343
        %v3357 = vsub.f32 0.0, %v3345
        %v3358 = vsub.f32 0.0, %v3347
        %v3359 = vsub.f32 0.0, %v3349
        %v3360 = vsub.f32 0.0, %v3351
        %v3361 = vsub.f32 0.0, %v3353
        %v3370 = vcombine.low %v3322, %v3323
        %v3371 = vcombine.high %v3322, %v3323
        %v3372 = vcombine.low %v3324, %v3325
        %v3373 = vcombine.high %v3324, %v3325
        %v3375 = vunpack.c.l.s4 1966171168
        %v3376 = vunpack.c.0.s8 %v3375
        %v3377 = vlaneseq
        %v3378 = vshrl.u32 %v3377, 7
        %v3379 = vsub.s32 %v3376, %v3378
        %v3380 = vrot.slane %v3370, %v3379
        %v3382 = vunpack.c.l.s4 1966171168
        %v3383 = vunpack.c.0.s8 %v3382
        %v3384 = vlaneseq
        %v3385 = vshrl.u32 %v3384, 7
        %v3386 = vsub.s32 %v3383, %v3385
        %v3387 = vrot.slane %v3371, %v3386
        %v3389 = vunpack.c.l.s4 1966171168
        %v3390 = vunpack.c.0.s8 %v3389
        %v3391 = vlaneseq
        %v3392 = vshrl.u32 %v3391, 7
        %v3393 = vsub.s32 %v3390, %v3392
        %v3394 = vrot.slane %v3372, %v3393
        %v3396 = vunpack.c.l.s4 1966171168
        %v3397 = vunpack.c.0.s8 %v3396
        %v3398 = vlaneseq
        %v3399 = vshrl.u32 %v3398, 7
        %v3400 = vsub.s32 %v3397, %v3399
        %v3401 = vrot.slane %v3373, %v3400
        %v3402 = vcombine.low %v3380, %v3394
        %v3403 = vcombine.high %v3380, %v3394
        %v3404 = vcombine.low %v3387, %v3401
        %v3405 = vcombine.high %v3387, %v3401
        %v3407 = vunpack.c.l.s4 1966171168
        %v3408 = vunpack.c.0.s8 %v3407
        %v3409 = vlaneseq
        %v3410 = vshrl.u32 %v3409, 7
        %v3411 = vsub.s32 %v3408, %v3410
        %v3412 = vrot.slane %v3402, %v3411
        %v3414 = vunpack.c.l.s4 1966171168
        %v3415 = vunpack.c.0.s8 %v3414
        %v3416 = vlaneseq
        %v3417 = vshrl.u32 %v3416, 7
        %v3418 = vsub.s32 %v3415, %v3417
        %v3419 = vrot.slane %v3404, %v3418
        %v3421 = vunpack.c.l.s4 1966171168
        %v3422 = vunpack.c.0.s8 %v3421
        %v3423 = vlaneseq
        %v3424 = vshrl.u32 %v3423, 7
        %v3425 = vsub.s32 %v3422, %v3424
        %v3426 = vrot.slane %v3403, %v3425
        %v3428 = vunpack.c.l.s4 1966171168
        %v3429 = vunpack.c.0.s8 %v3428
        %v3430 = vlaneseq
        %v3431 = vshrl.u32 %v3430, 7
        %v3432 = vsub.s32 %v3429, %v3431
        %v3433 = vrot.slane %v3405, %v3432
        %v3434 = vcombine.high %v3412, %v3412
        %v3435 = vcombine.high %v3419, %v3419
        %v3436 = vcombine.high %v3426, %v3426
        %v3437 = vcombine.high %v3433, %v3433
        %v3438 = vcombine.low %v3326, %v3327
        %v3439 = vcombine.high %v3326, %v3327
        %v3440 = vcombine.low %v3328, %v3329
        %v3441 = vcombine.high %v3328, %v3329
        %v3443 = vunpack.c.l.s4 1966171168
        %v3444 = vunpack.c.0.s8 %v3443
        %v3445 = vlaneseq
        %v3446 = vshrl.u32 %v3445, 7
        %v3447 = vsub.s32 %v3444, %v3446
        %v3448 = vrot.slane %v3438, %v3447
        %v3450 = vunpack.c.l.s4 1966171168
        %v3451 = vunpack.c.0.s8 %v3450
        %v3452 = vlaneseq
        %v3453 = vshrl.u32 %v3452, 7
        %v3454 = vsub.s32 %v3451, %v3453
        %v3455 = vrot.slane %v3439, %v3454
        %v3457 = vunpack.c.l.s4 1966171168
        %v3458 = vunpack.c.0.s8 %v3457
        %v3459 = vlaneseq
        %v3460 = vshrl.u32 %v3459, 7
        %v3461 = vsub.s32 %v3458, %v3460
        %v3462 = vrot.slane %v3440, %v3461
        %v3464 = vunpack.c.l.s4 1966171168
        %v3465 = vunpack.c.0.s8 %v3464
        %v3466 = vlaneseq
        %v3467 = vshrl.u32 %v3466, 7
        %v3468 = vsub.s32 %v3465, %v3467
        %v3469 = vrot.slane %v3441, %v3468
        %v3470 = vcombine.low %v3448, %v3462
        %v3471 = vcombine.high %v3448, %v3462
        %v3472 = vcombine.low %v3455, %v3469
        %v3473 = vcombine.high %v3455, %v3469
        %v3475 = vunpack.c.l.s4 1966171168
        %v3476 = vunpack.c.0.s8 %v3475
        %v3477 = vlaneseq
        %v3478 = vshrl.u32 %v3477, 7
        %v3479 = vsub.s32 %v3476, %v3478
        %v3480 = vrot.slane %v3470, %v3479
        %v3482 = vunpack.c.l.s4 1966171168
        %v3483 = vunpack.c.0.s8 %v3482
        %v3484 = vlaneseq
        %v3485 = vshrl.u32 %v3484, 7
        %v3486 = vsub.s32 %v3483, %v3485
        %v3487 = vrot.slane %v3472, %v3486
        %v3489 = vunpack.c.l.s4 1966171168
        %v3490 = vunpack.c.0.s8 %v3489
        %v3491 = vlaneseq
        %v3492 = vshrl.u32 %v3491, 7
        %v3493 = vsub.s32 %v3490, %v3492
        %v3494 = vrot.slane %v3471, %v3493
        %v3496 = vunpack.c.l.s4 1966171168
        %v3497 = vunpack.c.0.s8 %v3496
        %v3498 = vlaneseq
        %v3499 = vshrl.u32 %v3498, 7
        %v3500 = vsub.s32 %v3497, %v3499
        %v3501 = vrot.slane %v3473, %v3500
        %v3502 = vcombine.high %v3480, %v3480
        %v3503 = vcombine.high %v3487, %v3487
        %v3504 = vcombine.high %v3494, %v3494
        %v3505 = vcombine.high %v3501, %v3501
        %v3506 = vlaneseq
        %v3507 = vshrl.u32 %v3506, 7
        %v3508 = vsub.s32 0, %v3507
        %v3509 = vrot.slane %v3412, %v3508
        %v3510 = vlaneseq
        %v3511 = vshrl.u32 %v3510, 7
        %v3512 = vsub.s32 1, %v3511
        %v3513 = vrot.slane %v3412, %v3512
        %v3514 = vlaneseq
        %v3515 = vshrl.u32 %v3514, 7
        %v3516 = vsub.s32 2, %v3515
        %v3517 = vrot.slane %v3412, %v3516
        %v3518 = vlaneseq
        %v3519 = vshrl.u32 %v3518, 7
        %v3520 = vsub.s32 3, %v3519
        %v3521 = vrot.slane %v3412, %v3520
        %v3522 = vlaneseq
        %v3523 = vshrl.u32 %v3522, 7
        %v3524 = vsub.s32 0, %v3523
        %v3525 = vrot.slane %v3426, %v3524
        %v3526 = vlaneseq
        %v3527 = vshrl.u32 %v3526, 7
        %v3528 = vsub.s32 1, %v3527
        %v3529 = vrot.slane %v3426, %v3528
        %v3530 = vlaneseq
        %v3531 = vshrl.u32 %v3530, 7
        %v3532 = vsub.s32 2, %v3531
        %v3533 = vrot.slane %v3426, %v3532
        %v3534 = vlaneseq
        %v3535 = vshrl.u32 %v3534, 7
        %v3536 = vsub.s32 3, %v3535
        %v3537 = vrot.slane %v3426, %v3536
        %v3538 = vlaneseq
        %v3539 = vshrl.u32 %v3538, 7
        %v3540 = vsub.s32 0, %v3539
        %v3541 = vrot.slane %v3434, %v3540
        %v3542 = vlaneseq
        %v3543 = vshrl.u32 %v3542, 7
        %v3544 = vsub.s32 1, %v3543
        %v3545 = vrot.slane %v3434, %v3544
        %v3546 = vlaneseq
        %v3547 = vshrl.u32 %v3546, 7
        %v3548 = vsub.s32 2, %v3547
        %v3549 = vrot.slane %v3434, %v3548
        %v3550 = vlaneseq
        %v3551 = vshrl.u32 %v3550, 7
        %v3552 = vsub.s32 3, %v3551
        %v3553 = vrot.slane %v3434, %v3552
        %v3554 = vlaneseq
        %v3555 = vshrl.u32 %v3554, 7
        %v3556 = vsub.s32 0, %v3555
        %v3557 = vrot.slane %v3436, %v3556
        %v3558 = vlaneseq
        %v3559 = vshrl.u32 %v3558, 7
        %v3560 = vsub.s32 1, %v3559
        %v3561 = vrot.slane %v3436, %v3560
        %v3562 = vlaneseq
        %v3563 = vshrl.u32 %v3562, 7
        %v3564 = vsub.s32 2, %v3563
        %v3565 = vrot.slane %v3436, %v3564
        %v3566 = vlaneseq
        %v3567 = vshrl.u32 %v3566, 7
        %v3568 = vsub.s32 3, %v3567
        %v3569 = vrot.slane %v3436, %v3568
        %v3570 = vlaneseq
        %v3571 = vshrl.u32 %v3570, 7
        %v3572 = vsub.s32 0, %v3571
        %v3573 = vrot.slane %v3419, %v3572
        %v3574 = vlaneseq
        %v3575 = vshrl.u32 %v3574, 7
        %v3576 = vsub.s32 1, %v3575
        %v3577 = vrot.slane %v3419, %v3576
        %v3578 = vlaneseq
        %v3579 = vshrl.u32 %v3578, 7
        %v3580 = vsub.s32 2, %v3579
        %v3581 = vrot.slane %v3419, %v3580
        %v3582 = vlaneseq
        %v3583 = vshrl.u32 %v3582, 7
        %v3584 = vsub.s32 3, %v3583
        %v3585 = vrot.slane %v3419, %v3584
        %v3586 = vlaneseq
        %v3587 = vshrl.u32 %v3586, 7
        %v3588 = vsub.s32 0, %v3587
        %v3589 = vrot.slane %v3433, %v3588
        %v3590 = vlaneseq
        %v3591 = vshrl.u32 %v3590, 7
        %v3592 = vsub.s32 1, %v3591
        %v3593 = vrot.slane %v3433, %v3592
        %v3594 = vlaneseq
        %v3595 = vshrl.u32 %v3594, 7
        %v3596 = vsub.s32 2, %v3595
        %v3597 = vrot.slane %v3433, %v3596
        %v3598 = vlaneseq
        %v3599 = vshrl.u32 %v3598, 7
        %v3600 = vsub.s32 3, %v3599
        %v3601 = vrot.slane %v3433, %v3600
        %v3602 = vlaneseq
        %v3603 = vshrl.u32 %v3602, 7
        %v3604 = vsub.s32 0, %v3603
        %v3605 = vrot.slane %v3435, %v3604
        %v3606 = vlaneseq
        %v3607 = vshrl.u32 %v3606, 7
        %v3608 = vsub.s32 1, %v3607
        %v3609 = vrot.slane %v3435, %v3608
        %v3610 = vlaneseq
        %v3611 = vshrl.u32 %v3610, 7
        %v3612 = vsub.s32 2, %v3611
        %v3613 = vrot.slane %v3435, %v3612
        %v3614 = vlaneseq
        %v3615 = vshrl.u32 %v3614, 7
        %v3616 = vsub.s32 3, %v3615
        %v3617 = vrot.slane %v3435, %v3616
        %v3618 = vlaneseq
        %v3619 = vshrl.u32 %v3618, 7
        %v3620 = vsub.s32 0, %v3619
        %v3621 = vrot.slane %v3437, %v3620
        %v3622 = vlaneseq
        %v3623 = vshrl.u32 %v3622, 7
        %v3624 = vsub.s32 1, %v3623
        %v3625 = vrot.slane %v3437, %v3624
        %v3626 = vlaneseq
        %v3627 = vshrl.u32 %v3626, 7
        %v3628 = vsub.s32 2, %v3627
        %v3629 = vrot.slane %v3437, %v3628
        %v3630 = vlaneseq
        %v3631 = vshrl.u32 %v3630, 7
        %v3632 = vsub.s32 3, %v3631
        %v3633 = vrot.slane %v3437, %v3632
        %v3634 = vlaneseq
        %v3635 = vshrl.u32 %v3634, 7
        %v3636 = vsub.s32 0, %v3635
        %v3637 = vrot.slane %v3480, %v3636
        %v3638 = vlaneseq
        %v3639 = vshrl.u32 %v3638, 7
        %v3640 = vsub.s32 1, %v3639
        %v3641 = vrot.slane %v3480, %v3640
        %v3642 = vlaneseq
        %v3643 = vshrl.u32 %v3642, 7
        %v3644 = vsub.s32 2, %v3643
        %v3645 = vrot.slane %v3480, %v3644
        %v3646 = vlaneseq
        %v3647 = vshrl.u32 %v3646, 7
        %v3648 = vsub.s32 3, %v3647
        %v3649 = vrot.slane %v3480, %v3648
        %v3650 = vlaneseq
        %v3651 = vshrl.u32 %v3650, 7
        %v3652 = vsub.s32 0, %v3651
        %v3653 = vrot.slane %v3494, %v3652
        %v3654 = vlaneseq
        %v3655 = vshrl.u32 %v3654, 7
        %v3656 = vsub.s32 1, %v3655
        %v3657 = vrot.slane %v3494, %v3656
        %v3658 = vlaneseq
        %v3659 = vshrl.u32 %v3658, 7
        %v3660 = vsub.s32 2, %v3659
        %v3661 = vrot.slane %v3494, %v3660
        %v3662 = vlaneseq
        %v3663 = vshrl.u32 %v3662, 7
        %v3664 = vsub.s32 3, %v3663
        %v3665 = vrot.slane %v3494, %v3664
        %v3666 = vlaneseq
        %v3667 = vshrl.u32 %v3666, 7
        %v3668 = vsub.s32 0, %v3667
        %v3669 = vrot.slane %v3502, %v3668
        %v3670 = vlaneseq
        %v3671 = vshrl.u32 %v3670, 7
        %v3672 = vsub.s32 1, %v3671
        %v3673 = vrot.slane %v3502, %v3672
        %v3674 = vlaneseq
        %v3675 = vshrl.u32 %v3674, 7
        %v3676 = vsub.s32 2, %v3675
        %v3677 = vrot.slane %v3502, %v3676
        %v3678 = vlaneseq
        %v3679 = vshrl.u32 %v3678, 7
        %v3680 = vsub.s32 3, %v3679
        %v3681 = vrot.slane %v3502, %v3680
        %v3682 = vlaneseq
        %v3683 = vshrl.u32 %v3682, 7
        %v3684 = vsub.s32 0, %v3683
        %v3685 = vrot.slane %v3504, %v3684
        %v3686 = vlaneseq
        %v3687 = vshrl.u32 %v3686, 7
        %v3688 = vsub.s32 1, %v3687
        %v3689 = vrot.slane %v3504, %v3688
        %v3690 = vlaneseq
        %v3691 = vshrl.u32 %v3690, 7
        %v3692 = vsub.s32 2, %v3691
        %v3693 = vrot.slane %v3504, %v3692
        %v3694 = vlaneseq
        %v3695 = vshrl.u32 %v3694, 7
        %v3696 = vsub.s32 3, %v3695
        %v3697 = vrot.slane %v3504, %v3696
        %v3698 = vlaneseq
        %v3699 = vshrl.u32 %v3698, 7
        %v3700 = vsub.s32 0, %v3699
        %v3701 = vrot.slane %v3487, %v3700
        %v3702 = vlaneseq
        %v3703 = vshrl.u32 %v3702, 7
        %v3704 = vsub.s32 1, %v3703
        %v3705 = vrot.slane %v3487, %v3704
        %v3706 = vlaneseq
        %v3707 = vshrl.u32 %v3706, 7
        %v3708 = vsub.s32 2, %v3707
        %v3709 = vrot.slane %v3487, %v3708
        %v3710 = vlaneseq
        %v3711 = vshrl.u32 %v3710, 7
        %v3712 = vsub.s32 3, %v3711
        %v3713 = vrot.slane %v3487, %v3712
        %v3714 = vlaneseq
        %v3715 = vshrl.u32 %v3714, 7
        %v3716 = vsub.s32 0, %v3715
        %v3717 = vrot.slane %v3501, %v3716
        %v3718 = vlaneseq
        %v3719 = vshrl.u32 %v3718, 7
        %v3720 = vsub.s32 1, %v3719
        %v3721 = vrot.slane %v3501, %v3720
        %v3722 = vlaneseq
        %v3723 = vshrl.u32 %v3722, 7
        %v3724 = vsub.s32 2, %v3723
        %v3725 = vrot.slane %v3501, %v3724
        %v3726 = vlaneseq
        %v3727 = vshrl.u32 %v3726, 7
        %v3728 = vsub.s32 3, %v3727
        %v3729 = vrot.slane %v3501, %v3728
        %v3730 = vlaneseq
        %v3731 = vshrl.u32 %v3730, 7
        %v3732 = vsub.s32 0, %v3731
        %v3733 = vrot.slane %v3503, %v3732
        %v3734 = vlaneseq
        %v3735 = vshrl.u32 %v3734, 7
        %v3736 = vsub.s32 1, %v3735
        %v3737 = vrot.slane %v3503, %v3736
        %v3738 = vlaneseq
        %v3739 = vshrl.u32 %v3738, 7
        %v3740 = vsub.s32 2, %v3739
        %v3741 = vrot.slane %v3503, %v3740
        %v3742 = vlaneseq
        %v3743 = vshrl.u32 %v3742, 7
        %v3744 = vsub.s32 3, %v3743
        %v3745 = vrot.slane %v3503, %v3744
        %v3746 = vlaneseq
        %v3747 = vshrl.u32 %v3746, 7
        %v3748 = vsub.s32 0, %v3747
        %v3749 = vrot.slane %v3505, %v3748
        %v3750 = vlaneseq
        %v3751 = vshrl.u32 %v3750, 7
        %v3752 = vsub.s32 1, %v3751
        %v3753 = vrot.slane %v3505, %v3752
        %v3754 = vlaneseq
        %v3755 = vshrl.u32 %v3754, 7
        %v3756 = vsub.s32 2, %v3755
        %v3757 = vrot.slane %v3505, %v3756
        %v3758 = vlaneseq
        %v3759 = vshrl.u32 %v3758, 7
        %v3760 = vsub.s32 3, %v3759
        %v3761 = vrot.slane %v3505, %v3760
        %v3826 = vmul.f32 %v3509, %v3354
        %v3827 = vmul.f32 %v3513, %v3355
        %v3828 = vmul.f32 %v3517, %v3356
        %v3829 = vmul.f32 %v3521, %v3357
        %v3830 = vmul.f32 %v3509, %v3358
        %v3831 = vmul.f32 %v3513, %v3359
        %v3832 = vmul.f32 %v3517, %v3360
        %v3833 = vmul.f32 %v3521, %v3361
        %v3834 = vmul.f32 %v3525, %v3354
        %v3835 = vmul.f32 %v3529, %v3355
        %v3836 = vmul.f32 %v3533, %v3356
        %v3837 = vmul.f32 %v3537, %v3357
        %v3838 = vmul.f32 %v3525, %v3358
        %v3839 = vmul.f32 %v3529, %v3359
        %v3840 = vmul.f32 %v3533, %v3360
        %v3841 = vmul.f32 %v3537, %v3361
        %v3842 = vmul.f32 %v3541, %v3354
        %v3843 = vmul.f32 %v3545, %v3355
        %v3844 = vmul.f32 %v3549, %v3356
        %v3845 = vmul.f32 %v3553, %v3357
        %v3846 = vmul.f32 %v3541, %v3358
        %v3847 = vmul.f32 %v3545, %v3359
        %v3848 = vmul.f32 %v3549, %v3360
        %v3849 = vmul.f32 %v3553, %v3361
        %v3850 = vmul.f32 %v3557, %v3354
        %v3851 = vmul.f32 %v3561, %v3355
        %v3852 = vmul.f32 %v3565, %v3356
        %v3853 = vmul.f32 %v3569, %v3357
        %v3854 = vmul.f32 %v3557, %v3358
        %v3855 = vmul.f32 %v3561, %v3359
        %v3856 = vmul.f32 %v3565, %v3360
        %v3857 = vmul.f32 %v3569, %v3361
        %v3858 = vmul.f32 %v3573, %v3354
        %v3859 = vmul.f32 %v3577, %v3355
        %v3860 = vmul.f32 %v3581, %v3356
        %v3861 = vmul.f32 %v3585, %v3357
        %v3862 = vmul.f32 %v3573, %v3358
        %v3863 = vmul.f32 %v3577, %v3359
        %v3864 = vmul.f32 %v3581, %v3360
        %v3865 = vmul.f32 %v3585, %v3361
        %v3866 = vmul.f32 %v3589, %v3354
        %v3867 = vmul.f32 %v3593, %v3355
        %v3868 = vmul.f32 %v3597, %v3356
        %v3869 = vmul.f32 %v3601, %v3357
        %v3870 = vmul.f32 %v3589, %v3358
        %v3871 = vmul.f32 %v3593, %v3359
        %v3872 = vmul.f32 %v3597, %v3360
        %v3873 = vmul.f32 %v3601, %v3361
        %v3874 = vmul.f32 %v3605, %v3354
        %v3875 = vmul.f32 %v3609, %v3355
        %v3876 = vmul.f32 %v3613, %v3356
        %v3877 = vmul.f32 %v3617, %v3357
        %v3878 = vmul.f32 %v3605, %v3358
        %v3879 = vmul.f32 %v3609, %v3359
        %v3880 = vmul.f32 %v3613, %v3360
        %v3881 = vmul.f32 %v3617, %v3361
        %v3882 = vmul.f32 %v3621, %v3354
        %v3883 = vmul.f32 %v3625, %v3355
        %v3884 = vmul.f32 %v3629, %v3356
        %v3885 = vmul.f32 %v3633, %v3357
        %v3886 = vmul.f32 %v3621, %v3358
        %v3887 = vmul.f32 %v3625, %v3359
        %v3888 = vmul.f32 %v3629, %v3360
        %v3889 = vmul.f32 %v3633, %v3361
        %v3890 = vmul.f32 %v3637, %v3354
        %v3891 = vmul.f32 %v3641, %v3355
        %v3892 = vmul.f32 %v3645, %v3356
        %v3893 = vmul.f32 %v3649, %v3357
        %v3894 = vmul.f32 %v3637, %v3358
        %v3895 = vmul.f32 %v3641, %v3359
        %v3896 = vmul.f32 %v3645, %v3360
        %v3897 = vmul.f32 %v3649, %v3361
        %v3898 = vmul.f32 %v3653, %v3354
        %v3899 = vmul.f32 %v3657, %v3355
        %v3900 = vmul.f32 %v3661, %v3356
        %v3901 = vmul.f32 %v3665, %v3357
        %v3902 = vmul.f32 %v3653, %v3358
        %v3903 = vmul.f32 %v3657, %v3359
        %v3904 = vmul.f32 %v3661, %v3360
        %v3905 = vmul.f32 %v3665, %v3361
        %v3906 = vmul.f32 %v3669, %v3354
        %v3907 = vmul.f32 %v3673, %v3355
        %v3908 = vmul.f32 %v3677, %v3356
        %v3909 = vmul.f32 %v3681, %v3357
        %v3910 = vmul.f32 %v3669, %v3358
        %v3911 = vmul.f32 %v3673, %v3359
        %v3912 = vmul.f32 %v3677, %v3360
        %v3913 = vmul.f32 %v3681, %v3361
        %v3914 = vmul.f32 %v3685, %v3354
        %v3915 = vmul.f32 %v3689, %v3355
        %v3916 = vmul.f32 %v3693, %v3356
        %v3917 = vmul.f32 %v3697, %v3357
        %v3918 = vmul.f32 %v3685, %v3358
        %v3919 = vmul.f32 %v3689, %v3359
        %v3920 = vmul.f32 %v3693, %v3360
        %v3921 = vmul.f32 %v3697, %v3361
        %v3922 = vmul.f32 %v3701, %v3354
        %v3923 = vmul.f32 %v3705, %v3355
        %v3924 = vmul.f32 %v3709, %v3356
        %v3925 = vmul.f32 %v3713, %v3357
        %v3926 = vmul.f32 %v3701, %v3358
        %v3927 = vmul.f32 %v3705, %v3359
        %v3928 = vmul.f32 %v3709, %v3360
        %v3929 = vmul.f32 %v3713, %v3361
        %v3930 = vmul.f32 %v3717, %v3354
        %v3931 = vmul.f32 %v3721, %v3355
        %v3932 = vmul.f32 %v3725, %v3356
        %v3933 = vmul.f32 %v3729, %v3357
        %v3934 = vmul.f32 %v3717, %v3358
        %v3935 = vmul.f32 %v3721, %v3359
        %v3936 = vmul.f32 %v3725, %v3360
        %v3937 = vmul.f32 %v3729, %v3361
        %v3938 = vmul.f32 %v3733, %v3354
        %v3939 = vmul.f32 %v3737, %v3355
        %v3940 = vmul.f32 %v3741, %v3356
        %v3941 = vmul.f32 %v3745, %v3357
        %v3942 = vmul.f32 %v3733, %v3358
        %v3943 = vmul.f32 %v3737, %v3359
        %v3944 = vmul.f32 %v3741, %v3360
        %v3945 = vmul.f32 %v3745, %v3361
        %v3946 = vmul.f32 %v3749, %v3354
        %v3947 = vmul.f32 %v3753, %v3355
        %v3948 = vmul.f32 %v3757, %v3356
        %v3949 = vmul.f32 %v3761, %v3357
        %v3950 = vmul.f32 %v3749, %v3358
        %v3951 = vmul.f32 %v3753, %v3359
        %v3952 = vmul.f32 %v3757, %v3360
        %v3953 = vmul.f32 %v3761, %v3361
        %v3954 = vmul.f32 %v3826, 1.442695
        %v3955 = vpow.pop %v3954
        %v3956 = vmul.f32 %v3827, 1.442695
        %v3957 = vpow.pop %v3956
        %v3958 = vmul.f32 %v3828, 1.442695
        %v3959 = vpow.pop %v3958
        %v3960 = vmul.f32 %v3829, 1.442695
        %v3961 = vpow.pop %v3960
        %v3962 = vmul.f32 %v3830, 1.442695
        %v3963 = vpow.pop %v3962
        %v3964 = vmul.f32 %v3831, 1.442695
        %v3965 = vpow.pop %v3964
        %v3966 = vmul.f32 %v3832, 1.442695
        %v3967 = vpow.pop %v3966
        %v3968 = vmul.f32 %v3833, 1.442695
        %v3969 = vpow.pop %v3968
        %v3970 = vmul.f32 %v3834, 1.442695
        %v3971 = vpow.pop %v3970
        %v3972 = vmul.f32 %v3835, 1.442695
        %v3973 = vpow.pop %v3972
        %v3974 = vmul.f32 %v3836, 1.442695
        %v3975 = vpow.pop %v3974
        %v3976 = vmul.f32 %v3837, 1.442695
        %v3977 = vpow.pop %v3976
        %v3978 = vmul.f32 %v3838, 1.442695
        %v3979 = vpow.pop %v3978
        %v3980 = vmul.f32 %v3839, 1.442695
        %v3981 = vpow.pop %v3980
        %v3982 = vmul.f32 %v3840, 1.442695
        %v3983 = vpow.pop %v3982
        %v3984 = vmul.f32 %v3841, 1.442695
        %v3985 = vpow.pop %v3984
        %v3986 = vmul.f32 %v3842, 1.442695
        %v3987 = vpow.pop %v3986
        %v3988 = vmul.f32 %v3843, 1.442695
        %v3989 = vpow.pop %v3988
        %v3990 = vmul.f32 %v3844, 1.442695
        %v3991 = vpow.pop %v3990
        %v3992 = vmul.f32 %v3845, 1.442695
        %v3993 = vpow.pop %v3992
        %v3994 = vmul.f32 %v3846, 1.442695
        %v3995 = vpow.pop %v3994
        %v3996 = vmul.f32 %v3847, 1.442695
        %v3997 = vpow.pop %v3996
        %v3998 = vmul.f32 %v3848, 1.442695
        %v3999 = vpow.pop %v3998
        %v4000 = vmul.f32 %v3849, 1.442695
        %v4001 = vpow.pop %v4000
        %v4002 = vmul.f32 %v3850, 1.442695
        %v4003 = vpow.pop %v4002
        %v4004 = vmul.f32 %v3851, 1.442695
        %v4005 = vpow.pop %v4004
        %v4006 = vmul.f32 %v3852, 1.442695
        %v4007 = vpow.pop %v4006
        %v4008 = vmul.f32 %v3853, 1.442695
        %v4009 = vpow.pop %v4008
        %v4010 = vmul.f32 %v3854, 1.442695
        %v4011 = vpow.pop %v4010
        %v4012 = vmul.f32 %v3855, 1.442695
        %v4013 = vpow.pop %v4012
        %v4014 = vmul.f32 %v3856, 1.442695
        %v4015 = vpow.pop %v4014
        %v4016 = vmul.f32 %v3857, 1.442695
        %v4017 = vpow.pop %v4016
        %v4018 = vmul.f32 %v3858, 1.442695
        %v4019 = vpow.pop %v4018
        %v4020 = vmul.f32 %v3859, 1.442695
        %v4021 = vpow.pop %v4020
        %v4022 = vmul.f32 %v3860, 1.442695
        %v4023 = vpow.pop %v4022
        %v4024 = vmul.f32 %v3861, 1.442695
        %v4025 = vpow.pop %v4024
        %v4026 = vmul.f32 %v3862, 1.442695
        %v4027 = vpow.pop %v4026
        %v4028 = vmul.f32 %v3863, 1.442695
        %v4029 = vpow.pop %v4028
        %v4030 = vmul.f32 %v3864, 1.442695
        %v4031 = vpow.pop %v4030
        %v4032 = vmul.f32 %v3865, 1.442695
        %v4033 = vpow.pop %v4032
        %v4034 = vmul.f32 %v3866, 1.442695
        %v4035 = vpow.pop %v4034
        %v4036 = vmul.f32 %v3867, 1.442695
        %v4037 = vpow.pop %v4036
        %v4038 = vmul.f32 %v3868, 1.442695
        %v4039 = vpow.pop %v4038
        %v4040 = vmul.f32 %v3869, 1.442695
        %v4041 = vpow.pop %v4040
        %v4042 = vmul.f32 %v3870, 1.442695
        %v4043 = vpow.pop %v4042
        %v4044 = vmul.f32 %v3871, 1.442695
        %v4045 = vpow.pop %v4044
        %v4046 = vmul.f32 %v3872, 1.442695
        %v4047 = vpow.pop %v4046
        %v4048 = vmul.f32 %v3873, 1.442695
        %v4049 = vpow.pop %v4048
        %v4050 = vmul.f32 %v3874, 1.442695
        %v4051 = vpow.pop %v4050
        %v4052 = vmul.f32 %v3875, 1.442695
        %v4053 = vpow.pop %v4052
        %v4054 = vmul.f32 %v3876, 1.442695
        %v4055 = vpow.pop %v4054
        %v4056 = vmul.f32 %v3877, 1.442695
        %v4057 = vpow.pop %v4056
        %v4058 = vmul.f32 %v3878, 1.442695
        %v4059 = vpow.pop %v4058
        %v4060 = vmul.f32 %v3879, 1.442695
        %v4061 = vpow.pop %v4060
        %v4062 = vmul.f32 %v3880, 1.442695
        %v4063 = vpow.pop %v4062
        %v4064 = vmul.f32 %v3881, 1.442695
        %v4065 = vpow.pop %v4064
        %v4066 = vmul.f32 %v3882, 1.442695
        %v4067 = vpow.pop %v4066
        %v4068 = vmul.f32 %v3883, 1.442695
        %v4069 = vpow.pop %v4068
        %v4070 = vmul.f32 %v3884, 1.442695
        %v4071 = vpow.pop %v4070
        %v4072 = vmul.f32 %v3885, 1.442695
        %v4073 = vpow.pop %v4072
        %v4074 = vmul.f32 %v3886, 1.442695
        %v4075 = vpow.pop %v4074
        %v4076 = vmul.f32 %v3887, 1.442695
        %v4077 = vpow.pop %v4076
        %v4078 = vmul.f32 %v3888, 1.442695
        %v4079 = vpow.pop %v4078
        %v4080 = vmul.f32 %v3889, 1.442695
        %v4081 = vpow.pop %v4080
        %v4082 = vmul.f32 %v3890, 1.442695
        %v4083 = vpow.pop %v4082
        %v4084 = vmul.f32 %v3891, 1.442695
        %v4085 = vpow.pop %v4084
        %v4086 = vmul.f32 %v3892, 1.442695
        %v4087 = vpow.pop %v4086
        %v4088 = vmul.f32 %v3893, 1.442695
        %v4089 = vpow.pop %v4088
        %v4090 = vmul.f32 %v3894, 1.442695
        %v4091 = vpow.pop %v4090
        %v4092 = vmul.f32 %v3895, 1.442695
        %v4093 = vpow.pop %v4092
        %v4094 = vmul.f32 %v3896, 1.442695
        %v4095 = vpow.pop %v4094
        %v4096 = vmul.f32 %v3897, 1.442695
        %v4097 = vpow.pop %v4096
        %v4098 = vmul.f32 %v3898, 1.442695
        %v4099 = vpow.pop %v4098
        %v4100 = vmul.f32 %v3899, 1.442695
        %v4101 = vpow.pop %v4100
        %v4102 = vmul.f32 %v3900, 1.442695
        %v4103 = vpow.pop %v4102
        %v4104 = vmul.f32 %v3901, 1.442695
        %v4105 = vpow.pop %v4104
        %v4106 = vmul.f32 %v3902, 1.442695
        %v4107 = vpow.pop %v4106
        %v4108 = vmul.f32 %v3903, 1.442695
        %v4109 = vpow.pop %v4108
        %v4110 = vmul.f32 %v3904, 1.442695
        %v4111 = vpow.pop %v4110
        %v4112 = vmul.f32 %v3905, 1.442695
        %v4113 = vpow.pop %v4112
        %v4114 = vmul.f32 %v3906, 1.442695
        %v4115 = vpow.pop %v4114
        %v4116 = vmul.f32 %v3907, 1.442695
        %v4117 = vpow.pop %v4116
        %v4118 = vmul.f32 %v3908, 1.442695
        %v4119 = vpow.pop %v4118
        %v4120 = vmul.f32 %v3909, 1.442695
        %v4121 = vpow.pop %v4120
        %v4122 = vmul.f32 %v3910, 1.442695
        %v4123 = vpow.pop %v4122
        %v4124 = vmul.f32 %v3911, 1.442695
        %v4125 = vpow.pop %v4124
        %v4126 = vmul.f32 %v3912, 1.442695
        %v4127 = vpow.pop %v4126
        %v4128 = vmul.f32 %v3913, 1.442695
        %v4129 = vpow.pop %v4128
        %v4130 = vmul.f32 %v3914, 1.442695
        %v4131 = vpow.pop %v4130
        %v4132 = vmul.f32 %v3915, 1.442695
        %v4133 = vpow.pop %v4132
        %v4134 = vmul.f32 %v3916, 1.442695
        %v4135 = vpow.pop %v4134
        %v4136 = vmul.f32 %v3917, 1.442695
        %v4137 = vpow.pop %v4136
        %v4138 = vmul.f32 %v3918, 1.442695
        %v4139 = vpow.pop %v4138
        %v4140 = vmul.f32 %v3919, 1.442695
        %v4141 = vpow.pop %v4140
        %v4142 = vmul.f32 %v3920, 1.442695
        %v4143 = vpow.pop %v4142
        %v4144 = vmul.f32 %v3921, 1.442695
        %v4145 = vpow.pop %v4144
        %v4146 = vmul.f32 %v3922, 1.442695
        %v4147 = vpow.pop %v4146
        %v4148 = vmul.f32 %v3923, 1.442695
        %v4149 = vpow.pop %v4148
        %v4150 = vmul.f32 %v3924, 1.442695
        %v4151 = vpow.pop %v4150
        %v4152 = vmul.f32 %v3925, 1.442695
        %v4153 = vpow.pop %v4152
        %v4154 = vmul.f32 %v3926, 1.442695
        %v4155 = vpow.pop %v4154
        %v4156 = vmul.f32 %v3927, 1.442695
        %v4157 = vpow.pop %v4156
        %v4158 = vmul.f32 %v3928, 1.442695
        %v4159 = vpow.pop %v4158
        %v4160 = vmul.f32 %v3929, 1.442695
        %v4161 = vpow.pop %v4160
        %v4162 = vmul.f32 %v3930, 1.442695
        %v4163 = vpow.pop %v4162
        %v4164 = vmul.f32 %v3931, 1.442695
        %v4165 = vpow.pop %v4164
        %v4166 = vmul.f32 %v3932, 1.442695
        %v4167 = vpow.pop %v4166
        %v4168 = vmul.f32 %v3933, 1.442695
        %v4169 = vpow.pop %v4168
        %v4170 = vmul.f32 %v3934, 1.442695
        %v4171 = vpow.pop %v4170
        %v4172 = vmul.f32 %v3935, 1.442695
        %v4173 = vpow.pop %v4172
        %v4174 = vmul.f32 %v3936, 1.442695
        %v4175 = vpow.pop %v4174
        %v4176 = vmul.f32 %v3937, 1.442695
        %v4177 = vpow.pop %v4176
        %v4178 = vmul.f32 %v3938, 1.442695
        %v4179 = vpow.pop %v4178
        %v4180 = vmul.f32 %v3939, 1.442695
        %v4181 = vpow.pop %v4180
        %v4182 = vmul.f32 %v3940, 1.442695
        %v4183 = vpow.pop %v4182
        %v4184 = vmul.f32 %v3941, 1.442695
        %v4185 = vpow.pop %v4184
        %v4186 = vmul.f32 %v3942, 1.442695
        %v4187 = vpow.pop %v4186
        %v4188 = vmul.f32 %v3943, 1.442695
        %v4189 = vpow.pop %v4188
        %v4190 = vmul.f32 %v3944, 1.442695
        %v4191 = vpow.pop %v4190
        %v4192 = vmul.f32 %v3945, 1.442695
        %v4193 = vpow.pop %v4192
        %v4194 = vmul.f32 %v3946, 1.442695
        %v4195 = vpow.pop %v4194
        %v4196 = vmul.f32 %v3947, 1.442695
        %v4197 = vpow.pop %v4196
        %v4198 = vmul.f32 %v3948, 1.442695
        %v4199 = vpow.pop %v4198
        %v4200 = vmul.f32 %v3949, 1.442695
        %v4201 = vpow.pop %v4200
        %v4202 = vmul.f32 %v3950, 1.442695
        %v4203 = vpow.pop %v4202
        %v4204 = vmul.f32 %v3951, 1.442695
        %v4205 = vpow.pop %v4204
        %v4206 = vmul.f32 %v3952, 1.442695
        %v4207 = vpow.pop %v4206
        %v4208 = vmul.f32 %v3953, 1.442695
        %v4209 = vpow.pop %v4208
        %v4210 = vmul.f32 %v3322, %v2731
        %v4211 = vmul.f32 %v3323, %v2732
        %v4212 = vmul.f32 %v3324, %v2733
        %v4213 = vmul.f32 %v3325, %v2734
        %v4214 = vmul.f32 %v3326, %v2735
        %v4215 = vmul.f32 %v3327, %v2736
        %v4216 = vmul.f32 %v3328, %v2737
        %v4217 = vmul.f32 %v3329, %v2738
        %v4226 = vcombine.low %v4210, %v4211
        %v4227 = vcombine.high %v4210, %v4211
        %v4228 = vcombine.low %v4212, %v4213
        %v4229 = vcombine.high %v4212, %v4213
        %v4231 = vunpack.c.l.s4 1966171168
        %v4232 = vunpack.c.0.s8 %v4231
        %v4233 = vlaneseq
        %v4234 = vshrl.u32 %v4233, 7
        %v4235 = vsub.s32 %v4232, %v4234
        %v4236 = vrot.slane %v4226, %v4235
        %v4238 = vunpack.c.l.s4 1966171168
        %v4239 = vunpack.c.0.s8 %v4238
        %v4240 = vlaneseq
        %v4241 = vshrl.u32 %v4240, 7
        %v4242 = vsub.s32 %v4239, %v4241
        %v4243 = vrot.slane %v4227, %v4242
        %v4245 = vunpack.c.l.s4 1966171168
        %v4246 = vunpack.c.0.s8 %v4245
        %v4247 = vlaneseq
        %v4248 = vshrl.u32 %v4247, 7
        %v4249 = vsub.s32 %v4246, %v4248
        %v4250 = vrot.slane %v4228, %v4249
        %v4252 = vunpack.c.l.s4 1966171168
        %v4253 = vunpack.c.0.s8 %v4252
        %v4254 = vlaneseq
        %v4255 = vshrl.u32 %v4254, 7
        %v4256 = vsub.s32 %v4253, %v4255
        %v4257 = vrot.slane %v4229, %v4256
        %v4258 = vcombine.low %v4236, %v4250
        %v4259 = vcombine.high %v4236, %v4250
        %v4260 = vcombine.low %v4243, %v4257
        %v4261 = vcombine.high %v4243, %v4257
        %v4263 = vunpack.c.l.s4 1966171168
        %v4264 = vunpack.c.0.s8 %v4263
        %v4265 = vlaneseq
        %v4266 = vshrl.u32 %v4265, 7
        %v4267 = vsub.s32 %v4264, %v4266
        %v4268 = vrot.slane %v4258, %v4267
        %v4270 = vunpack.c.l.s4 1966171168
        %v4271 = vunpack.c.0.s8 %v4270
        %v4272 = vlaneseq
        %v4273 = vshrl.u32 %v4272, 7
        %v4274 = vsub.s32 %v4271, %v4273
        %v4275 = vrot.slane %v4260, %v4274
        %v4277 = vunpack.c.l.s4 1966171168
        %v4278 = vunpack.c.0.s8 %v4277
        %v4279 = vlaneseq
        %v4280 = vshrl.u32 %v4279, 7
        %v4281 = vsub.s32 %v4278, %v4280
        %v4282 = vrot.slane %v4259, %v4281
        %v4284 = vunpack.c.l.s4 1966171168
        %v4285 = vunpack.c.0.s8 %v4284
        %v4286 = vlaneseq
        %v4287 = vshrl.u32 %v4286, 7
        %v4288 = vsub.s32 %v4285, %v4287
        %v4289 = vrot.slane %v4261, %v4288
        %v4290 = vcombine.high %v4268, %v4268
        %v4291 = vcombine.high %v4275, %v4275
        %v4292 = vcombine.high %v4282, %v4282
        %v4293 = vcombine.high %v4289, %v4289
        %v4294 = vcombine.low %v4214, %v4215
        %v4295 = vcombine.high %v4214, %v4215
        %v4296 = vcombine.low %v4216, %v4217
        %v4297 = vcombine.high %v4216, %v4217
        %v4299 = vunpack.c.l.s4 1966171168
        %v4300 = vunpack.c.0.s8 %v4299
        %v4301 = vlaneseq
        %v4302 = vshrl.u32 %v4301, 7
        %v4303 = vsub.s32 %v4300, %v4302
        %v4304 = vrot.slane %v4294, %v4303
        %v4306 = vunpack.c.l.s4 1966171168
        %v4307 = vunpack.c.0.s8 %v4306
        %v4308 = vlaneseq
        %v4309 = vshrl.u32 %v4308, 7
        %v4310 = vsub.s32 %v4307, %v4309
        %v4311 = vrot.slane %v4295, %v4310
        %v4313 = vunpack.c.l.s4 1966171168
        %v4314 = vunpack.c.0.s8 %v4313
        %v4315 = vlaneseq
        %v4316 = vshrl.u32 %v4315, 7
        %v4317 = vsub.s32 %v4314, %v4316
        %v4318 = vrot.slane %v4296, %v4317
        %v4320 = vunpack.c.l.s4 1966171168
        %v4321 = vunpack.c.0.s8 %v4320
        %v4322 = vlaneseq
        %v4323 = vshrl.u32 %v4322, 7
        %v4324 = vsub.s32 %v4321, %v4323
        %v4325 = vrot.slane %v4297, %v4324
        %v4326 = vcombine.low %v4304, %v4318
        %v4327 = vcombine.high %v4304, %v4318
        %v4328 = vcombine.low %v4311, %v4325
        %v4329 = vcombine.high %v4311, %v4325
        %v4331 = vunpack.c.l.s4 1966171168
        %v4332 = vunpack.c.0.s8 %v4331
        %v4333 = vlaneseq
        %v4334 = vshrl.u32 %v4333, 7
        %v4335 = vsub.s32 %v4332, %v4334
        %v4336 = vrot.slane %v4326, %v4335
        %v4338 = vunpack.c.l.s4 1966171168
        %v4339 = vunpack.c.0.s8 %v4338
        %v4340 = vlaneseq
        %v4341 = vshrl.u32 %v4340, 7
        %v4342 = vsub.s32 %v4339, %v4341
        %v4343 = vrot.slane %v4328, %v4342
        %v4345 = vunpack.c.l.s4 1966171168
        %v4346 = vunpack.c.0.s8 %v4345
        %v4347 = vlaneseq
        %v4348 = vshrl.u32 %v4347, 7
        %v4349 = vsub.s32 %v4346, %v4348
        %v4350 = vrot.slane %v4327, %v4349
        %v4352 = vunpack.c.l.s4 1966171168
        %v4353 = vunpack.c.0.s8 %v4352
        %v4354 = vlaneseq
        %v4355 = vshrl.u32 %v4354, 7
        %v4356 = vsub.s32 %v4353, %v4355
        %v4357 = vrot.slane %v4329, %v4356
        %v4358 = vcombine.high %v4336, %v4336
        %v4359 = vcombine.high %v4343, %v4343
        %v4360 = vcombine.high %v4350, %v4350
        %v4361 = vcombine.high %v4357, %v4357
        %v4362 = vlaneseq
        %v4363 = vshrl.u32 %v4362, 7
        %v4364 = vsub.s32 0, %v4363
        %v4365 = vrot.slane %v3075, %v4364
        %s4367 = sor.u32 256, 16
        %4368 = vbcast.lane.b32.xlu0 %v4365, %s4367
        %v4369 = vpop.permute.xlu0 %4368
        %s4371 = sor.u32 256, 24
        %4372 = vbcast.lane.b32.xlu0 %v4365, %s4371
        %v4373 = vpop.permute.xlu0 %4372
        %v4374 = vlaneseq
        %v4375 = vshrl.u32 %v4374, 7
        %v4376 = vsub.s32 1, %v4375
        %v4377 = vrot.slane %v3075, %v4376
        %s4379 = sor.u32 256, 16
        %4380 = vbcast.lane.b32.xlu0 %v4377, %s4379
        %v4381 = vpop.permute.xlu0 %4380
        %s4383 = sor.u32 256, 24
        %4384 = vbcast.lane.b32.xlu0 %v4377, %s4383
        %v4385 = vpop.permute.xlu0 %4384
        %v4386 = vlaneseq
        %v4387 = vshrl.u32 %v4386, 7
        %v4388 = vsub.s32 2, %v4387
        %v4389 = vrot.slane %v3075, %v4388
        %s4391 = sor.u32 256, 16
        %4392 = vbcast.lane.b32.xlu0 %v4389, %s4391
        %v4393 = vpop.permute.xlu0 %4392
        %s4395 = sor.u32 256, 24
        %4396 = vbcast.lane.b32.xlu0 %v4389, %s4395
        %v4397 = vpop.permute.xlu0 %4396
        %v4398 = vlaneseq
        %v4399 = vshrl.u32 %v4398, 7
        %v4400 = vsub.s32 3, %v4399
        %v4401 = vrot.slane %v3075, %v4400
        %s4403 = sor.u32 256, 16
        %4404 = vbcast.lane.b32.xlu0 %v4401, %s4403
        %v4405 = vpop.permute.xlu0 %4404
        %s4407 = sor.u32 256, 24
        %4408 = vbcast.lane.b32.xlu0 %v4401, %s4407
        %v4409 = vpop.permute.xlu0 %4408
        %v4410 = vlaneseq
        %v4411 = vshrl.u32 %v4410, 7
        %v4412 = vsub.s32 4, %v4411
        %v4413 = vrot.slane %v3075, %v4412
        %s4415 = sor.u32 256, 16
        %4416 = vbcast.lane.b32.xlu0 %v4413, %s4415
        %v4417 = vpop.permute.xlu0 %4416
        %s4419 = sor.u32 256, 24
        %4420 = vbcast.lane.b32.xlu0 %v4413, %s4419
        %v4421 = vpop.permute.xlu0 %4420
        %v4422 = vlaneseq
        %v4423 = vshrl.u32 %v4422, 7
        %v4424 = vsub.s32 5, %v4423
        %v4425 = vrot.slane %v3075, %v4424
        %s4427 = sor.u32 256, 16
        %4428 = vbcast.lane.b32.xlu0 %v4425, %s4427
        %v4429 = vpop.permute.xlu0 %4428
        %s4431 = sor.u32 256, 24
        %4432 = vbcast.lane.b32.xlu0 %v4425, %s4431
        %v4433 = vpop.permute.xlu0 %4432
        %v4434 = vlaneseq
        %v4435 = vshrl.u32 %v4434, 7
        %v4436 = vsub.s32 6, %v4435
        %v4437 = vrot.slane %v3075, %v4436
        %s4439 = sor.u32 256, 16
        %4440 = vbcast.lane.b32.xlu0 %v4437, %s4439
        %v4441 = vpop.permute.xlu0 %4440
        %s4443 = sor.u32 256, 24
        %4444 = vbcast.lane.b32.xlu0 %v4437, %s4443
        %v4445 = vpop.permute.xlu0 %4444
        %v4446 = vlaneseq
        %v4447 = vshrl.u32 %v4446, 7
        %v4448 = vsub.s32 7, %v4447
        %v4449 = vrot.slane %v3075, %v4448
        %s4451 = sor.u32 256, 16
        %4452 = vbcast.lane.b32.xlu0 %v4449, %s4451
        %v4453 = vpop.permute.xlu0 %4452
        %s4455 = sor.u32 256, 24
        %4456 = vbcast.lane.b32.xlu0 %v4449, %s4455
        %v4457 = vpop.permute.xlu0 %4456
        %v4458 = vlaneseq
        %v4459 = vshrl.u32 %v4458, 7
        %v4460 = vsub.s32 0, %v4459
        %v4461 = vrot.slane %v3078, %v4460
        %s4463 = sor.u32 256, 16
        %4464 = vbcast.lane.b32.xlu0 %v4461, %s4463
        %v4465 = vpop.permute.xlu0 %4464
        %s4467 = sor.u32 256, 24
        %4468 = vbcast.lane.b32.xlu0 %v4461, %s4467
        %v4469 = vpop.permute.xlu0 %4468
        %v4470 = vlaneseq
        %v4471 = vshrl.u32 %v4470, 7
        %v4472 = vsub.s32 1, %v4471
        %v4473 = vrot.slane %v3078, %v4472
        %s4475 = sor.u32 256, 16
        %4476 = vbcast.lane.b32.xlu0 %v4473, %s4475
        %v4477 = vpop.permute.xlu0 %4476
        %s4479 = sor.u32 256, 24
        %4480 = vbcast.lane.b32.xlu0 %v4473, %s4479
        %v4481 = vpop.permute.xlu0 %4480
        %v4482 = vlaneseq
        %v4483 = vshrl.u32 %v4482, 7
        %v4484 = vsub.s32 2, %v4483
        %v4485 = vrot.slane %v3078, %v4484
        %s4487 = sor.u32 256, 16
        %4488 = vbcast.lane.b32.xlu0 %v4485, %s4487
        %v4489 = vpop.permute.xlu0 %4488
        %s4491 = sor.u32 256, 24
        %4492 = vbcast.lane.b32.xlu0 %v4485, %s4491
        %v4493 = vpop.permute.xlu0 %4492
        %v4494 = vlaneseq
        %v4495 = vshrl.u32 %v4494, 7
        %v4496 = vsub.s32 3, %v4495
        %v4497 = vrot.slane %v3078, %v4496
        %s4499 = sor.u32 256, 16
        %4500 = vbcast.lane.b32.xlu0 %v4497, %s4499
        %v4501 = vpop.permute.xlu0 %4500
        %s4503 = sor.u32 256, 24
        %4504 = vbcast.lane.b32.xlu0 %v4497, %s4503
        %v4505 = vpop.permute.xlu0 %4504
        %v4506 = vlaneseq
        %v4507 = vshrl.u32 %v4506, 7
        %v4508 = vsub.s32 4, %v4507
        %v4509 = vrot.slane %v3078, %v4508
        %s4511 = sor.u32 256, 16
        %4512 = vbcast.lane.b32.xlu0 %v4509, %s4511
        %v4513 = vpop.permute.xlu0 %4512
        %s4515 = sor.u32 256, 24
        %4516 = vbcast.lane.b32.xlu0 %v4509, %s4515
        %v4517 = vpop.permute.xlu0 %4516
        %v4518 = vlaneseq
        %v4519 = vshrl.u32 %v4518, 7
        %v4520 = vsub.s32 5, %v4519
        %v4521 = vrot.slane %v3078, %v4520
        %s4523 = sor.u32 256, 16
        %4524 = vbcast.lane.b32.xlu0 %v4521, %s4523
        %v4525 = vpop.permute.xlu0 %4524
        %s4527 = sor.u32 256, 24
        %4528 = vbcast.lane.b32.xlu0 %v4521, %s4527
        %v4529 = vpop.permute.xlu0 %4528
        %v4530 = vlaneseq
        %v4531 = vshrl.u32 %v4530, 7
        %v4532 = vsub.s32 6, %v4531
        %v4533 = vrot.slane %v3078, %v4532
        %s4535 = sor.u32 256, 16
        %4536 = vbcast.lane.b32.xlu0 %v4533, %s4535
        %v4537 = vpop.permute.xlu0 %4536
        %s4539 = sor.u32 256, 24
        %4540 = vbcast.lane.b32.xlu0 %v4533, %s4539
        %v4541 = vpop.permute.xlu0 %4540
        %v4542 = vlaneseq
        %v4543 = vshrl.u32 %v4542, 7
        %v4544 = vsub.s32 7, %v4543
        %v4545 = vrot.slane %v3078, %v4544
        %s4547 = sor.u32 256, 16
        %4548 = vbcast.lane.b32.xlu0 %v4545, %s4547
        %v4549 = vpop.permute.xlu0 %4548
        %s4551 = sor.u32 256, 24
        %4552 = vbcast.lane.b32.xlu0 %v4545, %s4551
        %v4553 = vpop.permute.xlu0 %4552
        %v4554 = vlaneseq
        %v4555 = vshrl.u32 %v4554, 7
        %v4556 = vsub.s32 0, %v4555
        %v4557 = vrot.slane %v4268, %v4556
        %v4558 = vlaneseq
        %v4559 = vshrl.u32 %v4558, 7
        %v4560 = vsub.s32 1, %v4559
        %v4561 = vrot.slane %v4268, %v4560
        %v4562 = vlaneseq
        %v4563 = vshrl.u32 %v4562, 7
        %v4564 = vsub.s32 2, %v4563
        %v4565 = vrot.slane %v4268, %v4564
        %v4566 = vlaneseq
        %v4567 = vshrl.u32 %v4566, 7
        %v4568 = vsub.s32 3, %v4567
        %v4569 = vrot.slane %v4268, %v4568
        %v4570 = vlaneseq
        %v4571 = vshrl.u32 %v4570, 7
        %v4572 = vsub.s32 0, %v4571
        %v4573 = vrot.slane %v4282, %v4572
        %v4574 = vlaneseq
        %v4575 = vshrl.u32 %v4574, 7
        %v4576 = vsub.s32 1, %v4575
        %v4577 = vrot.slane %v4282, %v4576
        %v4578 = vlaneseq
        %v4579 = vshrl.u32 %v4578, 7
        %v4580 = vsub.s32 2, %v4579
        %v4581 = vrot.slane %v4282, %v4580
        %v4582 = vlaneseq
        %v4583 = vshrl.u32 %v4582, 7
        %v4584 = vsub.s32 3, %v4583
        %v4585 = vrot.slane %v4282, %v4584
        %v4586 = vlaneseq
        %v4587 = vshrl.u32 %v4586, 7
        %v4588 = vsub.s32 0, %v4587
        %v4589 = vrot.slane %v4290, %v4588
        %v4590 = vlaneseq
        %v4591 = vshrl.u32 %v4590, 7
        %v4592 = vsub.s32 1, %v4591
        %v4593 = vrot.slane %v4290, %v4592
        %v4594 = vlaneseq
        %v4595 = vshrl.u32 %v4594, 7
        %v4596 = vsub.s32 2, %v4595
        %v4597 = vrot.slane %v4290, %v4596
        %v4598 = vlaneseq
        %v4599 = vshrl.u32 %v4598, 7
        %v4600 = vsub.s32 3, %v4599
        %v4601 = vrot.slane %v4290, %v4600
        %v4602 = vlaneseq
        %v4603 = vshrl.u32 %v4602, 7
        %v4604 = vsub.s32 0, %v4603
        %v4605 = vrot.slane %v4292, %v4604
        %v4606 = vlaneseq
        %v4607 = vshrl.u32 %v4606, 7
        %v4608 = vsub.s32 1, %v4607
        %v4609 = vrot.slane %v4292, %v4608
        %v4610 = vlaneseq
        %v4611 = vshrl.u32 %v4610, 7
        %v4612 = vsub.s32 2, %v4611
        %v4613 = vrot.slane %v4292, %v4612
        %v4614 = vlaneseq
        %v4615 = vshrl.u32 %v4614, 7
        %v4616 = vsub.s32 3, %v4615
        %v4617 = vrot.slane %v4292, %v4616
        %v4618 = vlaneseq
        %v4619 = vshrl.u32 %v4618, 7
        %v4620 = vsub.s32 0, %v4619
        %v4621 = vrot.slane %v4275, %v4620
        %v4622 = vlaneseq
        %v4623 = vshrl.u32 %v4622, 7
        %v4624 = vsub.s32 1, %v4623
        %v4625 = vrot.slane %v4275, %v4624
        %v4626 = vlaneseq
        %v4627 = vshrl.u32 %v4626, 7
        %v4628 = vsub.s32 2, %v4627
        %v4629 = vrot.slane %v4275, %v4628
        %v4630 = vlaneseq
        %v4631 = vshrl.u32 %v4630, 7
        %v4632 = vsub.s32 3, %v4631
        %v4633 = vrot.slane %v4275, %v4632
        %v4634 = vlaneseq
        %v4635 = vshrl.u32 %v4634, 7
        %v4636 = vsub.s32 0, %v4635
        %v4637 = vrot.slane %v4289, %v4636
        %v4638 = vlaneseq
        %v4639 = vshrl.u32 %v4638, 7
        %v4640 = vsub.s32 1, %v4639
        %v4641 = vrot.slane %v4289, %v4640
        %v4642 = vlaneseq
        %v4643 = vshrl.u32 %v4642, 7
        %v4644 = vsub.s32 2, %v4643
        %v4645 = vrot.slane %v4289, %v4644
        %v4646 = vlaneseq
        %v4647 = vshrl.u32 %v4646, 7
        %v4648 = vsub.s32 3, %v4647
        %v4649 = vrot.slane %v4289, %v4648
        %v4650 = vlaneseq
        %v4651 = vshrl.u32 %v4650, 7
        %v4652 = vsub.s32 0, %v4651
        %v4653 = vrot.slane %v4291, %v4652
        %v4654 = vlaneseq
        %v4655 = vshrl.u32 %v4654, 7
        %v4656 = vsub.s32 1, %v4655
        %v4657 = vrot.slane %v4291, %v4656
        %v4658 = vlaneseq
        %v4659 = vshrl.u32 %v4658, 7
        %v4660 = vsub.s32 2, %v4659
        %v4661 = vrot.slane %v4291, %v4660
        %v4662 = vlaneseq
        %v4663 = vshrl.u32 %v4662, 7
        %v4664 = vsub.s32 3, %v4663
        %v4665 = vrot.slane %v4291, %v4664
        %v4666 = vlaneseq
        %v4667 = vshrl.u32 %v4666, 7
        %v4668 = vsub.s32 0, %v4667
        %v4669 = vrot.slane %v4293, %v4668
        %v4670 = vlaneseq
        %v4671 = vshrl.u32 %v4670, 7
        %v4672 = vsub.s32 1, %v4671
        %v4673 = vrot.slane %v4293, %v4672
        %v4674 = vlaneseq
        %v4675 = vshrl.u32 %v4674, 7
        %v4676 = vsub.s32 2, %v4675
        %v4677 = vrot.slane %v4293, %v4676
        %v4678 = vlaneseq
        %v4679 = vshrl.u32 %v4678, 7
        %v4680 = vsub.s32 3, %v4679
        %v4681 = vrot.slane %v4293, %v4680
        %v4682 = vlaneseq
        %v4683 = vshrl.u32 %v4682, 7
        %v4684 = vsub.s32 0, %v4683
        %v4685 = vrot.slane %v4336, %v4684
        %v4686 = vlaneseq
        %v4687 = vshrl.u32 %v4686, 7
        %v4688 = vsub.s32 1, %v4687
        %v4689 = vrot.slane %v4336, %v4688
        %v4690 = vlaneseq
        %v4691 = vshrl.u32 %v4690, 7
        %v4692 = vsub.s32 2, %v4691
        %v4693 = vrot.slane %v4336, %v4692
        %v4694 = vlaneseq
        %v4695 = vshrl.u32 %v4694, 7
        %v4696 = vsub.s32 3, %v4695
        %v4697 = vrot.slane %v4336, %v4696
        %v4698 = vlaneseq
        %v4699 = vshrl.u32 %v4698, 7
        %v4700 = vsub.s32 0, %v4699
        %v4701 = vrot.slane %v4350, %v4700
        %v4702 = vlaneseq
        %v4703 = vshrl.u32 %v4702, 7
        %v4704 = vsub.s32 1, %v4703
        %v4705 = vrot.slane %v4350, %v4704
        %v4706 = vlaneseq
        %v4707 = vshrl.u32 %v4706, 7
        %v4708 = vsub.s32 2, %v4707
        %v4709 = vrot.slane %v4350, %v4708
        %v4710 = vlaneseq
        %v4711 = vshrl.u32 %v4710, 7
        %v4712 = vsub.s32 3, %v4711
        %v4713 = vrot.slane %v4350, %v4712
        %v4714 = vlaneseq
        %v4715 = vshrl.u32 %v4714, 7
        %v4716 = vsub.s32 0, %v4715
        %v4717 = vrot.slane %v4358, %v4716
        %v4718 = vlaneseq
        %v4719 = vshrl.u32 %v4718, 7
        %v4720 = vsub.s32 1, %v4719
        %v4721 = vrot.slane %v4358, %v4720
        %v4722 = vlaneseq
        %v4723 = vshrl.u32 %v4722, 7
        %v4724 = vsub.s32 2, %v4723
        %v4725 = vrot.slane %v4358, %v4724
        %v4726 = vlaneseq
        %v4727 = vshrl.u32 %v4726, 7
        %v4728 = vsub.s32 3, %v4727
        %v4729 = vrot.slane %v4358, %v4728
        %v4730 = vlaneseq
        %v4731 = vshrl.u32 %v4730, 7
        %v4732 = vsub.s32 0, %v4731
        %v4733 = vrot.slane %v4360, %v4732
        %v4734 = vlaneseq
        %v4735 = vshrl.u32 %v4734, 7
        %v4736 = vsub.s32 1, %v4735
        %v4737 = vrot.slane %v4360, %v4736
        %v4738 = vlaneseq
        %v4739 = vshrl.u32 %v4738, 7
        %v4740 = vsub.s32 2, %v4739
        %v4741 = vrot.slane %v4360, %v4740
        %v4742 = vlaneseq
        %v4743 = vshrl.u32 %v4742, 7
        %v4744 = vsub.s32 3, %v4743
        %v4745 = vrot.slane %v4360, %v4744
        %v4746 = vlaneseq
        %v4747 = vshrl.u32 %v4746, 7
        %v4748 = vsub.s32 0, %v4747
        %v4749 = vrot.slane %v4343, %v4748
        %v4750 = vlaneseq
        %v4751 = vshrl.u32 %v4750, 7
        %v4752 = vsub.s32 1, %v4751
        %v4753 = vrot.slane %v4343, %v4752
        %v4754 = vlaneseq
        %v4755 = vshrl.u32 %v4754, 7
        %v4756 = vsub.s32 2, %v4755
        %v4757 = vrot.slane %v4343, %v4756
        %v4758 = vlaneseq
        %v4759 = vshrl.u32 %v4758, 7
        %v4760 = vsub.s32 3, %v4759
        %v4761 = vrot.slane %v4343, %v4760
        %v4762 = vlaneseq
        %v4763 = vshrl.u32 %v4762, 7
        %v4764 = vsub.s32 0, %v4763
        %v4765 = vrot.slane %v4357, %v4764
        %v4766 = vlaneseq
        %v4767 = vshrl.u32 %v4766, 7
        %v4768 = vsub.s32 1, %v4767
        %v4769 = vrot.slane %v4357, %v4768
        %v4770 = vlaneseq
        %v4771 = vshrl.u32 %v4770, 7
        %v4772 = vsub.s32 2, %v4771
        %v4773 = vrot.slane %v4357, %v4772
        %v4774 = vlaneseq
        %v4775 = vshrl.u32 %v4774, 7
        %v4776 = vsub.s32 3, %v4775
        %v4777 = vrot.slane %v4357, %v4776
        %v4778 = vlaneseq
        %v4779 = vshrl.u32 %v4778, 7
        %v4780 = vsub.s32 0, %v4779
        %v4781 = vrot.slane %v4359, %v4780
        %v4782 = vlaneseq
        %v4783 = vshrl.u32 %v4782, 7
        %v4784 = vsub.s32 1, %v4783
        %v4785 = vrot.slane %v4359, %v4784
        %v4786 = vlaneseq
        %v4787 = vshrl.u32 %v4786, 7
        %v4788 = vsub.s32 2, %v4787
        %v4789 = vrot.slane %v4359, %v4788
        %v4790 = vlaneseq
        %v4791 = vshrl.u32 %v4790, 7
        %v4792 = vsub.s32 3, %v4791
        %v4793 = vrot.slane %v4359, %v4792
        %v4794 = vlaneseq
        %v4795 = vshrl.u32 %v4794, 7
        %v4796 = vsub.s32 0, %v4795
        %v4797 = vrot.slane %v4361, %v4796
        %v4798 = vlaneseq
        %v4799 = vshrl.u32 %v4798, 7
        %v4800 = vsub.s32 1, %v4799
        %v4801 = vrot.slane %v4361, %v4800
        %v4802 = vlaneseq
        %v4803 = vshrl.u32 %v4802, 7
        %v4804 = vsub.s32 2, %v4803
        %v4805 = vrot.slane %v4361, %v4804
        %v4806 = vlaneseq
        %v4807 = vshrl.u32 %v4806, 7
        %v4808 = vsub.s32 3, %v4807
        %v4809 = vrot.slane %v4361, %v4808
        %v4874 = vmul.f32 %v4557, %v4369
        %v4875 = vmul.f32 %v4561, %v4369
        %v4876 = vmul.f32 %v4565, %v4369
        %v4877 = vmul.f32 %v4569, %v4369
        %v4878 = vmul.f32 %v4557, %v4373
        %v4879 = vmul.f32 %v4561, %v4373
        %v4880 = vmul.f32 %v4565, %v4373
        %v4881 = vmul.f32 %v4569, %v4373
        %v4882 = vmul.f32 %v4573, %v4381
        %v4883 = vmul.f32 %v4577, %v4381
        %v4884 = vmul.f32 %v4581, %v4381
        %v4885 = vmul.f32 %v4585, %v4381
        %v4886 = vmul.f32 %v4573, %v4385
        %v4887 = vmul.f32 %v4577, %v4385
        %v4888 = vmul.f32 %v4581, %v4385
        %v4889 = vmul.f32 %v4585, %v4385
        %v4890 = vmul.f32 %v4589, %v4393
        %v4891 = vmul.f32 %v4593, %v4393
        %v4892 = vmul.f32 %v4597, %v4393
        %v4893 = vmul.f32 %v4601, %v4393
        %v4894 = vmul.f32 %v4589, %v4397
        %v4895 = vmul.f32 %v4593, %v4397
        %v4896 = vmul.f32 %v4597, %v4397
        %v4897 = vmul.f32 %v4601, %v4397
        %v4898 = vmul.f32 %v4605, %v4405
        %v4899 = vmul.f32 %v4609, %v4405
        %v4900 = vmul.f32 %v4613, %v4405
        %v4901 = vmul.f32 %v4617, %v4405
        %v4902 = vmul.f32 %v4605, %v4409
        %v4903 = vmul.f32 %v4609, %v4409
        %v4904 = vmul.f32 %v4613, %v4409
        %v4905 = vmul.f32 %v4617, %v4409
        %v4906 = vmul.f32 %v4621, %v4417
        %v4907 = vmul.f32 %v4625, %v4417
        %v4908 = vmul.f32 %v4629, %v4417
        %v4909 = vmul.f32 %v4633, %v4417
        %v4910 = vmul.f32 %v4621, %v4421
        %v4911 = vmul.f32 %v4625, %v4421
        %v4912 = vmul.f32 %v4629, %v4421
        %v4913 = vmul.f32 %v4633, %v4421
        %v4914 = vmul.f32 %v4637, %v4429
        %v4915 = vmul.f32 %v4641, %v4429
        %v4916 = vmul.f32 %v4645, %v4429
        %v4917 = vmul.f32 %v4649, %v4429
        %v4918 = vmul.f32 %v4637, %v4433
        %v4919 = vmul.f32 %v4641, %v4433
        %v4920 = vmul.f32 %v4645, %v4433
        %v4921 = vmul.f32 %v4649, %v4433
        %v4922 = vmul.f32 %v4653, %v4441
        %v4923 = vmul.f32 %v4657, %v4441
        %v4924 = vmul.f32 %v4661, %v4441
        %v4925 = vmul.f32 %v4665, %v4441
        %v4926 = vmul.f32 %v4653, %v4445
        %v4927 = vmul.f32 %v4657, %v4445
        %v4928 = vmul.f32 %v4661, %v4445
        %v4929 = vmul.f32 %v4665, %v4445
        %v4930 = vmul.f32 %v4669, %v4453
        %v4931 = vmul.f32 %v4673, %v4453
        %v4932 = vmul.f32 %v4677, %v4453
        %v4933 = vmul.f32 %v4681, %v4453
        %v4934 = vmul.f32 %v4669, %v4457
        %v4935 = vmul.f32 %v4673, %v4457
        %v4936 = vmul.f32 %v4677, %v4457
        %v4937 = vmul.f32 %v4681, %v4457
        %v4938 = vmul.f32 %v4685, %v4465
        %v4939 = vmul.f32 %v4689, %v4465
        %v4940 = vmul.f32 %v4693, %v4465
        %v4941 = vmul.f32 %v4697, %v4465
        %v4942 = vmul.f32 %v4685, %v4469
        %v4943 = vmul.f32 %v4689, %v4469
        %v4944 = vmul.f32 %v4693, %v4469
        %v4945 = vmul.f32 %v4697, %v4469
        %v4946 = vmul.f32 %v4701, %v4477
        %v4947 = vmul.f32 %v4705, %v4477
        %v4948 = vmul.f32 %v4709, %v4477
        %v4949 = vmul.f32 %v4713, %v4477
        %v4950 = vmul.f32 %v4701, %v4481
        %v4951 = vmul.f32 %v4705, %v4481
        %v4952 = vmul.f32 %v4709, %v4481
        %v4953 = vmul.f32 %v4713, %v4481
        %v4954 = vmul.f32 %v4717, %v4489
        %v4955 = vmul.f32 %v4721, %v4489
        %v4956 = vmul.f32 %v4725, %v4489
        %v4957 = vmul.f32 %v4729, %v4489
        %v4958 = vmul.f32 %v4717, %v4493
        %v4959 = vmul.f32 %v4721, %v4493
        %v4960 = vmul.f32 %v4725, %v4493
        %v4961 = vmul.f32 %v4729, %v4493
        %v4962 = vmul.f32 %v4733, %v4501
        %v4963 = vmul.f32 %v4737, %v4501
        %v4964 = vmul.f32 %v4741, %v4501
        %v4965 = vmul.f32 %v4745, %v4501
        %v4966 = vmul.f32 %v4733, %v4505
        %v4967 = vmul.f32 %v4737, %v4505
        %v4968 = vmul.f32 %v4741, %v4505
        %v4969 = vmul.f32 %v4745, %v4505
        %v4970 = vmul.f32 %v4749, %v4513
        %v4971 = vmul.f32 %v4753, %v4513
        %v4972 = vmul.f32 %v4757, %v4513
        %v4973 = vmul.f32 %v4761, %v4513
        %v4974 = vmul.f32 %v4749, %v4517
        %v4975 = vmul.f32 %v4753, %v4517
        %v4976 = vmul.f32 %v4757, %v4517
        %v4977 = vmul.f32 %v4761, %v4517
        %v4978 = vmul.f32 %v4765, %v4525
        %v4979 = vmul.f32 %v4769, %v4525
        %v4980 = vmul.f32 %v4773, %v4525
        %v4981 = vmul.f32 %v4777, %v4525
        %v4982 = vmul.f32 %v4765, %v4529
        %v4983 = vmul.f32 %v4769, %v4529
        %v4984 = vmul.f32 %v4773, %v4529
        %v4985 = vmul.f32 %v4777, %v4529
        %v4986 = vmul.f32 %v4781, %v4537
        %v4987 = vmul.f32 %v4785, %v4537
        %v4988 = vmul.f32 %v4789, %v4537
        %v4989 = vmul.f32 %v4793, %v4537
        %v4990 = vmul.f32 %v4781, %v4541
        %v4991 = vmul.f32 %v4785, %v4541
        %v4992 = vmul.f32 %v4789, %v4541
        %v4993 = vmul.f32 %v4793, %v4541
        %v4994 = vmul.f32 %v4797, %v4549
        %v4995 = vmul.f32 %v4801, %v4549
        %v4996 = vmul.f32 %v4805, %v4549
        %v4997 = vmul.f32 %v4809, %v4549
        %v4998 = vmul.f32 %v4797, %v4553
        %v4999 = vmul.f32 %v4801, %v4553
        %v5000 = vmul.f32 %v4805, %v4553
        %v5001 = vmul.f32 %v4809, %v4553
        %v5002 = vmul.f32 %v3955, 0.0
        %v5003 = vmul.f32 %v3957, 0.0
        %v5004 = vmul.f32 %v3959, 0.0
        %v5005 = vmul.f32 %v3961, 0.0
        %v5006 = vmul.f32 %v3963, 0.0
        %v5007 = vmul.f32 %v3965, 0.0
        %v5008 = vmul.f32 %v3967, 0.0
        %v5009 = vmul.f32 %v3969, 0.0
        %v5010 = vmul.f32 %v4083, 0.0
        %v5011 = vmul.f32 %v4085, 0.0
        %v5012 = vmul.f32 %v4087, 0.0
        %v5013 = vmul.f32 %v4089, 0.0
        %v5014 = vmul.f32 %v4091, 0.0
        %v5015 = vmul.f32 %v4093, 0.0
        %v5016 = vmul.f32 %v4095, 0.0
        %v5017 = vmul.f32 %v4097, 0.0
        %v5018 = vadd.f32 %v5002, %v4874
        %v5019 = vadd.f32 %v5003, %v4875
        %v5020 = vadd.f32 %v5004, %v4876
        %v5021 = vadd.f32 %v5005, %v4877
        %v5022 = vadd.f32 %v5006, %v4878
        %v5023 = vadd.f32 %v5007, %v4879
        %v5024 = vadd.f32 %v5008, %v4880
        %v5025 = vadd.f32 %v5009, %v4881
        %v5026 = vadd.f32 %v5010, %v4938
        %v5027 = vadd.f32 %v5011, %v4939
        %v5028 = vadd.f32 %v5012, %v4940
        %v5029 = vadd.f32 %v5013, %v4941
        %v5030 = vadd.f32 %v5014, %v4942
        %v5031 = vadd.f32 %v5015, %v4943
        %v5032 = vadd.f32 %v5016, %v4944
        %v5033 = vadd.f32 %v5017, %v4945
        %5034 = vst [vmem:[#allocation3] sm:$0xff] %v5018
        %5035 = vst [vmem:[#allocation3 + $0x8] sm:$0xff] %v5019
        %5036 = vst [vmem:[#allocation3 + $0x10] sm:$0xff] %v5020
        %5037 = vst [vmem:[#allocation3 + $0x18] sm:$0xff] %v5021
        %5038 = vst [vmem:[#allocation3 + $0x20] sm:$0xff] %v5022
        %5039 = vst [vmem:[#allocation3 + $0x28] sm:$0xff] %v5023
        %5040 = vst [vmem:[#allocation3 + $0x30] sm:$0xff] %v5024
        %5041 = vst [vmem:[#allocation3 + $0x38] sm:$0xff] %v5025
        %5042 = vst [vmem:[#allocation3 + $0x200] sm:$0xff] %v5026
        %5043 = vst [vmem:[#allocation3 + $0x208] sm:$0xff] %v5027
        %5044 = vst [vmem:[#allocation3 + $0x210] sm:$0xff] %v5028
        %5045 = vst [vmem:[#allocation3 + $0x218] sm:$0xff] %v5029
        %5046 = vst [vmem:[#allocation3 + $0x220] sm:$0xff] %v5030
        %5047 = vst [vmem:[#allocation3 + $0x228] sm:$0xff] %v5031
        %5048 = vst [vmem:[#allocation3 + $0x230] sm:$0xff] %v5032
        %5049 = vst [vmem:[#allocation3 + $0x238] sm:$0xff] %v5033
        %v5050 = vmul.f32 %v3971, %v5018
        %v5051 = vmul.f32 %v3973, %v5019
        %v5052 = vmul.f32 %v3975, %v5020
        %v5053 = vmul.f32 %v3977, %v5021
        %v5054 = vmul.f32 %v3979, %v5022
        %v5055 = vmul.f32 %v3981, %v5023
        %v5056 = vmul.f32 %v3983, %v5024
        %v5057 = vmul.f32 %v3985, %v5025
        %v5058 = vmul.f32 %v4099, %v5026
        %v5059 = vmul.f32 %v4101, %v5027
        %v5060 = vmul.f32 %v4103, %v5028
        %v5061 = vmul.f32 %v4105, %v5029
        %v5062 = vmul.f32 %v4107, %v5030
        %v5063 = vmul.f32 %v4109, %v5031
        %v5064 = vmul.f32 %v4111, %v5032
        %v5065 = vmul.f32 %v4113, %v5033
        %v5066 = vadd.f32 %v5050, %v4882
        %v5067 = vadd.f32 %v5051, %v4883
        %v5068 = vadd.f32 %v5052, %v4884
        %v5069 = vadd.f32 %v5053, %v4885
        %v5070 = vadd.f32 %v5054, %v4886
        %v5071 = vadd.f32 %v5055, %v4887
        %v5072 = vadd.f32 %v5056, %v4888
        %v5073 = vadd.f32 %v5057, %v4889
        %v5074 = vadd.f32 %v5058, %v4946
        %v5075 = vadd.f32 %v5059, %v4947
        %v5076 = vadd.f32 %v5060, %v4948
        %v5077 = vadd.f32 %v5061, %v4949
        %v5078 = vadd.f32 %v5062, %v4950
        %v5079 = vadd.f32 %v5063, %v4951
        %v5080 = vadd.f32 %v5064, %v4952
        %v5081 = vadd.f32 %v5065, %v4953
        %s5082 = scalar_lea.vmem [#allocation3], 64
        %5083 = vst [vmem:[%s5082] sm:$0xff] %v5066
        %5084 = vst [vmem:[%s5082 + $0x8] sm:$0xff] %v5067
        %5085 = vst [vmem:[%s5082 + $0x10] sm:$0xff] %v5068
        %5086 = vst [vmem:[%s5082 + $0x18] sm:$0xff] %v5069
        %5087 = vst [vmem:[%s5082 + $0x20] sm:$0xff] %v5070
        %5088 = vst [vmem:[%s5082 + $0x28] sm:$0xff] %v5071
        %5089 = vst [vmem:[%s5082 + $0x30] sm:$0xff] %v5072
        %5090 = vst [vmem:[%s5082 + $0x38] sm:$0xff] %v5073
        %5091 = vst [vmem:[%s5082 + $0x200] sm:$0xff] %v5074
        %5092 = vst [vmem:[%s5082 + $0x208] sm:$0xff] %v5075
        %5093 = vst [vmem:[%s5082 + $0x210] sm:$0xff] %v5076
        %5094 = vst [vmem:[%s5082 + $0x218] sm:$0xff] %v5077
        %5095 = vst [vmem:[%s5082 + $0x220] sm:$0xff] %v5078
        %5096 = vst [vmem:[%s5082 + $0x228] sm:$0xff] %v5079
        %5097 = vst [vmem:[%s5082 + $0x230] sm:$0xff] %v5080
        %5098 = vst [vmem:[%s5082 + $0x238] sm:$0xff] %v5081
        %v5099 = vmul.f32 %v3987, %v5066
        %v5100 = vmul.f32 %v3989, %v5067
        %v5101 = vmul.f32 %v3991, %v5068
        %v5102 = vmul.f32 %v3993, %v5069
        %v5103 = vmul.f32 %v3995, %v5070
        %v5104 = vmul.f32 %v3997, %v5071
        %v5105 = vmul.f32 %v3999, %v5072
        %v5106 = vmul.f32 %v4001, %v5073
        %v5107 = vmul.f32 %v4115, %v5074
        %v5108 = vmul.f32 %v4117, %v5075
        %v5109 = vmul.f32 %v4119, %v5076
        %v5110 = vmul.f32 %v4121, %v5077
        %v5111 = vmul.f32 %v4123, %v5078
        %v5112 = vmul.f32 %v4125, %v5079
        %v5113 = vmul.f32 %v4127, %v5080
        %v5114 = vmul.f32 %v4129, %v5081
        %v5115 = vadd.f32 %v5099, %v4890
        %v5116 = vadd.f32 %v5100, %v4891
        %v5117 = vadd.f32 %v5101, %v4892
        %v5118 = vadd.f32 %v5102, %v4893
        %v5119 = vadd.f32 %v5103, %v4894
        %v5120 = vadd.f32 %v5104, %v4895
        %v5121 = vadd.f32 %v5105, %v4896
        %v5122 = vadd.f32 %v5106, %v4897
        %v5123 = vadd.f32 %v5107, %v4954
        %v5124 = vadd.f32 %v5108, %v4955
        %v5125 = vadd.f32 %v5109, %v4956
        %v5126 = vadd.f32 %v5110, %v4957
        %v5127 = vadd.f32 %v5111, %v4958
        %v5128 = vadd.f32 %v5112, %v4959
        %v5129 = vadd.f32 %v5113, %v4960
        %v5130 = vadd.f32 %v5114, %v4961
        %s5131 = scalar_lea.vmem [#allocation3], 128
        %5132 = vst [vmem:[%s5131] sm:$0xff] %v5115
        %5133 = vst [vmem:[%s5131 + $0x8] sm:$0xff] %v5116
        %5134 = vst [vmem:[%s5131 + $0x10] sm:$0xff] %v5117
        %5135 = vst [vmem:[%s5131 + $0x18] sm:$0xff] %v5118
        %5136 = vst [vmem:[%s5131 + $0x20] sm:$0xff] %v5119
        %5137 = vst [vmem:[%s5131 + $0x28] sm:$0xff] %v5120
        %5138 = vst [vmem:[%s5131 + $0x30] sm:$0xff] %v5121
        %5139 = vst [vmem:[%s5131 + $0x38] sm:$0xff] %v5122
        %5140 = vst [vmem:[%s5131 + $0x200] sm:$0xff] %v5123
        %5141 = vst [vmem:[%s5131 + $0x208] sm:$0xff] %v5124
        %5142 = vst [vmem:[%s5131 + $0x210] sm:$0xff] %v5125
        %5143 = vst [vmem:[%s5131 + $0x218] sm:$0xff] %v5126
        %5144 = vst [vmem:[%s5131 + $0x220] sm:$0xff] %v5127
        %5145 = vst [vmem:[%s5131 + $0x228] sm:$0xff] %v5128
        %5146 = vst [vmem:[%s5131 + $0x230] sm:$0xff] %v5129
        %5147 = vst [vmem:[%s5131 + $0x238] sm:$0xff] %v5130
        %v5148 = vmul.f32 %v4003, %v5115
        %v5149 = vmul.f32 %v4005, %v5116
        %v5150 = vmul.f32 %v4007, %v5117
        %v5151 = vmul.f32 %v4009, %v5118
        %v5152 = vmul.f32 %v4011, %v5119
        %v5153 = vmul.f32 %v4013, %v5120
        %v5154 = vmul.f32 %v4015, %v5121
        %v5155 = vmul.f32 %v4017, %v5122
        %v5156 = vmul.f32 %v4131, %v5123
        %v5157 = vmul.f32 %v4133, %v5124
        %v5158 = vmul.f32 %v4135, %v5125
        %v5159 = vmul.f32 %v4137, %v5126
        %v5160 = vmul.f32 %v4139, %v5127
        %v5161 = vmul.f32 %v4141, %v5128
        %v5162 = vmul.f32 %v4143, %v5129
        %v5163 = vmul.f32 %v4145, %v5130
        %v5164 = vadd.f32 %v5148, %v4898
        %v5165 = vadd.f32 %v5149, %v4899
        %v5166 = vadd.f32 %v5150, %v4900
        %v5167 = vadd.f32 %v5151, %v4901
        %v5168 = vadd.f32 %v5152, %v4902
        %v5169 = vadd.f32 %v5153, %v4903
        %v5170 = vadd.f32 %v5154, %v4904
        %v5171 = vadd.f32 %v5155, %v4905
        %v5172 = vadd.f32 %v5156, %v4962
        %v5173 = vadd.f32 %v5157, %v4963
        %v5174 = vadd.f32 %v5158, %v4964
        %v5175 = vadd.f32 %v5159, %v4965
        %v5176 = vadd.f32 %v5160, %v4966
        %v5177 = vadd.f32 %v5161, %v4967
        %v5178 = vadd.f32 %v5162, %v4968
        %v5179 = vadd.f32 %v5163, %v4969
        %s5180 = scalar_lea.vmem [#allocation3], 192
        %5181 = vst [vmem:[%s5180] sm:$0xff] %v5164
        %5182 = vst [vmem:[%s5180 + $0x8] sm:$0xff] %v5165
        %5183 = vst [vmem:[%s5180 + $0x10] sm:$0xff] %v5166
        %5184 = vst [vmem:[%s5180 + $0x18] sm:$0xff] %v5167
        %5185 = vst [vmem:[%s5180 + $0x20] sm:$0xff] %v5168
        %5186 = vst [vmem:[%s5180 + $0x28] sm:$0xff] %v5169
        %5187 = vst [vmem:[%s5180 + $0x30] sm:$0xff] %v5170
        %5188 = vst [vmem:[%s5180 + $0x38] sm:$0xff] %v5171
        %5189 = vst [vmem:[%s5180 + $0x200] sm:$0xff] %v5172
        %5190 = vst [vmem:[%s5180 + $0x208] sm:$0xff] %v5173
        %5191 = vst [vmem:[%s5180 + $0x210] sm:$0xff] %v5174
        %5192 = vst [vmem:[%s5180 + $0x218] sm:$0xff] %v5175
        %5193 = vst [vmem:[%s5180 + $0x220] sm:$0xff] %v5176
        %5194 = vst [vmem:[%s5180 + $0x228] sm:$0xff] %v5177
        %5195 = vst [vmem:[%s5180 + $0x230] sm:$0xff] %v5178
        %5196 = vst [vmem:[%s5180 + $0x238] sm:$0xff] %v5179
        %v5197 = vmul.f32 %v4019, %v5164
        %v5198 = vmul.f32 %v4021, %v5165
        %v5199 = vmul.f32 %v4023, %v5166
        %v5200 = vmul.f32 %v4025, %v5167
        %v5201 = vmul.f32 %v4027, %v5168
        %v5202 = vmul.f32 %v4029, %v5169
        %v5203 = vmul.f32 %v4031, %v5170
        %v5204 = vmul.f32 %v4033, %v5171
        %v5205 = vmul.f32 %v4147, %v5172
        %v5206 = vmul.f32 %v4149, %v5173
        %v5207 = vmul.f32 %v4151, %v5174
        %v5208 = vmul.f32 %v4153, %v5175
        %v5209 = vmul.f32 %v4155, %v5176
        %v5210 = vmul.f32 %v4157, %v5177
        %v5211 = vmul.f32 %v4159, %v5178
        %v5212 = vmul.f32 %v4161, %v5179
        %v5213 = vadd.f32 %v5197, %v4906
        %v5214 = vadd.f32 %v5198, %v4907
        %v5215 = vadd.f32 %v5199, %v4908
        %v5216 = vadd.f32 %v5200, %v4909
        %v5217 = vadd.f32 %v5201, %v4910
        %v5218 = vadd.f32 %v5202, %v4911
        %v5219 = vadd.f32 %v5203, %v4912
        %v5220 = vadd.f32 %v5204, %v4913
        %v5221 = vadd.f32 %v5205, %v4970
        %v5222 = vadd.f32 %v5206, %v4971
        %v5223 = vadd.f32 %v5207, %v4972
        %v5224 = vadd.f32 %v5208, %v4973
        %v5225 = vadd.f32 %v5209, %v4974
        %v5226 = vadd.f32 %v5210, %v4975
        %v5227 = vadd.f32 %v5211, %v4976
        %v5228 = vadd.f32 %v5212, %v4977
        %s5229 = scalar_lea.vmem [#allocation3], 256
        %5230 = vst [vmem:[%s5229] sm:$0xff] %v5213
        %5231 = vst [vmem:[%s5229 + $0x8] sm:$0xff] %v5214
        %5232 = vst [vmem:[%s5229 + $0x10] sm:$0xff] %v5215
        %5233 = vst [vmem:[%s5229 + $0x18] sm:$0xff] %v5216
        %5234 = vst [vmem:[%s5229 + $0x20] sm:$0xff] %v5217
        %5235 = vst [vmem:[%s5229 + $0x28] sm:$0xff] %v5218
        %5236 = vst [vmem:[%s5229 + $0x30] sm:$0xff] %v5219
        %5237 = vst [vmem:[%s5229 + $0x38] sm:$0xff] %v5220
        %5238 = vst [vmem:[%s5229 + $0x200] sm:$0xff] %v5221
        %5239 = vst [vmem:[%s5229 + $0x208] sm:$0xff] %v5222
        %5240 = vst [vmem:[%s5229 + $0x210] sm:$0xff] %v5223
        %5241 = vst [vmem:[%s5229 + $0x218] sm:$0xff] %v5224
        %5242 = vst [vmem:[%s5229 + $0x220] sm:$0xff] %v5225
        %5243 = vst [vmem:[%s5229 + $0x228] sm:$0xff] %v5226
        %5244 = vst [vmem:[%s5229 + $0x230] sm:$0xff] %v5227
        %5245 = vst [vmem:[%s5229 + $0x238] sm:$0xff] %v5228
        %v5246 = vmul.f32 %v4035, %v5213
        %v5247 = vmul.f32 %v4037, %v5214
        %v5248 = vmul.f32 %v4039, %v5215
        %v5249 = vmul.f32 %v4041, %v5216
        %v5250 = vmul.f32 %v4043, %v5217
        %v5251 = vmul.f32 %v4045, %v5218
        %v5252 = vmul.f32 %v4047, %v5219
        %v5253 = vmul.f32 %v4049, %v5220
        %v5254 = vmul.f32 %v4163, %v5221
        %v5255 = vmul.f32 %v4165, %v5222
        %v5256 = vmul.f32 %v4167, %v5223
        %v5257 = vmul.f32 %v4169, %v5224
        %v5258 = vmul.f32 %v4171, %v5225
        %v5259 = vmul.f32 %v4173, %v5226
        %v5260 = vmul.f32 %v4175, %v5227
        %v5261 = vmul.f32 %v4177, %v5228
        %v5262 = vadd.f32 %v5246, %v4914
        %v5263 = vadd.f32 %v5247, %v4915
        %v5264 = vadd.f32 %v5248, %v4916
        %v5265 = vadd.f32 %v5249, %v4917
        %v5266 = vadd.f32 %v5250, %v4918
        %v5267 = vadd.f32 %v5251, %v4919
        %v5268 = vadd.f32 %v5252, %v4920
        %v5269 = vadd.f32 %v5253, %v4921
        %v5270 = vadd.f32 %v5254, %v4978
        %v5271 = vadd.f32 %v5255, %v4979
        %v5272 = vadd.f32 %v5256, %v4980
        %v5273 = vadd.f32 %v5257, %v4981
        %v5274 = vadd.f32 %v5258, %v4982
        %v5275 = vadd.f32 %v5259, %v4983
        %v5276 = vadd.f32 %v5260, %v4984
        %v5277 = vadd.f32 %v5261, %v4985
        %s5278 = scalar_lea.vmem [#allocation3], 320
        %5279 = vst [vmem:[%s5278] sm:$0xff] %v5262
        %5280 = vst [vmem:[%s5278 + $0x8] sm:$0xff] %v5263
        %5281 = vst [vmem:[%s5278 + $0x10] sm:$0xff] %v5264
        %5282 = vst [vmem:[%s5278 + $0x18] sm:$0xff] %v5265
        %5283 = vst [vmem:[%s5278 + $0x20] sm:$0xff] %v5266
        %5284 = vst [vmem:[%s5278 + $0x28] sm:$0xff] %v5267
        %5285 = vst [vmem:[%s5278 + $0x30] sm:$0xff] %v5268
        %5286 = vst [vmem:[%s5278 + $0x38] sm:$0xff] %v5269
        %5287 = vst [vmem:[%s5278 + $0x200] sm:$0xff] %v5270
        %5288 = vst [vmem:[%s5278 + $0x208] sm:$0xff] %v5271
        %5289 = vst [vmem:[%s5278 + $0x210] sm:$0xff] %v5272
        %5290 = vst [vmem:[%s5278 + $0x218] sm:$0xff] %v5273
        %5291 = vst [vmem:[%s5278 + $0x220] sm:$0xff] %v5274
        %5292 = vst [vmem:[%s5278 + $0x228] sm:$0xff] %v5275
        %5293 = vst [vmem:[%s5278 + $0x230] sm:$0xff] %v5276
        %5294 = vst [vmem:[%s5278 + $0x238] sm:$0xff] %v5277
        %v5295 = vmul.f32 %v4051, %v5262
        %v5296 = vmul.f32 %v4053, %v5263
        %v5297 = vmul.f32 %v4055, %v5264
        %v5298 = vmul.f32 %v4057, %v5265
        %v5299 = vmul.f32 %v4059, %v5266
        %v5300 = vmul.f32 %v4061, %v5267
        %v5301 = vmul.f32 %v4063, %v5268
        %v5302 = vmul.f32 %v4065, %v5269
        %v5303 = vmul.f32 %v4179, %v5270
        %v5304 = vmul.f32 %v4181, %v5271
        %v5305 = vmul.f32 %v4183, %v5272
        %v5306 = vmul.f32 %v4185, %v5273
        %v5307 = vmul.f32 %v4187, %v5274
        %v5308 = vmul.f32 %v4189, %v5275
        %v5309 = vmul.f32 %v4191, %v5276
        %v5310 = vmul.f32 %v4193, %v5277
        %v5311 = vadd.f32 %v5295, %v4922
        %v5312 = vadd.f32 %v5296, %v4923
        %v5313 = vadd.f32 %v5297, %v4924
        %v5314 = vadd.f32 %v5298, %v4925
        %v5315 = vadd.f32 %v5299, %v4926
        %v5316 = vadd.f32 %v5300, %v4927
        %v5317 = vadd.f32 %v5301, %v4928
        %v5318 = vadd.f32 %v5302, %v4929
        %v5319 = vadd.f32 %v5303, %v4986
        %v5320 = vadd.f32 %v5304, %v4987
        %v5321 = vadd.f32 %v5305, %v4988
        %v5322 = vadd.f32 %v5306, %v4989
        %v5323 = vadd.f32 %v5307, %v4990
        %v5324 = vadd.f32 %v5308, %v4991
        %v5325 = vadd.f32 %v5309, %v4992
        %v5326 = vadd.f32 %v5310, %v4993
        %s5327 = scalar_lea.vmem [#allocation3], 384
        %5328 = vst [vmem:[%s5327] sm:$0xff] %v5311
        %5329 = vst [vmem:[%s5327 + $0x8] sm:$0xff] %v5312
        %5330 = vst [vmem:[%s5327 + $0x10] sm:$0xff] %v5313
        %5331 = vst [vmem:[%s5327 + $0x18] sm:$0xff] %v5314
        %5332 = vst [vmem:[%s5327 + $0x20] sm:$0xff] %v5315
        %5333 = vst [vmem:[%s5327 + $0x28] sm:$0xff] %v5316
        %5334 = vst [vmem:[%s5327 + $0x30] sm:$0xff] %v5317
        %5335 = vst [vmem:[%s5327 + $0x38] sm:$0xff] %v5318
        %5336 = vst [vmem:[%s5327 + $0x200] sm:$0xff] %v5319
        %5337 = vst [vmem:[%s5327 + $0x208] sm:$0xff] %v5320
        %5338 = vst [vmem:[%s5327 + $0x210] sm:$0xff] %v5321
        %5339 = vst [vmem:[%s5327 + $0x218] sm:$0xff] %v5322
        %5340 = vst [vmem:[%s5327 + $0x220] sm:$0xff] %v5323
        %5341 = vst [vmem:[%s5327 + $0x228] sm:$0xff] %v5324
        %5342 = vst [vmem:[%s5327 + $0x230] sm:$0xff] %v5325
        %5343 = vst [vmem:[%s5327 + $0x238] sm:$0xff] %v5326
        %v5344 = vmul.f32 %v4067, %v5311
        %v5345 = vmul.f32 %v4069, %v5312
        %v5346 = vmul.f32 %v4071, %v5313
        %v5347 = vmul.f32 %v4073, %v5314
        %v5348 = vmul.f32 %v4075, %v5315
        %v5349 = vmul.f32 %v4077, %v5316
        %v5350 = vmul.f32 %v4079, %v5317
        %v5351 = vmul.f32 %v4081, %v5318
        %v5352 = vmul.f32 %v4195, %v5319
        %v5353 = vmul.f32 %v4197, %v5320
        %v5354 = vmul.f32 %v4199, %v5321
        %v5355 = vmul.f32 %v4201, %v5322
        %v5356 = vmul.f32 %v4203, %v5323
        %v5357 = vmul.f32 %v4205, %v5324
        %v5358 = vmul.f32 %v4207, %v5325
        %v5359 = vmul.f32 %v4209, %v5326
        %v5360 = vadd.f32 %v5344, %v4930
        %v5361 = vadd.f32 %v5345, %v4931
        %v5362 = vadd.f32 %v5346, %v4932
        %v5363 = vadd.f32 %v5347, %v4933
        %v5364 = vadd.f32 %v5348, %v4934
        %v5365 = vadd.f32 %v5349, %v4935
        %v5366 = vadd.f32 %v5350, %v4936
        %v5367 = vadd.f32 %v5351, %v4937
        %v5368 = vadd.f32 %v5352, %v4994
        %v5369 = vadd.f32 %v5353, %v4995
        %v5370 = vadd.f32 %v5354, %v4996
        %v5371 = vadd.f32 %v5355, %v4997
        %v5372 = vadd.f32 %v5356, %v4998
        %v5373 = vadd.f32 %v5357, %v4999
        %v5374 = vadd.f32 %v5358, %v5000
        %v5375 = vadd.f32 %v5359, %v5001
        %s5376 = scalar_lea.vmem [#allocation3], 448
        %5377 = vst [vmem:[%s5376] sm:$0xff] %v5360
        %5378 = vst [vmem:[%s5376 + $0x8] sm:$0xff] %v5361
        %5379 = vst [vmem:[%s5376 + $0x10] sm:$0xff] %v5362
        %5380 = vst [vmem:[%s5376 + $0x18] sm:$0xff] %v5363
        %5381 = vst [vmem:[%s5376 + $0x20] sm:$0xff] %v5364
        %5382 = vst [vmem:[%s5376 + $0x28] sm:$0xff] %v5365
        %5383 = vst [vmem:[%s5376 + $0x30] sm:$0xff] %v5366
        %5384 = vst [vmem:[%s5376 + $0x38] sm:$0xff] %v5367
        %5385 = vst [vmem:[%s5376 + $0x200] sm:$0xff] %v5368
        %5386 = vst [vmem:[%s5376 + $0x208] sm:$0xff] %v5369
        %5387 = vst [vmem:[%s5376 + $0x210] sm:$0xff] %v5370
        %5388 = vst [vmem:[%s5376 + $0x218] sm:$0xff] %v5371
        %5389 = vst [vmem:[%s5376 + $0x220] sm:$0xff] %v5372
        %5390 = vst [vmem:[%s5376 + $0x228] sm:$0xff] %v5373
        %5391 = vst [vmem:[%s5376 + $0x230] sm:$0xff] %v5374
        %5392 = vst [vmem:[%s5376 + $0x238] sm:$0xff] %v5375
        %s5394 = sor.u32 256, 32
        %5395 = vbcast.lane.b32.xlu0 %v4365, %s5394
        %v5396 = vpop.permute.xlu0 %5395
        %s5398 = sor.u32 256, 40
        %5399 = vbcast.lane.b32.xlu0 %v4365, %s5398
        %v5400 = vpop.permute.xlu0 %5399
        %s5402 = sor.u32 256, 32
        %5403 = vbcast.lane.b32.xlu0 %v4377, %s5402
        %v5404 = vpop.permute.xlu0 %5403
        %s5406 = sor.u32 256, 40
        %5407 = vbcast.lane.b32.xlu0 %v4377, %s5406
        %v5408 = vpop.permute.xlu0 %5407
        %s5410 = sor.u32 256, 32
        %5411 = vbcast.lane.b32.xlu0 %v4389, %s5410
        %v5412 = vpop.permute.xlu0 %5411
        %s5414 = sor.u32 256, 40
        %5415 = vbcast.lane.b32.xlu0 %v4389, %s5414
        %v5416 = vpop.permute.xlu0 %5415
        %s5418 = sor.u32 256, 32
        %5419 = vbcast.lane.b32.xlu0 %v4401, %s5418
        %v5420 = vpop.permute.xlu0 %5419
        %s5422 = sor.u32 256, 40
        %5423 = vbcast.lane.b32.xlu0 %v4401, %s5422
        %v5424 = vpop.permute.xlu0 %5423
        %s5426 = sor.u32 256, 32
        %5427 = vbcast.lane.b32.xlu0 %v4413, %s5426
        %v5428 = vpop.permute.xlu0 %5427
        %s5430 = sor.u32 256, 40
        %5431 = vbcast.lane.b32.xlu0 %v4413, %s5430
        %v5432 = vpop.permute.xlu0 %5431
        %s5434 = sor.u32 256, 32
        %5435 = vbcast.lane.b32.xlu0 %v4425, %s5434
        %v5436 = vpop.permute.xlu0 %5435
        %s5438 = sor.u32 256, 40
        %5439 = vbcast.lane.b32.xlu0 %v4425, %s5438
        %v5440 = vpop.permute.xlu0 %5439
        %s5442 = sor.u32 256, 32
        %5443 = vbcast.lane.b32.xlu0 %v4437, %s5442
        %v5444 = vpop.permute.xlu0 %5443
        %s5446 = sor.u32 256, 40
        %5447 = vbcast.lane.b32.xlu0 %v4437, %s5446
        %v5448 = vpop.permute.xlu0 %5447
        %s5450 = sor.u32 256, 32
        %5451 = vbcast.lane.b32.xlu0 %v4449, %s5450
        %v5452 = vpop.permute.xlu0 %5451
        %s5454 = sor.u32 256, 40
        %5455 = vbcast.lane.b32.xlu0 %v4449, %s5454
        %v5456 = vpop.permute.xlu0 %5455
        %s5458 = sor.u32 256, 32
        %5459 = vbcast.lane.b32.xlu0 %v4461, %s5458
        %v5460 = vpop.permute.xlu0 %5459
        %s5462 = sor.u32 256, 40
        %5463 = vbcast.lane.b32.xlu0 %v4461, %s5462
        %v5464 = vpop.permute.xlu0 %5463
        %s5466 = sor.u32 256, 32
        %5467 = vbcast.lane.b32.xlu0 %v4473, %s5466
        %v5468 = vpop.permute.xlu0 %5467
        %s5470 = sor.u32 256, 40
        %5471 = vbcast.lane.b32.xlu0 %v4473, %s5470
        %v5472 = vpop.permute.xlu0 %5471
        %s5474 = sor.u32 256, 32
        %5475 = vbcast.lane.b32.xlu0 %v4485, %s5474
        %v5476 = vpop.permute.xlu0 %5475
        %s5478 = sor.u32 256, 40
        %5479 = vbcast.lane.b32.xlu0 %v4485, %s5478
        %v5480 = vpop.permute.xlu0 %5479
        %s5482 = sor.u32 256, 32
        %5483 = vbcast.lane.b32.xlu0 %v4497, %s5482
        %v5484 = vpop.permute.xlu0 %5483
        %s5486 = sor.u32 256, 40
        %5487 = vbcast.lane.b32.xlu0 %v4497, %s5486
        %v5488 = vpop.permute.xlu0 %5487
        %s5490 = sor.u32 256, 32
        %5491 = vbcast.lane.b32.xlu0 %v4509, %s5490
        %v5492 = vpop.permute.xlu0 %5491
        %s5494 = sor.u32 256, 40
        %5495 = vbcast.lane.b32.xlu0 %v4509, %s5494
        %v5496 = vpop.permute.xlu0 %5495
        %s5498 = sor.u32 256, 32
        %5499 = vbcast.lane.b32.xlu0 %v4521, %s5498
        %v5500 = vpop.permute.xlu0 %5499
        %s5502 = sor.u32 256, 40
        %5503 = vbcast.lane.b32.xlu0 %v4521, %s5502
        %v5504 = vpop.permute.xlu0 %5503
        %s5506 = sor.u32 256, 32
        %5507 = vbcast.lane.b32.xlu0 %v4533, %s5506
        %v5508 = vpop.permute.xlu0 %5507
        %s5510 = sor.u32 256, 40
        %5511 = vbcast.lane.b32.xlu0 %v4533, %s5510
        %v5512 = vpop.permute.xlu0 %5511
        %s5514 = sor.u32 256, 32
        %5515 = vbcast.lane.b32.xlu0 %v4545, %s5514
        %v5516 = vpop.permute.xlu0 %5515
        %s5518 = sor.u32 256, 40
        %5519 = vbcast.lane.b32.xlu0 %v4545, %s5518
        %v5520 = vpop.permute.xlu0 %5519
        %v5521 = vld [vmem:[#allocation3] sm:$0xff]
        %v5522 = vld [vmem:[#allocation3 + $0x8] sm:$0xff]
        %v5523 = vld [vmem:[#allocation3 + $0x10] sm:$0xff]
        %v5524 = vld [vmem:[#allocation3 + $0x18] sm:$0xff]
        %v5525 = vld [vmem:[#allocation3 + $0x20] sm:$0xff]
        %v5526 = vld [vmem:[#allocation3 + $0x28] sm:$0xff]
        %v5527 = vld [vmem:[#allocation3 + $0x30] sm:$0xff]
        %v5528 = vld [vmem:[#allocation3 + $0x38] sm:$0xff]
        %v5529 = vld [vmem:[#allocation3 + $0x40] sm:$0xff]
        %v5530 = vld [vmem:[#allocation3 + $0x48] sm:$0xff]
        %v5531 = vld [vmem:[#allocation3 + $0x50] sm:$0xff]
        %v5532 = vld [vmem:[#allocation3 + $0x58] sm:$0xff]
        %v5533 = vld [vmem:[#allocation3 + $0x60] sm:$0xff]
        %v5534 = vld [vmem:[#allocation3 + $0x68] sm:$0xff]
        %v5535 = vld [vmem:[#allocation3 + $0x70] sm:$0xff]
        %v5536 = vld [vmem:[#allocation3 + $0x78] sm:$0xff]
        %v5537 = vld [vmem:[#allocation3 + $0x80] sm:$0xff]
        %v5538 = vld [vmem:[#allocation3 + $0x88] sm:$0xff]
        %v5539 = vld [vmem:[#allocation3 + $0x90] sm:$0xff]
        %v5540 = vld [vmem:[#allocation3 + $0x98] sm:$0xff]
        %v5541 = vld [vmem:[#allocation3 + $0xa0] sm:$0xff]
        %v5542 = vld [vmem:[#allocation3 + $0xa8] sm:$0xff]
        %v5543 = vld [vmem:[#allocation3 + $0xb0] sm:$0xff]
        %v5544 = vld [vmem:[#allocation3 + $0xb8] sm:$0xff]
        %v5545 = vld [vmem:[#allocation3 + $0xc0] sm:$0xff]
        %v5546 = vld [vmem:[#allocation3 + $0xc8] sm:$0xff]
        %v5547 = vld [vmem:[#allocation3 + $0xd0] sm:$0xff]
        %v5548 = vld [vmem:[#allocation3 + $0xd8] sm:$0xff]
        %v5549 = vld [vmem:[#allocation3 + $0xe0] sm:$0xff]
        %v5550 = vld [vmem:[#allocation3 + $0xe8] sm:$0xff]
        %v5551 = vld [vmem:[#allocation3 + $0xf0] sm:$0xff]
        %v5552 = vld [vmem:[#allocation3 + $0xf8] sm:$0xff]
        %v5553 = vld [vmem:[#allocation3 + $0x100] sm:$0xff]
        %v5554 = vld [vmem:[#allocation3 + $0x108] sm:$0xff]
        %v5555 = vld [vmem:[#allocation3 + $0x110] sm:$0xff]
        %v5556 = vld [vmem:[#allocation3 + $0x118] sm:$0xff]
        %v5557 = vld [vmem:[#allocation3 + $0x120] sm:$0xff]
        %v5558 = vld [vmem:[#allocation3 + $0x128] sm:$0xff]
        %v5559 = vld [vmem:[#allocation3 + $0x130] sm:$0xff]
        %v5560 = vld [vmem:[#allocation3 + $0x138] sm:$0xff]
        %v5561 = vld [vmem:[#allocation3 + $0x140] sm:$0xff]
        %v5562 = vld [vmem:[#allocation3 + $0x148] sm:$0xff]
        %v5563 = vld [vmem:[#allocation3 + $0x150] sm:$0xff]
        %v5564 = vld [vmem:[#allocation3 + $0x158] sm:$0xff]
        %v5565 = vld [vmem:[#allocation3 + $0x160] sm:$0xff]
        %v5566 = vld [vmem:[#allocation3 + $0x168] sm:$0xff]
        %v5567 = vld [vmem:[#allocation3 + $0x170] sm:$0xff]
        %v5568 = vld [vmem:[#allocation3 + $0x178] sm:$0xff]
        %v5569 = vld [vmem:[#allocation3 + $0x180] sm:$0xff]
        %v5570 = vld [vmem:[#allocation3 + $0x188] sm:$0xff]
        %v5571 = vld [vmem:[#allocation3 + $0x190] sm:$0xff]
        %v5572 = vld [vmem:[#allocation3 + $0x198] sm:$0xff]
        %v5573 = vld [vmem:[#allocation3 + $0x1a0] sm:$0xff]
        %v5574 = vld [vmem:[#allocation3 + $0x1a8] sm:$0xff]
        %v5575 = vld [vmem:[#allocation3 + $0x1b0] sm:$0xff]
        %v5576 = vld [vmem:[#allocation3 + $0x1b8] sm:$0xff]
        %v5577 = vld [vmem:[#allocation3 + $0x1c0] sm:$0xff]
        %v5578 = vld [vmem:[#allocation3 + $0x1c8] sm:$0xff]
        %v5579 = vld [vmem:[#allocation3 + $0x1d0] sm:$0xff]
        %v5580 = vld [vmem:[#allocation3 + $0x1d8] sm:$0xff]
        %v5581 = vld [vmem:[#allocation3 + $0x1e0] sm:$0xff]
        %v5582 = vld [vmem:[#allocation3 + $0x1e8] sm:$0xff]
        %v5583 = vld [vmem:[#allocation3 + $0x1f0] sm:$0xff]
        %v5584 = vld [vmem:[#allocation3 + $0x1f8] sm:$0xff]
        %v5585 = vld [vmem:[#allocation3 + $0x200] sm:$0xff]
        %v5586 = vld [vmem:[#allocation3 + $0x208] sm:$0xff]
        %v5587 = vld [vmem:[#allocation3 + $0x210] sm:$0xff]
        %v5588 = vld [vmem:[#allocation3 + $0x218] sm:$0xff]
        %v5589 = vld [vmem:[#allocation3 + $0x220] sm:$0xff]
        %v5590 = vld [vmem:[#allocation3 + $0x228] sm:$0xff]
        %v5591 = vld [vmem:[#allocation3 + $0x230] sm:$0xff]
        %v5592 = vld [vmem:[#allocation3 + $0x238] sm:$0xff]
        %v5593 = vld [vmem:[#allocation3 + $0x240] sm:$0xff]
        %v5594 = vld [vmem:[#allocation3 + $0x248] sm:$0xff]
        %v5595 = vld [vmem:[#allocation3 + $0x250] sm:$0xff]
        %v5596 = vld [vmem:[#allocation3 + $0x258] sm:$0xff]
        %v5597 = vld [vmem:[#allocation3 + $0x260] sm:$0xff]
        %v5598 = vld [vmem:[#allocation3 + $0x268] sm:$0xff]
        %v5599 = vld [vmem:[#allocation3 + $0x270] sm:$0xff]
        %v5600 = vld [vmem:[#allocation3 + $0x278] sm:$0xff]
        %v5601 = vld [vmem:[#allocation3 + $0x280] sm:$0xff]
        %v5602 = vld [vmem:[#allocation3 + $0x288] sm:$0xff]
        %v5603 = vld [vmem:[#allocation3 + $0x290] sm:$0xff]
        %v5604 = vld [vmem:[#allocation3 + $0x298] sm:$0xff]
        %v5605 = vld [vmem:[#allocation3 + $0x2a0] sm:$0xff]
        %v5606 = vld [vmem:[#allocation3 + $0x2a8] sm:$0xff]
        %v5607 = vld [vmem:[#allocation3 + $0x2b0] sm:$0xff]
        %v5608 = vld [vmem:[#allocation3 + $0x2b8] sm:$0xff]
        %v5609 = vld [vmem:[#allocation3 + $0x2c0] sm:$0xff]
        %v5610 = vld [vmem:[#allocation3 + $0x2c8] sm:$0xff]
        %v5611 = vld [vmem:[#allocation3 + $0x2d0] sm:$0xff]
        %v5612 = vld [vmem:[#allocation3 + $0x2d8] sm:$0xff]
        %v5613 = vld [vmem:[#allocation3 + $0x2e0] sm:$0xff]
        %v5614 = vld [vmem:[#allocation3 + $0x2e8] sm:$0xff]
        %v5615 = vld [vmem:[#allocation3 + $0x2f0] sm:$0xff]
        %v5616 = vld [vmem:[#allocation3 + $0x2f8] sm:$0xff]
        %v5617 = vld [vmem:[#allocation3 + $0x300] sm:$0xff]
        %v5618 = vld [vmem:[#allocation3 + $0x308] sm:$0xff]
        %v5619 = vld [vmem:[#allocation3 + $0x310] sm:$0xff]
        %v5620 = vld [vmem:[#allocation3 + $0x318] sm:$0xff]
        %v5621 = vld [vmem:[#allocation3 + $0x320] sm:$0xff]
        %v5622 = vld [vmem:[#allocation3 + $0x328] sm:$0xff]
        %v5623 = vld [vmem:[#allocation3 + $0x330] sm:$0xff]
        %v5624 = vld [vmem:[#allocation3 + $0x338] sm:$0xff]
        %v5625 = vld [vmem:[#allocation3 + $0x340] sm:$0xff]
        %v5626 = vld [vmem:[#allocation3 + $0x348] sm:$0xff]
        %v5627 = vld [vmem:[#allocation3 + $0x350] sm:$0xff]
        %v5628 = vld [vmem:[#allocation3 + $0x358] sm:$0xff]
        %v5629 = vld [vmem:[#allocation3 + $0x360] sm:$0xff]
        %v5630 = vld [vmem:[#allocation3 + $0x368] sm:$0xff]
        %v5631 = vld [vmem:[#allocation3 + $0x370] sm:$0xff]
        %v5632 = vld [vmem:[#allocation3 + $0x378] sm:$0xff]
        %v5633 = vld [vmem:[#allocation3 + $0x380] sm:$0xff]
        %v5634 = vld [vmem:[#allocation3 + $0x388] sm:$0xff]
        %v5635 = vld [vmem:[#allocation3 + $0x390] sm:$0xff]
        %v5636 = vld [vmem:[#allocation3 + $0x398] sm:$0xff]
        %v5637 = vld [vmem:[#allocation3 + $0x3a0] sm:$0xff]
        %v5638 = vld [vmem:[#allocation3 + $0x3a8] sm:$0xff]
        %v5639 = vld [vmem:[#allocation3 + $0x3b0] sm:$0xff]
        %v5640 = vld [vmem:[#allocation3 + $0x3b8] sm:$0xff]
        %v5641 = vld [vmem:[#allocation3 + $0x3c0] sm:$0xff]
        %v5642 = vld [vmem:[#allocation3 + $0x3c8] sm:$0xff]
        %v5643 = vld [vmem:[#allocation3 + $0x3d0] sm:$0xff]
        %v5644 = vld [vmem:[#allocation3 + $0x3d8] sm:$0xff]
        %v5645 = vld [vmem:[#allocation3 + $0x3e0] sm:$0xff]
        %v5646 = vld [vmem:[#allocation3 + $0x3e8] sm:$0xff]
        %v5647 = vld [vmem:[#allocation3 + $0x3f0] sm:$0xff]
        %v5648 = vld [vmem:[#allocation3 + $0x3f8] sm:$0xff]
        %v5649 = vmul.f32 %v5396, %v5521
        %v5650 = vmul.f32 %v5396, %v5522
        %v5651 = vmul.f32 %v5396, %v5523
        %v5652 = vmul.f32 %v5396, %v5524
        %v5653 = vmul.f32 %v5400, %v5525
        %v5654 = vmul.f32 %v5400, %v5526
        %v5655 = vmul.f32 %v5400, %v5527
        %v5656 = vmul.f32 %v5400, %v5528
        %v5657 = vmul.f32 %v5404, %v5529
        %v5658 = vmul.f32 %v5404, %v5530
        %v5659 = vmul.f32 %v5404, %v5531
        %v5660 = vmul.f32 %v5404, %v5532
        %v5661 = vmul.f32 %v5408, %v5533
        %v5662 = vmul.f32 %v5408, %v5534
        %v5663 = vmul.f32 %v5408, %v5535
        %v5664 = vmul.f32 %v5408, %v5536
        %v5665 = vmul.f32 %v5412, %v5537
        %v5666 = vmul.f32 %v5412, %v5538
        %v5667 = vmul.f32 %v5412, %v5539
        %v5668 = vmul.f32 %v5412, %v5540
        %v5669 = vmul.f32 %v5416, %v5541
        %v5670 = vmul.f32 %v5416, %v5542
        %v5671 = vmul.f32 %v5416, %v5543
        %v5672 = vmul.f32 %v5416, %v5544
        %v5673 = vmul.f32 %v5420, %v5545
        %v5674 = vmul.f32 %v5420, %v5546
        %v5675 = vmul.f32 %v5420, %v5547
        %v5676 = vmul.f32 %v5420, %v5548
        %v5677 = vmul.f32 %v5424, %v5549
        %v5678 = vmul.f32 %v5424, %v5550
        %v5679 = vmul.f32 %v5424, %v5551
        %v5680 = vmul.f32 %v5424, %v5552
        %v5681 = vmul.f32 %v5428, %v5553
        %v5682 = vmul.f32 %v5428, %v5554
        %v5683 = vmul.f32 %v5428, %v5555
        %v5684 = vmul.f32 %v5428, %v5556
        %v5685 = vmul.f32 %v5432, %v5557
        %v5686 = vmul.f32 %v5432, %v5558
        %v5687 = vmul.f32 %v5432, %v5559
        %v5688 = vmul.f32 %v5432, %v5560
        %v5689 = vmul.f32 %v5436, %v5561
        %v5690 = vmul.f32 %v5436, %v5562
        %v5691 = vmul.f32 %v5436, %v5563
        %v5692 = vmul.f32 %v5436, %v5564
        %v5693 = vmul.f32 %v5440, %v5565
        %v5694 = vmul.f32 %v5440, %v5566
        %v5695 = vmul.f32 %v5440, %v5567
        %v5696 = vmul.f32 %v5440, %v5568
        %v5697 = vmul.f32 %v5444, %v5569
        %v5698 = vmul.f32 %v5444, %v5570
        %v5699 = vmul.f32 %v5444, %v5571
        %v5700 = vmul.f32 %v5444, %v5572
        %v5701 = vmul.f32 %v5448, %v5573
        %v5702 = vmul.f32 %v5448, %v5574
        %v5703 = vmul.f32 %v5448, %v5575
        %v5704 = vmul.f32 %v5448, %v5576
        %v5705 = vmul.f32 %v5452, %v5577
        %v5706 = vmul.f32 %v5452, %v5578
        %v5707 = vmul.f32 %v5452, %v5579
        %v5708 = vmul.f32 %v5452, %v5580
        %v5709 = vmul.f32 %v5456, %v5581
        %v5710 = vmul.f32 %v5456, %v5582
        %v5711 = vmul.f32 %v5456, %v5583
        %v5712 = vmul.f32 %v5456, %v5584
        %v5713 = vmul.f32 %v5460, %v5585
        %v5714 = vmul.f32 %v5460, %v5586
        %v5715 = vmul.f32 %v5460, %v5587
        %v5716 = vmul.f32 %v5460, %v5588
        %v5717 = vmul.f32 %v5464, %v5589
        %v5718 = vmul.f32 %v5464, %v5590
        %v5719 = vmul.f32 %v5464, %v5591
        %v5720 = vmul.f32 %v5464, %v5592
        %v5721 = vmul.f32 %v5468, %v5593
        %v5722 = vmul.f32 %v5468, %v5594
        %v5723 = vmul.f32 %v5468, %v5595
        %v5724 = vmul.f32 %v5468, %v5596
        %v5725 = vmul.f32 %v5472, %v5597
        %v5726 = vmul.f32 %v5472, %v5598
        %v5727 = vmul.f32 %v5472, %v5599
        %v5728 = vmul.f32 %v5472, %v5600
        %v5729 = vmul.f32 %v5476, %v5601
        %v5730 = vmul.f32 %v5476, %v5602
        %v5731 = vmul.f32 %v5476, %v5603
        %v5732 = vmul.f32 %v5476, %v5604
        %v5733 = vmul.f32 %v5480, %v5605
        %v5734 = vmul.f32 %v5480, %v5606
        %v5735 = vmul.f32 %v5480, %v5607
        %v5736 = vmul.f32 %v5480, %v5608
        %v5737 = vmul.f32 %v5484, %v5609
        %v5738 = vmul.f32 %v5484, %v5610
        %v5739 = vmul.f32 %v5484, %v5611
        %v5740 = vmul.f32 %v5484, %v5612
        %v5741 = vmul.f32 %v5488, %v5613
        %v5742 = vmul.f32 %v5488, %v5614
        %v5743 = vmul.f32 %v5488, %v5615
        %v5744 = vmul.f32 %v5488, %v5616
        %v5745 = vmul.f32 %v5492, %v5617
        %v5746 = vmul.f32 %v5492, %v5618
        %v5747 = vmul.f32 %v5492, %v5619
        %v5748 = vmul.f32 %v5492, %v5620
        %v5749 = vmul.f32 %v5496, %v5621
        %v5750 = vmul.f32 %v5496, %v5622
        %v5751 = vmul.f32 %v5496, %v5623
        %v5752 = vmul.f32 %v5496, %v5624
        %v5753 = vmul.f32 %v5500, %v5625
        %v5754 = vmul.f32 %v5500, %v5626
        %v5755 = vmul.f32 %v5500, %v5627
        %v5756 = vmul.f32 %v5500, %v5628
        %v5757 = vmul.f32 %v5504, %v5629
        %v5758 = vmul.f32 %v5504, %v5630
        %v5759 = vmul.f32 %v5504, %v5631
        %v5760 = vmul.f32 %v5504, %v5632
        %v5761 = vmul.f32 %v5508, %v5633
        %v5762 = vmul.f32 %v5508, %v5634
        %v5763 = vmul.f32 %v5508, %v5635
        %v5764 = vmul.f32 %v5508, %v5636
        %v5765 = vmul.f32 %v5512, %v5637
        %v5766 = vmul.f32 %v5512, %v5638
        %v5767 = vmul.f32 %v5512, %v5639
        %v5768 = vmul.f32 %v5512, %v5640
        %v5769 = vmul.f32 %v5516, %v5641
        %v5770 = vmul.f32 %v5516, %v5642
        %v5771 = vmul.f32 %v5516, %v5643
        %v5772 = vmul.f32 %v5516, %v5644
        %v5773 = vmul.f32 %v5520, %v5645
        %v5774 = vmul.f32 %v5520, %v5646
        %v5775 = vmul.f32 %v5520, %v5647
        %v5776 = vmul.f32 %v5520, %v5648
        %v5777 = vadd.f32 %v5649, %v5653
        %v5778 = vrot.slane %v5777, 4
        %v5779 = vadd.f32 %v5777, %v5778
        %v5780 = vrot.slane %v5779, 2
        %v5781 = vadd.f32 %v5779, %v5780
        %v5782 = vrot.slane %v5781, 1
        %v5783 = vadd.f32 %v5781, %v5782
        %v5784 = vadd.f32 %v5650, %v5654
        %v5785 = vrot.slane %v5784, 4
        %v5786 = vadd.f32 %v5784, %v5785
        %v5787 = vrot.slane %v5786, 2
        %v5788 = vadd.f32 %v5786, %v5787
        %v5789 = vrot.slane %v5788, 1
        %v5790 = vadd.f32 %v5788, %v5789
        %v5791 = vadd.f32 %v5651, %v5655
        %v5792 = vrot.slane %v5791, 4
        %v5793 = vadd.f32 %v5791, %v5792
        %v5794 = vrot.slane %v5793, 2
        %v5795 = vadd.f32 %v5793, %v5794
        %v5796 = vrot.slane %v5795, 1
        %v5797 = vadd.f32 %v5795, %v5796
        %v5798 = vadd.f32 %v5652, %v5656
        %v5799 = vrot.slane %v5798, 4
        %v5800 = vadd.f32 %v5798, %v5799
        %v5801 = vrot.slane %v5800, 2
        %v5802 = vadd.f32 %v5800, %v5801
        %v5803 = vrot.slane %v5802, 1
        %v5804 = vadd.f32 %v5802, %v5803
        %v5805 = vadd.f32 %v5657, %v5661
        %v5806 = vrot.slane %v5805, 4
        %v5807 = vadd.f32 %v5805, %v5806
        %v5808 = vrot.slane %v5807, 2
        %v5809 = vadd.f32 %v5807, %v5808
        %v5810 = vrot.slane %v5809, 1
        %v5811 = vadd.f32 %v5809, %v5810
        %v5812 = vadd.f32 %v5658, %v5662
        %v5813 = vrot.slane %v5812, 4
        %v5814 = vadd.f32 %v5812, %v5813
        %v5815 = vrot.slane %v5814, 2
        %v5816 = vadd.f32 %v5814, %v5815
        %v5817 = vrot.slane %v5816, 1
        %v5818 = vadd.f32 %v5816, %v5817
        %v5819 = vadd.f32 %v5659, %v5663
        %v5820 = vrot.slane %v5819, 4
        %v5821 = vadd.f32 %v5819, %v5820
        %v5822 = vrot.slane %v5821, 2
        %v5823 = vadd.f32 %v5821, %v5822
        %v5824 = vrot.slane %v5823, 1
        %v5825 = vadd.f32 %v5823, %v5824
        %v5826 = vadd.f32 %v5660, %v5664
        %v5827 = vrot.slane %v5826, 4
        %v5828 = vadd.f32 %v5826, %v5827
        %v5829 = vrot.slane %v5828, 2
        %v5830 = vadd.f32 %v5828, %v5829
        %v5831 = vrot.slane %v5830, 1
        %v5832 = vadd.f32 %v5830, %v5831
        %v5833 = vadd.f32 %v5665, %v5669
        %v5834 = vrot.slane %v5833, 4
        %v5835 = vadd.f32 %v5833, %v5834
        %v5836 = vrot.slane %v5835, 2
        %v5837 = vadd.f32 %v5835, %v5836
        %v5838 = vrot.slane %v5837, 1
        %v5839 = vadd.f32 %v5837, %v5838
        %v5840 = vadd.f32 %v5666, %v5670
        %v5841 = vrot.slane %v5840, 4
        %v5842 = vadd.f32 %v5840, %v5841
        %v5843 = vrot.slane %v5842, 2
        %v5844 = vadd.f32 %v5842, %v5843
        %v5845 = vrot.slane %v5844, 1
        %v5846 = vadd.f32 %v5844, %v5845
        %v5847 = vadd.f32 %v5667, %v5671
        %v5848 = vrot.slane %v5847, 4
        %v5849 = vadd.f32 %v5847, %v5848
        %v5850 = vrot.slane %v5849, 2
        %v5851 = vadd.f32 %v5849, %v5850
        %v5852 = vrot.slane %v5851, 1
        %v5853 = vadd.f32 %v5851, %v5852
        %v5854 = vadd.f32 %v5668, %v5672
        %v5855 = vrot.slane %v5854, 4
        %v5856 = vadd.f32 %v5854, %v5855
        %v5857 = vrot.slane %v5856, 2
        %v5858 = vadd.f32 %v5856, %v5857
        %v5859 = vrot.slane %v5858, 1
        %v5860 = vadd.f32 %v5858, %v5859
        %v5861 = vadd.f32 %v5673, %v5677
        %v5862 = vrot.slane %v5861, 4
        %v5863 = vadd.f32 %v5861, %v5862
        %v5864 = vrot.slane %v5863, 2
        %v5865 = vadd.f32 %v5863, %v5864
        %v5866 = vrot.slane %v5865, 1
        %v5867 = vadd.f32 %v5865, %v5866
        %v5868 = vadd.f32 %v5674, %v5678
        %v5869 = vrot.slane %v5868, 4
        %v5870 = vadd.f32 %v5868, %v5869
        %v5871 = vrot.slane %v5870, 2
        %v5872 = vadd.f32 %v5870, %v5871
        %v5873 = vrot.slane %v5872, 1
        %v5874 = vadd.f32 %v5872, %v5873
        %v5875 = vadd.f32 %v5675, %v5679
        %v5876 = vrot.slane %v5875, 4
        %v5877 = vadd.f32 %v5875, %v5876
        %v5878 = vrot.slane %v5877, 2
        %v5879 = vadd.f32 %v5877, %v5878
        %v5880 = vrot.slane %v5879, 1
        %v5881 = vadd.f32 %v5879, %v5880
        %v5882 = vadd.f32 %v5676, %v5680
        %v5883 = vrot.slane %v5882, 4
        %v5884 = vadd.f32 %v5882, %v5883
        %v5885 = vrot.slane %v5884, 2
        %v5886 = vadd.f32 %v5884, %v5885
        %v5887 = vrot.slane %v5886, 1
        %v5888 = vadd.f32 %v5886, %v5887
        %v5889 = vadd.f32 %v5681, %v5685
        %v5890 = vrot.slane %v5889, 4
        %v5891 = vadd.f32 %v5889, %v5890
        %v5892 = vrot.slane %v5891, 2
        %v5893 = vadd.f32 %v5891, %v5892
        %v5894 = vrot.slane %v5893, 1
        %v5895 = vadd.f32 %v5893, %v5894
        %v5896 = vadd.f32 %v5682, %v5686
        %v5897 = vrot.slane %v5896, 4
        %v5898 = vadd.f32 %v5896, %v5897
        %v5899 = vrot.slane %v5898, 2
        %v5900 = vadd.f32 %v5898, %v5899
        %v5901 = vrot.slane %v5900, 1
        %v5902 = vadd.f32 %v5900, %v5901
        %v5903 = vadd.f32 %v5683, %v5687
        %v5904 = vrot.slane %v5903, 4
        %v5905 = vadd.f32 %v5903, %v5904
        %v5906 = vrot.slane %v5905, 2
        %v5907 = vadd.f32 %v5905, %v5906
        %v5908 = vrot.slane %v5907, 1
        %v5909 = vadd.f32 %v5907, %v5908
        %v5910 = vadd.f32 %v5684, %v5688
        %v5911 = vrot.slane %v5910, 4
        %v5912 = vadd.f32 %v5910, %v5911
        %v5913 = vrot.slane %v5912, 2
        %v5914 = vadd.f32 %v5912, %v5913
        %v5915 = vrot.slane %v5914, 1
        %v5916 = vadd.f32 %v5914, %v5915
        %v5917 = vadd.f32 %v5689, %v5693
        %v5918 = vrot.slane %v5917, 4
        %v5919 = vadd.f32 %v5917, %v5918
        %v5920 = vrot.slane %v5919, 2
        %v5921 = vadd.f32 %v5919, %v5920
        %v5922 = vrot.slane %v5921, 1
        %v5923 = vadd.f32 %v5921, %v5922
        %v5924 = vadd.f32 %v5690, %v5694
        %v5925 = vrot.slane %v5924, 4
        %v5926 = vadd.f32 %v5924, %v5925
        %v5927 = vrot.slane %v5926, 2
        %v5928 = vadd.f32 %v5926, %v5927
        %v5929 = vrot.slane %v5928, 1
        %v5930 = vadd.f32 %v5928, %v5929
        %v5931 = vadd.f32 %v5691, %v5695
        %v5932 = vrot.slane %v5931, 4
        %v5933 = vadd.f32 %v5931, %v5932
        %v5934 = vrot.slane %v5933, 2
        %v5935 = vadd.f32 %v5933, %v5934
        %v5936 = vrot.slane %v5935, 1
        %v5937 = vadd.f32 %v5935, %v5936
        %v5938 = vadd.f32 %v5692, %v5696
        %v5939 = vrot.slane %v5938, 4
        %v5940 = vadd.f32 %v5938, %v5939
        %v5941 = vrot.slane %v5940, 2
        %v5942 = vadd.f32 %v5940, %v5941
        %v5943 = vrot.slane %v5942, 1
        %v5944 = vadd.f32 %v5942, %v5943
        %v5945 = vadd.f32 %v5697, %v5701
        %v5946 = vrot.slane %v5945, 4
        %v5947 = vadd.f32 %v5945, %v5946
        %v5948 = vrot.slane %v5947, 2
        %v5949 = vadd.f32 %v5947, %v5948
        %v5950 = vrot.slane %v5949, 1
        %v5951 = vadd.f32 %v5949, %v5950
        %v5952 = vadd.f32 %v5698, %v5702
        %v5953 = vrot.slane %v5952, 4
        %v5954 = vadd.f32 %v5952, %v5953
        %v5955 = vrot.slane %v5954, 2
        %v5956 = vadd.f32 %v5954, %v5955
        %v5957 = vrot.slane %v5956, 1
        %v5958 = vadd.f32 %v5956, %v5957
        %v5959 = vadd.f32 %v5699, %v5703
        %v5960 = vrot.slane %v5959, 4
        %v5961 = vadd.f32 %v5959, %v5960
        %v5962 = vrot.slane %v5961, 2
        %v5963 = vadd.f32 %v5961, %v5962
        %v5964 = vrot.slane %v5963, 1
        %v5965 = vadd.f32 %v5963, %v5964
        %v5966 = vadd.f32 %v5700, %v5704
        %v5967 = vrot.slane %v5966, 4
        %v5968 = vadd.f32 %v5966, %v5967
        %v5969 = vrot.slane %v5968, 2
        %v5970 = vadd.f32 %v5968, %v5969
        %v5971 = vrot.slane %v5970, 1
        %v5972 = vadd.f32 %v5970, %v5971
        %v5973 = vadd.f32 %v5705, %v5709
        %v5974 = vrot.slane %v5973, 4
        %v5975 = vadd.f32 %v5973, %v5974
        %v5976 = vrot.slane %v5975, 2
        %v5977 = vadd.f32 %v5975, %v5976
        %v5978 = vrot.slane %v5977, 1
        %v5979 = vadd.f32 %v5977, %v5978
        %v5980 = vadd.f32 %v5706, %v5710
        %v5981 = vrot.slane %v5980, 4
        %v5982 = vadd.f32 %v5980, %v5981
        %v5983 = vrot.slane %v5982, 2
        %v5984 = vadd.f32 %v5982, %v5983
        %v5985 = vrot.slane %v5984, 1
        %v5986 = vadd.f32 %v5984, %v5985
        %v5987 = vadd.f32 %v5707, %v5711
        %v5988 = vrot.slane %v5987, 4
        %v5989 = vadd.f32 %v5987, %v5988
        %v5990 = vrot.slane %v5989, 2
        %v5991 = vadd.f32 %v5989, %v5990
        %v5992 = vrot.slane %v5991, 1
        %v5993 = vadd.f32 %v5991, %v5992
        %v5994 = vadd.f32 %v5708, %v5712
        %v5995 = vrot.slane %v5994, 4
        %v5996 = vadd.f32 %v5994, %v5995
        %v5997 = vrot.slane %v5996, 2
        %v5998 = vadd.f32 %v5996, %v5997
        %v5999 = vrot.slane %v5998, 1
        %v6000 = vadd.f32 %v5998, %v5999
        %v6001 = vadd.f32 %v5713, %v5717
        %v6002 = vrot.slane %v6001, 4
        %v6003 = vadd.f32 %v6001, %v6002
        %v6004 = vrot.slane %v6003, 2
        %v6005 = vadd.f32 %v6003, %v6004
        %v6006 = vrot.slane %v6005, 1
        %v6007 = vadd.f32 %v6005, %v6006
        %v6008 = vadd.f32 %v5714, %v5718
        %v6009 = vrot.slane %v6008, 4
        %v6010 = vadd.f32 %v6008, %v6009
        %v6011 = vrot.slane %v6010, 2
        %v6012 = vadd.f32 %v6010, %v6011
        %v6013 = vrot.slane %v6012, 1
        %v6014 = vadd.f32 %v6012, %v6013
        %v6015 = vadd.f32 %v5715, %v5719
        %v6016 = vrot.slane %v6015, 4
        %v6017 = vadd.f32 %v6015, %v6016
        %v6018 = vrot.slane %v6017, 2
        %v6019 = vadd.f32 %v6017, %v6018
        %v6020 = vrot.slane %v6019, 1
        %v6021 = vadd.f32 %v6019, %v6020
        %v6022 = vadd.f32 %v5716, %v5720
        %v6023 = vrot.slane %v6022, 4
        %v6024 = vadd.f32 %v6022, %v6023
        %v6025 = vrot.slane %v6024, 2
        %v6026 = vadd.f32 %v6024, %v6025
        %v6027 = vrot.slane %v6026, 1
        %v6028 = vadd.f32 %v6026, %v6027
        %v6029 = vadd.f32 %v5721, %v5725
        %v6030 = vrot.slane %v6029, 4
        %v6031 = vadd.f32 %v6029, %v6030
        %v6032 = vrot.slane %v6031, 2
        %v6033 = vadd.f32 %v6031, %v6032
        %v6034 = vrot.slane %v6033, 1
        %v6035 = vadd.f32 %v6033, %v6034
        %v6036 = vadd.f32 %v5722, %v5726
        %v6037 = vrot.slane %v6036, 4
        %v6038 = vadd.f32 %v6036, %v6037
        %v6039 = vrot.slane %v6038, 2
        %v6040 = vadd.f32 %v6038, %v6039
        %v6041 = vrot.slane %v6040, 1
        %v6042 = vadd.f32 %v6040, %v6041
        %v6043 = vadd.f32 %v5723, %v5727
        %v6044 = vrot.slane %v6043, 4
        %v6045 = vadd.f32 %v6043, %v6044
        %v6046 = vrot.slane %v6045, 2
        %v6047 = vadd.f32 %v6045, %v6046
        %v6048 = vrot.slane %v6047, 1
        %v6049 = vadd.f32 %v6047, %v6048
        %v6050 = vadd.f32 %v5724, %v5728
        %v6051 = vrot.slane %v6050, 4
        %v6052 = vadd.f32 %v6050, %v6051
        %v6053 = vrot.slane %v6052, 2
        %v6054 = vadd.f32 %v6052, %v6053
        %v6055 = vrot.slane %v6054, 1
        %v6056 = vadd.f32 %v6054, %v6055
        %v6057 = vadd.f32 %v5729, %v5733
        %v6058 = vrot.slane %v6057, 4
        %v6059 = vadd.f32 %v6057, %v6058
        %v6060 = vrot.slane %v6059, 2
        %v6061 = vadd.f32 %v6059, %v6060
        %v6062 = vrot.slane %v6061, 1
        %v6063 = vadd.f32 %v6061, %v6062
        %v6064 = vadd.f32 %v5730, %v5734
        %v6065 = vrot.slane %v6064, 4
        %v6066 = vadd.f32 %v6064, %v6065
        %v6067 = vrot.slane %v6066, 2
        %v6068 = vadd.f32 %v6066, %v6067
        %v6069 = vrot.slane %v6068, 1
        %v6070 = vadd.f32 %v6068, %v6069
        %v6071 = vadd.f32 %v5731, %v5735
        %v6072 = vrot.slane %v6071, 4
        %v6073 = vadd.f32 %v6071, %v6072
        %v6074 = vrot.slane %v6073, 2
        %v6075 = vadd.f32 %v6073, %v6074
        %v6076 = vrot.slane %v6075, 1
        %v6077 = vadd.f32 %v6075, %v6076
        %v6078 = vadd.f32 %v5732, %v5736
        %v6079 = vrot.slane %v6078, 4
        %v6080 = vadd.f32 %v6078, %v6079
        %v6081 = vrot.slane %v6080, 2
        %v6082 = vadd.f32 %v6080, %v6081
        %v6083 = vrot.slane %v6082, 1
        %v6084 = vadd.f32 %v6082, %v6083
        %v6085 = vadd.f32 %v5737, %v5741
        %v6086 = vrot.slane %v6085, 4
        %v6087 = vadd.f32 %v6085, %v6086
        %v6088 = vrot.slane %v6087, 2
        %v6089 = vadd.f32 %v6087, %v6088
        %v6090 = vrot.slane %v6089, 1
        %v6091 = vadd.f32 %v6089, %v6090
        %v6092 = vadd.f32 %v5738, %v5742
        %v6093 = vrot.slane %v6092, 4
        %v6094 = vadd.f32 %v6092, %v6093
        %v6095 = vrot.slane %v6094, 2
        %v6096 = vadd.f32 %v6094, %v6095
        %v6097 = vrot.slane %v6096, 1
        %v6098 = vadd.f32 %v6096, %v6097
        %v6099 = vadd.f32 %v5739, %v5743
        %v6100 = vrot.slane %v6099, 4
        %v6101 = vadd.f32 %v6099, %v6100
        %v6102 = vrot.slane %v6101, 2
        %v6103 = vadd.f32 %v6101, %v6102
        %v6104 = vrot.slane %v6103, 1
        %v6105 = vadd.f32 %v6103, %v6104
        %v6106 = vadd.f32 %v5740, %v5744
        %v6107 = vrot.slane %v6106, 4
        %v6108 = vadd.f32 %v6106, %v6107
        %v6109 = vrot.slane %v6108, 2
        %v6110 = vadd.f32 %v6108, %v6109
        %v6111 = vrot.slane %v6110, 1
        %v6112 = vadd.f32 %v6110, %v6111
        %v6113 = vadd.f32 %v5745, %v5749
        %v6114 = vrot.slane %v6113, 4
        %v6115 = vadd.f32 %v6113, %v6114
        %v6116 = vrot.slane %v6115, 2
        %v6117 = vadd.f32 %v6115, %v6116
        %v6118 = vrot.slane %v6117, 1
        %v6119 = vadd.f32 %v6117, %v6118
        %v6120 = vadd.f32 %v5746, %v5750
        %v6121 = vrot.slane %v6120, 4
        %v6122 = vadd.f32 %v6120, %v6121
        %v6123 = vrot.slane %v6122, 2
        %v6124 = vadd.f32 %v6122, %v6123
        %v6125 = vrot.slane %v6124, 1
        %v6126 = vadd.f32 %v6124, %v6125
        %v6127 = vadd.f32 %v5747, %v5751
        %v6128 = vrot.slane %v6127, 4
        %v6129 = vadd.f32 %v6127, %v6128
        %v6130 = vrot.slane %v6129, 2
        %v6131 = vadd.f32 %v6129, %v6130
        %v6132 = vrot.slane %v6131, 1
        %v6133 = vadd.f32 %v6131, %v6132
        %v6134 = vadd.f32 %v5748, %v5752
        %v6135 = vrot.slane %v6134, 4
        %v6136 = vadd.f32 %v6134, %v6135
        %v6137 = vrot.slane %v6136, 2
        %v6138 = vadd.f32 %v6136, %v6137
        %v6139 = vrot.slane %v6138, 1
        %v6140 = vadd.f32 %v6138, %v6139
        %v6141 = vadd.f32 %v5753, %v5757
        %v6142 = vrot.slane %v6141, 4
        %v6143 = vadd.f32 %v6141, %v6142
        %v6144 = vrot.slane %v6143, 2
        %v6145 = vadd.f32 %v6143, %v6144
        %v6146 = vrot.slane %v6145, 1
        %v6147 = vadd.f32 %v6145, %v6146
        %v6148 = vadd.f32 %v5754, %v5758
        %v6149 = vrot.slane %v6148, 4
        %v6150 = vadd.f32 %v6148, %v6149
        %v6151 = vrot.slane %v6150, 2
        %v6152 = vadd.f32 %v6150, %v6151
        %v6153 = vrot.slane %v6152, 1
        %v6154 = vadd.f32 %v6152, %v6153
        %v6155 = vadd.f32 %v5755, %v5759
        %v6156 = vrot.slane %v6155, 4
        %v6157 = vadd.f32 %v6155, %v6156
        %v6158 = vrot.slane %v6157, 2
        %v6159 = vadd.f32 %v6157, %v6158
        %v6160 = vrot.slane %v6159, 1
        %v6161 = vadd.f32 %v6159, %v6160
        %v6162 = vadd.f32 %v5756, %v5760
        %v6163 = vrot.slane %v6162, 4
        %v6164 = vadd.f32 %v6162, %v6163
        %v6165 = vrot.slane %v6164, 2
        %v6166 = vadd.f32 %v6164, %v6165
        %v6167 = vrot.slane %v6166, 1
        %v6168 = vadd.f32 %v6166, %v6167
        %v6169 = vadd.f32 %v5761, %v5765
        %v6170 = vrot.slane %v6169, 4
        %v6171 = vadd.f32 %v6169, %v6170
        %v6172 = vrot.slane %v6171, 2
        %v6173 = vadd.f32 %v6171, %v6172
        %v6174 = vrot.slane %v6173, 1
        %v6175 = vadd.f32 %v6173, %v6174
        %v6176 = vadd.f32 %v5762, %v5766
        %v6177 = vrot.slane %v6176, 4
        %v6178 = vadd.f32 %v6176, %v6177
        %v6179 = vrot.slane %v6178, 2
        %v6180 = vadd.f32 %v6178, %v6179
        %v6181 = vrot.slane %v6180, 1
        %v6182 = vadd.f32 %v6180, %v6181
        %v6183 = vadd.f32 %v5763, %v5767
        %v6184 = vrot.slane %v6183, 4
        %v6185 = vadd.f32 %v6183, %v6184
        %v6186 = vrot.slane %v6185, 2
        %v6187 = vadd.f32 %v6185, %v6186
        %v6188 = vrot.slane %v6187, 1
        %v6189 = vadd.f32 %v6187, %v6188
        %v6190 = vadd.f32 %v5764, %v5768
        %v6191 = vrot.slane %v6190, 4
        %v6192 = vadd.f32 %v6190, %v6191
        %v6193 = vrot.slane %v6192, 2
        %v6194 = vadd.f32 %v6192, %v6193
        %v6195 = vrot.slane %v6194, 1
        %v6196 = vadd.f32 %v6194, %v6195
        %v6197 = vadd.f32 %v5769, %v5773
        %v6198 = vrot.slane %v6197, 4
        %v6199 = vadd.f32 %v6197, %v6198
        %v6200 = vrot.slane %v6199, 2
        %v6201 = vadd.f32 %v6199, %v6200
        %v6202 = vrot.slane %v6201, 1
        %v6203 = vadd.f32 %v6201, %v6202
        %v6204 = vadd.f32 %v5770, %v5774
        %v6205 = vrot.slane %v6204, 4
        %v6206 = vadd.f32 %v6204, %v6205
        %v6207 = vrot.slane %v6206, 2
        %v6208 = vadd.f32 %v6206, %v6207
        %v6209 = vrot.slane %v6208, 1
        %v6210 = vadd.f32 %v6208, %v6209
        %v6211 = vadd.f32 %v5771, %v5775
        %v6212 = vrot.slane %v6211, 4
        %v6213 = vadd.f32 %v6211, %v6212
        %v6214 = vrot.slane %v6213, 2
        %v6215 = vadd.f32 %v6213, %v6214
        %v6216 = vrot.slane %v6215, 1
        %v6217 = vadd.f32 %v6215, %v6216
        %v6218 = vadd.f32 %v5772, %v5776
        %v6219 = vrot.slane %v6218, 4
        %v6220 = vadd.f32 %v6218, %v6219
        %v6221 = vrot.slane %v6220, 2
        %v6222 = vadd.f32 %v6220, %v6221
        %v6223 = vrot.slane %v6222, 1
        %v6224 = vadd.f32 %v6222, %v6223
        %v6225 = vld [vmem:[%s1146] sm:$0xf]
        %v6227 = vlaneseq
        %v6228 = vshrl.u32 %v6227, 7
        %v6229 = vsub.s32 0, %v6228
        %v6230 = vrot.slane %v6225, %v6229
        %v6231 = vlaneseq
        %v6232 = vshrl.u32 %v6231, 7
        %v6233 = vsub.s32 1, %v6232
        %v6234 = vrot.slane %v6225, %v6233
        %v6235 = vlaneseq
        %v6236 = vshrl.u32 %v6235, 7
        %v6237 = vsub.s32 2, %v6236
        %v6238 = vrot.slane %v6225, %v6237
        %v6239 = vlaneseq
        %v6240 = vshrl.u32 %v6239, 7
        %v6241 = vsub.s32 3, %v6240
        %v6242 = vrot.slane %v6225, %v6241
        %v6247 = vmul.f32 %v6230, %v2731
        %v6248 = vmul.f32 %v6234, %v2732
        %v6249 = vmul.f32 %v6238, %v2733
        %v6250 = vmul.f32 %v6242, %v2734
        %v6251 = vmul.f32 %v6230, %v2735
        %v6252 = vmul.f32 %v6234, %v2736
        %v6253 = vmul.f32 %v6238, %v2737
        %v6254 = vmul.f32 %v6242, %v2738
        %v6263 = vrot.slane %v6247, 1
        %v6264 = vrot.slane %v6248, 1
        %v6265 = vrot.slane %v6249, 1
        %v6266 = vrot.slane %v6250, 1
        %v6267 = vrot.slane %v6247, 2
        %v6268 = vrot.slane %v6248, 2
        %v6269 = vrot.slane %v6249, 2
        %v6270 = vrot.slane %v6250, 2
        %v6271 = vrot.slane %v6247, 3
        %v6272 = vrot.slane %v6248, 3
        %v6273 = vrot.slane %v6249, 3
        %v6274 = vrot.slane %v6250, 3
        %v6275 = vrot.slane %v6247, 4
        %v6276 = vrot.slane %v6248, 4
        %v6277 = vrot.slane %v6249, 4
        %v6278 = vrot.slane %v6250, 4
        %v6279 = vrot.slane %v6247, 5
        %v6280 = vrot.slane %v6248, 5
        %v6281 = vrot.slane %v6249, 5
        %v6282 = vrot.slane %v6250, 5
        %v6283 = vrot.slane %v6247, 6
        %v6284 = vrot.slane %v6248, 6
        %v6285 = vrot.slane %v6249, 6
        %v6286 = vrot.slane %v6250, 6
        %v6287 = vrot.slane %v6247, 7
        %v6288 = vrot.slane %v6248, 7
        %v6289 = vrot.slane %v6249, 7
        %v6290 = vrot.slane %v6250, 7
        %v6291 = vrot.slane %v6251, 1
        %v6292 = vrot.slane %v6252, 1
        %v6293 = vrot.slane %v6253, 1
        %v6294 = vrot.slane %v6254, 1
        %v6295 = vrot.slane %v6251, 2
        %v6296 = vrot.slane %v6252, 2
        %v6297 = vrot.slane %v6253, 2
        %v6298 = vrot.slane %v6254, 2
        %v6299 = vrot.slane %v6251, 3
        %v6300 = vrot.slane %v6252, 3
        %v6301 = vrot.slane %v6253, 3
        %v6302 = vrot.slane %v6254, 3
        %v6303 = vrot.slane %v6251, 4
        %v6304 = vrot.slane %v6252, 4
        %v6305 = vrot.slane %v6253, 4
        %v6306 = vrot.slane %v6254, 4
        %v6307 = vrot.slane %v6251, 5
        %v6308 = vrot.slane %v6252, 5
        %v6309 = vrot.slane %v6253, 5
        %v6310 = vrot.slane %v6254, 5
        %v6311 = vrot.slane %v6251, 6
        %v6312 = vrot.slane %v6252, 6
        %v6313 = vrot.slane %v6253, 6
        %v6314 = vrot.slane %v6254, 6
        %v6315 = vrot.slane %v6251, 7
        %v6316 = vrot.slane %v6252, 7
        %v6317 = vrot.slane %v6253, 7
        %v6318 = vrot.slane %v6254, 7
        %v6383 = vadd.f32 %v5783, %v6247
        %v6384 = vadd.f32 %v5790, %v6248
        %v6385 = vadd.f32 %v5797, %v6249
        %v6386 = vadd.f32 %v5804, %v6250
        %v6387 = vadd.f32 %v5811, %v6263
        %v6388 = vadd.f32 %v5818, %v6264
        %v6389 = vadd.f32 %v5825, %v6265
        %v6390 = vadd.f32 %v5832, %v6266
        %v6391 = vadd.f32 %v5839, %v6267
        %v6392 = vadd.f32 %v5846, %v6268
        %v6393 = vadd.f32 %v5853, %v6269
        %v6394 = vadd.f32 %v5860, %v6270
        %v6395 = vadd.f32 %v5867, %v6271
        %v6396 = vadd.f32 %v5874, %v6272
        %v6397 = vadd.f32 %v5881, %v6273
        %v6398 = vadd.f32 %v5888, %v6274
        %v6399 = vadd.f32 %v5895, %v6275
        %v6400 = vadd.f32 %v5902, %v6276
        %v6401 = vadd.f32 %v5909, %v6277
        %v6402 = vadd.f32 %v5916, %v6278
        %v6403 = vadd.f32 %v5923, %v6279
        %v6404 = vadd.f32 %v5930, %v6280
        %v6405 = vadd.f32 %v5937, %v6281
        %v6406 = vadd.f32 %v5944, %v6282
        %v6407 = vadd.f32 %v5951, %v6283
        %v6408 = vadd.f32 %v5958, %v6284
        %v6409 = vadd.f32 %v5965, %v6285
        %v6410 = vadd.f32 %v5972, %v6286
        %v6411 = vadd.f32 %v5979, %v6287
        %v6412 = vadd.f32 %v5986, %v6288
        %v6413 = vadd.f32 %v5993, %v6289
        %v6414 = vadd.f32 %v6000, %v6290
        %v6415 = vadd.f32 %v6007, %v6251
        %v6416 = vadd.f32 %v6014, %v6252
        %v6417 = vadd.f32 %v6021, %v6253
        %v6418 = vadd.f32 %v6028, %v6254
        %v6419 = vadd.f32 %v6035, %v6291
        %v6420 = vadd.f32 %v6042, %v6292
        %v6421 = vadd.f32 %v6049, %v6293
        %v6422 = vadd.f32 %v6056, %v6294
        %v6423 = vadd.f32 %v6063, %v6295
        %v6424 = vadd.f32 %v6070, %v6296
        %v6425 = vadd.f32 %v6077, %v6297
        %v6426 = vadd.f32 %v6084, %v6298
        %v6427 = vadd.f32 %v6091, %v6299
        %v6428 = vadd.f32 %v6098, %v6300
        %v6429 = vadd.f32 %v6105, %v6301
        %v6430 = vadd.f32 %v6112, %v6302
        %v6431 = vadd.f32 %v6119, %v6303
        %v6432 = vadd.f32 %v6126, %v6304
        %v6433 = vadd.f32 %v6133, %v6305
        %v6434 = vadd.f32 %v6140, %v6306
        %v6435 = vadd.f32 %v6147, %v6307
        %v6436 = vadd.f32 %v6154, %v6308
        %v6437 = vadd.f32 %v6161, %v6309
        %v6438 = vadd.f32 %v6168, %v6310
        %v6439 = vadd.f32 %v6175, %v6311
        %v6440 = vadd.f32 %v6182, %v6312
        %v6441 = vadd.f32 %v6189, %v6313
        %v6442 = vadd.f32 %v6196, %v6314
        %v6443 = vadd.f32 %v6203, %v6315
        %v6444 = vadd.f32 %v6210, %v6316
        %v6445 = vadd.f32 %v6217, %v6317
        %v6446 = vadd.f32 %v6224, %v6318
        %v6447 = vxor.u32 %v2345, 2147483648
        %v6448 = vxor.u32 %v2347, 2147483648
        %v6449 = vxor.u32 %v2388, 2147483648
        %v6450 = vxor.u32 %v2390, 2147483648
        %v6451 = vxor.u32 %v2349, 2147483648
        %v6452 = vxor.u32 %v2351, 2147483648
        %v6453 = vxor.u32 %v2392, 2147483648
        %v6454 = vxor.u32 %v2394, 2147483648
        %v6455 = vmul.f32 %v6447, 1.442695
        %v6456 = vpow.pop %v6455
        %v6457 = vmul.f32 %v6448, 1.442695
        %v6458 = vpow.pop %v6457
        %v6459 = vmul.f32 %v6449, 1.442695
        %v6460 = vpow.pop %v6459
        %v6461 = vmul.f32 %v6450, 1.442695
        %v6462 = vpow.pop %v6461
        %v6463 = vmul.f32 %v6451, 1.442695
        %v6464 = vpow.pop %v6463
        %v6465 = vmul.f32 %v6452, 1.442695
        %v6466 = vpow.pop %v6465
        %v6467 = vmul.f32 %v6453, 1.442695
        %v6468 = vpow.pop %v6467
        %v6469 = vmul.f32 %v6454, 1.442695
        %v6470 = vpow.pop %v6469
        %v6471 = vadd.f32 %v6456, 1.0
        %v6472 = vadd.f32 %v6458, 1.0
        %v6473 = vadd.f32 %v6460, 1.0
        %v6474 = vadd.f32 %v6462, 1.0
        %v6475 = vadd.f32 %v6464, 1.0
        %v6476 = vadd.f32 %v6466, 1.0
        %v6477 = vadd.f32 %v6468, 1.0
        %v6478 = vadd.f32 %v6470, 1.0
        %v6479 = vrcp.pop %v6471
        %v6480 = vmul.f32 1.0, %v6479
        %v6481 = vrcp.pop %v6472
        %v6482 = vmul.f32 1.0, %v6481
        %v6483 = vrcp.pop %v6473
        %v6484 = vmul.f32 1.0, %v6483
        %v6485 = vrcp.pop %v6474
        %v6486 = vmul.f32 1.0, %v6485
        %v6487 = vrcp.pop %v6475
        %v6488 = vmul.f32 1.0, %v6487
        %v6489 = vrcp.pop %v6476
        %v6490 = vmul.f32 1.0, %v6489
        %v6491 = vrcp.pop %v6477
        %v6492 = vmul.f32 1.0, %v6491
        %v6493 = vrcp.pop %v6478
        %v6494 = vmul.f32 1.0, %v6493
        %v6495 = vmul.f32 %v2345, %v6480
        %v6496 = vmul.f32 %v2347, %v6482
        %v6497 = vmul.f32 %v2388, %v6484
        %v6498 = vmul.f32 %v2390, %v6486
        %v6499 = vmul.f32 %v2349, %v6488
        %v6500 = vmul.f32 %v2351, %v6490
        %v6501 = vmul.f32 %v2392, %v6492
        %v6502 = vmul.f32 %v2394, %v6494
        %v6511 = vrot.slane %v6495, 1
        %v6512 = vrot.slane %v6496, 1
        %v6513 = vrot.slane %v6497, 1
        %v6514 = vrot.slane %v6498, 1
        %v6515 = vrot.slane %v6495, 2
        %v6516 = vrot.slane %v6496, 2
        %v6517 = vrot.slane %v6497, 2
        %v6518 = vrot.slane %v6498, 2
        %v6519 = vrot.slane %v6495, 3
        %v6520 = vrot.slane %v6496, 3
        %v6521 = vrot.slane %v6497, 3
        %v6522 = vrot.slane %v6498, 3
        %v6523 = vrot.slane %v6495, 4
        %v6524 = vrot.slane %v6496, 4
        %v6525 = vrot.slane %v6497, 4
        %v6526 = vrot.slane %v6498, 4
        %v6527 = vrot.slane %v6495, 5
        %v6528 = vrot.slane %v6496, 5
        %v6529 = vrot.slane %v6497, 5
        %v6530 = vrot.slane %v6498, 5
        %v6531 = vrot.slane %v6495, 6
        %v6532 = vrot.slane %v6496, 6
        %v6533 = vrot.slane %v6497, 6
        %v6534 = vrot.slane %v6498, 6
        %v6535 = vrot.slane %v6495, 7
        %v6536 = vrot.slane %v6496, 7
        %v6537 = vrot.slane %v6497, 7
        %v6538 = vrot.slane %v6498, 7
        %v6539 = vrot.slane %v6499, 1
        %v6540 = vrot.slane %v6500, 1
        %v6541 = vrot.slane %v6501, 1
        %v6542 = vrot.slane %v6502, 1
        %v6543 = vrot.slane %v6499, 2
        %v6544 = vrot.slane %v6500, 2
        %v6545 = vrot.slane %v6501, 2
        %v6546 = vrot.slane %v6502, 2
        %v6547 = vrot.slane %v6499, 3
        %v6548 = vrot.slane %v6500, 3
        %v6549 = vrot.slane %v6501, 3
        %v6550 = vrot.slane %v6502, 3
        %v6551 = vrot.slane %v6499, 4
        %v6552 = vrot.slane %v6500, 4
        %v6553 = vrot.slane %v6501, 4
        %v6554 = vrot.slane %v6502, 4
        %v6555 = vrot.slane %v6499, 5
        %v6556 = vrot.slane %v6500, 5
        %v6557 = vrot.slane %v6501, 5
        %v6558 = vrot.slane %v6502, 5
        %v6559 = vrot.slane %v6499, 6
        %v6560 = vrot.slane %v6500, 6
        %v6561 = vrot.slane %v6501, 6
        %v6562 = vrot.slane %v6502, 6
        %v6563 = vrot.slane %v6499, 7
        %v6564 = vrot.slane %v6500, 7
        %v6565 = vrot.slane %v6501, 7
        %v6566 = vrot.slane %v6502, 7
        %v6631 = vmul.f32 %v6383, %v6495
        %v6632 = vmul.f32 %v6384, %v6496
        %v6633 = vmul.f32 %v6385, %v6497
        %v6634 = vmul.f32 %v6386, %v6498
        %v6635 = vmul.f32 %v6387, %v6511
        %v6636 = vmul.f32 %v6388, %v6512
        %v6637 = vmul.f32 %v6389, %v6513
        %v6638 = vmul.f32 %v6390, %v6514
        %v6639 = vmul.f32 %v6391, %v6515
        %v6640 = vmul.f32 %v6392, %v6516
        %v6641 = vmul.f32 %v6393, %v6517
        %v6642 = vmul.f32 %v6394, %v6518
        %v6643 = vmul.f32 %v6395, %v6519
        %v6644 = vmul.f32 %v6396, %v6520
        %v6645 = vmul.f32 %v6397, %v6521
        %v6646 = vmul.f32 %v6398, %v6522
        %v6647 = vmul.f32 %v6399, %v6523
        %v6648 = vmul.f32 %v6400, %v6524
        %v6649 = vmul.f32 %v6401, %v6525
        %v6650 = vmul.f32 %v6402, %v6526
        %v6651 = vmul.f32 %v6403, %v6527
        %v6652 = vmul.f32 %v6404, %v6528
        %v6653 = vmul.f32 %v6405, %v6529
        %v6654 = vmul.f32 %v6406, %v6530
        %v6655 = vmul.f32 %v6407, %v6531
        %v6656 = vmul.f32 %v6408, %v6532
        %v6657 = vmul.f32 %v6409, %v6533
        %v6658 = vmul.f32 %v6410, %v6534
        %v6659 = vmul.f32 %v6411, %v6535
        %v6660 = vmul.f32 %v6412, %v6536
        %v6661 = vmul.f32 %v6413, %v6537
        %v6662 = vmul.f32 %v6414, %v6538
        %v6663 = vmul.f32 %v6415, %v6499
        %v6664 = vmul.f32 %v6416, %v6500
        %v6665 = vmul.f32 %v6417, %v6501
        %v6666 = vmul.f32 %v6418, %v6502
        %v6667 = vmul.f32 %v6419, %v6539
        %v6668 = vmul.f32 %v6420, %v6540
        %v6669 = vmul.f32 %v6421, %v6541
        %v6670 = vmul.f32 %v6422, %v6542
        %v6671 = vmul.f32 %v6423, %v6543
        %v6672 = vmul.f32 %v6424, %v6544
        %v6673 = vmul.f32 %v6425, %v6545
        %v6674 = vmul.f32 %v6426, %v6546
        %v6675 = vmul.f32 %v6427, %v6547
        %v6676 = vmul.f32 %v6428, %v6548
        %v6677 = vmul.f32 %v6429, %v6549
        %v6678 = vmul.f32 %v6430, %v6550
        %v6679 = vmul.f32 %v6431, %v6551
        %v6680 = vmul.f32 %v6432, %v6552
        %v6681 = vmul.f32 %v6433, %v6553
        %v6682 = vmul.f32 %v6434, %v6554
        %v6683 = vmul.f32 %v6435, %v6555
        %v6684 = vmul.f32 %v6436, %v6556
        %v6685 = vmul.f32 %v6437, %v6557
        %v6686 = vmul.f32 %v6438, %v6558
        %v6687 = vmul.f32 %v6439, %v6559
        %v6688 = vmul.f32 %v6440, %v6560
        %v6689 = vmul.f32 %v6441, %v6561
        %v6690 = vmul.f32 %v6442, %v6562
        %v6691 = vmul.f32 %v6443, %v6563
        %v6692 = vmul.f32 %v6444, %v6564
        %v6693 = vmul.f32 %v6445, %v6565
        %v6694 = vmul.f32 %v6446, %v6566
        %v6695 = vpack.c.bf16 %v6631, %v6631
        %v6696 = vpack.c.bf16 %v6632, %v6632
        %v6697 = vpack.c.bf16 %v6633, %v6633
        %v6698 = vpack.c.bf16 %v6634, %v6634
        %v6699 = vpack.c.bf16 %v6635, %v6635
        %v6700 = vpack.c.bf16 %v6636, %v6636
        %v6701 = vpack.c.bf16 %v6637, %v6637
        %v6702 = vpack.c.bf16 %v6638, %v6638
        %v6703 = vpack.c.bf16 %v6639, %v6639
        %v6704 = vpack.c.bf16 %v6640, %v6640
        %v6705 = vpack.c.bf16 %v6641, %v6641
        %v6706 = vpack.c.bf16 %v6642, %v6642
        %v6707 = vpack.c.bf16 %v6643, %v6643
        %v6708 = vpack.c.bf16 %v6644, %v6644
        %v6709 = vpack.c.bf16 %v6645, %v6645
        %v6710 = vpack.c.bf16 %v6646, %v6646
        %v6711 = vpack.c.bf16 %v6647, %v6647
        %v6712 = vpack.c.bf16 %v6648, %v6648
        %v6713 = vpack.c.bf16 %v6649, %v6649
        %v6714 = vpack.c.bf16 %v6650, %v6650
        %v6715 = vpack.c.bf16 %v6651, %v6651
        %v6716 = vpack.c.bf16 %v6652, %v6652
        %v6717 = vpack.c.bf16 %v6653, %v6653
        %v6718 = vpack.c.bf16 %v6654, %v6654
        %v6719 = vpack.c.bf16 %v6655, %v6655
        %v6720 = vpack.c.bf16 %v6656, %v6656
        %v6721 = vpack.c.bf16 %v6657, %v6657
        %v6722 = vpack.c.bf16 %v6658, %v6658
        %v6723 = vpack.c.bf16 %v6659, %v6659
        %v6724 = vpack.c.bf16 %v6660, %v6660
        %v6725 = vpack.c.bf16 %v6661, %v6661
        %v6726 = vpack.c.bf16 %v6662, %v6662
        %v6727 = vpack.c.bf16 %v6663, %v6663
        %v6728 = vpack.c.bf16 %v6664, %v6664
        %v6729 = vpack.c.bf16 %v6665, %v6665
        %v6730 = vpack.c.bf16 %v6666, %v6666
        %v6731 = vpack.c.bf16 %v6667, %v6667
        %v6732 = vpack.c.bf16 %v6668, %v6668
        %v6733 = vpack.c.bf16 %v6669, %v6669
        %v6734 = vpack.c.bf16 %v6670, %v6670
        %v6735 = vpack.c.bf16 %v6671, %v6671
        %v6736 = vpack.c.bf16 %v6672, %v6672
        %v6737 = vpack.c.bf16 %v6673, %v6673
        %v6738 = vpack.c.bf16 %v6674, %v6674
        %v6739 = vpack.c.bf16 %v6675, %v6675
        %v6740 = vpack.c.bf16 %v6676, %v6676
        %v6741 = vpack.c.bf16 %v6677, %v6677
        %v6742 = vpack.c.bf16 %v6678, %v6678
        %v6743 = vpack.c.bf16 %v6679, %v6679
        %v6744 = vpack.c.bf16 %v6680, %v6680
        %v6745 = vpack.c.bf16 %v6681, %v6681
        %v6746 = vpack.c.bf16 %v6682, %v6682
        %v6747 = vpack.c.bf16 %v6683, %v6683
        %v6748 = vpack.c.bf16 %v6684, %v6684
        %v6749 = vpack.c.bf16 %v6685, %v6685
        %v6750 = vpack.c.bf16 %v6686, %v6686
        %v6751 = vpack.c.bf16 %v6687, %v6687
        %v6752 = vpack.c.bf16 %v6688, %v6688
        %v6753 = vpack.c.bf16 %v6689, %v6689
        %v6754 = vpack.c.bf16 %v6690, %v6690
        %v6755 = vpack.c.bf16 %v6691, %v6691
        %v6756 = vpack.c.bf16 %v6692, %v6692
        %v6757 = vpack.c.bf16 %v6693, %v6693
        %v6758 = vpack.c.bf16 %v6694, %v6694
        %v6759 = vld [vmem:[%s1155] sm:$0xff]
        %v6760 = vld [vmem:[%s1155 + $0x8] sm:$0xff]
        %v6761 = vld [vmem:[%s1155 + $0x10] sm:$0xff]
        %v6762 = vld [vmem:[%s1155 + $0x18] sm:$0xff]
        %v6763 = vld [vmem:[%s1155 + $0x20] sm:$0xff]
        %v6764 = vld [vmem:[%s1155 + $0x28] sm:$0xff]
        %v6765 = vld [vmem:[%s1155 + $0x30] sm:$0xff]
        %v6766 = vld [vmem:[%s1155 + $0x38] sm:$0xff]
        %v6767 = vld [vmem:[%s1155 + $0x40] sm:$0xff]
        %v6768 = vld [vmem:[%s1155 + $0x48] sm:$0xff]
        %v6769 = vld [vmem:[%s1155 + $0x50] sm:$0xff]
        %v6770 = vld [vmem:[%s1155 + $0x58] sm:$0xff]
        %v6771 = vld [vmem:[%s1155 + $0x60] sm:$0xff]
        %v6772 = vld [vmem:[%s1155 + $0x68] sm:$0xff]
        %v6773 = vld [vmem:[%s1155 + $0x70] sm:$0xff]
        %v6774 = vld [vmem:[%s1155 + $0x78] sm:$0xff]
        %v6775 = vld [vmem:[%s1155 + $0x80] sm:$0xff]
        %v6776 = vld [vmem:[%s1155 + $0x88] sm:$0xff]
        %v6777 = vld [vmem:[%s1155 + $0x90] sm:$0xff]
        %v6778 = vld [vmem:[%s1155 + $0x98] sm:$0xff]
        %v6779 = vld [vmem:[%s1155 + $0xa0] sm:$0xff]
        %v6780 = vld [vmem:[%s1155 + $0xa8] sm:$0xff]
        %v6781 = vld [vmem:[%s1155 + $0xb0] sm:$0xff]
        %v6782 = vld [vmem:[%s1155 + $0xb8] sm:$0xff]
        %v6783 = vld [vmem:[%s1155 + $0xc0] sm:$0xff]
        %v6784 = vld [vmem:[%s1155 + $0xc8] sm:$0xff]
        %v6785 = vld [vmem:[%s1155 + $0xd0] sm:$0xff]
        %v6786 = vld [vmem:[%s1155 + $0xd8] sm:$0xff]
        %v6787 = vld [vmem:[%s1155 + $0xe0] sm:$0xff]
        %v6788 = vld [vmem:[%s1155 + $0xe8] sm:$0xff]
        %v6789 = vld [vmem:[%s1155 + $0xf0] sm:$0xff]
        %v6790 = vld [vmem:[%s1155 + $0xf8] sm:$0xff]
        %v6791 = vld [vmem:[%s1155 + $0x100] sm:$0xff]
        %v6792 = vld [vmem:[%s1155 + $0x108] sm:$0xff]
        %v6793 = vld [vmem:[%s1155 + $0x110] sm:$0xff]
        %v6794 = vld [vmem:[%s1155 + $0x118] sm:$0xff]
        %v6795 = vld [vmem:[%s1155 + $0x120] sm:$0xff]
        %v6796 = vld [vmem:[%s1155 + $0x128] sm:$0xff]
        %v6797 = vld [vmem:[%s1155 + $0x130] sm:$0xff]
        %v6798 = vld [vmem:[%s1155 + $0x138] sm:$0xff]
        %v6799 = vld [vmem:[%s1155 + $0x140] sm:$0xff]
        %v6800 = vld [vmem:[%s1155 + $0x148] sm:$0xff]
        %v6801 = vld [vmem:[%s1155 + $0x150] sm:$0xff]
        %v6802 = vld [vmem:[%s1155 + $0x158] sm:$0xff]
        %v6803 = vld [vmem:[%s1155 + $0x160] sm:$0xff]
        %v6804 = vld [vmem:[%s1155 + $0x168] sm:$0xff]
        %v6805 = vld [vmem:[%s1155 + $0x170] sm:$0xff]
        %v6806 = vld [vmem:[%s1155 + $0x178] sm:$0xff]
        %v6807 = vld [vmem:[%s1155 + $0x180] sm:$0xff]
        %v6808 = vld [vmem:[%s1155 + $0x188] sm:$0xff]
        %v6809 = vld [vmem:[%s1155 + $0x190] sm:$0xff]
        %v6810 = vld [vmem:[%s1155 + $0x198] sm:$0xff]
        %v6811 = vld [vmem:[%s1155 + $0x1a0] sm:$0xff]
        %v6812 = vld [vmem:[%s1155 + $0x1a8] sm:$0xff]
        %v6813 = vld [vmem:[%s1155 + $0x1b0] sm:$0xff]
        %v6814 = vld [vmem:[%s1155 + $0x1b8] sm:$0xff]
        %v6815 = vld [vmem:[%s1155 + $0x1c0] sm:$0xff]
        %v6816 = vld [vmem:[%s1155 + $0x1c8] sm:$0xff]
        %v6817 = vld [vmem:[%s1155 + $0x1d0] sm:$0xff]
        %v6818 = vld [vmem:[%s1155 + $0x1d8] sm:$0xff]
        %v6819 = vld [vmem:[%s1155 + $0x1e0] sm:$0xff]
        %v6820 = vld [vmem:[%s1155 + $0x1e8] sm:$0xff]
        %v6821 = vld [vmem:[%s1155 + $0x1f0] sm:$0xff]
        %v6822 = vld [vmem:[%s1155 + $0x1f8] sm:$0xff]
        %v6887 = vunpack.c.l.b16 %v6695
        %v6888 = vunpack.c.l.b16 %v6696
        %v6889 = vunpack.c.l.b16 %v6697
        %v6890 = vunpack.c.l.b16 %v6698
        %v6891 = vunpack.c.l.b16 %v6699
        %v6892 = vunpack.c.l.b16 %v6700
        %v6893 = vunpack.c.l.b16 %v6701
        %v6894 = vunpack.c.l.b16 %v6702
        %v6895 = vunpack.c.l.b16 %v6703
        %v6896 = vunpack.c.l.b16 %v6704
        %v6897 = vunpack.c.l.b16 %v6705
        %v6898 = vunpack.c.l.b16 %v6706
        %v6899 = vunpack.c.l.b16 %v6707
        %v6900 = vunpack.c.l.b16 %v6708
        %v6901 = vunpack.c.l.b16 %v6709
        %v6902 = vunpack.c.l.b16 %v6710
        %v6903 = vunpack.c.l.b16 %v6711
        %v6904 = vunpack.c.l.b16 %v6712
        %v6905 = vunpack.c.l.b16 %v6713
        %v6906 = vunpack.c.l.b16 %v6714
        %v6907 = vunpack.c.l.b16 %v6715
        %v6908 = vunpack.c.l.b16 %v6716
        %v6909 = vunpack.c.l.b16 %v6717
        %v6910 = vunpack.c.l.b16 %v6718
        %v6911 = vunpack.c.l.b16 %v6719
        %v6912 = vunpack.c.l.b16 %v6720
        %v6913 = vunpack.c.l.b16 %v6721
        %v6914 = vunpack.c.l.b16 %v6722
        %v6915 = vunpack.c.l.b16 %v6723
        %v6916 = vunpack.c.l.b16 %v6724
        %v6917 = vunpack.c.l.b16 %v6725
        %v6918 = vunpack.c.l.b16 %v6726
        %v6919 = vunpack.c.l.b16 %v6727
        %v6920 = vunpack.c.l.b16 %v6728
        %v6921 = vunpack.c.l.b16 %v6729
        %v6922 = vunpack.c.l.b16 %v6730
        %v6923 = vunpack.c.l.b16 %v6731
        %v6924 = vunpack.c.l.b16 %v6732
        %v6925 = vunpack.c.l.b16 %v6733
        %v6926 = vunpack.c.l.b16 %v6734
        %v6927 = vunpack.c.l.b16 %v6735
        %v6928 = vunpack.c.l.b16 %v6736
        %v6929 = vunpack.c.l.b16 %v6737
        %v6930 = vunpack.c.l.b16 %v6738
        %v6931 = vunpack.c.l.b16 %v6739
        %v6932 = vunpack.c.l.b16 %v6740
        %v6933 = vunpack.c.l.b16 %v6741
        %v6934 = vunpack.c.l.b16 %v6742
        %v6935 = vunpack.c.l.b16 %v6743
        %v6936 = vunpack.c.l.b16 %v6744
        %v6937 = vunpack.c.l.b16 %v6745
        %v6938 = vunpack.c.l.b16 %v6746
        %v6939 = vunpack.c.l.b16 %v6747
        %v6940 = vunpack.c.l.b16 %v6748
        %v6941 = vunpack.c.l.b16 %v6749
        %v6942 = vunpack.c.l.b16 %v6750
        %v6943 = vunpack.c.l.b16 %v6751
        %v6944 = vunpack.c.l.b16 %v6752
        %v6945 = vunpack.c.l.b16 %v6753
        %v6946 = vunpack.c.l.b16 %v6754
        %v6947 = vunpack.c.l.b16 %v6755
        %v6948 = vunpack.c.l.b16 %v6756
        %v6949 = vunpack.c.l.b16 %v6757
        %v6950 = vunpack.c.l.b16 %v6758
        %v6951 = vrot.slane %v6891, 7
        %vm6952 = vcmask 1041409
        %v6953 = vsel %vm6952, %v6951, %v6887
        %v6954 = vrot.slane %v6895, 6
        %vm6955 = vcmask 1042434
        %v6956 = vsel %vm6955, %v6954, %v6953
        %v6957 = vrot.slane %v6899, 5
        %vm6958 = vcmask 1043459
        %v6959 = vsel %vm6958, %v6957, %v6956
        %v6960 = vrot.slane %v6903, 4
        %vm6961 = vcmask 1044484
        %v6962 = vsel %vm6961, %v6960, %v6959
        %v6963 = vrot.slane %v6907, 3
        %vm6964 = vcmask 1045509
        %v6965 = vsel %vm6964, %v6963, %v6962
        %v6966 = vrot.slane %v6911, 2
        %vm6967 = vcmask 1046534
        %v6968 = vsel %vm6967, %v6966, %v6965
        %v6969 = vrot.slane %v6915, 1
        %vm6970 = vcmask 1047559
        %v6971 = vsel %vm6970, %v6969, %v6968
        %v6972 = vrot.slane %v6892, 7
        %v6973 = vsel %vm6952, %v6972, %v6888
        %v6974 = vrot.slane %v6896, 6
        %v6975 = vsel %vm6955, %v6974, %v6973
        %v6976 = vrot.slane %v6900, 5
        %v6977 = vsel %vm6958, %v6976, %v6975
        %v6978 = vrot.slane %v6904, 4
        %v6979 = vsel %vm6961, %v6978, %v6977
        %v6980 = vrot.slane %v6908, 3
        %v6981 = vsel %vm6964, %v6980, %v6979
        %v6982 = vrot.slane %v6912, 2
        %v6983 = vsel %vm6967, %v6982, %v6981
        %v6984 = vrot.slane %v6916, 1
        %v6985 = vsel %vm6970, %v6984, %v6983
        %v6986 = vrot.slane %v6893, 7
        %v6987 = vsel %vm6952, %v6986, %v6889
        %v6988 = vrot.slane %v6897, 6
        %v6989 = vsel %vm6955, %v6988, %v6987
        %v6990 = vrot.slane %v6901, 5
        %v6991 = vsel %vm6958, %v6990, %v6989
        %v6992 = vrot.slane %v6905, 4
        %v6993 = vsel %vm6961, %v6992, %v6991
        %v6994 = vrot.slane %v6909, 3
        %v6995 = vsel %vm6964, %v6994, %v6993
        %v6996 = vrot.slane %v6913, 2
        %v6997 = vsel %vm6967, %v6996, %v6995
        %v6998 = vrot.slane %v6917, 1
        %v6999 = vsel %vm6970, %v6998, %v6997
        %v7000 = vrot.slane %v6894, 7
        %v7001 = vsel %vm6952, %v7000, %v6890
        %v7002 = vrot.slane %v6898, 6
        %v7003 = vsel %vm6955, %v7002, %v7001
        %v7004 = vrot.slane %v6902, 5
        %v7005 = vsel %vm6958, %v7004, %v7003
        %v7006 = vrot.slane %v6906, 4
        %v7007 = vsel %vm6961, %v7006, %v7005
        %v7008 = vrot.slane %v6910, 3
        %v7009 = vsel %vm6964, %v7008, %v7007
        %v7010 = vrot.slane %v6914, 2
        %v7011 = vsel %vm6967, %v7010, %v7009
        %v7012 = vrot.slane %v6918, 1
        %v7013 = vsel %vm6970, %v7012, %v7011
        %v7014 = vrot.slane %v6923, 7
        %v7015 = vsel %vm6952, %v7014, %v6919
        %v7016 = vrot.slane %v6927, 6
        %v7017 = vsel %vm6955, %v7016, %v7015
        %v7018 = vrot.slane %v6931, 5
        %v7019 = vsel %vm6958, %v7018, %v7017
        %v7020 = vrot.slane %v6935, 4
        %v7021 = vsel %vm6961, %v7020, %v7019
        %v7022 = vrot.slane %v6939, 3
        %v7023 = vsel %vm6964, %v7022, %v7021
        %v7024 = vrot.slane %v6943, 2
        %v7025 = vsel %vm6967, %v7024, %v7023
        %v7026 = vrot.slane %v6947, 1
        %v7027 = vsel %vm6970, %v7026, %v7025
        %v7028 = vrot.slane %v6924, 7
        %v7029 = vsel %vm6952, %v7028, %v6920
        %v7030 = vrot.slane %v6928, 6
        %v7031 = vsel %vm6955, %v7030, %v7029
        %v7032 = vrot.slane %v6932, 5
        %v7033 = vsel %vm6958, %v7032, %v7031
        %v7034 = vrot.slane %v6936, 4
        %v7035 = vsel %vm6961, %v7034, %v7033
        %v7036 = vrot.slane %v6940, 3
        %v7037 = vsel %vm6964, %v7036, %v7035
        %v7038 = vrot.slane %v6944, 2
        %v7039 = vsel %vm6967, %v7038, %v7037
        %v7040 = vrot.slane %v6948, 1
        %v7041 = vsel %vm6970, %v7040, %v7039
        %v7042 = vrot.slane %v6925, 7
        %v7043 = vsel %vm6952, %v7042, %v6921
        %v7044 = vrot.slane %v6929, 6
        %v7045 = vsel %vm6955, %v7044, %v7043
        %v7046 = vrot.slane %v6933, 5
        %v7047 = vsel %vm6958, %v7046, %v7045
        %v7048 = vrot.slane %v6937, 4
        %v7049 = vsel %vm6961, %v7048, %v7047
        %v7050 = vrot.slane %v6941, 3
        %v7051 = vsel %vm6964, %v7050, %v7049
        %v7052 = vrot.slane %v6945, 2
        %v7053 = vsel %vm6967, %v7052, %v7051
        %v7054 = vrot.slane %v6949, 1
        %v7055 = vsel %vm6970, %v7054, %v7053
        %v7056 = vrot.slane %v6926, 7
        %v7057 = vsel %vm6952, %v7056, %v6922
        %v7058 = vrot.slane %v6930, 6
        %v7059 = vsel %vm6955, %v7058, %v7057
        %v7060 = vrot.slane %v6934, 5
        %v7061 = vsel %vm6958, %v7060, %v7059
        %v7062 = vrot.slane %v6938, 4
        %v7063 = vsel %vm6961, %v7062, %v7061
        %v7064 = vrot.slane %v6942, 3
        %v7065 = vsel %vm6964, %v7064, %v7063
        %v7066 = vrot.slane %v6946, 2
        %v7067 = vsel %vm6967, %v7066, %v7065
        %v7068 = vrot.slane %v6950, 1
        %v7069 = vsel %vm6970, %v7068, %v7067
        %v7070 = vpack.c.b16 %v7027, %v6971
        %v7071 = vpack.c.b16 %v7041, %v6985
        %v7072 = vpack.c.b16 %v7055, %v6999
        %v7073 = vpack.c.b16 %v7069, %v7013
        %v7142 = vunpack.c.l.b16 %v6759
        %v7143 = vunpack.c.h.b16 %v6759
        %v7144 = vunpack.c.l.b16 %v6760
        %v7145 = vunpack.c.h.b16 %v6760
        %v7146 = vunpack.c.l.b16 %v6761
        %v7147 = vunpack.c.h.b16 %v6761
        %v7148 = vunpack.c.l.b16 %v6762
        %v7149 = vunpack.c.h.b16 %v6762
        %v7150 = vunpack.c.l.b16 %v6763
        %v7151 = vunpack.c.h.b16 %v6763
        %v7152 = vunpack.c.l.b16 %v6764
        %v7153 = vunpack.c.h.b16 %v6764
        %v7154 = vunpack.c.l.b16 %v6765
        %v7155 = vunpack.c.h.b16 %v6765
        %v7156 = vunpack.c.l.b16 %v6766
        %v7157 = vunpack.c.h.b16 %v6766
        %v7158 = vunpack.c.l.b16 %v6767
        %v7159 = vunpack.c.h.b16 %v6767
        %v7160 = vunpack.c.l.b16 %v6768
        %v7161 = vunpack.c.h.b16 %v6768
        %v7162 = vunpack.c.l.b16 %v6769
        %v7163 = vunpack.c.h.b16 %v6769
        %v7164 = vunpack.c.l.b16 %v6770
        %v7165 = vunpack.c.h.b16 %v6770
        %v7166 = vunpack.c.l.b16 %v6771
        %v7167 = vunpack.c.h.b16 %v6771
        %v7168 = vunpack.c.l.b16 %v6772
        %v7169 = vunpack.c.h.b16 %v6772
        %v7170 = vunpack.c.l.b16 %v6773
        %v7171 = vunpack.c.h.b16 %v6773
        %v7172 = vunpack.c.l.b16 %v6774
        %v7173 = vunpack.c.h.b16 %v6774
        %v7174 = vunpack.c.l.b16 %v6775
        %v7175 = vunpack.c.h.b16 %v6775
        %v7176 = vunpack.c.l.b16 %v6776
        %v7177 = vunpack.c.h.b16 %v6776
        %v7178 = vunpack.c.l.b16 %v6777
        %v7179 = vunpack.c.h.b16 %v6777
        %v7180 = vunpack.c.l.b16 %v6778
        %v7181 = vunpack.c.h.b16 %v6778
        %v7182 = vunpack.c.l.b16 %v6779
        %v7183 = vunpack.c.h.b16 %v6779
        %v7184 = vunpack.c.l.b16 %v6780
        %v7185 = vunpack.c.h.b16 %v6780
        %v7186 = vunpack.c.l.b16 %v6781
        %v7187 = vunpack.c.h.b16 %v6781
        %v7188 = vunpack.c.l.b16 %v6782
        %v7189 = vunpack.c.h.b16 %v6782
        %v7190 = vunpack.c.l.b16 %v6783
        %v7191 = vunpack.c.h.b16 %v6783
        %v7192 = vunpack.c.l.b16 %v6784
        %v7193 = vunpack.c.h.b16 %v6784
        %v7194 = vunpack.c.l.b16 %v6785
        %v7195 = vunpack.c.h.b16 %v6785
        %v7196 = vunpack.c.l.b16 %v6786
        %v7197 = vunpack.c.h.b16 %v6786
        %v7198 = vunpack.c.l.b16 %v6787
        %v7199 = vunpack.c.h.b16 %v6787
        %v7200 = vunpack.c.l.b16 %v6788
        %v7201 = vunpack.c.h.b16 %v6788
        %v7202 = vunpack.c.l.b16 %v6789
        %v7203 = vunpack.c.h.b16 %v6789
        %v7204 = vunpack.c.l.b16 %v6790
        %v7205 = vunpack.c.h.b16 %v6790
        %v7206 = vunpack.c.l.b16 %v6791
        %v7207 = vunpack.c.h.b16 %v6791
        %v7208 = vunpack.c.l.b16 %v6792
        %v7209 = vunpack.c.h.b16 %v6792
        %v7210 = vunpack.c.l.b16 %v6793
        %v7211 = vunpack.c.h.b16 %v6793
        %v7212 = vunpack.c.l.b16 %v6794
        %v7213 = vunpack.c.h.b16 %v6794
        %v7214 = vunpack.c.l.b16 %v6795
        %v7215 = vunpack.c.h.b16 %v6795
        %v7216 = vunpack.c.l.b16 %v6796
        %v7217 = vunpack.c.h.b16 %v6796
        %v7218 = vunpack.c.l.b16 %v6797
        %v7219 = vunpack.c.h.b16 %v6797
        %v7220 = vunpack.c.l.b16 %v6798
        %v7221 = vunpack.c.h.b16 %v6798
        %v7222 = vunpack.c.l.b16 %v6799
        %v7223 = vunpack.c.h.b16 %v6799
        %v7224 = vunpack.c.l.b16 %v6800
        %v7225 = vunpack.c.h.b16 %v6800
        %v7226 = vunpack.c.l.b16 %v6801
        %v7227 = vunpack.c.h.b16 %v6801
        %v7228 = vunpack.c.l.b16 %v6802
        %v7229 = vunpack.c.h.b16 %v6802
        %v7230 = vunpack.c.l.b16 %v6803
        %v7231 = vunpack.c.h.b16 %v6803
        %v7232 = vunpack.c.l.b16 %v6804
        %v7233 = vunpack.c.h.b16 %v6804
        %v7234 = vunpack.c.l.b16 %v6805
        %v7235 = vunpack.c.h.b16 %v6805
        %v7236 = vunpack.c.l.b16 %v6806
        %v7237 = vunpack.c.h.b16 %v6806
        %v7238 = vunpack.c.l.b16 %v6807
        %v7239 = vunpack.c.h.b16 %v6807
        %v7240 = vunpack.c.l.b16 %v6808
        %v7241 = vunpack.c.h.b16 %v6808
        %v7242 = vunpack.c.l.b16 %v6809
        %v7243 = vunpack.c.h.b16 %v6809
        %v7244 = vunpack.c.l.b16 %v6810
        %v7245 = vunpack.c.h.b16 %v6810
        %v7246 = vunpack.c.l.b16 %v6811
        %v7247 = vunpack.c.h.b16 %v6811
        %v7248 = vunpack.c.l.b16 %v6812
        %v7249 = vunpack.c.h.b16 %v6812
        %v7250 = vunpack.c.l.b16 %v6813
        %v7251 = vunpack.c.h.b16 %v6813
        %v7252 = vunpack.c.l.b16 %v6814
        %v7253 = vunpack.c.h.b16 %v6814
        %v7254 = vunpack.c.l.b16 %v6815
        %v7255 = vunpack.c.h.b16 %v6815
        %v7256 = vunpack.c.l.b16 %v6816
        %v7257 = vunpack.c.h.b16 %v6816
        %v7258 = vunpack.c.l.b16 %v6817
        %v7259 = vunpack.c.h.b16 %v6817
        %v7260 = vunpack.c.l.b16 %v6818
        %v7261 = vunpack.c.h.b16 %v6818
        %v7262 = vunpack.c.l.b16 %v6819
        %v7263 = vunpack.c.h.b16 %v6819
        %v7264 = vunpack.c.l.b16 %v6820
        %v7265 = vunpack.c.h.b16 %v6820
        %v7266 = vunpack.c.l.b16 %v6821
        %v7267 = vunpack.c.h.b16 %v6821
        %v7268 = vunpack.c.l.b16 %v6822
        %v7269 = vunpack.c.h.b16 %v6822
        %v7270 = vpack.c.b16 %v7144, %v7142
        %v7271 = vpack.c.b16 %v7145, %v7143
        %v7272 = vpack.c.b16 %v7148, %v7146
        %v7273 = vpack.c.b16 %v7149, %v7147
        %v7274 = vpack.c.b16 %v7152, %v7150
        %v7275 = vpack.c.b16 %v7153, %v7151
        %v7276 = vpack.c.b16 %v7156, %v7154
        %v7277 = vpack.c.b16 %v7157, %v7155
        %v7278 = vpack.c.b16 %v7160, %v7158
        %v7279 = vpack.c.b16 %v7161, %v7159
        %v7280 = vpack.c.b16 %v7164, %v7162
        %v7281 = vpack.c.b16 %v7165, %v7163
        %v7282 = vpack.c.b16 %v7168, %v7166
        %v7283 = vpack.c.b16 %v7169, %v7167
        %v7284 = vpack.c.b16 %v7172, %v7170
        %v7285 = vpack.c.b16 %v7173, %v7171
        %v7286 = vpack.c.b16 %v7176, %v7174
        %v7287 = vpack.c.b16 %v7177, %v7175
        %v7288 = vpack.c.b16 %v7180, %v7178
        %v7289 = vpack.c.b16 %v7181, %v7179
        %v7290 = vpack.c.b16 %v7184, %v7182
        %v7291 = vpack.c.b16 %v7185, %v7183
        %v7292 = vpack.c.b16 %v7188, %v7186
        %v7293 = vpack.c.b16 %v7189, %v7187
        %v7294 = vpack.c.b16 %v7192, %v7190
        %v7295 = vpack.c.b16 %v7193, %v7191
        %v7296 = vpack.c.b16 %v7196, %v7194
        %v7297 = vpack.c.b16 %v7197, %v7195
        %v7298 = vpack.c.b16 %v7200, %v7198
        %v7299 = vpack.c.b16 %v7201, %v7199
        %v7300 = vpack.c.b16 %v7204, %v7202
        %v7301 = vpack.c.b16 %v7205, %v7203
        %v7302 = vpack.c.b16 %v7208, %v7206
        %v7303 = vpack.c.b16 %v7209, %v7207
        %v7304 = vpack.c.b16 %v7212, %v7210
        %v7305 = vpack.c.b16 %v7213, %v7211
        %v7306 = vpack.c.b16 %v7216, %v7214
        %v7307 = vpack.c.b16 %v7217, %v7215
        %v7308 = vpack.c.b16 %v7220, %v7218
        %v7309 = vpack.c.b16 %v7221, %v7219
        %v7310 = vpack.c.b16 %v7224, %v7222
        %v7311 = vpack.c.b16 %v7225, %v7223
        %v7312 = vpack.c.b16 %v7228, %v7226
        %v7313 = vpack.c.b16 %v7229, %v7227
        %v7314 = vpack.c.b16 %v7232, %v7230
        %v7315 = vpack.c.b16 %v7233, %v7231
        %v7316 = vpack.c.b16 %v7236, %v7234
        %v7317 = vpack.c.b16 %v7237, %v7235
        %v7318 = vpack.c.b16 %v7240, %v7238
        %v7319 = vpack.c.b16 %v7241, %v7239
        %v7320 = vpack.c.b16 %v7244, %v7242
        %v7321 = vpack.c.b16 %v7245, %v7243
        %v7322 = vpack.c.b16 %v7248, %v7246
        %v7323 = vpack.c.b16 %v7249, %v7247
        %v7324 = vpack.c.b16 %v7252, %v7250
        %v7325 = vpack.c.b16 %v7253, %v7251
        %v7326 = vpack.c.b16 %v7256, %v7254
        %v7327 = vpack.c.b16 %v7257, %v7255
        %v7328 = vpack.c.b16 %v7260, %v7258
        %v7329 = vpack.c.b16 %v7261, %v7259
        %v7330 = vpack.c.b16 %v7264, %v7262
        %v7331 = vpack.c.b16 %v7265, %v7263
        %v7332 = vpack.c.b16 %v7268, %v7266
        %v7333 = vpack.c.b16 %v7269, %v7267
        %7398 = vmatprep.subr.bf16.mxu0 %v7285
        %7399 = vmatpush1.bf16.msra.mxu0 %v7284
        %7400 = vmatprep.subr.bf16.mxu0 %v7283
        %7401 = vmatpush1.bf16.msra.mxu0 %v7282
        %7402 = vmatprep.subr.bf16.mxu0 %v7281
        %7403 = vmatpush1.bf16.msra.mxu0 %v7280
        %7404 = vmatprep.subr.bf16.mxu0 %v7279
        %7405 = vmatpush1.bf16.msra.mxu0 %v7278
        %7406 = vmatprep.subr.bf16.mxu0 %v7277
        %7407 = vmatpush1.bf16.msra.mxu0 %v7276
        %7408 = vmatprep.subr.bf16.mxu0 %v7275
        %7409 = vmatpush1.bf16.msra.mxu0 %v7274
        %7410 = vmatprep.subr.bf16.mxu0 %v7273
        %7411 = vmatpush1.bf16.msra.mxu0 %v7272
        %7412 = vmatprep.subr.bf16.mxu0 %v7271
        %7413 = vmatpush1.bf16.msra.mxu0 %v7270
        %7414 = vmatprep.subr.bf16.mxu0 %v7301
        %7415 = vmatpush2.bf16.msra.mxu0 %v7300
        %7416 = vmatprep.subr.bf16.mxu0 %v7299
        %7417 = vmatpush2.bf16.msra.mxu0 %v7298
        %7418 = vmatprep.subr.bf16.mxu0 %v7297
        %7419 = vmatpush2.bf16.msra.mxu0 %v7296
        %7420 = vmatprep.subr.bf16.mxu0 %v7295
        %7421 = vmatpush2.bf16.msra.mxu0 %v7294
        %7422 = vmatprep.subr.bf16.mxu0 %v7293
        %7423 = vmatpush2.bf16.msra.mxu0 %v7292
        %7424 = vmatprep.subr.bf16.mxu0 %v7291
        %7425 = vmatpush2.bf16.msra.mxu0 %v7290
        %7426 = vmatprep.subr.bf16.mxu0 %v7289
        %7427 = vmatpush2.bf16.msra.mxu0 %v7288
        %7428 = vmatprep.subr.bf16.mxu0 %v7287
        %7429 = vmatpush2.bf16.msra.mxu0 %v7286
        %7430 = vmatprep.mubr.bf16.mxu0 %v7071
        %7431 = vmatmul.mubr.bf16.gmra.mxu0 %v7070
        %v7432 = vpop.f32.mrf.mxu0
        %v7433 = vadd.f32 0.0, %v7432
        %v7434 = vpop.f32.mrf.mxu0
        %v7435 = vadd.f32 0.0, %v7434
        %v7436 = vpop.f32.mrf.mxu0
        %v7437 = vadd.f32 0.0, %v7436
        %v7438 = vpop.f32.mrf.mxu0
        %v7439 = vadd.f32 0.0, %v7438
        %7440 = vdwg.mxu0
        %7441 = vmatprep.subr.bf16.mxu0 %v7317
        %7442 = vmatpush1.bf16.msra.mxu0 %v7316
        %7443 = vmatprep.subr.bf16.mxu0 %v7315
        %7444 = vmatpush1.bf16.msra.mxu0 %v7314
        %7445 = vmatprep.subr.bf16.mxu0 %v7313
        %7446 = vmatpush1.bf16.msra.mxu0 %v7312
        %7447 = vmatprep.subr.bf16.mxu0 %v7311
        %7448 = vmatpush1.bf16.msra.mxu0 %v7310
        %7449 = vmatprep.subr.bf16.mxu0 %v7309
        %7450 = vmatpush1.bf16.msra.mxu0 %v7308
        %7451 = vmatprep.subr.bf16.mxu0 %v7307
        %7452 = vmatpush1.bf16.msra.mxu0 %v7306
        %7453 = vmatprep.subr.bf16.mxu0 %v7305
        %7454 = vmatpush1.bf16.msra.mxu0 %v7304
        %7455 = vmatprep.subr.bf16.mxu0 %v7303
        %7456 = vmatpush1.bf16.msra.mxu0 %v7302
        %7457 = vmatprep.subr.bf16.mxu0 %v7333
        %7458 = vmatpush2.bf16.msra.mxu0 %v7332
        %7459 = vmatprep.subr.bf16.mxu0 %v7331
        %7460 = vmatpush2.bf16.msra.mxu0 %v7330
        %7461 = vmatprep.subr.bf16.mxu0 %v7329
        %7462 = vmatpush2.bf16.msra.mxu0 %v7328
        %7463 = vmatprep.subr.bf16.mxu0 %v7327
        %7464 = vmatpush2.bf16.msra.mxu0 %v7326
        %7465 = vmatprep.subr.bf16.mxu0 %v7325
        %7466 = vmatpush2.bf16.msra.mxu0 %v7324
        %7467 = vmatprep.subr.bf16.mxu0 %v7323
        %7468 = vmatpush2.bf16.msra.mxu0 %v7322
        %7469 = vmatprep.subr.bf16.mxu0 %v7321
        %7470 = vmatpush2.bf16.msra.mxu0 %v7320
        %7471 = vmatprep.subr.bf16.mxu0 %v7319
        %7472 = vmatpush2.bf16.msra.mxu0 %v7318
        %7473 = vmatprep.mubr.bf16.mxu0 %v7073
        %7474 = vmatmul.mubr.bf16.gmra.mxu0 %v7072
        %v7475 = vpop.f32.mrf.mxu0
        %v7476 = vadd.f32 %v7433, %v7475
        %v7477 = vpop.f32.mrf.mxu0
        %v7478 = vadd.f32 %v7435, %v7477
        %v7479 = vpop.f32.mrf.mxu0
        %v7480 = vadd.f32 %v7437, %v7479
        %v7481 = vpop.f32.mrf.mxu0
        %v7482 = vadd.f32 %v7439, %v7481
        %7483 = vdwg.mxu0
        %v7484 = vadd.f32 %v1413, %v7476
        %v7485 = vadd.f32 %v1414, %v7478
        %v7486 = vadd.f32 %v1415, %v7480
        %v7487 = vadd.f32 %v1416, %v7482
        %7488 = vst [vmem:[#allocation2] sm:$0xff] %v7484
        %7489 = vst [vmem:[#allocation2 + $0x8] sm:$0xff] %v7485
        %7490 = vst [vmem:[#allocation2 + $0x10] sm:$0xff] %v7486
        %7491 = vst [vmem:[#allocation2 + $0x18] sm:$0xff] %v7487
        %p7492 = scmp.eq.s32.totalorder %s47, 5
        // Predicated region
        $region221: #{motion_ssm_forward.1} parent=119 // pred_check
          %p7493 = pneg %p7492
        $region222: #{motion_ssm_forward.1} parent=119 // pred_check_branch
          %7495 = sbr.rel (%p7493) target = $region224
        $region223: #{motion_ssm_forward.1} parent=119 // pred_region
          %s7496 = scalar_lea.vmem [#allocation2], 7
          %v7497 = vld [vmem:[%s7496] ss:$8 sm:$0x3]
          %s7498 = scalar_lea.vmem [#allocation2], 23
          %v7499 = vld [vmem:[%s7498] ss:$8 sm:$0x3]
          %v7500 = vld [vmem:[#allocation10] sm:$0x3]
          %v7501 = vmul.f32 %v7497, %v7497
          %v7502 = vmul.f32 %v7499, %v7499
          %v7505 = vcombine.low %v7501, %v7502
          %v7507 = vunpack.c.l.s4 1966171168
          %v7508 = vunpack.c.0.s8 %v7507
          %v7509 = vlaneseq
          %v7510 = vshrl.u32 %v7509, 7
          %v7511 = vsub.s32 %v7508, %v7510
          %v7512 = vrot.slane %v7505, %v7511
          %v7513 = vcombine.high %v7512, %v7512
          %v7515 = vunpack.c.l.s4 1966171168
          %v7516 = vunpack.c.0.s8 %v7515
          %v7517 = vlaneseq
          %v7518 = vshrl.u32 %v7517, 7
          %v7519 = vsub.s32 %v7516, %v7518
          %v7520 = vrot.slane %v7512, %v7519
          %v7522 = vunpack.c.l.s4 1966171168
          %v7523 = vunpack.c.0.s8 %v7522
          %v7524 = vlaneseq
          %v7525 = vshrl.u32 %v7524, 7
          %v7526 = vsub.s32 %v7523, %v7525
          %v7527 = vrot.slane %v7513, %v7526
          %vm7530 = vcmask 1041408
          %v7531 = vsel %vm7530, %v7520, 0.0
          %v7532 = vsel %vm7530, %v7527, 0.0
          %v7533 = vadd.f32 %v7531, %v7532
          %7534 = vadd.xlane.f32.xlu0 %v7533
          %v7535 = vpop.xlane.xlu0 %7534
          %v7536 = vmul.f32 %v7535, %v1428
          %v7537 = vadd.f32 %v7536, 1e-05
          %v7538 = vrsqrt.pop %v7537
          %v7540 = vlaneseq
          %v7541 = vshrl.u32 %v7540, 7
          %v7542 = vsub.s32 0, %v7541
          %v7543 = vrot.slane %v7538, %v7542
          %v7544 = vlaneseq
          %v7545 = vshrl.u32 %v7544, 7
          %v7546 = vsub.s32 1, %v7545
          %v7547 = vrot.slane %v7538, %v7546
          %v7550 = vmul.f32 %v7497, %v7543
          %v7551 = vmul.f32 %v7499, %v7547
          %v7553 = vlaneseq
          %v7554 = vshrl.u32 %v7553, 7
          %v7555 = vsub.s32 0, %v7554
          %v7556 = vrot.slane %v7500, %v7555
          %v7557 = vlaneseq
          %v7558 = vshrl.u32 %v7557, 7
          %v7559 = vsub.s32 1, %v7558
          %v7560 = vrot.slane %v7500, %v7559
          %v7561 = vcombine.low %v7556, %v7560
          %v7563 = vunpack.c.l.s4 1966171168
          %v7564 = vunpack.c.0.s8 %v7563
          %v7565 = vlaneseq
          %v7566 = vshrl.u32 %v7565, 7
          %v7567 = vsub.s32 %v7564, %v7566
          %v7568 = vrot.slane %v7561, %v7567
          %v7569 = vcombine.high %v7568, %v7568
          %v7571 = vunpack.c.l.s4 1966171168
          %v7572 = vunpack.c.0.s8 %v7571
          %v7573 = vlaneseq
          %v7574 = vshrl.u32 %v7573, 7
          %v7575 = vsub.s32 %v7572, %v7574
          %v7576 = vrot.slane %v7568, %v7575
          %v7578 = vunpack.c.l.s4 1966171168
          %v7579 = vunpack.c.0.s8 %v7578
          %v7580 = vlaneseq
          %v7581 = vshrl.u32 %v7580, 7
          %v7582 = vsub.s32 %v7579, %v7581
          %v7583 = vrot.slane %v7569, %v7582
          %v7586 = vmul.f32 %v7550, %v7576
          %v7587 = vmul.f32 %v7551, %v7583
          %v7588 = vld [vmem:[%s1] sm:$0x3]
          %v7589 = vld [vmem:[#allocation22] sm:$0xff]
          %v7590 = vld [vmem:[#allocation22 + $0x8] sm:$0xff]
          %v7591 = vld [vmem:[#allocation22 + $0x10] sm:$0xff]
          %v7592 = vld [vmem:[#allocation22 + $0x18] sm:$0xff]
          %v7593 = vld [vmem:[#allocation22 + $0x20] sm:$0xff]
          %v7594 = vld [vmem:[#allocation22 + $0x28] sm:$0xff]
          %v7595 = vld [vmem:[#allocation22 + $0x30] sm:$0xff]
          %v7596 = vld [vmem:[#allocation22 + $0x38] sm:$0xff]
          %v7597 = vld [vmem:[#allocation22 + $0x40] sm:$0xff]
          %v7598 = vld [vmem:[#allocation22 + $0x48] sm:$0xff]
          %v7599 = vld [vmem:[#allocation22 + $0x50] sm:$0xff]
          %v7600 = vld [vmem:[#allocation22 + $0x58] sm:$0xff]
          %v7601 = vld [vmem:[#allocation22 + $0x60] sm:$0xff]
          %v7602 = vld [vmem:[#allocation22 + $0x68] sm:$0xff]
          %v7603 = vld [vmem:[#allocation22 + $0x70] sm:$0xff]
          %v7604 = vld [vmem:[#allocation22 + $0x78] sm:$0xff]
          %v7605 = vld [vmem:[#allocation22 + $0x80] sm:$0xff]
          %v7606 = vld [vmem:[#allocation22 + $0x88] sm:$0xff]
          %v7607 = vld [vmem:[#allocation22 + $0x90] sm:$0xff]
          %v7608 = vld [vmem:[#allocation22 + $0x98] sm:$0xff]
          %v7609 = vld [vmem:[#allocation22 + $0xa0] sm:$0xff]
          %v7610 = vld [vmem:[#allocation22 + $0xa8] sm:$0xff]
          %v7611 = vld [vmem:[#allocation22 + $0xb0] sm:$0xff]
          %v7612 = vld [vmem:[#allocation22 + $0xb8] sm:$0xff]
          %v7613 = vld [vmem:[#allocation22 + $0xc0] sm:$0xff]
          %v7614 = vld [vmem:[#allocation22 + $0xc8] sm:$0xff]
          %v7615 = vld [vmem:[#allocation22 + $0xd0] sm:$0xff]
          %v7616 = vld [vmem:[#allocation22 + $0xd8] sm:$0xff]
          %v7617 = vld [vmem:[#allocation22 + $0xe0] sm:$0xff]
          %v7618 = vld [vmem:[#allocation22 + $0xe8] sm:$0xff]
          %v7619 = vld [vmem:[#allocation22 + $0xf0] sm:$0xff]
          %v7620 = vld [vmem:[#allocation22 + $0xf8] sm:$0xff]
          %v7621 = vld [vmem:[#allocation22 + $0x100] sm:$0xff]
          %v7622 = vld [vmem:[#allocation22 + $0x108] sm:$0xff]
          %v7623 = vld [vmem:[#allocation22 + $0x110] sm:$0xff]
          %v7624 = vld [vmem:[#allocation22 + $0x118] sm:$0xff]
          %v7625 = vld [vmem:[#allocation22 + $0x120] sm:$0xff]
          %v7626 = vld [vmem:[#allocation22 + $0x128] sm:$0xff]
          %v7627 = vld [vmem:[#allocation22 + $0x130] sm:$0xff]
          %v7628 = vld [vmem:[#allocation22 + $0x138] sm:$0xff]
          %v7629 = vld [vmem:[#allocation22 + $0x140] sm:$0xff]
          %v7630 = vld [vmem:[#allocation22 + $0x148] sm:$0xff]
          %v7631 = vld [vmem:[#allocation22 + $0x150] sm:$0xff]
          %v7632 = vld [vmem:[#allocation22 + $0x158] sm:$0xff]
          %v7633 = vld [vmem:[#allocation22 + $0x160] sm:$0xff]
          %v7634 = vld [vmem:[#allocation22 + $0x168] sm:$0xff]
          %v7635 = vld [vmem:[#allocation22 + $0x170] sm:$0xff]
          %v7636 = vld [vmem:[#allocation22 + $0x178] sm:$0xff]
          %v7637 = vld [vmem:[#allocation22 + $0x180] sm:$0xff]
          %v7638 = vld [vmem:[#allocation22 + $0x188] sm:$0xff]
          %v7639 = vld [vmem:[#allocation22 + $0x190] sm:$0xff]
          %v7640 = vld [vmem:[#allocation22 + $0x198] sm:$0xff]
          %v7641 = vld [vmem:[#allocation22 + $0x1a0] sm:$0xff]
          %v7642 = vld [vmem:[#allocation22 + $0x1a8] sm:$0xff]
          %v7643 = vld [vmem:[#allocation22 + $0x1b0] sm:$0xff]
          %v7644 = vld [vmem:[#allocation22 + $0x1b8] sm:$0xff]
          %v7645 = vld [vmem:[#allocation22 + $0x1c0] sm:$0xff]
          %v7646 = vld [vmem:[#allocation22 + $0x1c8] sm:$0xff]
          %v7647 = vld [vmem:[#allocation22 + $0x1d0] sm:$0xff]
          %v7648 = vld [vmem:[#allocation22 + $0x1d8] sm:$0xff]
          %v7649 = vld [vmem:[#allocation22 + $0x1e0] sm:$0xff]
          %v7650 = vld [vmem:[#allocation22 + $0x1e8] sm:$0xff]
          %v7651 = vld [vmem:[#allocation22 + $0x1f0] sm:$0xff]
          %v7652 = vld [vmem:[#allocation22 + $0x1f8] sm:$0xff]
          %v7653 = vld [vmem:[#allocation23] sm:$0x3]
          %v7655 = vlaneseq
          %v7656 = vshrl.u32 %v7655, 7
          %v7657 = vsub.s32 0, %v7656
          %v7658 = vrot.slane %v7653, %v7657
          %v7659 = vlaneseq
          %v7660 = vshrl.u32 %v7659, 7
          %v7661 = vsub.s32 1, %v7660
          %v7662 = vrot.slane %v7653, %v7661
          %v7667 = vcombine.low %v7586, %v7587
          %v7669 = vunpack.c.l.s4 1966171168
          %v7670 = vunpack.c.0.s8 %v7669
          %v7671 = vlaneseq
          %v7672 = vshrl.u32 %v7671, 7
          %v7673 = vsub.s32 %v7670, %v7672
          %v7674 = vrot.slane %v7667, %v7673
          %v7675 = vcombine.high %v7674, %v7674
          %v7677 = vunpack.c.l.s4 1966171168
          %v7678 = vunpack.c.0.s8 %v7677
          %v7679 = vlaneseq
          %v7680 = vshrl.u32 %v7679, 7
          %v7681 = vsub.s32 %v7678, %v7680
          %v7682 = vrot.slane %v7674, %v7681
          %v7684 = vunpack.c.l.s4 1966171168
          %v7685 = vunpack.c.0.s8 %v7684
          %v7686 = vlaneseq
          %v7687 = vshrl.u32 %v7686, 7
          %v7688 = vsub.s32 %v7685, %v7687
          %v7689 = vrot.slane %v7675, %v7688
          %7692 = vmatprep.subr.mxu0 %v7620
          %7693 = vmatpush1.msra.mxu0 %v7619
          %7694 = vmatprep.subr.mxu0 %v7618
          %7695 = vmatpush1.msra.mxu0 %v7617
          %7696 = vmatprep.subr.mxu0 %v7616
          %7697 = vmatpush1.msra.mxu0 %v7615
          %7698 = vmatprep.subr.mxu0 %v7614
          %7699 = vmatpush1.msra.mxu0 %v7613
          %7700 = vmatprep.subr.mxu0 %v7612
          %7701 = vmatpush1.msra.mxu0 %v7611
          %7702 = vmatprep.subr.mxu0 %v7610
          %7703 = vmatpush1.msra.mxu0 %v7609
          %7704 = vmatprep.subr.mxu0 %v7608
          %7705 = vmatpush1.msra.mxu0 %v7607
          %7706 = vmatprep.subr.mxu0 %v7606
          %7707 = vmatpush1.msra.mxu0 %v7605
          %7708 = vmatprep.subr.mxu0 %v7604
          %7709 = vmatpush1.msra.mxu0 %v7603
          %7710 = vmatprep.subr.mxu0 %v7602
          %7711 = vmatpush1.msra.mxu0 %v7601
          %7712 = vmatprep.subr.mxu0 %v7600
          %7713 = vmatpush1.msra.mxu0 %v7599
          %7714 = vmatprep.subr.mxu0 %v7598
          %7715 = vmatpush1.msra.mxu0 %v7597
          %7716 = vmatprep.subr.mxu0 %v7596
          %7717 = vmatpush1.msra.mxu0 %v7595
          %7718 = vmatprep.subr.mxu0 %v7594
          %7719 = vmatpush1.msra.mxu0 %v7593
          %7720 = vmatprep.subr.mxu0 %v7592
          %7721 = vmatpush1.msra.mxu0 %v7591
          %7722 = vmatprep.subr.mxu0 %v7590
          %7723 = vmatpush1.msra.mxu0 %v7589
          %7724 = vmatprep.subr.mxu0 %v7652
          %7725 = vmatpush2.msra.mxu0 %v7651
          %7726 = vmatprep.subr.mxu0 %v7650
          %7727 = vmatpush2.msra.mxu0 %v7649
          %7728 = vmatprep.subr.mxu0 %v7648
          %7729 = vmatpush2.msra.mxu0 %v7647
          %7730 = vmatprep.subr.mxu0 %v7646
          %7731 = vmatpush2.msra.mxu0 %v7645
          %7732 = vmatprep.subr.mxu0 %v7644
          %7733 = vmatpush2.msra.mxu0 %v7643
          %7734 = vmatprep.subr.mxu0 %v7642
          %7735 = vmatpush2.msra.mxu0 %v7641
          %7736 = vmatprep.subr.mxu0 %v7640
          %7737 = vmatpush2.msra.mxu0 %v7639
          %7738 = vmatprep.subr.mxu0 %v7638
          %7739 = vmatpush2.msra.mxu0 %v7637
          %7740 = vmatprep.subr.mxu0 %v7636
          %7741 = vmatpush2.msra.mxu0 %v7635
          %7742 = vmatprep.subr.mxu0 %v7634
          %7743 = vmatpush2.msra.mxu0 %v7633
          %7744 = vmatprep.subr.mxu0 %v7632
          %7745 = vmatpush2.msra.mxu0 %v7631
          %7746 = vmatprep.subr.mxu0 %v7630
          %7747 = vmatpush2.msra.mxu0 %v7629
          %7748 = vmatprep.subr.mxu0 %v7628
          %7749 = vmatpush2.msra.mxu0 %v7627
          %7750 = vmatprep.subr.mxu0 %v7626
          %7751 = vmatpush2.msra.mxu0 %v7625
          %7752 = vmatprep.subr.mxu0 %v7624
          %7753 = vmatpush2.msra.mxu0 %v7623
          %7754 = vmatprep.subr.mxu0 %v7622
          %7755 = vmatpush2.msra.mxu0 %v7621
          %7756 = vmatprep.mubr.f32.mxu0 %v7689
          %7757 = vmatmul.mubr.f32.gmra.mxu0 %v7682
          %v7758 = vpop.f32.mrf.mxu0
          %v7759 = vadd.f32 %v7658, %v7758
          %v7760 = vpop.f32.mrf.mxu0
          %v7761 = vadd.f32 %v7662, %v7760
          %7762 = vdwg.mxu0
          %v7763 = vmax.f32 %v7759, 0.0
          %v7764 = vmax.f32 %v7761, 0.0
          %v7765 = vld [vmem:[#allocation24] sm:$0xff]
          %v7766 = vld [vmem:[#allocation24 + $0x8] sm:$0xff]
          %v7767 = vld [vmem:[#allocation24 + $0x10] sm:$0xff]
          %v7768 = vld [vmem:[#allocation24 + $0x18] sm:$0xff]
          %v7769 = vld [vmem:[#allocation24 + $0x20] sm:$0xff]
          %v7770 = vld [vmem:[#allocation24 + $0x28] sm:$0xff]
          %v7771 = vld [vmem:[#allocation24 + $0x30] sm:$0xff]
          %v7772 = vld [vmem:[#allocation24 + $0x38] sm:$0xff]
          %v7773 = vld [vmem:[#allocation24 + $0x40] sm:$0xff]
          %v7774 = vld [vmem:[#allocation24 + $0x48] sm:$0xff]
          %v7775 = vld [vmem:[#allocation24 + $0x50] sm:$0xff]
          %v7776 = vld [vmem:[#allocation24 + $0x58] sm:$0xff]
          %v7777 = vld [vmem:[#allocation24 + $0x60] sm:$0xff]
          %v7778 = vld [vmem:[#allocation24 + $0x68] sm:$0xff]
          %v7779 = vld [vmem:[#allocation24 + $0x70] sm:$0xff]
          %v7780 = vld [vmem:[#allocation24 + $0x78] sm:$0xff]
          %v7781 = vld [vmem:[#allocation24 + $0x80] sm:$0xff]
          %v7782 = vld [vmem:[#allocation24 + $0x88] sm:$0xff]
          %v7783 = vld [vmem:[#allocation24 + $0x90] sm:$0xff]
          %v7784 = vld [vmem:[#allocation24 + $0x98] sm:$0xff]
          %v7785 = vld [vmem:[#allocation24 + $0xa0] sm:$0xff]
          %v7786 = vld [vmem:[#allocation24 + $0xa8] sm:$0xff]
          %v7787 = vld [vmem:[#allocation24 + $0xb0] sm:$0xff]
          %v7788 = vld [vmem:[#allocation24 + $0xb8] sm:$0xff]
          %v7789 = vld [vmem:[#allocation24 + $0xc0] sm:$0xff]
          %v7790 = vld [vmem:[#allocation24 + $0xc8] sm:$0xff]
          %v7791 = vld [vmem:[#allocation24 + $0xd0] sm:$0xff]
          %v7792 = vld [vmem:[#allocation24 + $0xd8] sm:$0xff]
          %v7793 = vld [vmem:[#allocation24 + $0xe0] sm:$0xff]
          %v7794 = vld [vmem:[#allocation24 + $0xe8] sm:$0xff]
          %v7795 = vld [vmem:[#allocation24 + $0xf0] sm:$0xff]
          %v7796 = vld [vmem:[#allocation24 + $0xf8] sm:$0xff]
          %v7797 = vld [vmem:[#allocation26] sm:$0x1]
          %v7799 = vlaneseq
          %v7800 = vshrl.u32 %v7799, 7
          %v7801 = vsub.s32 0, %v7800
          %v7802 = vrot.slane %v7797, %v7801
          %7804 = vmatprep.subr.mxu0 0.0
          %7805 = vmatpush1.msra.mxu0 %v7780
          %7806 = vmatprep.subr.mxu0 0.0
          %7807 = vmatpush1.msra.mxu0 %v7779
          %7808 = vmatprep.subr.mxu0 0.0
          %7809 = vmatpush1.msra.mxu0 %v7778
          %7810 = vmatprep.subr.mxu0 0.0
          %7811 = vmatpush1.msra.mxu0 %v7777
          %7812 = vmatprep.subr.mxu0 0.0
          %7813 = vmatpush1.msra.mxu0 %v7776
          %7814 = vmatprep.subr.mxu0 0.0
          %7815 = vmatpush1.msra.mxu0 %v7775
          %7816 = vmatprep.subr.mxu0 0.0
          %7817 = vmatpush1.msra.mxu0 %v7774
          %7818 = vmatprep.subr.mxu0 0.0
          %7819 = vmatpush1.msra.mxu0 %v7773
          %7820 = vmatprep.subr.mxu0 0.0
          %7821 = vmatpush1.msra.mxu0 %v7772
          %7822 = vmatprep.subr.mxu0 0.0
          %7823 = vmatpush1.msra.mxu0 %v7771
          %7824 = vmatprep.subr.mxu0 0.0
          %7825 = vmatpush1.msra.mxu0 %v7770
          %7826 = vmatprep.subr.mxu0 0.0
          %7827 = vmatpush1.msra.mxu0 %v7769
          %7828 = vmatprep.subr.mxu0 0.0
          %7829 = vmatpush1.msra.mxu0 %v7768
          %7830 = vmatprep.subr.mxu0 0.0
          %7831 = vmatpush1.msra.mxu0 %v7767
          %7832 = vmatprep.subr.mxu0 0.0
          %7833 = vmatpush1.msra.mxu0 %v7766
          %7834 = vmatprep.subr.mxu0 0.0
          %7835 = vmatpush1.msra.mxu0 %v7765
          %7836 = vmatprep.subr.mxu0 0.0
          %7837 = vmatpush2.msra.mxu0 %v7796
          %7838 = vmatprep.subr.mxu0 0.0
          %7839 = vmatpush2.msra.mxu0 %v7795
          %7840 = vmatprep.subr.mxu0 0.0
          %7841 = vmatpush2.msra.mxu0 %v7794
          %7842 = vmatprep.subr.mxu0 0.0
          %7843 = vmatpush2.msra.mxu0 %v7793
          %7844 = vmatprep.subr.mxu0 0.0
          %7845 = vmatpush2.msra.mxu0 %v7792
          %7846 = vmatprep.subr.mxu0 0.0
          %7847 = vmatpush2.msra.mxu0 %v7791
          %7848 = vmatprep.subr.mxu0 0.0
          %7849 = vmatpush2.msra.mxu0 %v7790
          %7850 = vmatprep.subr.mxu0 0.0
          %7851 = vmatpush2.msra.mxu0 %v7789
          %7852 = vmatprep.subr.mxu0 0.0
          %7853 = vmatpush2.msra.mxu0 %v7788
          %7854 = vmatprep.subr.mxu0 0.0
          %7855 = vmatpush2.msra.mxu0 %v7787
          %7856 = vmatprep.subr.mxu0 0.0
          %7857 = vmatpush2.msra.mxu0 %v7786
          %7858 = vmatprep.subr.mxu0 0.0
          %7859 = vmatpush2.msra.mxu0 %v7785
          %7860 = vmatprep.subr.mxu0 0.0
          %7861 = vmatpush2.msra.mxu0 %v7784
          %7862 = vmatprep.subr.mxu0 0.0
          %7863 = vmatpush2.msra.mxu0 %v7783
          %7864 = vmatprep.subr.mxu0 0.0
          %7865 = vmatpush2.msra.mxu0 %v7782
          %7866 = vmatprep.subr.mxu0 0.0
          %7867 = vmatpush2.msra.mxu0 %v7781
          %7868 = vmatprep.mubr.f32.mxu0 %v7764
          %7869 = vmatmul.mubr.f32.gmra.mxu0 %v7763
          %v7870 = vpop.f32.mrf.mxu0
          %v7871 = vadd.f32 %v7802, %v7870
          %v7872 = vpop.f32.mrf.mxu0
          %7873 = vdwg.mxu0
          %v7874 = vadd.f32 %v7588, %v7871
          %v7875 = vld [vmem:[#allocation27] sm:$0xff]
          %v7876 = vld [vmem:[#allocation27 + $0x8] sm:$0xff]
          %v7877 = vld [vmem:[#allocation27 + $0x10] sm:$0xff]
          %v7878 = vld [vmem:[#allocation27 + $0x18] sm:$0xff]
          %v7879 = vld [vmem:[#allocation27 + $0x20] sm:$0xff]
          %v7880 = vld [vmem:[#allocation27 + $0x28] sm:$0xff]
          %v7881 = vld [vmem:[#allocation27 + $0x30] sm:$0xff]
          %v7882 = vld [vmem:[#allocation27 + $0x38] sm:$0xff]
          %v7883 = vld [vmem:[#allocation27 + $0x40] sm:$0xff]
          %v7884 = vld [vmem:[#allocation27 + $0x48] sm:$0xff]
          %v7885 = vld [vmem:[#allocation27 + $0x50] sm:$0xff]
          %v7886 = vld [vmem:[#allocation27 + $0x58] sm:$0xff]
          %v7887 = vld [vmem:[#allocation27 + $0x60] sm:$0xff]
          %v7888 = vld [vmem:[#allocation27 + $0x68] sm:$0xff]
          %v7889 = vld [vmem:[#allocation27 + $0x70] sm:$0xff]
          %v7890 = vld [vmem:[#allocation27 + $0x78] sm:$0xff]
          %v7891 = vld [vmem:[#allocation27 + $0x80] sm:$0xff]
          %v7892 = vld [vmem:[#allocation27 + $0x88] sm:$0xff]
          %v7893 = vld [vmem:[#allocation27 + $0x90] sm:$0xff]
          %v7894 = vld [vmem:[#allocation27 + $0x98] sm:$0xff]
          %v7895 = vld [vmem:[#allocation27 + $0xa0] sm:$0xff]
          %v7896 = vld [vmem:[#allocation27 + $0xa8] sm:$0xff]
          %v7897 = vld [vmem:[#allocation27 + $0xb0] sm:$0xff]
          %v7898 = vld [vmem:[#allocation27 + $0xb8] sm:$0xff]
          %v7899 = vld [vmem:[#allocation27 + $0xc0] sm:$0xff]
          %v7900 = vld [vmem:[#allocation27 + $0xc8] sm:$0xff]
          %v7901 = vld [vmem:[#allocation27 + $0xd0] sm:$0xff]
          %v7902 = vld [vmem:[#allocation27 + $0xd8] sm:$0xff]
          %v7903 = vld [vmem:[#allocation27 + $0xe0] sm:$0xff]
          %v7904 = vld [vmem:[#allocation27 + $0xe8] sm:$0xff]
          %v7905 = vld [vmem:[#allocation27 + $0xf0] sm:$0xff]
          %v7906 = vld [vmem:[#allocation27 + $0xf8] sm:$0xff]
          %v7907 = vld [vmem:[#allocation29] sm:$0x3]
          %v7909 = vlaneseq
          %v7910 = vshrl.u32 %v7909, 7
          %v7911 = vsub.s32 0, %v7910
          %v7912 = vrot.slane %v7907, %v7911
          %v7913 = vlaneseq
          %v7914 = vshrl.u32 %v7913, 7
          %v7915 = vsub.s32 1, %v7914
          %v7916 = vrot.slane %v7907, %v7915
          %7919 = vmatprep.subr.mxu0 %v7906
          %7920 = vmatpush1.msra.mxu0 %v7905
          %7921 = vmatprep.subr.mxu0 %v7904
          %7922 = vmatpush1.msra.mxu0 %v7903
          %7923 = vmatprep.subr.mxu0 %v7902
          %7924 = vmatpush1.msra.mxu0 %v7901
          %7925 = vmatprep.subr.mxu0 %v7900
          %7926 = vmatpush1.msra.mxu0 %v7899
          %7927 = vmatprep.subr.mxu0 %v7898
          %7928 = vmatpush1.msra.mxu0 %v7897
          %7929 = vmatprep.subr.mxu0 %v7896
          %7930 = vmatpush1.msra.mxu0 %v7895
          %7931 = vmatprep.subr.mxu0 %v7894
          %7932 = vmatpush1.msra.mxu0 %v7893
          %7933 = vmatprep.subr.mxu0 %v7892
          %7934 = vmatpush1.msra.mxu0 %v7891
          %7935 = vmatprep.subr.mxu0 %v7890
          %7936 = vmatpush1.msra.mxu0 %v7889
          %7937 = vmatprep.subr.mxu0 %v7888
          %7938 = vmatpush1.msra.mxu0 %v7887
          %7939 = vmatprep.subr.mxu0 %v7886
          %7940 = vmatpush1.msra.mxu0 %v7885
          %7941 = vmatprep.subr.mxu0 %v7884
          %7942 = vmatpush1.msra.mxu0 %v7883
          %7943 = vmatprep.subr.mxu0 %v7882
          %7944 = vmatpush1.msra.mxu0 %v7881
          %7945 = vmatprep.subr.mxu0 %v7880
          %7946 = vmatpush1.msra.mxu0 %v7879
          %7947 = vmatprep.subr.mxu0 %v7878
          %7948 = vmatpush1.msra.mxu0 %v7877
          %7949 = vmatprep.subr.mxu0 %v7876
          %7950 = vmatpush1.msra.mxu0 %v7875
          %7951 = vmatprep.subr.mxu0 0.0
          %7952 = vmatpush2.msra.mxu0 0.0
          %7953 = vmatprep.subr.mxu0 0.0
          %7954 = vmatpush2.msra.mxu0 0.0
          %7955 = vmatprep.subr.mxu0 0.0
          %7956 = vmatpush2.msra.mxu0 0.0
          %7957 = vmatprep.subr.mxu0 0.0
          %7958 = vmatpush2.msra.mxu0 0.0
          %7959 = vmatprep.subr.mxu0 0.0
          %7960 = vmatpush2.msra.mxu0 0.0
          %7961 = vmatprep.subr.mxu0 0.0
          %7962 = vmatpush2.msra.mxu0 0.0
          %7963 = vmatprep.subr.mxu0 0.0
          %7964 = vmatpush2.msra.mxu0 0.0
          %7965 = vmatprep.subr.mxu0 0.0
          %7966 = vmatpush2.msra.mxu0 0.0
          %7967 = vmatprep.subr.mxu0 0.0
          %7968 = vmatpush2.msra.mxu0 0.0
          %7969 = vmatprep.subr.mxu0 0.0
          %7970 = vmatpush2.msra.mxu0 0.0
          %7971 = vmatprep.subr.mxu0 0.0
          %7972 = vmatpush2.msra.mxu0 0.0
          %7973 = vmatprep.subr.mxu0 0.0
          %7974 = vmatpush2.msra.mxu0 0.0
          %7975 = vmatprep.subr.mxu0 0.0
          %7976 = vmatpush2.msra.mxu0 0.0
          %7977 = vmatprep.subr.mxu0 0.0
          %7978 = vmatpush2.msra.mxu0 0.0
          %7979 = vmatprep.subr.mxu0 0.0
          %7980 = vmatpush2.msra.mxu0 0.0
          %7981 = vmatprep.subr.mxu0 0.0
          %7982 = vmatpush2.msra.mxu0 0.0
          %7983 = vmatprep.mubr.f32.mxu0 0.0
          %7984 = vmatmul.mubr.f32.gmra.mxu0 %v7874
          %v7985 = vpop.f32.mrf.mxu0
          %v7986 = vadd.f32 %v7912, %v7985
          %v7987 = vpop.f32.mrf.mxu0
          %v7988 = vadd.f32 %v7916, %v7987
          %7989 = vdwg.mxu0
          %v7990 = vmax.f32 %v7986, 0.0
          %v7991 = vmax.f32 %v7988, 0.0
          %v7994 = vcombine.low %v7990, %v7991
          %v7996 = vunpack.c.l.s4 1966171168
          %v7997 = vunpack.c.0.s8 %v7996
          %v7998 = vlaneseq
          %v7999 = vshrl.u32 %v7998, 7
          %v8000 = vsub.s32 %v7997, %v7999
          %v8001 = vrot.slane %v7994, %v8000
          %v8002 = vcombine.high %v8001, %v8001
          %v8004 = vunpack.c.l.s4 1966171168
          %v8005 = vunpack.c.0.s8 %v8004
          %v8006 = vlaneseq
          %v8007 = vshrl.u32 %v8006, 7
          %v8008 = vsub.s32 %v8005, %v8007
          %v8009 = vrot.slane %v8001, %v8008
          %v8011 = vunpack.c.l.s4 1966171168
          %v8012 = vunpack.c.0.s8 %v8011
          %v8013 = vlaneseq
          %v8014 = vshrl.u32 %v8013, 7
          %v8015 = vsub.s32 %v8012, %v8014
          %v8016 = vrot.slane %v8002, %v8015
          %v8019 = vadd.f32 %v7586, %v8009
          %v8020 = vadd.f32 %v7587, %v8016
          %v8021 = vld [vmem:[#allocation30] sm:$0xff]
          %v8022 = vld [vmem:[#allocation30 + $0x8] sm:$0xff]
          %v8023 = vld [vmem:[#allocation30 + $0x10] sm:$0xff]
          %v8024 = vld [vmem:[#allocation30 + $0x18] sm:$0xff]
          %v8025 = vld [vmem:[#allocation30 + $0x20] sm:$0xff]
          %v8026 = vld [vmem:[#allocation30 + $0x28] sm:$0xff]
          %v8027 = vld [vmem:[#allocation30 + $0x30] sm:$0xff]
          %v8028 = vld [vmem:[#allocation30 + $0x38] sm:$0xff]
          %v8029 = vld [vmem:[#allocation30 + $0x40] sm:$0xff]
          %v8030 = vld [vmem:[#allocation30 + $0x48] sm:$0xff]
          %v8031 = vld [vmem:[#allocation30 + $0x50] sm:$0xff]
          %v8032 = vld [vmem:[#allocation30 + $0x58] sm:$0xff]
          %v8033 = vld [vmem:[#allocation30 + $0x60] sm:$0xff]
          %v8034 = vld [vmem:[#allocation30 + $0x68] sm:$0xff]
          %v8035 = vld [vmem:[#allocation30 + $0x70] sm:$0xff]
          %v8036 = vld [vmem:[#allocation30 + $0x78] sm:$0xff]
          %v8037 = vld [vmem:[#allocation30 + $0x80] sm:$0xff]
          %v8038 = vld [vmem:[#allocation30 + $0x88] sm:$0xff]
          %v8039 = vld [vmem:[#allocation30 + $0x90] sm:$0xff]
          %v8040 = vld [vmem:[#allocation30 + $0x98] sm:$0xff]
          %v8041 = vld [vmem:[#allocation30 + $0xa0] sm:$0xff]
          %v8042 = vld [vmem:[#allocation30 + $0xa8] sm:$0xff]
          %v8043 = vld [vmem:[#allocation30 + $0xb0] sm:$0xff]
          %v8044 = vld [vmem:[#allocation30 + $0xb8] sm:$0xff]
          %v8045 = vld [vmem:[#allocation30 + $0xc0] sm:$0xff]
          %v8046 = vld [vmem:[#allocation30 + $0xc8] sm:$0xff]
          %v8047 = vld [vmem:[#allocation30 + $0xd0] sm:$0xff]
          %v8048 = vld [vmem:[#allocation30 + $0xd8] sm:$0xff]
          %v8049 = vld [vmem:[#allocation30 + $0xe0] sm:$0xff]
          %v8050 = vld [vmem:[#allocation30 + $0xe8] sm:$0xff]
          %v8051 = vld [vmem:[#allocation30 + $0xf0] sm:$0xff]
          %v8052 = vld [vmem:[#allocation30 + $0xf8] sm:$0xff]
          %v8053 = vld [vmem:[#allocation30 + $0x100] sm:$0xff]
          %v8054 = vld [vmem:[#allocation30 + $0x108] sm:$0xff]
          %v8055 = vld [vmem:[#allocation30 + $0x110] sm:$0xff]
          %v8056 = vld [vmem:[#allocation30 + $0x118] sm:$0xff]
          %v8057 = vld [vmem:[#allocation30 + $0x120] sm:$0xff]
          %v8058 = vld [vmem:[#allocation30 + $0x128] sm:$0xff]
          %v8059 = vld [vmem:[#allocation30 + $0x130] sm:$0xff]
          %v8060 = vld [vmem:[#allocation30 + $0x138] sm:$0xff]
          %v8061 = vld [vmem:[#allocation30 + $0x140] sm:$0xff]
          %v8062 = vld [vmem:[#allocation30 + $0x148] sm:$0xff]
          %v8063 = vld [vmem:[#allocation30 + $0x150] sm:$0xff]
          %v8064 = vld [vmem:[#allocation30 + $0x158] sm:$0xff]
          %v8065 = vld [vmem:[#allocation30 + $0x160] sm:$0xff]
          %v8066 = vld [vmem:[#allocation30 + $0x168] sm:$0xff]
          %v8067 = vld [vmem:[#allocation30 + $0x170] sm:$0xff]
          %v8068 = vld [vmem:[#allocation30 + $0x178] sm:$0xff]
          %v8069 = vld [vmem:[#allocation30 + $0x180] sm:$0xff]
          %v8070 = vld [vmem:[#allocation30 + $0x188] sm:$0xff]
          %v8071 = vld [vmem:[#allocation30 + $0x190] sm:$0xff]
          %v8072 = vld [vmem:[#allocation30 + $0x198] sm:$0xff]
          %v8073 = vld [vmem:[#allocation30 + $0x1a0] sm:$0xff]
          %v8074 = vld [vmem:[#allocation30 + $0x1a8] sm:$0xff]
          %v8075 = vld [vmem:[#allocation30 + $0x1b0] sm:$0xff]
          %v8076 = vld [vmem:[#allocation30 + $0x1b8] sm:$0xff]
          %v8077 = vld [vmem:[#allocation30 + $0x1c0] sm:$0xff]
          %v8078 = vld [vmem:[#allocation30 + $0x1c8] sm:$0xff]
          %v8079 = vld [vmem:[#allocation30 + $0x1d0] sm:$0xff]
          %v8080 = vld [vmem:[#allocation30 + $0x1d8] sm:$0xff]
          %v8081 = vld [vmem:[#allocation30 + $0x1e0] sm:$0xff]
          %v8082 = vld [vmem:[#allocation30 + $0x1e8] sm:$0xff]
          %v8083 = vld [vmem:[#allocation30 + $0x1f0] sm:$0xff]
          %v8084 = vld [vmem:[#allocation30 + $0x1f8] sm:$0xff]
          %v8085 = vld [vmem:[#allocation32] sm:$0x3]
          %v8087 = vlaneseq
          %v8088 = vshrl.u32 %v8087, 7
          %v8089 = vsub.s32 0, %v8088
          %v8090 = vrot.slane %v8085, %v8089
          %v8091 = vlaneseq
          %v8092 = vshrl.u32 %v8091, 7
          %v8093 = vsub.s32 1, %v8092
          %v8094 = vrot.slane %v8085, %v8093
          %v8099 = vcombine.low %v8019, %v8020
          %v8101 = vunpack.c.l.s4 1966171168
          %v8102 = vunpack.c.0.s8 %v8101
          %v8103 = vlaneseq
          %v8104 = vshrl.u32 %v8103, 7
          %v8105 = vsub.s32 %v8102, %v8104
          %v8106 = vrot.slane %v8099, %v8105
          %v8107 = vcombine.high %v8106, %v8106
          %v8109 = vunpack.c.l.s4 1966171168
          %v8110 = vunpack.c.0.s8 %v8109
          %v8111 = vlaneseq
          %v8112 = vshrl.u32 %v8111, 7
          %v8113 = vsub.s32 %v8110, %v8112
          %v8114 = vrot.slane %v8106, %v8113
          %v8116 = vunpack.c.l.s4 1966171168
          %v8117 = vunpack.c.0.s8 %v8116
          %v8118 = vlaneseq
          %v8119 = vshrl.u32 %v8118, 7
          %v8120 = vsub.s32 %v8117, %v8119
          %v8121 = vrot.slane %v8107, %v8120
          %8124 = vmatprep.subr.mxu0 %v8052
          %8125 = vmatpush1.msra.mxu0 %v8051
          %8126 = vmatprep.subr.mxu0 %v8050
          %8127 = vmatpush1.msra.mxu0 %v8049
          %8128 = vmatprep.subr.mxu0 %v8048
          %8129 = vmatpush1.msra.mxu0 %v8047
          %8130 = vmatprep.subr.mxu0 %v8046
          %8131 = vmatpush1.msra.mxu0 %v8045
          %8132 = vmatprep.subr.mxu0 %v8044
          %8133 = vmatpush1.msra.mxu0 %v8043
          %8134 = vmatprep.subr.mxu0 %v8042
          %8135 = vmatpush1.msra.mxu0 %v8041
          %8136 = vmatprep.subr.mxu0 %v8040
          %8137 = vmatpush1.msra.mxu0 %v8039
          %8138 = vmatprep.subr.mxu0 %v8038
          %8139 = vmatpush1.msra.mxu0 %v8037
          %8140 = vmatprep.subr.mxu0 %v8036
          %8141 = vmatpush1.msra.mxu0 %v8035
          %8142 = vmatprep.subr.mxu0 %v8034
          %8143 = vmatpush1.msra.mxu0 %v8033
          %8144 = vmatprep.subr.mxu0 %v8032
          %8145 = vmatpush1.msra.mxu0 %v8031
          %8146 = vmatprep.subr.mxu0 %v8030
          %8147 = vmatpush1.msra.mxu0 %v8029
          %8148 = vmatprep.subr.mxu0 %v8028
          %8149 = vmatpush1.msra.mxu0 %v8027
          %8150 = vmatprep.subr.mxu0 %v8026
          %8151 = vmatpush1.msra.mxu0 %v8025
          %8152 = vmatprep.subr.mxu0 %v8024
          %8153 = vmatpush1.msra.mxu0 %v8023
          %8154 = vmatprep.subr.mxu0 %v8022
          %8155 = vmatpush1.msra.mxu0 %v8021
          %8156 = vmatprep.subr.mxu0 %v8084
          %8157 = vmatpush2.msra.mxu0 %v8083
          %8158 = vmatprep.subr.mxu0 %v8082
          %8159 = vmatpush2.msra.mxu0 %v8081
          %8160 = vmatprep.subr.mxu0 %v8080
          %8161 = vmatpush2.msra.mxu0 %v8079
          %8162 = vmatprep.subr.mxu0 %v8078
          %8163 = vmatpush2.msra.mxu0 %v8077
          %8164 = vmatprep.subr.mxu0 %v8076
          %8165 = vmatpush2.msra.mxu0 %v8075
          %8166 = vmatprep.subr.mxu0 %v8074
          %8167 = vmatpush2.msra.mxu0 %v8073
          %8168 = vmatprep.subr.mxu0 %v8072
          %8169 = vmatpush2.msra.mxu0 %v8071
          %8170 = vmatprep.subr.mxu0 %v8070
          %8171 = vmatpush2.msra.mxu0 %v8069
          %8172 = vmatprep.subr.mxu0 %v8068
          %8173 = vmatpush2.msra.mxu0 %v8067
          %8174 = vmatprep.subr.mxu0 %v8066
          %8175 = vmatpush2.msra.mxu0 %v8065
          %8176 = vmatprep.subr.mxu0 %v8064
          %8177 = vmatpush2.msra.mxu0 %v8063
          %8178 = vmatprep.subr.mxu0 %v8062
          %8179 = vmatpush2.msra.mxu0 %v8061
          %8180 = vmatprep.subr.mxu0 %v8060
          %8181 = vmatpush2.msra.mxu0 %v8059
          %8182 = vmatprep.subr.mxu0 %v8058
          %8183 = vmatpush2.msra.mxu0 %v8057
          %8184 = vmatprep.subr.mxu0 %v8056
          %8185 = vmatpush2.msra.mxu0 %v8055
          %8186 = vmatprep.subr.mxu0 %v8054
          %8187 = vmatpush2.msra.mxu0 %v8053
          %8188 = vmatprep.mubr.f32.mxu0 %v8121
          %8189 = vmatmul.mubr.f32.gmra.mxu0 %v8114
          %v8190 = vpop.f32.mrf.mxu0
          %v8191 = vadd.f32 %v8090, %v8190
          %v8192 = vpop.f32.mrf.mxu0
          %v8193 = vadd.f32 %v8094, %v8192
          %8194 = vdwg.mxu0
          %v8195 = vmax.f32 %v8191, 0.0
          %v8196 = vmax.f32 %v8193, 0.0
          %v8197 = vld [vmem:[#allocation33] sm:$0xff]
          %v8198 = vld [vmem:[#allocation33 + $0x8] sm:$0xff]
          %v8199 = vld [vmem:[#allocation33 + $0x10] sm:$0xff]
          %v8200 = vld [vmem:[#allocation33 + $0x18] sm:$0xff]
          %v8201 = vld [vmem:[#allocation33 + $0x20] sm:$0xff]
          %v8202 = vld [vmem:[#allocation33 + $0x28] sm:$0xff]
          %v8203 = vld [vmem:[#allocation33 + $0x30] sm:$0xff]
          %v8204 = vld [vmem:[#allocation33 + $0x38] sm:$0xff]
          %v8205 = vld [vmem:[#allocation33 + $0x40] sm:$0xff]
          %v8206 = vld [vmem:[#allocation33 + $0x48] sm:$0xff]
          %v8207 = vld [vmem:[#allocation33 + $0x50] sm:$0xff]
          %v8208 = vld [vmem:[#allocation33 + $0x58] sm:$0xff]
          %v8209 = vld [vmem:[#allocation33 + $0x60] sm:$0xff]
          %v8210 = vld [vmem:[#allocation33 + $0x68] sm:$0xff]
          %v8211 = vld [vmem:[#allocation33 + $0x70] sm:$0xff]
          %v8212 = vld [vmem:[#allocation33 + $0x78] sm:$0xff]
          %v8213 = vld [vmem:[#allocation33 + $0x80] sm:$0xff]
          %v8214 = vld [vmem:[#allocation33 + $0x88] sm:$0xff]
          %v8215 = vld [vmem:[#allocation33 + $0x90] sm:$0xff]
          %v8216 = vld [vmem:[#allocation33 + $0x98] sm:$0xff]
          %v8217 = vld [vmem:[#allocation33 + $0xa0] sm:$0xff]
          %v8218 = vld [vmem:[#allocation33 + $0xa8] sm:$0xff]
          %v8219 = vld [vmem:[#allocation33 + $0xb0] sm:$0xff]
          %v8220 = vld [vmem:[#allocation33 + $0xb8] sm:$0xff]
          %v8221 = vld [vmem:[#allocation33 + $0xc0] sm:$0xff]
          %v8222 = vld [vmem:[#allocation33 + $0xc8] sm:$0xff]
          %v8223 = vld [vmem:[#allocation33 + $0xd0] sm:$0xff]
          %v8224 = vld [vmem:[#allocation33 + $0xd8] sm:$0xff]
          %v8225 = vld [vmem:[#allocation33 + $0xe0] sm:$0xff]
          %v8226 = vld [vmem:[#allocation33 + $0xe8] sm:$0xff]
          %v8227 = vld [vmem:[#allocation33 + $0xf0] sm:$0xff]
          %v8228 = vld [vmem:[#allocation33 + $0xf8] sm:$0xff]
          %v8229 = vld [vmem:[#allocation35] sm:$0x1]
          %v8231 = vlaneseq
          %v8232 = vshrl.u32 %v8231, 7
          %v8233 = vsub.s32 0, %v8232
          %v8234 = vrot.slane %v8229, %v8233
          %8236 = vmatprep.subr.mxu0 0.0
          %8237 = vmatpush1.msra.mxu0 %v8212
          %8238 = vmatprep.subr.mxu0 0.0
          %8239 = vmatpush1.msra.mxu0 %v8211
          %8240 = vmatprep.subr.mxu0 0.0
          %8241 = vmatpush1.msra.mxu0 %v8210
          %8242 = vmatprep.subr.mxu0 0.0
          %8243 = vmatpush1.msra.mxu0 %v8209
          %8244 = vmatprep.subr.mxu0 0.0
          %8245 = vmatpush1.msra.mxu0 %v8208
          %8246 = vmatprep.subr.mxu0 0.0
          %8247 = vmatpush1.msra.mxu0 %v8207
          %8248 = vmatprep.subr.mxu0 0.0
          %8249 = vmatpush1.msra.mxu0 %v8206
          %8250 = vmatprep.subr.mxu0 0.0
          %8251 = vmatpush1.msra.mxu0 %v8205
          %8252 = vmatprep.subr.mxu0 0.0
          %8253 = vmatpush1.msra.mxu0 %v8204
          %8254 = vmatprep.subr.mxu0 0.0
          %8255 = vmatpush1.msra.mxu0 %v8203
          %8256 = vmatprep.subr.mxu0 0.0
          %8257 = vmatpush1.msra.mxu0 %v8202
          %8258 = vmatprep.subr.mxu0 0.0
          %8259 = vmatpush1.msra.mxu0 %v8201
          %8260 = vmatprep.subr.mxu0 0.0
          %8261 = vmatpush1.msra.mxu0 %v8200
          %8262 = vmatprep.subr.mxu0 0.0
          %8263 = vmatpush1.msra.mxu0 %v8199
          %8264 = vmatprep.subr.mxu0 0.0
          %8265 = vmatpush1.msra.mxu0 %v8198
          %8266 = vmatprep.subr.mxu0 0.0
          %8267 = vmatpush1.msra.mxu0 %v8197
          %8268 = vmatprep.subr.mxu0 0.0
          %8269 = vmatpush2.msra.mxu0 %v8228
          %8270 = vmatprep.subr.mxu0 0.0
          %8271 = vmatpush2.msra.mxu0 %v8227
          %8272 = vmatprep.subr.mxu0 0.0
          %8273 = vmatpush2.msra.mxu0 %v8226
          %8274 = vmatprep.subr.mxu0 0.0
          %8275 = vmatpush2.msra.mxu0 %v8225
          %8276 = vmatprep.subr.mxu0 0.0
          %8277 = vmatpush2.msra.mxu0 %v8224
          %8278 = vmatprep.subr.mxu0 0.0
          %8279 = vmatpush2.msra.mxu0 %v8223
          %8280 = vmatprep.subr.mxu0 0.0
          %8281 = vmatpush2.msra.mxu0 %v8222
          %8282 = vmatprep.subr.mxu0 0.0
          %8283 = vmatpush2.msra.mxu0 %v8221
          %8284 = vmatprep.subr.mxu0 0.0
          %8285 = vmatpush2.msra.mxu0 %v8220
          %8286 = vmatprep.subr.mxu0 0.0
          %8287 = vmatpush2.msra.mxu0 %v8219
          %8288 = vmatprep.subr.mxu0 0.0
          %8289 = vmatpush2.msra.mxu0 %v8218
          %8290 = vmatprep.subr.mxu0 0.0
          %8291 = vmatpush2.msra.mxu0 %v8217
          %8292 = vmatprep.subr.mxu0 0.0
          %8293 = vmatpush2.msra.mxu0 %v8216
          %8294 = vmatprep.subr.mxu0 0.0
          %8295 = vmatpush2.msra.mxu0 %v8215
          %8296 = vmatprep.subr.mxu0 0.0
          %8297 = vmatpush2.msra.mxu0 %v8214
          %8298 = vmatprep.subr.mxu0 0.0
          %8299 = vmatpush2.msra.mxu0 %v8213
          %8300 = vmatprep.mubr.f32.mxu0 %v8196
          %8301 = vmatmul.mubr.f32.gmra.mxu0 %v8195
          %v8302 = vpop.f32.mrf.mxu0
          %v8303 = vadd.f32 %v8234, %v8302
          %v8304 = vpop.f32.mrf.mxu0
          %8305 = vdwg.mxu0
          %v8306 = vadd.f32 %v7874, %v8303
          %8307 = vst [vmem:[#allocation36] sm:$0x3] %v8306
          %8308 = vst [vmem:[#allocation37] sm:$0x3] %v7874
        $region224: #{motion_ssm_forward.1} parent=119 // pred_fallthru
          _
        // Predicated region
        $region225: #{motion_ssm_forward.1} parent=119 // pred_check
          %p8309 = pneg %p635
        $region226: #{motion_ssm_forward.1} parent=119 // pred_check_branch
          %8311 = sbr.rel (%p8309) target = $region228
        $region227: #{motion_ssm_forward.1} parent=119 // pred_region
          %s8313 = ssub.s32 32, 32
          %8314 = vsyncadd [#allocation6], %s8313
          %s8316 = sshll.u32 [#allocation36], 4
          %s8317 = int_to_ptr.vmem [resolvable:$true] %s8316
          %8319 = dma.vmem_to_hbm [thread:$0]  %s8317, 32, %s25, [#allocation6]
        $region228: #{motion_ssm_forward.1} parent=119 // pred_fallthru
          _
        // Predicated region
        $region229: #{motion_ssm_forward.1} parent=119 // pred_check
          %p8320 = pneg %p656
        $region230: #{motion_ssm_forward.1} parent=119 // pred_check_branch
          %8322 = sbr.rel (%p8320) target = $region232
        $region231: #{motion_ssm_forward.1} parent=119 // pred_region
          %s8324 = ssub.s32 32, 32
          %8325 = vsyncadd [#allocation38], %s8324
          %s8327 = sshll.u32 [#allocation37], 4
          %s8328 = int_to_ptr.vmem [resolvable:$true] %s8327
          %8330 = dma.vmem_to_hbm [thread:$0]  %s8328, 32, %s26, [#allocation38]
        $region232: #{motion_ssm_forward.1} parent=119 // pred_fallthru
          _
        // Predicated region
        $region233: #{motion_ssm_forward.1} parent=119 // pred_check
          %p8331 = pneg %p635
        $region234: #{motion_ssm_forward.1} parent=119 // pred_check_branch
          %8333 = sbr.rel (%p8331) target = $region236
        $region235: #{motion_ssm_forward.1} parent=119 // pred_region
          %8334 = dma.done [#allocation6], 32
        $region236: #{motion_ssm_forward.1} parent=119 // pred_fallthru
          _
        // Predicated region
        $region237: #{motion_ssm_forward.1} parent=119 // pred_check
          %p8335 = pneg %p656
        $region238: #{motion_ssm_forward.1} parent=119 // pred_check_branch
          %8337 = sbr.rel (%p8335) target = $region240
        $region239: #{motion_ssm_forward.1} parent=119 // pred_region
          %8338 = dma.done [#allocation38], 32
        $region240: #{motion_ssm_forward.1} parent=119 // pred_fallthru
          _
      $region120: #{motion_ssm_forward.1} parent=5 // pred_fallthru
        _
      %p8339 = scmp.le.s32.totalorder 2, %s42
      // Predicated region
      $region241: #{motion_ssm_forward.1} parent=5 // pred_check
        %p8340 = pneg %p8339
      $region242: #{motion_ssm_forward.1} parent=5 // pred_check_branch
        %8342 = sbr.rel (%p8340) target = $region244
      $region243: #{motion_ssm_forward.1} parent=5 // pred_region
        %s8343 = ssub.s32 %s42, 2
      $region244: #{motion_ssm_forward.1} parent=5 // pred_fallthru
        _
    $region6: #{motion_ssm_forward.1} parent=1 // loop_footer
      %s46 = sadd.s32 1, %s42
    $region7: #{motion_ssm_forward.1} parent=1 // loop_footer_branch
      %41 = sbr.rel target = $region3
    $region8: #{motion_ssm_forward.1} parent=1 // loop_exit
      _
    %8344 = vsyncpa [#allocation5], 1
    %s8345 = scalar_lea.sflag [#allocation5], 1
    %8346 = vsyncpa %s8345, 1
    %8347 = vsyncpa [#allocation8], 1
    %8348 = vsyncpa [#allocation11], 1
    %8349 = vsyncpa [#allocation25], 1
    %8350 = vsyncpa [#allocation28], 1
    %8351 = vsyncpa [#allocation31], 1
    %8352 = vsyncpa [#allocation34], 1
    %8353 = vsyncpa [#allocation6], 1
    %s8354 = scalar_lea.sflag [#allocation6], 1
    %8355 = vsyncpa %s8354, 1
    %8356 = vsyncpa [#allocation38], 1

</llo_original>
